<compile_context>
chip_gen: v7x
topology: tpu7x:2x2x1
jax: 0.10.0
libtpu: 0.0.40
codegen_flags: <defaults>
</compile_context>

<pallas_src>
import math

import jax
import jax.numpy as jnp
from jax.experimental import pallas as pl
from jax.experimental.pallas import tpu as pltpu

# ----------------------------- model config ---------------------------------
B = 2              # batch
S = 8              # sequence length
H = 32             # hidden size
NUM_HEADS = 4
DH = H // NUM_HEADS
INTER = 64         # FFN intermediate size
NUM_LAYERS = 2
VOCAB = 50
MAX_POS = 16
NUM_CLASSES = 3
NESTING_DIMS = (8, 16, 32)
LN_EPS = 1e-12

G = NUM_HEADS * B                      # number of (head, batch) groups
NC3 = NUM_CLASSES * len(NESTING_DIMS)  # 9 = all classifier logits concatenated

# --------- row layout of the packed 32-lane parameter slab ("p32") ----------
WE_OFF = 0                             # word embeddings            rows [0, 50)
PT_OFF = 56                            # pos+token-type term        rows [56, 72)  (B*S rows)
WP_OFF = 72                            # pooler weight (in,out)     rows [72, 104)
WC_OFF = 104                           # padded classifier weight^T rows [104, 113)
ROW_EMB_LN_G = 113
ROW_EMB_LN_B = 114
ROW_BP = 115
ROW_BC = 116                           # classifier biases (first 9 lanes)
ROW_LVEC = 117                         # + 6*l + {0:bo,1:ln1g,2:ln1b,3:b2,4:ln2g,5:ln2b}
P32_ROWS = ROW_LVEC + 6 * NUM_LAYERS   # 129


# ----------------------------- shared math helpers ----------------------------
def _layer_norm(x, gamma, beta):
    mu = jnp.mean(x, axis=-1, keepdims=True)
    var = jnp.mean(jnp.square(x - mu), axis=-1, keepdims=True)
    return (x - mu) * jax.lax.rsqrt(var + LN_EPS) * gamma + beta


def _gelu(x):
    # TODO(synk): tanh-approximate GELU; PyTorch nn.GELU() defaults to the erf form
    # (~1e-3 deviation).  Switch to an erf-based GELU if bit-level parity is required.
    c = math.sqrt(2.0 / math.pi)
    return 0.5 * x * (1.0 + jnp.tanh(c * (x + 0.044715 * x * x * x)))


# ----------------------------- fused Pallas kernel ----------------------------
def mrl_fused_kernel(ids_ref, mask_ref, attn_w_ref, bqkv_ref, ffn_w_ref, p32_ref,
                     out_ref):
    f32 = jnp.float32

    def row(r):                                    # (1, H) row of the packed vector slab
        return p32_ref[r:r + 1, :]

    # ---------- embeddings: one-hot gather on the (idle) MXU + embedding LayerNorm ----------
    ids = ids_ref[...]                                                  # (B*S, 1) int32
    vocab_iota = jax.lax.broadcasted_iota(jnp.int32, (B * S, VOCAB), 1)
    onehot = jnp.where(vocab_iota == ids, 1.0, 0.0).astype(f32)         # (B*S, VOCAB)
    x = jnp.dot(onehot, p32_ref[WE_OFF:WE_OFF + VOCAB, :],
                preferred_element_type=f32)                             # (B*S, H)
    x = x + p32_ref[PT_OFF:PT_OFF + B * S, :]                           # + position + token-type
    x = _layer_norm(x, row(ROW_EMB_LN_G), row(ROW_EMB_LN_B))

    # ---------- additive attention-mask bias in the head-batched (G, 1, S) layout ----------
    mask_f = mask_ref[...].astype(f32)                                  # (B, 1, S)
    bias = (mask_f - 1.0) * 1e9                                         # == (1-mask)*(-1e9)
    bias_bh = jnp.broadcast_to(bias[None], (NUM_HEADS, B, 1, S)).reshape(G, 1, S)

    for l in range(NUM_LAYERS):                    # static unroll over the 2 encoder layers
        # ----- attention: replicated-batch einsums, no lane slices / concats -----
        wqkv = attn_w_ref[l, 0:3 * G, :, :]                             # (3G, DH, H)
        wo = attn_w_ref[l, 3 * G:4 * G, :, :]                           # (G, DH, H)
        x_rep = jnp.broadcast_to(x.reshape(B, S, H)[None],
                                 (3 * NUM_HEADS, B, S, H)).reshape(3 * G, S, H)
        qkv = jnp.einsum('gsc,gdc->gsd', x_rep, wqkv,
                         preferred_element_type=f32) + bqkv_ref[l]      # (3G, S, DH)
        q = qkv[0:G]               # 1/sqrt(DH) already folded into the Q weights/bias
        k = qkv[G:2 * G]
        v = qkv[2 * G:3 * G]

        s = jnp.einsum('gqd,gkd->gqk', q, k,
                       preferred_element_type=f32) + bias_bh            # (G, S, S)
        s = s - jnp.max(s, axis=-1, keepdims=True)
        p = jnp.exp(s)
        p = p * pl.reciprocal(jnp.sum(p, axis=-1, keepdims=True), approx=True)
        ctx = jnp.einsum('gqk,gkd->gqd', p, v,
                         preferred_element_type=f32)                    # (G, S, DH)

        # per-(head,batch) partial output projections, then head merge = plain adds
        parts = jnp.einsum('gsd,gdo->gso', ctx, wo,
                           preferred_element_type=f32)                  # (G, S, H)
        attn = (parts[0:B] + parts[B:2 * B] + parts[2 * B:3 * B]
                + parts[3 * B:4 * B]).reshape(B * S, H)
        attn = attn + row(ROW_LVEC + 6 * l + 0)                         # bo

        x = _layer_norm(x + attn,
                        row(ROW_LVEC + 6 * l + 1), row(ROW_LVEC + 6 * l + 2))

        # ----- FFN (activation stays 2-D (B*S, H)) -----
        w1t = ffn_w_ref[l, 0:H, :]                                      # (H, INTER)
        w2 = ffn_w_ref[l, H:2 * H, :]                                   # (H, INTER) torch layout
        b1 = ffn_w_ref[l, 2 * H:2 * H + 1, :]                           # (1, INTER)
        hmid = _gelu(jnp.dot(x, w1t, preferred_element_type=f32) + b1)  # (B*S, INTER)
        ffn = jax.lax.dot_general(hmid, w2, (((1,), (1,)), ((), ())),
                                  preferred_element_type=f32)           # (B*S, H)
        ffn = ffn + row(ROW_LVEC + 6 * l + 3)                           # b2
        x = _layer_norm(x + ffn,
                        row(ROW_LVEC + 6 * l + 4), row(ROW_LVEC + 6 * l + 5))

    # ---------- BERT pooler + all nested (Matryoshka) classifiers ----------
    cls_tok = x.reshape(B, S, H)[:, 0, :]                               # (B, H)
    pooled = jnp.tanh(jnp.dot(cls_tok, p32_ref[WP_OFF:WP_OFF + H, :],
                              preferred_element_type=f32) + row(ROW_BP))
    logits = jax.lax.dot_general(pooled, p32_ref[WC_OFF:WC_OFF + NC3, :],
                                 (((1,), (1,)), ((), ())),
                                 preferred_element_type=f32)            # (B, 9)
    logits = logits + row(ROW_BC)[:, 0:NC3]

    # single merged output buffer (pooled | all logits)
    out_ref[:, 0:H] = pooled
    out_ref[:, H:H + NC3] = logits


# ----------------------------- wrapper -----------------------------------------
def mrl_transformer_forward(input_ids, attention_mask, packed):
    """Mirrors MRLTransformer.forward -> (nested_logits, pooled_output)."""
    ids2d = input_ids.reshape(B * S, 1).astype(jnp.int32)
    mask3d = attention_mask.reshape(B, 1, S).astype(jnp.int32)
    vmem = pl.BlockSpec(memory_space=pltpu.MemorySpace.VMEM)
    # Single TensorCore, no grid: a batch grid axis / core_map split costs more than the
    # entire compute at B=2, S=8.  Total VMEM residency is < 1 MiB -> no vmem tuning.
    out = pl.pallas_call(
        mrl_fused_kernel,
        out_shape=jax.ShapeDtypeStruct((B, H + NC3), jnp.float32),
        in_specs=[vmem] * 6,
        out_specs=vmem,
    )(ids2d, mask3d, packed['attn_w'], packed['bqkv'], packed['ffn_w'], packed['p32'])

    pooled = out[:, :H]
    nested_logits = [out[:, H + i * NUM_CLASSES: H + (i + 1) * NUM_CLASSES]
                     for i in range(len(NESTING_DIMS))]
    return nested_logits, pooled


# ----------------------------- params ------------------------------------------
def init_params(key):
    """PyTorch-convention parameters (nn.Linear weight: (out, in))."""
    keys = iter(jax.random.split(key, 64))

    def nrm(shape):
        return 0.02 * jax.random.normal(next(keys), shape, dtype=jnp.float32)

    params = {
        'word_emb': nrm((VOCAB, H)),
        'pos_emb': nrm((MAX_POS, H)),
        'type_emb': nrm((2, H)),
        'emb_ln_g': jnp.ones((H,), jnp.float32),
        'emb_ln_b': jnp.zeros((H,), jnp.float32),
        'wp': nrm((H, H)),
        'bp': jnp.zeros((1, H), jnp.float32),
        'cls_w': [nrm((NUM_CLASSES, d)) for d in NESTING_DIMS],
        'cls_b': [jnp.zeros((1, NUM_CLASSES), jnp.float32) for _ in NESTING_DIMS],
        'layers': [],
    }
    for _ in range(NUM_LAYERS):
        params['layers'].append({
            'wq': nrm((H, H)), 'bq': jnp.zeros((1, H), jnp.float32),
            'wk': nrm((H, H)), 'bk': jnp.zeros((1, H), jnp.float32),
            'wv': nrm((H, H)), 'bv': jnp.zeros((1, H), jnp.float32),
            'wo': nrm((H, H)), 'bo': jnp.zeros((1, H), jnp.float32),
            'ln1g': jnp.ones((1, H), jnp.float32),
            'ln1b': jnp.zeros((1, H), jnp.float32),
            'w1': nrm((INTER, H)), 'b1': jnp.zeros((1, INTER), jnp.float32),
            'w2': nrm((H, INTER)), 'b2': jnp.zeros((1, H), jnp.float32),
            'ln2g': jnp.ones((1, H), jnp.float32),
            'ln2b': jnp.zeros((1, H), jnp.float32),
        })
    return params


def pack_params(params):
    """One-time host-side repack: per-(head,batch) weight blocks, folded 1/sqrt(DH)
    scale, FFN slab, and one 32-lane slab for every remaining vector/matrix."""
    scale = 1.0 / math.sqrt(DH)
    layers = params['layers']

    attn_w, bqkv, ffn_w = [], [], []
    for lp in layers:
        w_blocks, b_blocks = [], []
        # QKV blocks, ordered (tensor, head, batch) to match the kernel's group index.
        for t_idx, (wk_, bk_) in enumerate((('wq', 'bq'), ('wk', 'bk'), ('wv', 'bv'))):
            sc = scale if t_idx == 0 else 1.0        # fold attention scale into Q
            for h in range(NUM_HEADS):
                blk = lp[wk_][h * DH:(h + 1) * DH, :] * sc           # (DH, H)
                bvec = lp[bk_][0, h * DH:(h + 1) * DH] * sc          # (DH,)
                for _ in range(B):
                    w_blocks.append(blk)
                    b_blocks.append(jnp.broadcast_to(bvec, (S, DH)))
        # output-projection blocks: wo_block[d, o] = Wo[o, h*DH + d]
        for h in range(NUM_HEADS):
            blk = lp['wo'][:, h * DH:(h + 1) * DH].T                 # (DH, H)
            for _ in range(B):
                w_blocks.append(blk)
        attn_w.append(jnp.stack(w_blocks))                           # (4G, DH, H)
        bqkv.append(jnp.stack(b_blocks))                             # (3G, S, DH)
        # FFN slab: [W1^T ; W2 ; b1] with last dim INTER
        ffn_w.append(jnp.concatenate([lp['w1'].T, lp['w2'], lp['b1']], axis=0))  # (2H+1, INTER)

    # ---- 32-lane slab ----
    p32 = jnp.zeros((P32_ROWS, H), jnp.float32)
    p32 = p32.at[WE_OFF:WE_OFF + VOCAB].set(params['word_emb'])
    pos_type = params['pos_emb'][:S] + params['type_emb'][0][None, :]     # (S, H)
    p32 = p32.at[PT_OFF:PT_OFF + B * S].set(jnp.tile(pos_type, (B, 1)))
    p32 = p32.at[WP_OFF:WP_OFF + H].set(params['wp'].T)
    # pooled[:, :dim] @ W_i.T  ==  pooled @ zero_pad(W_i.T) ; store transposed (9, H)
    wcT = jnp.zeros((NC3, H), jnp.float32)
    bc = jnp.zeros((H,), jnp.float32)
    for i, d in enumerate(NESTING_DIMS):
        wcT = wcT.at[i * NUM_CLASSES:(i + 1) * NUM_CLASSES, :d].set(params['cls_w'][i])
        bc = bc.at[i * NUM_CLASSES:(i + 1) * NUM_CLASSES].set(params['cls_b'][i][0])
    p32 = p32.at[WC_OFF:WC_OFF + NC3].set(wcT)
    p32 = p32.at[ROW_EMB_LN_G].set(params['emb_ln_g'])
    p32 = p32.at[ROW_EMB_LN_B].set(params['emb_ln_b'])
    p32 = p32.at[ROW_BP].set(params['bp'][0])
    p32 = p32.at[ROW_BC].set(bc)
    for l, lp in enumerate(layers):
        rows = jnp.stack([lp['bo'][0], lp['ln1g'][0], lp['ln1b'][0],
                          lp['b2'][0], lp['ln2g'][0], lp['ln2b'][0]])    # (6, H)
        p32 = p32.at[ROW_LVEC + 6 * l:ROW_LVEC + 6 * l + 6].set(rows)

    return {'attn_w': jnp.stack(attn_w),   # (L, 4G, DH, H)
            'bqkv': jnp.stack(bqkv),       # (L, 3G, S, DH)
            'ffn_w': jnp.stack(ffn_w),     # (L, 2H+1, INTER)
            'p32': p32}                    # (P32_ROWS, H)


# ----------------------------- pure-JAX reference (for correctness) -------------
def reference_forward(input_ids, attention_mask, params):
    we = params['word_emb'][input_ids]                               # (B, S, H)
    pe = params['pos_emb'][:S][None]
    te = params['type_emb'][0][None, None]
    x = _layer_norm(we + pe + te, params['emb_ln_g'], params['emb_ln_b'])
    bias = (1.0 - attention_mask.astype(jnp.float32)) * (-1e9)       # (B, S)
    scale = 1.0 / math.sqrt(DH)
    for lp in params['layers']:
        q = x @ lp['wq'].T + lp['bq']
        k = x @ lp['wk'].T + lp['bk']
        v = x @ lp['wv'].T + lp['bv']
        qh = q.reshape(B, S, NUM_HEADS, DH).transpose(0, 2, 1, 3)
        kh = k.reshape(B, S, NUM_HEADS, DH).transpose(0, 2, 1, 3)
        vh = v.reshape(B, S, NUM_HEADS, DH).transpose(0, 2, 1, 3)
        s = jnp.einsum('bhqd,bhkd->bhqk', qh, kh) * scale + bias[:, None, None, :]
        p = jax.nn.softmax(s, axis=-1)
        ctx = jnp.einsum('bhqk,bhkd->bhqd', p, vh).transpose(0, 2, 1, 3).reshape(B, S, H)
        attn = ctx @ lp['wo'].T + lp['bo']
        x = _layer_norm(x + attn, lp['ln1g'], lp['ln1b'])
        hmid = _gelu(x @ lp['w1'].T + lp['b1'])
        ffn = hmid @ lp['w2'].T + lp['b2']
        x = _layer_norm(x + ffn, lp['ln2g'], lp['ln2b'])
    pooled = jnp.tanh(x[:, 0, :] @ params['wp'].T + params['bp'])
    logits = [pooled[:, :d] @ params['cls_w'][i].T + params['cls_b'][i]
              for i, d in enumerate(NESTING_DIMS)]
    return logits, pooled


# ----------------------------- main ---------------------------------------------
if __name__ == "__main__":
    params = init_params(jax.random.PRNGKey(0))
    packed = pack_params(params)           # one-time host-side repack

    kid = jax.random.fold_in(jax.random.PRNGKey(0), 1)
    input_ids = jax.random.randint(kid, (B, S), 0, VOCAB, dtype=jnp.int32)
    attention_mask = jnp.ones((B, S), dtype=jnp.int32).at[1, -2:].set(0)

    fwd = jax.jit(mrl_transformer_forward)
    nested_logits, pooled = fwd(input_ids, attention_mask, packed)
    jax.block_until_ready((nested_logits, pooled))

    assert pooled.shape == (B, H)
    assert len(nested_logits) == len(NESTING_DIMS)
    assert all(l.shape == (B, NUM_CLASSES) for l in nested_logits)

    # numeric sanity check against a pure-JAX mirror of the PyTorch forward
    with jax.default_matmul_precision('highest'):
        ref_logits, ref_pooled = reference_forward(input_ids, attention_mask, params)
    err = float(jnp.max(jnp.abs(pooled - ref_pooled)))
    for a, r in zip(nested_logits, ref_logits):
        err = max(err, float(jnp.max(jnp.abs(a - r))))
    assert err < 5e-3, f"kernel/reference mismatch: max abs err {err}"

    print("KERNEL_OK")
</pallas_src>

<mosaic_0001>
module attributes {stable_mosaic.version = 11 : i64} {
  func.func @mrl_fused_kernel(%arg0: memref<16x1xi32, #tpu.memory_space<vmem>>, %arg1: memref<2x1x8xi32, #tpu.memory_space<vmem>>, %arg2: memref<2x32x8x32xf32, #tpu.memory_space<vmem>>, %arg3: memref<2x24x8x8xf32, #tpu.memory_space<vmem>>, %arg4: memref<2x65x64xf32, #tpu.memory_space<vmem>>, %arg5: memref<129x32xf32, #tpu.memory_space<vmem>>, %arg6: memref<2x41xf32, #tpu.memory_space<vmem>>) attributes {dimension_semantics = [], scalar_prefetch = 0 : i64, scratch_operands = 0 : i64, tpu.core_type = #tpu.core_type<tc>} {
    %c0 = arith.constant 0 : index
    %c0_0 = arith.constant 0 : index
    %0 = vector.load %arg0[%c0, %c0_0] : memref<16x1xi32, #tpu.memory_space<vmem>>, vector<16x1xi32>
    %1 = tpu.iota {dimensions = array<i32: 1>} : vector<16x50xi32>
    %2 = vector.broadcast %0 : vector<16x1xi32> to vector<16x50xi32>
    %3 = arith.cmpi eq, %1, %2 : vector<16x50xi32>
    %cst = arith.constant 1.000000e+00 : f32
    %cst_1 = arith.constant 0.000000e+00 : f32
    %4 = vector.broadcast %cst : f32 to vector<16x50xf32>
    %5 = vector.broadcast %cst_1 : f32 to vector<16x50xf32>
    %6 = arith.select %3, %4, %5 : vector<16x50xi1>, vector<16x50xf32>
    %c0_2 = arith.constant 0 : index
    %c0_3 = arith.constant 0 : index
    %7 = vector.load %arg5[%c0_2, %c0_3] : memref<129x32xf32, #tpu.memory_space<vmem>>, vector<50x32xf32>
    %cst_4 = arith.constant dense<0.000000e+00> : vector<16x32xf32>
    %8 = tpu.matmul %6, %7, %cst_4 {dimension_numbers = #tpu.dot_dimension_numbers<[1], [0], [0], [1], [0, 0, 1, 1], [], []>} : vector<16x50xf32>, vector<50x32xf32>, vector<16x32xf32> -> vector<16x32xf32>
    %c56 = arith.constant 56 : index
    %c0_5 = arith.constant 0 : index
    %9 = vector.load %arg5[%c56, %c0_5] : memref<129x32xf32, #tpu.memory_space<vmem>>, vector<16x32xf32>
    %10 = arith.addf %8, %9 : vector<16x32xf32>
    %c113 = arith.constant 113 : index
    %c0_6 = arith.constant 0 : index
    %11 = vector.load %arg5[%c113, %c0_6] : memref<129x32xf32, #tpu.memory_space<vmem>>, vector<1x32xf32>
    %c114 = arith.constant 114 : index
    %c0_7 = arith.constant 0 : index
    %12 = vector.load %arg5[%c114, %c0_7] : memref<129x32xf32, #tpu.memory_space<vmem>>, vector<1x32xf32>
    %cst_8 = arith.constant dense<0.000000e+00> : vector<16xf32>
    %13 = vector.multi_reduction <add>, %10, %cst_8 [1] : vector<16x32xf32> to vector<16xf32>
    %14 = vector.shape_cast %13 : vector<16xf32> to vector<16x1xf32>
    %cst_9 = arith.constant 3.200000e+01 : f32
    %15 = vector.broadcast %cst_9 : f32 to vector<16x1xf32>
    %16 = arith.divf %14, %15 : vector<16x1xf32>
    %17 = vector.broadcast %16 : vector<16x1xf32> to vector<16x32xf32>
    %18 = arith.subf %10, %17 : vector<16x32xf32>
    %19 = arith.mulf %18, %18 : vector<16x32xf32>
    %cst_10 = arith.constant dense<0.000000e+00> : vector<16xf32>
    %20 = vector.multi_reduction <add>, %19, %cst_10 [1] : vector<16x32xf32> to vector<16xf32>
    %21 = vector.shape_cast %20 : vector<16xf32> to vector<16x1xf32>
    %cst_11 = arith.constant 3.200000e+01 : f32
    %22 = vector.broadcast %cst_11 : f32 to vector<16x1xf32>
    %23 = arith.divf %21, %22 : vector<16x1xf32>
    %24 = vector.broadcast %16 : vector<16x1xf32> to vector<16x32xf32>
    %25 = arith.subf %10, %24 : vector<16x32xf32>
    %cst_12 = arith.constant 9.99999996E-13 : f32
    %26 = vector.broadcast %cst_12 : f32 to vector<16x1xf32>
    %27 = arith.addf %23, %26 : vector<16x1xf32>
    %28 = math.rsqrt %27 : vector<16x1xf32>
    %29 = vector.broadcast %28 : vector<16x1xf32> to vector<16x32xf32>
    %30 = arith.mulf %25, %29 : vector<16x32xf32>
    %31 = vector.broadcast %11 : vector<1x32xf32> to vector<16x32xf32>
    %32 = arith.mulf %30, %31 : vector<16x32xf32>
    %33 = vector.broadcast %12 : vector<1x32xf32> to vector<16x32xf32>
    %34 = arith.addf %32, %33 : vector<16x32xf32>
    %c0_13 = arith.constant 0 : index
    %c0_14 = arith.constant 0 : index
    %c0_15 = arith.constant 0 : index
    %35 = vector.load %arg1[%c0_13, %c0_14, %c0_15] : memref<2x1x8xi32, #tpu.memory_space<vmem>>, vector<2x1x8xi32>
    %36 = arith.sitofp %35 : vector<2x1x8xi32> to vector<2x1x8xf32>
    %cst_16 = arith.constant 1.000000e+00 : f32
    %37 = vector.broadcast %cst_16 : f32 to vector<2x1x8xf32>
    %38 = arith.subf %36, %37 : vector<2x1x8xf32>
    %cst_17 = arith.constant 1.000000e+09 : f32
    %39 = vector.broadcast %cst_17 : f32 to vector<2x1x8xf32>
    %40 = arith.mulf %38, %39 : vector<2x1x8xf32>
    %41 = vector.shape_cast %40 : vector<2x1x8xf32> to vector<1x2x1x8xf32>
    %42 = vector.shape_cast %41 : vector<1x2x1x8xf32> to vector<1x2x1x8xf32>
    %43 = vector.broadcast %42 : vector<1x2x1x8xf32> to vector<4x2x1x8xf32>
    %44 = vector.shape_cast %43 : vector<4x2x1x8xf32> to vector<8x1x8xf32>
    %c0_18 = arith.constant 0 : index
    %c0_19 = arith.constant 0 : index
    %c0_20 = arith.constant 0 : index
    %c0_21 = arith.constant 0 : index
    %45 = vector.load %arg2[%c0_18, %c0_19, %c0_20, %c0_21] : memref<2x32x8x32xf32, #tpu.memory_space<vmem>>, vector<1x24x8x32xf32>
    %46 = vector.shape_cast %45 : vector<1x24x8x32xf32> to vector<24x8x32xf32>
    %c0_22 = arith.constant 0 : index
    %c24 = arith.constant 24 : index
    %c0_23 = arith.constant 0 : index
    %c0_24 = arith.constant 0 : index
    %47 = vector.load %arg2[%c0_22, %c24, %c0_23, %c0_24] : memref<2x32x8x32xf32, #tpu.memory_space<vmem>>, vector<1x8x8x32xf32>
    %48 = vector.shape_cast %47 : vector<1x8x8x32xf32> to vector<8x8x32xf32>
    %49 = vector.shape_cast %34 : vector<16x32xf32> to vector<2x8x32xf32>
    %50 = vector.shape_cast %49 : vector<2x8x32xf32> to vector<1x2x8x32xf32>
    %51 = vector.shape_cast %50 : vector<1x2x8x32xf32> to vector<1x2x8x32xf32>
    %52 = vector.broadcast %51 : vector<1x2x8x32xf32> to vector<12x2x8x32xf32>
    %53 = vector.shape_cast %52 : vector<12x2x8x32xf32> to vector<24x8x32xf32>
    "tpu.trace_start"() <{level = 10 : i32, message = "gsc,gdc->gsd"}> : () -> ()
    %cst_25 = arith.constant dense<0.000000e+00> : vector<24x8x8xf32>
    %54 = tpu.matmul %53, %46, %cst_25 {dimension_numbers = #tpu.dot_dimension_numbers<[2], [2], [1], [1], [0, 0, 0, 1, 1, 1], [0], [0]>} : vector<24x8x32xf32>, vector<24x8x32xf32>, vector<24x8x8xf32> -> vector<24x8x8xf32>
    "tpu.trace_stop"() : () -> ()
    %c0_26 = arith.constant 0 : index
    %c0_27 = arith.constant 0 : index
    %c0_28 = arith.constant 0 : index
    %c0_29 = arith.constant 0 : index
    %55 = vector.load %arg3[%c0_26, %c0_27, %c0_28, %c0_29] : memref<2x24x8x8xf32, #tpu.memory_space<vmem>>, vector<1x24x8x8xf32>
    %56 = vector.shape_cast %55 : vector<1x24x8x8xf32> to vector<24x8x8xf32>
    %57 = arith.addf %54, %56 : vector<24x8x8xf32>
    %58 = vector.extract_strided_slice %57 {offsets = [0, 0, 0], sizes = [8, 8, 8], strides = [1, 1, 1]} : vector<24x8x8xf32> to vector<8x8x8xf32>
    %59 = vector.extract_strided_slice %57 {offsets = [8, 0, 0], sizes = [8, 8, 8], strides = [1, 1, 1]} : vector<24x8x8xf32> to vector<8x8x8xf32>
    %60 = vector.extract_strided_slice %57 {offsets = [16, 0, 0], sizes = [8, 8, 8], strides = [1, 1, 1]} : vector<24x8x8xf32> to vector<8x8x8xf32>
    "tpu.trace_start"() <{level = 10 : i32, message = "gqd,gkd->gqk"}> : () -> ()
    %cst_30 = arith.constant dense<0.000000e+00> : vector<8x8x8xf32>
    %61 = tpu.matmul %58, %59, %cst_30 {dimension_numbers = #tpu.dot_dimension_numbers<[2], [2], [1], [1], [0, 0, 0, 1, 1, 1], [0], [0]>} : vector<8x8x8xf32>, vector<8x8x8xf32>, vector<8x8x8xf32> -> vector<8x8x8xf32>
    "tpu.trace_stop"() : () -> ()
    %62 = vector.broadcast %44 : vector<8x1x8xf32> to vector<8x8x8xf32>
    %63 = arith.addf %61, %62 : vector<8x8x8xf32>
    %cst_31 = arith.constant dense<0xFF800000> : vector<8x8xf32>
    %64 = vector.multi_reduction <maximumf>, %63, %cst_31 [2] : vector<8x8x8xf32> to vector<8x8xf32>
    %65 = vector.shape_cast %64 : vector<8x8xf32> to vector<8x8x1xf32>
    %66 = vector.broadcast %65 : vector<8x8x1xf32> to vector<8x8x8xf32>
    %67 = arith.subf %63, %66 : vector<8x8x8xf32>
    %68 = math.exp %67 : vector<8x8x8xf32>
    %cst_32 = arith.constant dense<0.000000e+00> : vector<8x8xf32>
    %69 = vector.multi_reduction <add>, %68, %cst_32 [2] : vector<8x8x8xf32> to vector<8x8xf32>
    %70 = vector.shape_cast %69 : vector<8x8xf32> to vector<8x8x1xf32>
    %71 = tpu.reciprocal %70 {approx = true} : vector<8x8x1xf32> -> vector<8x8x1xf32>
    %72 = vector.broadcast %71 : vector<8x8x1xf32> to vector<8x8x8xf32>
    %73 = arith.mulf %68, %72 : vector<8x8x8xf32>
    "tpu.trace_start"() <{level = 10 : i32, message = "gqk,gkd->gqd"}> : () -> ()
    %cst_33 = arith.constant dense<0.000000e+00> : vector<8x8x8xf32>
    %74 = tpu.matmul %73, %60, %cst_33 {dimension_numbers = #tpu.dot_dimension_numbers<[2], [1], [1], [2], [0, 0, 0, 1, 1, 2], [0], [0]>} : vector<8x8x8xf32>, vector<8x8x8xf32>, vector<8x8x8xf32> -> vector<8x8x8xf32>
    "tpu.trace_stop"() : () -> ()
    "tpu.trace_start"() <{level = 10 : i32, message = "gsd,gdo->gso"}> : () -> ()
    %cst_34 = arith.constant dense<0.000000e+00> : vector<8x8x32xf32>
    %75 = tpu.matmul %74, %48, %cst_34 {dimension_numbers = #tpu.dot_dimension_numbers<[2], [1], [1], [2], [0, 0, 0, 1, 1, 2], [0], [0]>} : vector<8x8x8xf32>, vector<8x8x32xf32>, vector<8x8x32xf32> -> vector<8x8x32xf32>
    "tpu.trace_stop"() : () -> ()
    %76 = vector.extract_strided_slice %75 {offsets = [0, 0, 0], sizes = [2, 8, 32], strides = [1, 1, 1]} : vector<8x8x32xf32> to vector<2x8x32xf32>
    %77 = vector.extract_strided_slice %75 {offsets = [2, 0, 0], sizes = [2, 8, 32], strides = [1, 1, 1]} : vector<8x8x32xf32> to vector<2x8x32xf32>
    %78 = arith.addf %76, %77 : vector<2x8x32xf32>
    %79 = vector.extract_strided_slice %75 {offsets = [4, 0, 0], sizes = [2, 8, 32], strides = [1, 1, 1]} : vector<8x8x32xf32> to vector<2x8x32xf32>
    %80 = arith.addf %78, %79 : vector<2x8x32xf32>
    %81 = vector.extract_strided_slice %75 {offsets = [6, 0, 0], sizes = [2, 8, 32], strides = [1, 1, 1]} : vector<8x8x32xf32> to vector<2x8x32xf32>
    %82 = arith.addf %80, %81 : vector<2x8x32xf32>
    %83 = vector.shape_cast %82 : vector<2x8x32xf32> to vector<16x32xf32>
    %c117 = arith.constant 117 : index
    %c0_35 = arith.constant 0 : index
    %84 = vector.load %arg5[%c117, %c0_35] : memref<129x32xf32, #tpu.memory_space<vmem>>, vector<1x32xf32>
    %85 = vector.broadcast %84 : vector<1x32xf32> to vector<16x32xf32>
    %86 = arith.addf %83, %85 : vector<16x32xf32>
    %87 = arith.addf %34, %86 : vector<16x32xf32>
    %c118 = arith.constant 118 : index
    %c0_36 = arith.constant 0 : index
    %88 = vector.load %arg5[%c118, %c0_36] : memref<129x32xf32, #tpu.memory_space<vmem>>, vector<1x32xf32>
    %c119 = arith.constant 119 : index
    %c0_37 = arith.constant 0 : index
    %89 = vector.load %arg5[%c119, %c0_37] : memref<129x32xf32, #tpu.memory_space<vmem>>, vector<1x32xf32>
    %cst_38 = arith.constant dense<0.000000e+00> : vector<16xf32>
    %90 = vector.multi_reduction <add>, %87, %cst_38 [1] : vector<16x32xf32> to vector<16xf32>
    %91 = vector.shape_cast %90 : vector<16xf32> to vector<16x1xf32>
    %cst_39 = arith.constant 3.200000e+01 : f32
    %92 = vector.broadcast %cst_39 : f32 to vector<16x1xf32>
    %93 = arith.divf %91, %92 : vector<16x1xf32>
    %94 = vector.broadcast %93 : vector<16x1xf32> to vector<16x32xf32>
    %95 = arith.subf %87, %94 : vector<16x32xf32>
    %96 = arith.mulf %95, %95 : vector<16x32xf32>
    %cst_40 = arith.constant dense<0.000000e+00> : vector<16xf32>
    %97 = vector.multi_reduction <add>, %96, %cst_40 [1] : vector<16x32xf32> to vector<16xf32>
    %98 = vector.shape_cast %97 : vector<16xf32> to vector<16x1xf32>
    %cst_41 = arith.constant 3.200000e+01 : f32
    %99 = vector.broadcast %cst_41 : f32 to vector<16x1xf32>
    %100 = arith.divf %98, %99 : vector<16x1xf32>
    %101 = vector.broadcast %93 : vector<16x1xf32> to vector<16x32xf32>
    %102 = arith.subf %87, %101 : vector<16x32xf32>
    %cst_42 = arith.constant 9.99999996E-13 : f32
    %103 = vector.broadcast %cst_42 : f32 to vector<16x1xf32>
    %104 = arith.addf %100, %103 : vector<16x1xf32>
    %105 = math.rsqrt %104 : vector<16x1xf32>
    %106 = vector.broadcast %105 : vector<16x1xf32> to vector<16x32xf32>
    %107 = arith.mulf %102, %106 : vector<16x32xf32>
    %108 = vector.broadcast %88 : vector<1x32xf32> to vector<16x32xf32>
    %109 = arith.mulf %107, %108 : vector<16x32xf32>
    %110 = vector.broadcast %89 : vector<1x32xf32> to vector<16x32xf32>
    %111 = arith.addf %109, %110 : vector<16x32xf32>
    %c0_43 = arith.constant 0 : index
    %c0_44 = arith.constant 0 : index
    %c0_45 = arith.constant 0 : index
    %112 = vector.load %arg4[%c0_43, %c0_44, %c0_45] : memref<2x65x64xf32, #tpu.memory_space<vmem>>, vector<1x32x64xf32>
    %113 = vector.shape_cast %112 : vector<1x32x64xf32> to vector<32x64xf32>
    %c0_46 = arith.constant 0 : index
    %c32 = arith.constant 32 : index
    %c0_47 = arith.constant 0 : index
    %114 = vector.load %arg4[%c0_46, %c32, %c0_47] : memref<2x65x64xf32, #tpu.memory_space<vmem>>, vector<1x32x64xf32>
    %115 = vector.shape_cast %114 : vector<1x32x64xf32> to vector<32x64xf32>
    %c0_48 = arith.constant 0 : index
    %c64 = arith.constant 64 : index
    %c0_49 = arith.constant 0 : index
    %116 = vector.load %arg4[%c0_48, %c64, %c0_49] : memref<2x65x64xf32, #tpu.memory_space<vmem>>, vector<1x1x64xf32>
    %117 = vector.shape_cast %116 : vector<1x1x64xf32> to vector<1x64xf32>
    %cst_50 = arith.constant dense<0.000000e+00> : vector<16x64xf32>
    %118 = tpu.matmul %111, %113, %cst_50 {dimension_numbers = #tpu.dot_dimension_numbers<[1], [0], [0], [1], [0, 0, 1, 1], [], []>} : vector<16x32xf32>, vector<32x64xf32>, vector<16x64xf32> -> vector<16x64xf32>
    %119 = vector.broadcast %117 : vector<1x64xf32> to vector<16x64xf32>
    %120 = arith.addf %118, %119 : vector<16x64xf32>
    %cst_51 = arith.constant 5.000000e-01 : f32
    %121 = vector.broadcast %cst_51 : f32 to vector<16x64xf32>
    %122 = arith.mulf %121, %120 : vector<16x64xf32>
    %cst_52 = arith.constant 4.471500e-02 : f32
    %123 = vector.broadcast %cst_52 : f32 to vector<16x64xf32>
    %124 = arith.mulf %123, %120 : vector<16x64xf32>
    %125 = arith.mulf %124, %120 : vector<16x64xf32>
    %126 = arith.mulf %125, %120 : vector<16x64xf32>
    %127 = arith.addf %120, %126 : vector<16x64xf32>
    %cst_53 = arith.constant 0.797884583 : f32
    %128 = vector.broadcast %cst_53 : f32 to vector<16x64xf32>
    %129 = arith.mulf %128, %127 : vector<16x64xf32>
    %130 = math.tanh %129 : vector<16x64xf32>
    %cst_54 = arith.constant 1.000000e+00 : f32
    %131 = vector.broadcast %cst_54 : f32 to vector<16x64xf32>
    %132 = arith.addf %131, %130 : vector<16x64xf32>
    %133 = arith.mulf %122, %132 : vector<16x64xf32>
    %cst_55 = arith.constant dense<0.000000e+00> : vector<16x32xf32>
    %134 = tpu.matmul %133, %115, %cst_55 {dimension_numbers = #tpu.dot_dimension_numbers<[1], [1], [0], [0], [0, 0, 1, 0], [], []>} : vector<16x64xf32>, vector<32x64xf32>, vector<16x32xf32> -> vector<16x32xf32>
    %c120 = arith.constant 120 : index
    %c0_56 = arith.constant 0 : index
    %135 = vector.load %arg5[%c120, %c0_56] : memref<129x32xf32, #tpu.memory_space<vmem>>, vector<1x32xf32>
    %136 = vector.broadcast %135 : vector<1x32xf32> to vector<16x32xf32>
    %137 = arith.addf %134, %136 : vector<16x32xf32>
    %138 = arith.addf %111, %137 : vector<16x32xf32>
    %c121 = arith.constant 121 : index
    %c0_57 = arith.constant 0 : index
    %139 = vector.load %arg5[%c121, %c0_57] : memref<129x32xf32, #tpu.memory_space<vmem>>, vector<1x32xf32>
    %c122 = arith.constant 122 : index
    %c0_58 = arith.constant 0 : index
    %140 = vector.load %arg5[%c122, %c0_58] : memref<129x32xf32, #tpu.memory_space<vmem>>, vector<1x32xf32>
    %cst_59 = arith.constant dense<0.000000e+00> : vector<16xf32>
    %141 = vector.multi_reduction <add>, %138, %cst_59 [1] : vector<16x32xf32> to vector<16xf32>
    %142 = vector.shape_cast %141 : vector<16xf32> to vector<16x1xf32>
    %cst_60 = arith.constant 3.200000e+01 : f32
    %143 = vector.broadcast %cst_60 : f32 to vector<16x1xf32>
    %144 = arith.divf %142, %143 : vector<16x1xf32>
    %145 = vector.broadcast %144 : vector<16x1xf32> to vector<16x32xf32>
    %146 = arith.subf %138, %145 : vector<16x32xf32>
    %147 = arith.mulf %146, %146 : vector<16x32xf32>
    %cst_61 = arith.constant dense<0.000000e+00> : vector<16xf32>
    %148 = vector.multi_reduction <add>, %147, %cst_61 [1] : vector<16x32xf32> to vector<16xf32>
    %149 = vector.shape_cast %148 : vector<16xf32> to vector<16x1xf32>
    %cst_62 = arith.constant 3.200000e+01 : f32
    %150 = vector.broadcast %cst_62 : f32 to vector<16x1xf32>
    %151 = arith.divf %149, %150 : vector<16x1xf32>
    %152 = vector.broadcast %144 : vector<16x1xf32> to vector<16x32xf32>
    %153 = arith.subf %138, %152 : vector<16x32xf32>
    %cst_63 = arith.constant 9.99999996E-13 : f32
    %154 = vector.broadcast %cst_63 : f32 to vector<16x1xf32>
    %155 = arith.addf %151, %154 : vector<16x1xf32>
    %156 = math.rsqrt %155 : vector<16x1xf32>
    %157 = vector.broadcast %156 : vector<16x1xf32> to vector<16x32xf32>
    %158 = arith.mulf %153, %157 : vector<16x32xf32>
    %159 = vector.broadcast %139 : vector<1x32xf32> to vector<16x32xf32>
    %160 = arith.mulf %158, %159 : vector<16x32xf32>
    %161 = vector.broadcast %140 : vector<1x32xf32> to vector<16x32xf32>
    %162 = arith.addf %160, %161 : vector<16x32xf32>
    %c1 = arith.constant 1 : index
    %c0_64 = arith.constant 0 : index
    %c0_65 = arith.constant 0 : index
    %c0_66 = arith.constant 0 : index
    %163 = vector.load %arg2[%c1, %c0_64, %c0_65, %c0_66] : memref<2x32x8x32xf32, #tpu.memory_space<vmem>>, vector<1x24x8x32xf32>
    %164 = vector.shape_cast %163 : vector<1x24x8x32xf32> to vector<24x8x32xf32>
    %c1_67 = arith.constant 1 : index
    %c24_68 = arith.constant 24 : index
    %c0_69 = arith.constant 0 : index
    %c0_70 = arith.constant 0 : index
    %165 = vector.load %arg2[%c1_67, %c24_68, %c0_69, %c0_70] : memref<2x32x8x32xf32, #tpu.memory_space<vmem>>, vector<1x8x8x32xf32>
    %166 = vector.shape_cast %165 : vector<1x8x8x32xf32> to vector<8x8x32xf32>
    %167 = vector.shape_cast %162 : vector<16x32xf32> to vector<2x8x32xf32>
    %168 = vector.shape_cast %167 : vector<2x8x32xf32> to vector<1x2x8x32xf32>
    %169 = vector.shape_cast %168 : vector<1x2x8x32xf32> to vector<1x2x8x32xf32>
    %170 = vector.broadcast %169 : vector<1x2x8x32xf32> to vector<12x2x8x32xf32>
    %171 = vector.shape_cast %170 : vector<12x2x8x32xf32> to vector<24x8x32xf32>
    "tpu.trace_start"() <{level = 10 : i32, message = "gsc,gdc->gsd"}> : () -> ()
    %cst_71 = arith.constant dense<0.000000e+00> : vector<24x8x8xf32>
    %172 = tpu.matmul %171, %164, %cst_71 {dimension_numbers = #tpu.dot_dimension_numbers<[2], [2], [1], [1], [0, 0, 0, 1, 1, 1], [0], [0]>} : vector<24x8x32xf32>, vector<24x8x32xf32>, vector<24x8x8xf32> -> vector<24x8x8xf32>
    "tpu.trace_stop"() : () -> ()
    %c1_72 = arith.constant 1 : index
    %c0_73 = arith.constant 0 : index
    %c0_74 = arith.constant 0 : index
    %c0_75 = arith.constant 0 : index
    %173 = vector.load %arg3[%c1_72, %c0_73, %c0_74, %c0_75] : memref<2x24x8x8xf32, #tpu.memory_space<vmem>>, vector<1x24x8x8xf32>
    %174 = vector.shape_cast %173 : vector<1x24x8x8xf32> to vector<24x8x8xf32>
    %175 = arith.addf %172, %174 : vector<24x8x8xf32>
    %176 = vector.extract_strided_slice %175 {offsets = [0, 0, 0], sizes = [8, 8, 8], strides = [1, 1, 1]} : vector<24x8x8xf32> to vector<8x8x8xf32>
    %177 = vector.extract_strided_slice %175 {offsets = [8, 0, 0], sizes = [8, 8, 8], strides = [1, 1, 1]} : vector<24x8x8xf32> to vector<8x8x8xf32>
    %178 = vector.extract_strided_slice %175 {offsets = [16, 0, 0], sizes = [8, 8, 8], strides = [1, 1, 1]} : vector<24x8x8xf32> to vector<8x8x8xf32>
    "tpu.trace_start"() <{level = 10 : i32, message = "gqd,gkd->gqk"}> : () -> ()
    %cst_76 = arith.constant dense<0.000000e+00> : vector<8x8x8xf32>
    %179 = tpu.matmul %176, %177, %cst_76 {dimension_numbers = #tpu.dot_dimension_numbers<[2], [2], [1], [1], [0, 0, 0, 1, 1, 1], [0], [0]>} : vector<8x8x8xf32>, vector<8x8x8xf32>, vector<8x8x8xf32> -> vector<8x8x8xf32>
    "tpu.trace_stop"() : () -> ()
    %180 = vector.broadcast %44 : vector<8x1x8xf32> to vector<8x8x8xf32>
    %181 = arith.addf %179, %180 : vector<8x8x8xf32>
    %cst_77 = arith.constant dense<0xFF800000> : vector<8x8xf32>
    %182 = vector.multi_reduction <maximumf>, %181, %cst_77 [2] : vector<8x8x8xf32> to vector<8x8xf32>
    %183 = vector.shape_cast %182 : vector<8x8xf32> to vector<8x8x1xf32>
    %184 = vector.broadcast %183 : vector<8x8x1xf32> to vector<8x8x8xf32>
    %185 = arith.subf %181, %184 : vector<8x8x8xf32>
    %186 = math.exp %185 : vector<8x8x8xf32>
    %cst_78 = arith.constant dense<0.000000e+00> : vector<8x8xf32>
    %187 = vector.multi_reduction <add>, %186, %cst_78 [2] : vector<8x8x8xf32> to vector<8x8xf32>
    %188 = vector.shape_cast %187 : vector<8x8xf32> to vector<8x8x1xf32>
    %189 = tpu.reciprocal %188 {approx = true} : vector<8x8x1xf32> -> vector<8x8x1xf32>
    %190 = vector.broadcast %189 : vector<8x8x1xf32> to vector<8x8x8xf32>
    %191 = arith.mulf %186, %190 : vector<8x8x8xf32>
    "tpu.trace_start"() <{level = 10 : i32, message = "gqk,gkd->gqd"}> : () -> ()
    %cst_79 = arith.constant dense<0.000000e+00> : vector<8x8x8xf32>
    %192 = tpu.matmul %191, %178, %cst_79 {dimension_numbers = #tpu.dot_dimension_numbers<[2], [1], [1], [2], [0, 0, 0, 1, 1, 2], [0], [0]>} : vector<8x8x8xf32>, vector<8x8x8xf32>, vector<8x8x8xf32> -> vector<8x8x8xf32>
    "tpu.trace_stop"() : () -> ()
    "tpu.trace_start"() <{level = 10 : i32, message = "gsd,gdo->gso"}> : () -> ()
    %cst_80 = arith.constant dense<0.000000e+00> : vector<8x8x32xf32>
    %193 = tpu.matmul %192, %166, %cst_80 {dimension_numbers = #tpu.dot_dimension_numbers<[2], [1], [1], [2], [0, 0, 0, 1, 1, 2], [0], [0]>} : vector<8x8x8xf32>, vector<8x8x32xf32>, vector<8x8x32xf32> -> vector<8x8x32xf32>
    "tpu.trace_stop"() : () -> ()
    %194 = vector.extract_strided_slice %193 {offsets = [0, 0, 0], sizes = [2, 8, 32], strides = [1, 1, 1]} : vector<8x8x32xf32> to vector<2x8x32xf32>
    %195 = vector.extract_strided_slice %193 {offsets = [2, 0, 0], sizes = [2, 8, 32], strides = [1, 1, 1]} : vector<8x8x32xf32> to vector<2x8x32xf32>
    %196 = arith.addf %194, %195 : vector<2x8x32xf32>
    %197 = vector.extract_strided_slice %193 {offsets = [4, 0, 0], sizes = [2, 8, 32], strides = [1, 1, 1]} : vector<8x8x32xf32> to vector<2x8x32xf32>
    %198 = arith.addf %196, %197 : vector<2x8x32xf32>
    %199 = vector.extract_strided_slice %193 {offsets = [6, 0, 0], sizes = [2, 8, 32], strides = [1, 1, 1]} : vector<8x8x32xf32> to vector<2x8x32xf32>
    %200 = arith.addf %198, %199 : vector<2x8x32xf32>
    %201 = vector.shape_cast %200 : vector<2x8x32xf32> to vector<16x32xf32>
    %c123 = arith.constant 123 : index
    %c0_81 = arith.constant 0 : index
    %202 = vector.load %arg5[%c123, %c0_81] : memref<129x32xf32, #tpu.memory_space<vmem>>, vector<1x32xf32>
    %203 = vector.broadcast %202 : vector<1x32xf32> to vector<16x32xf32>
    %204 = arith.addf %201, %203 : vector<16x32xf32>
    %205 = arith.addf %162, %204 : vector<16x32xf32>
    %c124 = arith.constant 124 : index
    %c0_82 = arith.constant 0 : index
    %206 = vector.load %arg5[%c124, %c0_82] : memref<129x32xf32, #tpu.memory_space<vmem>>, vector<1x32xf32>
    %c125 = arith.constant 125 : index
    %c0_83 = arith.constant 0 : index
    %207 = vector.load %arg5[%c125, %c0_83] : memref<129x32xf32, #tpu.memory_space<vmem>>, vector<1x32xf32>
    %cst_84 = arith.constant dense<0.000000e+00> : vector<16xf32>
    %208 = vector.multi_reduction <add>, %205, %cst_84 [1] : vector<16x32xf32> to vector<16xf32>
    %209 = vector.shape_cast %208 : vector<16xf32> to vector<16x1xf32>
    %cst_85 = arith.constant 3.200000e+01 : f32
    %210 = vector.broadcast %cst_85 : f32 to vector<16x1xf32>
    %211 = arith.divf %209, %210 : vector<16x1xf32>
    %212 = vector.broadcast %211 : vector<16x1xf32> to vector<16x32xf32>
    %213 = arith.subf %205, %212 : vector<16x32xf32>
    %214 = arith.mulf %213, %213 : vector<16x32xf32>
    %cst_86 = arith.constant dense<0.000000e+00> : vector<16xf32>
    %215 = vector.multi_reduction <add>, %214, %cst_86 [1] : vector<16x32xf32> to vector<16xf32>
    %216 = vector.shape_cast %215 : vector<16xf32> to vector<16x1xf32>
    %cst_87 = arith.constant 3.200000e+01 : f32
    %217 = vector.broadcast %cst_87 : f32 to vector<16x1xf32>
    %218 = arith.divf %216, %217 : vector<16x1xf32>
    %219 = vector.broadcast %211 : vector<16x1xf32> to vector<16x32xf32>
    %220 = arith.subf %205, %219 : vector<16x32xf32>
    %cst_88 = arith.constant 9.99999996E-13 : f32
    %221 = vector.broadcast %cst_88 : f32 to vector<16x1xf32>
    %222 = arith.addf %218, %221 : vector<16x1xf32>
    %223 = math.rsqrt %222 : vector<16x1xf32>
    %224 = vector.broadcast %223 : vector<16x1xf32> to vector<16x32xf32>
    %225 = arith.mulf %220, %224 : vector<16x32xf32>
    %226 = vector.broadcast %206 : vector<1x32xf32> to vector<16x32xf32>
    %227 = arith.mulf %225, %226 : vector<16x32xf32>
    %228 = vector.broadcast %207 : vector<1x32xf32> to vector<16x32xf32>
    %229 = arith.addf %227, %228 : vector<16x32xf32>
    %c1_89 = arith.constant 1 : index
    %c0_90 = arith.constant 0 : index
    %c0_91 = arith.constant 0 : index
    %230 = vector.load %arg4[%c1_89, %c0_90, %c0_91] : memref<2x65x64xf32, #tpu.memory_space<vmem>>, vector<1x32x64xf32>
    %231 = vector.shape_cast %230 : vector<1x32x64xf32> to vector<32x64xf32>
    %c1_92 = arith.constant 1 : index
    %c32_93 = arith.constant 32 : index
    %c0_94 = arith.constant 0 : index
    %232 = vector.load %arg4[%c1_92, %c32_93, %c0_94] : memref<2x65x64xf32, #tpu.memory_space<vmem>>, vector<1x32x64xf32>
    %233 = vector.shape_cast %232 : vector<1x32x64xf32> to vector<32x64xf32>
    %c1_95 = arith.constant 1 : index
    %c64_96 = arith.constant 64 : index
    %c0_97 = arith.constant 0 : index
    %234 = vector.load %arg4[%c1_95, %c64_96, %c0_97] : memref<2x65x64xf32, #tpu.memory_space<vmem>>, vector<1x1x64xf32>
    %235 = vector.shape_cast %234 : vector<1x1x64xf32> to vector<1x64xf32>
    %cst_98 = arith.constant dense<0.000000e+00> : vector<16x64xf32>
    %236 = tpu.matmul %229, %231, %cst_98 {dimension_numbers = #tpu.dot_dimension_numbers<[1], [0], [0], [1], [0, 0, 1, 1], [], []>} : vector<16x32xf32>, vector<32x64xf32>, vector<16x64xf32> -> vector<16x64xf32>
    %237 = vector.broadcast %235 : vector<1x64xf32> to vector<16x64xf32>
    %238 = arith.addf %236, %237 : vector<16x64xf32>
    %cst_99 = arith.constant 5.000000e-01 : f32
    %239 = vector.broadcast %cst_99 : f32 to vector<16x64xf32>
    %240 = arith.mulf %239, %238 : vector<16x64xf32>
    %cst_100 = arith.constant 4.471500e-02 : f32
    %241 = vector.broadcast %cst_100 : f32 to vector<16x64xf32>
    %242 = arith.mulf %241, %238 : vector<16x64xf32>
    %243 = arith.mulf %242, %238 : vector<16x64xf32>
    %244 = arith.mulf %243, %238 : vector<16x64xf32>
    %245 = arith.addf %238, %244 : vector<16x64xf32>
    %cst_101 = arith.constant 0.797884583 : f32
    %246 = vector.broadcast %cst_101 : f32 to vector<16x64xf32>
    %247 = arith.mulf %246, %245 : vector<16x64xf32>
    %248 = math.tanh %247 : vector<16x64xf32>
    %cst_102 = arith.constant 1.000000e+00 : f32
    %249 = vector.broadcast %cst_102 : f32 to vector<16x64xf32>
    %250 = arith.addf %249, %248 : vector<16x64xf32>
    %251 = arith.mulf %240, %250 : vector<16x64xf32>
    %cst_103 = arith.constant dense<0.000000e+00> : vector<16x32xf32>
    %252 = tpu.matmul %251, %233, %cst_103 {dimension_numbers = #tpu.dot_dimension_numbers<[1], [1], [0], [0], [0, 0, 1, 0], [], []>} : vector<16x64xf32>, vector<32x64xf32>, vector<16x32xf32> -> vector<16x32xf32>
    %c126 = arith.constant 126 : index
    %c0_104 = arith.constant 0 : index
    %253 = vector.load %arg5[%c126, %c0_104] : memref<129x32xf32, #tpu.memory_space<vmem>>, vector<1x32xf32>
    %254 = vector.broadcast %253 : vector<1x32xf32> to vector<16x32xf32>
    %255 = arith.addf %252, %254 : vector<16x32xf32>
    %256 = arith.addf %229, %255 : vector<16x32xf32>
    %c127 = arith.constant 127 : index
    %c0_105 = arith.constant 0 : index
    %257 = vector.load %arg5[%c127, %c0_105] : memref<129x32xf32, #tpu.memory_space<vmem>>, vector<1x32xf32>
    %c128 = arith.constant 128 : index
    %c0_106 = arith.constant 0 : index
    %258 = vector.load %arg5[%c128, %c0_106] : memref<129x32xf32, #tpu.memory_space<vmem>>, vector<1x32xf32>
    %cst_107 = arith.constant dense<0.000000e+00> : vector<16xf32>
    %259 = vector.multi_reduction <add>, %256, %cst_107 [1] : vector<16x32xf32> to vector<16xf32>
    %260 = vector.shape_cast %259 : vector<16xf32> to vector<16x1xf32>
    %cst_108 = arith.constant 3.200000e+01 : f32
    %261 = vector.broadcast %cst_108 : f32 to vector<16x1xf32>
    %262 = arith.divf %260, %261 : vector<16x1xf32>
    %263 = vector.broadcast %262 : vector<16x1xf32> to vector<16x32xf32>
    %264 = arith.subf %256, %263 : vector<16x32xf32>
    %265 = arith.mulf %264, %264 : vector<16x32xf32>
    %cst_109 = arith.constant dense<0.000000e+00> : vector<16xf32>
    %266 = vector.multi_reduction <add>, %265, %cst_109 [1] : vector<16x32xf32> to vector<16xf32>
    %267 = vector.shape_cast %266 : vector<16xf32> to vector<16x1xf32>
    %cst_110 = arith.constant 3.200000e+01 : f32
    %268 = vector.broadcast %cst_110 : f32 to vector<16x1xf32>
    %269 = arith.divf %267, %268 : vector<16x1xf32>
    %270 = vector.broadcast %262 : vector<16x1xf32> to vector<16x32xf32>
    %271 = arith.subf %256, %270 : vector<16x32xf32>
    %cst_111 = arith.constant 9.99999996E-13 : f32
    %272 = vector.broadcast %cst_111 : f32 to vector<16x1xf32>
    %273 = arith.addf %269, %272 : vector<16x1xf32>
    %274 = math.rsqrt %273 : vector<16x1xf32>
    %275 = vector.broadcast %274 : vector<16x1xf32> to vector<16x32xf32>
    %276 = arith.mulf %271, %275 : vector<16x32xf32>
    %277 = vector.broadcast %257 : vector<1x32xf32> to vector<16x32xf32>
    %278 = arith.mulf %276, %277 : vector<16x32xf32>
    %279 = vector.broadcast %258 : vector<1x32xf32> to vector<16x32xf32>
    %280 = arith.addf %278, %279 : vector<16x32xf32>
    %281 = vector.shape_cast %280 : vector<16x32xf32> to vector<2x8x32xf32>
    %282 = vector.extract_strided_slice %281 {offsets = [0, 0, 0], sizes = [2, 1, 32], strides = [1, 1, 1]} : vector<2x8x32xf32> to vector<2x1x32xf32>
    %283 = vector.shape_cast %282 : vector<2x1x32xf32> to vector<2x32xf32>
    %c72 = arith.constant 72 : index
    %c0_112 = arith.constant 0 : index
    %284 = vector.load %arg5[%c72, %c0_112] : memref<129x32xf32, #tpu.memory_space<vmem>>, vector<32x32xf32>
    %cst_113 = arith.constant dense<0.000000e+00> : vector<2x32xf32>
    %285 = tpu.matmul %283, %284, %cst_113 {dimension_numbers = #tpu.dot_dimension_numbers<[1], [0], [0], [1], [0, 0, 1, 1], [], []>} : vector<2x32xf32>, vector<32x32xf32>, vector<2x32xf32> -> vector<2x32xf32>
    %c115 = arith.constant 115 : index
    %c0_114 = arith.constant 0 : index
    %286 = vector.load %arg5[%c115, %c0_114] : memref<129x32xf32, #tpu.memory_space<vmem>>, vector<1x32xf32>
    %287 = vector.broadcast %286 : vector<1x32xf32> to vector<2x32xf32>
    %288 = arith.addf %285, %287 : vector<2x32xf32>
    %289 = math.tanh %288 : vector<2x32xf32>
    %c104 = arith.constant 104 : index
    %c0_115 = arith.constant 0 : index
    %290 = vector.load %arg5[%c104, %c0_115] : memref<129x32xf32, #tpu.memory_space<vmem>>, vector<9x32xf32>
    %cst_116 = arith.constant dense<0.000000e+00> : vector<2x9xf32>
    %291 = tpu.matmul %289, %290, %cst_116 {dimension_numbers = #tpu.dot_dimension_numbers<[1], [1], [0], [0], [0, 0, 1, 0], [], []>} : vector<2x32xf32>, vector<9x32xf32>, vector<2x9xf32> -> vector<2x9xf32>
    %c116 = arith.constant 116 : index
    %c0_117 = arith.constant 0 : index
    %292 = vector.load %arg5[%c116, %c0_117] : memref<129x32xf32, #tpu.memory_space<vmem>>, vector<1x32xf32>
    %293 = vector.extract_strided_slice %292 {offsets = [0, 0], sizes = [1, 9], strides = [1, 1]} : vector<1x32xf32> to vector<1x9xf32>
    %294 = vector.broadcast %293 : vector<1x9xf32> to vector<2x9xf32>
    %295 = arith.addf %291, %294 : vector<2x9xf32>
    %c0_118 = arith.constant 0 : index
    %c0_119 = arith.constant 0 : index
    %296 = vector.load %arg6[%c0_118, %c0_119] : memref<2x41xf32, #tpu.memory_space<vmem>>, vector<2x32xf32>
    tpu.vector_store %arg6[%c0_118, %c0_119], %289 {strides = array<i32>} : memref<2x41xf32, #tpu.memory_space<vmem>>, vector<2x32xf32>,
    %c0_120 = arith.constant 0 : index
    %c32_121 = arith.constant 32 : index
    %297 = vector.load %arg6[%c0_120, %c32_121] : memref<2x41xf32, #tpu.memory_space<vmem>>, vector<2x9xf32>
    tpu.vector_store %arg6[%c0_120, %c32_121], %295 {strides = array<i32>} : memref<2x41xf32, #tpu.memory_space<vmem>>, vector<2x9xf32>,
    return
  }
}

</mosaic_0001>

<llo_original>
// kernel: mrl_transformer_forward.1
$region0: #{mrl_transformer_forward.1}
  #allocation0 [shape = 'u32[]', space=smem, size = 0x4, offset = 0x4, fixed_abs, tag = 'smem constant byte address 0x4 - core index']
  #allocation1 [shape = 'u32[144,128]{1,0:T(1,128)}', space=vmem, size = 0x12000, scoped, tag = 'internal scratch']
  %s0 = inlined_call_operand.vmem [shape: s32[16,1], index: 0, kind: input, shape index: {}]
  %s1 = inlined_call_operand.vmem [shape: s32[2,1,8], index: 1, kind: input, shape index: {}]
  %s2 = inlined_call_operand.vmem [shape: f32[2,32,8,32], index: 2, kind: input, shape index: {}]
  %s3 = inlined_call_operand.vmem [shape: f32[2,24,8,8], index: 3, kind: input, shape index: {}]
  %s4 = inlined_call_operand.vmem [shape: f32[2,65,64], index: 4, kind: input, shape index: {}]
  %s5 = inlined_call_operand.vmem [shape: f32[129,32], index: 5, kind: input, shape index: {}]
  %s6 = inlined_call_operand.vmem [shape: f32[2,41], index: 6, kind: output, shape index: {}]
  %s7 = sld [smem:[#allocation0]]
  $region34: #{mrl_transformer_forward.1} parent=0
    _
  %s9 = ssub.s32 1, %s7
  %s10 = scalar_select 0, %s9, %s7
  // Predicated region
  $region2: #{mrl_transformer_forward.1} parent=0 // pred_check
    _
  $region3: #{mrl_transformer_forward.1} parent=0 // pred_check_branch
    %12 = sbr.rel (0) target = $region5
  $region4: #{mrl_transformer_forward.1} parent=0 // pred_region
    _
  $region5: #{mrl_transformer_forward.1} parent=0 // pred_fallthru
    _
  // Predicated region
  $region6: #{mrl_transformer_forward.1} parent=0 // pred_check
    _
  $region7: #{mrl_transformer_forward.1} parent=0 // pred_check_branch
    %14 = sbr.rel (0) target = $region9
  $region8: #{mrl_transformer_forward.1} parent=0 // pred_region
    _
  $region9: #{mrl_transformer_forward.1} parent=0 // pred_fallthru
    _
  // Predicated region
  $region10: #{mrl_transformer_forward.1} parent=0 // pred_check
    _
  $region11: #{mrl_transformer_forward.1} parent=0 // pred_check_branch
    %16 = sbr.rel (0) target = $region13
  $region12: #{mrl_transformer_forward.1} parent=0 // pred_region
    _
  $region13: #{mrl_transformer_forward.1} parent=0 // pred_fallthru
    _
  // Predicated region
  $region14: #{mrl_transformer_forward.1} parent=0 // pred_check
    _
  $region15: #{mrl_transformer_forward.1} parent=0 // pred_check_branch
    %18 = sbr.rel (0) target = $region17
  $region16: #{mrl_transformer_forward.1} parent=0 // pred_region
    _
  $region17: #{mrl_transformer_forward.1} parent=0 // pred_fallthru
    _
  // Predicated region
  $region18: #{mrl_transformer_forward.1} parent=0 // pred_check
    _
  $region19: #{mrl_transformer_forward.1} parent=0 // pred_check_branch
    %20 = sbr.rel (0) target = $region21
  $region20: #{mrl_transformer_forward.1} parent=0 // pred_region
    _
  $region21: #{mrl_transformer_forward.1} parent=0 // pred_fallthru
    _
  // Predicated region
  $region22: #{mrl_transformer_forward.1} parent=0 // pred_check
    _
  $region23: #{mrl_transformer_forward.1} parent=0 // pred_check_branch
    %22 = sbr.rel (0) target = $region25
  $region24: #{mrl_transformer_forward.1} parent=0 // pred_region
    _
  $region25: #{mrl_transformer_forward.1} parent=0 // pred_fallthru
    _
  %v23 = vld [vmem:[%s0] sm:$0xff]
  %v24 = vld [vmem:[%s0 + $0x8] sm:$0xff]
  %v25 = vlaneseq
  %v26 = vand.u32 %v25, 127
  %27 = vset.pattern.permute.xlu0 0
  %28 = vperm.xlu0 %27, %v23
  %v29 = vpop.permute.xlu0 %28
  %30 = vset.pattern.permute.xlu0 0
  %31 = vperm.xlu0 %30, %v24
  %v32 = vpop.permute.xlu0 %31
  %vm33 = vcmp.eq.s32.totalorder %v26, %v29
  %vm34 = vcmp.eq.s32.totalorder %v26, %v32
  %v35 = vsel %vm33, 1.0, 0.0
  %v36 = vsel %vm34, 1.0, 0.0
  %v37 = vld [vmem:[%s5] sm:$0xff]
  %v38 = vld [vmem:[%s5 + $0x8] sm:$0xff]
  %v39 = vld [vmem:[%s5 + $0x10] sm:$0xff]
  %v40 = vld [vmem:[%s5 + $0x18] sm:$0xff]
  %v41 = vld [vmem:[%s5 + $0x20] sm:$0xff]
  %v42 = vld [vmem:[%s5 + $0x28] sm:$0xff]
  %v43 = vld [vmem:[%s5 + $0x30] sm:$0x3]
  %v44 = vld [vmem:[%s5 + $0x38] sm:$0xff]
  %v45 = vld [vmem:[%s5 + $0x40] sm:$0xff]
  %vm46 = vcmask 408576
  %v48 = vsel %vm46, %v35, 0
  %v51 = vsel %vm46, %v36, 0
  %vm53 = vcmask 1041408
  %v55 = vsel %vm53, %v43, 0
  %57 = vmatprep.subr.mxu0 0.0
  %58 = vmatpush1.msra.mxu0 %v37
  %59 = vmatprep.subr.mxu0 0.0
  %60 = vmatpush1.msra.mxu0 %v38
  %61 = vmatprep.subr.mxu0 0.0
  %62 = vmatpush1.msra.mxu0 %v39
  %63 = vmatprep.subr.mxu0 0.0
  %64 = vmatpush1.msra.mxu0 %v40
  %65 = vmatprep.subr.mxu0 0.0
  %66 = vmatpush1.msra.mxu0 %v41
  %67 = vmatprep.subr.mxu0 0.0
  %68 = vmatpush1.msra.mxu0 %v42
  %69 = vmatprep.subr.mxu0 0.0
  %70 = vmatpush1.msra.mxu0 %v55
  %71 = vmatprep.subr.mxu0 0.0
  %72 = vmatpush1.msra.mxu0 0.0
  %73 = vmatprep.subr.mxu0 0.0
  %74 = vmatpush1.msra.mxu0 0.0
  %75 = vmatprep.subr.mxu0 0.0
  %76 = vmatpush1.msra.mxu0 0.0
  %77 = vmatprep.subr.mxu0 0.0
  %78 = vmatpush1.msra.mxu0 0.0
  %79 = vmatprep.subr.mxu0 0.0
  %80 = vmatpush1.msra.mxu0 0.0
  %81 = vmatprep.subr.mxu0 0.0
  %82 = vmatpush1.msra.mxu0 0.0
  %83 = vmatprep.subr.mxu0 0.0
  %84 = vmatpush1.msra.mxu0 0.0
  %85 = vmatprep.subr.mxu0 0.0
  %86 = vmatpush1.msra.mxu0 0.0
  %87 = vmatprep.subr.mxu0 0.0
  %88 = vmatpush1.msra.mxu0 0.0
  %89 = vmatprep.subr.mxu0 0.0
  %90 = vmatpush1.msra.mxu0 0.0
  %91 = vmatprep.subr.mxu0 0.0
  %92 = vmatpush1.msra.mxu0 0.0
  %93 = vmatprep.subr.mxu0 0.0
  %94 = vmatpush1.msra.mxu0 0.0
  %95 = vmatprep.subr.mxu0 0.0
  %96 = vmatpush1.msra.mxu0 0.0
  %97 = vmatprep.subr.mxu0 0.0
  %98 = vmatpush1.msra.mxu0 0.0
  %99 = vmatprep.subr.mxu0 0.0
  %100 = vmatpush1.msra.mxu0 0.0
  %101 = vmatprep.subr.mxu0 0.0
  %102 = vmatpush1.msra.mxu0 0.0
  %103 = vmatprep.subr.mxu0 0.0
  %104 = vmatpush1.msra.mxu0 0.0
  %105 = vmatprep.subr.mxu0 0.0
  %106 = vmatpush1.msra.mxu0 0.0
  %107 = vmatprep.subr.mxu0 0.0
  %108 = vmatpush1.msra.mxu0 0.0
  %109 = vmatprep.subr.mxu0 0.0
  %110 = vmatpush1.msra.mxu0 0.0
  %111 = vmatprep.subr.mxu0 0.0
  %112 = vmatpush1.msra.mxu0 0.0
  %113 = vmatprep.subr.mxu0 0.0
  %114 = vmatpush1.msra.mxu0 0.0
  %115 = vmatprep.subr.mxu0 0.0
  %116 = vmatpush1.msra.mxu0 0.0
  %117 = vmatprep.subr.mxu0 0.0
  %118 = vmatpush1.msra.mxu0 0.0
  %119 = vmatprep.subr.mxu0 0.0
  %120 = vmatpush1.msra.mxu0 0.0
  %121 = vmatprep.mubr.f32.mxu0 0.0
  %122 = vmatmul.mubr.f32.gmra.mrb[0].mxu0 %v48
  %v123 = vpop.f32.mrb[0].mxu0
  %v124 = vadd.f32 %v44, %v123
  %v125 = vpop.f32.mrb[0].mxu0
  %126 = vmatprep.mubr.f32.mxu0 0.0
  %127 = vmatmul.mubr.f32.gmra.mrb[0].mxu0 %v51
  %v128 = vpop.f32.mrb[0].mxu0
  %v129 = vadd.f32 %v45, %v128
  %v130 = vpop.f32.mrb[0].mxu0
  %131 = vdwg.mxu0
  %v132 = vld [vmem:[%s5 + $0x71] sm:$0x1]
  %v133 = vld [vmem:[%s5 + $0x72] sm:$0x1]
  %vm134 = vcmask 261120
  %v135 = vsel %vm134, %v124, 0.0
  %136 = vadd.xlane.f32.xlu0 %v135
  %v137 = vpop.xlane.xlu0 %136
  %v138 = vsel %vm134, %v129, 0.0
  %139 = vadd.xlane.f32.xlu0 %v138
  %v140 = vpop.xlane.xlu0 %139
  %v141 = vrcp.pop 32.0
  %v142 = vmul.f32 %v137, %v141
  %v143 = vmul.f32 %v140, %v141
  %v144 = vsub.f32 %v124, %v142
  %v145 = vsub.f32 %v129, %v143
  %v146 = vmul.f32 %v144, %v144
  %v147 = vmul.f32 %v145, %v145
  %v148 = vsel %vm134, %v146, 0.0
  %149 = vadd.xlane.f32.xlu0 %v148
  %v150 = vpop.xlane.xlu0 %149
  %v151 = vsel %vm134, %v147, 0.0
  %152 = vadd.xlane.f32.xlu0 %v151
  %v153 = vpop.xlane.xlu0 %152
  %v154 = vmul.f32 %v150, %v141
  %v155 = vmul.f32 %v153, %v141
  %v156 = vadd.f32 %v154, 1e-12
  %v157 = vadd.f32 %v155, 1e-12
  %v158 = vrsqrt.pop %v156
  %v159 = vrsqrt.pop %v157
  %v160 = vmul.f32 %v144, %v158
  %v161 = vmul.f32 %v145, %v159
  %v162 = vlaneseq
  %v163 = vshrl.u32 %v162, 7
  %v164 = vsub.s32 0, %v163
  %v165 = vrot.slane %v132, %v164
  %v166 = vmul.f32 %v160, %v165
  %v167 = vmul.f32 %v161, %v165
  %v168 = vlaneseq
  %v169 = vshrl.u32 %v168, 7
  %v170 = vsub.s32 0, %v169
  %v171 = vrot.slane %v133, %v170
  %v172 = vadd.f32 %v166, %v171
  %v173 = vadd.f32 %v167, %v171
  %v174 = vld [vmem:[%s1] sm:$0x1]
  %v175 = vld [vmem:[%s1 + $0x1] sm:$0x1]
  %v176 = vcvt.s32.f32 %v174
  %v177 = vcvt.s32.f32 %v175
  %v178 = vsub.f32 %v176, 1.0
  %v179 = vsub.f32 %v177, 1.0
  %v180 = vmul.f32 %v178, 1e+09
  %v181 = vmul.f32 %v179, 1e+09
  %v182 = vld [vmem:[%s2] sm:$0xff]
  %v183 = vld [vmem:[%s2 + $0x8] sm:$0xff]
  %v184 = vld [vmem:[%s2 + $0x10] sm:$0xff]
  %v185 = vld [vmem:[%s2 + $0x18] sm:$0xff]
  %v186 = vld [vmem:[%s2 + $0x20] sm:$0xff]
  %v187 = vld [vmem:[%s2 + $0x28] sm:$0xff]
  %v188 = vld [vmem:[%s2 + $0x30] sm:$0xff]
  %v189 = vld [vmem:[%s2 + $0x38] sm:$0xff]
  %v190 = vld [vmem:[%s2 + $0x40] sm:$0xff]
  %v191 = vld [vmem:[%s2 + $0x48] sm:$0xff]
  %v192 = vld [vmem:[%s2 + $0x50] sm:$0xff]
  %v193 = vld [vmem:[%s2 + $0x58] sm:$0xff]
  %v194 = vld [vmem:[%s2 + $0x60] sm:$0xff]
  %v195 = vld [vmem:[%s2 + $0x68] sm:$0xff]
  %v196 = vld [vmem:[%s2 + $0x70] sm:$0xff]
  %v197 = vld [vmem:[%s2 + $0x78] sm:$0xff]
  %v198 = vld [vmem:[%s2 + $0x80] sm:$0xff]
  %v199 = vld [vmem:[%s2 + $0x88] sm:$0xff]
  %v200 = vld [vmem:[%s2 + $0x90] sm:$0xff]
  %v201 = vld [vmem:[%s2 + $0x98] sm:$0xff]
  %v202 = vld [vmem:[%s2 + $0xa0] sm:$0xff]
  %v203 = vld [vmem:[%s2 + $0xa8] sm:$0xff]
  %v204 = vld [vmem:[%s2 + $0xb0] sm:$0xff]
  %v205 = vld [vmem:[%s2 + $0xb8] sm:$0xff]
  %s206 = scalar_lea.vmem %s2, 192
  %v207 = vld [vmem:[%s206] sm:$0xff]
  %v208 = vld [vmem:[%s206 + $0x8] sm:$0xff]
  %v209 = vld [vmem:[%s206 + $0x10] sm:$0xff]
  %v210 = vld [vmem:[%s206 + $0x18] sm:$0xff]
  %v211 = vld [vmem:[%s206 + $0x20] sm:$0xff]
  %v212 = vld [vmem:[%s206 + $0x28] sm:$0xff]
  %v213 = vld [vmem:[%s206 + $0x30] sm:$0xff]
  %v214 = vld [vmem:[%s206 + $0x38] sm:$0xff]
  %v215 = vld [vmem:[%s3] sm:$0xff]
  %v216 = vld [vmem:[%s3 + $0x8] sm:$0xff]
  %v217 = vld [vmem:[%s3 + $0x10] sm:$0xff]
  %v218 = vld [vmem:[%s3 + $0x18] sm:$0xff]
  %v219 = vld [vmem:[%s3 + $0x20] sm:$0xff]
  %v220 = vld [vmem:[%s3 + $0x28] sm:$0xff]
  %v221 = vld [vmem:[%s3 + $0x30] sm:$0xff]
  %v222 = vld [vmem:[%s3 + $0x38] sm:$0xff]
  %v223 = vld [vmem:[%s3 + $0x40] sm:$0xff]
  %v224 = vld [vmem:[%s3 + $0x48] sm:$0xff]
  %v225 = vld [vmem:[%s3 + $0x50] sm:$0xff]
  %v226 = vld [vmem:[%s3 + $0x58] sm:$0xff]
  %v227 = vld [vmem:[%s3 + $0x60] sm:$0xff]
  %v228 = vld [vmem:[%s3 + $0x68] sm:$0xff]
  %v229 = vld [vmem:[%s3 + $0x70] sm:$0xff]
  %v230 = vld [vmem:[%s3 + $0x78] sm:$0xff]
  %v231 = vld [vmem:[%s3 + $0x80] sm:$0xff]
  %v232 = vld [vmem:[%s3 + $0x88] sm:$0xff]
  %v233 = vld [vmem:[%s3 + $0x90] sm:$0xff]
  %v234 = vld [vmem:[%s3 + $0x98] sm:$0xff]
  %v235 = vld [vmem:[%s3 + $0xa0] sm:$0xff]
  %v236 = vld [vmem:[%s3 + $0xa8] sm:$0xff]
  %v237 = vld [vmem:[%s3 + $0xb0] sm:$0xff]
  %v238 = vld [vmem:[%s3 + $0xb8] sm:$0xff]
  %v240 = vsel %vm134, %v172, 0
  %v243 = vsel %vm134, %v182, 0
  %245 = vmatprep.subr.mxu0 0.0
  %246 = vmatpush1.xpose.msra.mxu0 %v243
  %247 = vmatprep.subr.mxu0 0.0
  %248 = vmatpush1.xpose.msra.mxu0 0.0
  %249 = vmatprep.subr.mxu0 0.0
  %250 = vmatpush1.xpose.msra.mxu0 0.0
  %251 = vmatprep.subr.mxu0 0.0
  %252 = vmatpush1.xpose.msra.mxu0 0.0
  %253 = vmatprep.subr.mxu0 0.0
  %254 = vmatpush1.xpose.msra.mxu0 0.0
  %255 = vmatprep.subr.mxu0 0.0
  %256 = vmatpush1.xpose.msra.mxu0 0.0
  %257 = vmatprep.subr.mxu0 0.0
  %258 = vmatpush1.xpose.msra.mxu0 0.0
  %259 = vmatprep.subr.mxu0 0.0
  %260 = vmatpush1.xpose.msra.mxu0 0.0
  %261 = vmatprep.subr.mxu0 0.0
  %262 = vmatpush1.xpose.msra.mxu0 0.0
  %263 = vmatprep.subr.mxu0 0.0
  %264 = vmatpush1.xpose.msra.mxu0 0.0
  %265 = vmatprep.subr.mxu0 0.0
  %266 = vmatpush1.xpose.msra.mxu0 0.0
  %267 = vmatprep.subr.mxu0 0.0
  %268 = vmatpush1.xpose.msra.mxu0 0.0
  %269 = vmatprep.subr.mxu0 0.0
  %270 = vmatpush1.xpose.msra.mxu0 0.0
  %271 = vmatprep.subr.mxu0 0.0
  %272 = vmatpush1.xpose.msra.mxu0 0.0
  %273 = vmatprep.subr.mxu0 0.0
  %274 = vmatpush1.xpose.msra.mxu0 0.0
  %275 = vmatprep.subr.mxu0 0.0
  %276 = vmatpush1.xpose.msra.mxu0 0.0
  %277 = vmatprep.subr.mxu0 0.0
  %278 = vmatpush1.xpose.msra.mxu0 0.0
  %279 = vmatprep.subr.mxu0 0.0
  %280 = vmatpush1.xpose.msra.mxu0 0.0
  %281 = vmatprep.subr.mxu0 0.0
  %282 = vmatpush1.xpose.msra.mxu0 0.0
  %283 = vmatprep.subr.mxu0 0.0
  %284 = vmatpush1.xpose.msra.mxu0 0.0
  %285 = vmatprep.subr.mxu0 0.0
  %286 = vmatpush1.xpose.msra.mxu0 0.0
  %287 = vmatprep.subr.mxu0 0.0
  %288 = vmatpush1.xpose.msra.mxu0 0.0
  %289 = vmatprep.subr.mxu0 0.0
  %290 = vmatpush1.xpose.msra.mxu0 0.0
  %291 = vmatprep.subr.mxu0 0.0
  %292 = vmatpush1.xpose.msra.mxu0 0.0
  %293 = vmatprep.subr.mxu0 0.0
  %294 = vmatpush1.xpose.msra.mxu0 0.0
  %295 = vmatprep.subr.mxu0 0.0
  %296 = vmatpush1.xpose.msra.mxu0 0.0
  %297 = vmatprep.subr.mxu0 0.0
  %298 = vmatpush1.xpose.msra.mxu0 0.0
  %299 = vmatprep.subr.mxu0 0.0
  %300 = vmatpush1.xpose.msra.mxu0 0.0
  %301 = vmatprep.subr.mxu0 0.0
  %302 = vmatpush1.xpose.msra.mxu0 0.0
  %303 = vmatprep.subr.mxu0 0.0
  %304 = vmatpush1.xpose.msra.mxu0 0.0
  %305 = vmatprep.subr.mxu0 0.0
  %306 = vmatpush1.xpose.msra.mxu0 0.0
  %307 = vmatprep.subr.mxu0 0.0
  %308 = vmatpush1.xpose.msra.mxu0 0.0
  %309 = vmatprep.mubr.f32.mxu0 0.0
  %310 = vmatmul.mubr.f32.gmra.mrb[0].mxu0 %v240
  %v311 = vpop.f32.mrb[0].mxu0
  %v312 = vadd.f32 %v215, %v311
  %v313 = vpop.f32.mrb[0].mxu0
  %314 = vdwg.mxu0
  %v316 = vsel %vm134, %v173, 0
  %v319 = vsel %vm134, %v183, 0
  %321 = vmatprep.subr.mxu0 0.0
  %322 = vmatpush1.xpose.msra.mxu0 %v319
  %323 = vmatprep.subr.mxu0 0.0
  %324 = vmatpush1.xpose.msra.mxu0 0.0
  %325 = vmatprep.subr.mxu0 0.0
  %326 = vmatpush1.xpose.msra.mxu0 0.0
  %327 = vmatprep.subr.mxu0 0.0
  %328 = vmatpush1.xpose.msra.mxu0 0.0
  %329 = vmatprep.subr.mxu0 0.0
  %330 = vmatpush1.xpose.msra.mxu0 0.0
  %331 = vmatprep.subr.mxu0 0.0
  %332 = vmatpush1.xpose.msra.mxu0 0.0
  %333 = vmatprep.subr.mxu0 0.0
  %334 = vmatpush1.xpose.msra.mxu0 0.0
  %335 = vmatprep.subr.mxu0 0.0
  %336 = vmatpush1.xpose.msra.mxu0 0.0
  %337 = vmatprep.subr.mxu0 0.0
  %338 = vmatpush1.xpose.msra.mxu0 0.0
  %339 = vmatprep.subr.mxu0 0.0
  %340 = vmatpush1.xpose.msra.mxu0 0.0
  %341 = vmatprep.subr.mxu0 0.0
  %342 = vmatpush1.xpose.msra.mxu0 0.0
  %343 = vmatprep.subr.mxu0 0.0
  %344 = vmatpush1.xpose.msra.mxu0 0.0
  %345 = vmatprep.subr.mxu0 0.0
  %346 = vmatpush1.xpose.msra.mxu0 0.0
  %347 = vmatprep.subr.mxu0 0.0
  %348 = vmatpush1.xpose.msra.mxu0 0.0
  %349 = vmatprep.subr.mxu0 0.0
  %350 = vmatpush1.xpose.msra.mxu0 0.0
  %351 = vmatprep.subr.mxu0 0.0
  %352 = vmatpush1.xpose.msra.mxu0 0.0
  %353 = vmatprep.subr.mxu0 0.0
  %354 = vmatpush1.xpose.msra.mxu0 0.0
  %355 = vmatprep.subr.mxu0 0.0
  %356 = vmatpush1.xpose.msra.mxu0 0.0
  %357 = vmatprep.subr.mxu0 0.0
  %358 = vmatpush1.xpose.msra.mxu0 0.0
  %359 = vmatprep.subr.mxu0 0.0
  %360 = vmatpush1.xpose.msra.mxu0 0.0
  %361 = vmatprep.subr.mxu0 0.0
  %362 = vmatpush1.xpose.msra.mxu0 0.0
  %363 = vmatprep.subr.mxu0 0.0
  %364 = vmatpush1.xpose.msra.mxu0 0.0
  %365 = vmatprep.subr.mxu0 0.0
  %366 = vmatpush1.xpose.msra.mxu0 0.0
  %367 = vmatprep.subr.mxu0 0.0
  %368 = vmatpush1.xpose.msra.mxu0 0.0
  %369 = vmatprep.subr.mxu0 0.0
  %370 = vmatpush1.xpose.msra.mxu0 0.0
  %371 = vmatprep.subr.mxu0 0.0
  %372 = vmatpush1.xpose.msra.mxu0 0.0
  %373 = vmatprep.subr.mxu0 0.0
  %374 = vmatpush1.xpose.msra.mxu0 0.0
  %375 = vmatprep.subr.mxu0 0.0
  %376 = vmatpush1.xpose.msra.mxu0 0.0
  %377 = vmatprep.subr.mxu0 0.0
  %378 = vmatpush1.xpose.msra.mxu0 0.0
  %379 = vmatprep.subr.mxu0 0.0
  %380 = vmatpush1.xpose.msra.mxu0 0.0
  %381 = vmatprep.subr.mxu0 0.0
  %382 = vmatpush1.xpose.msra.mxu0 0.0
  %383 = vmatprep.subr.mxu0 0.0
  %384 = vmatpush1.xpose.msra.mxu0 0.0
  %385 = vmatprep.mubr.f32.mxu0 0.0
  %386 = vmatmul.mubr.f32.gmra.mrb[0].mxu0 %v316
  %v387 = vpop.f32.mrb[0].mxu0
  %v388 = vadd.f32 %v216, %v387
  %v389 = vpop.f32.mrb[0].mxu0
  %390 = vdwg.mxu0
  %v392 = vsel %vm134, %v184, 0
  %394 = vmatprep.subr.mxu0 0.0
  %395 = vmatpush1.xpose.msra.mxu0 %v392
  %396 = vmatprep.subr.mxu0 0.0
  %397 = vmatpush1.xpose.msra.mxu0 0.0
  %398 = vmatprep.subr.mxu0 0.0
  %399 = vmatpush1.xpose.msra.mxu0 0.0
  %400 = vmatprep.subr.mxu0 0.0
  %401 = vmatpush1.xpose.msra.mxu0 0.0
  %402 = vmatprep.subr.mxu0 0.0
  %403 = vmatpush1.xpose.msra.mxu0 0.0
  %404 = vmatprep.subr.mxu0 0.0
  %405 = vmatpush1.xpose.msra.mxu0 0.0
  %406 = vmatprep.subr.mxu0 0.0
  %407 = vmatpush1.xpose.msra.mxu0 0.0
  %408 = vmatprep.subr.mxu0 0.0
  %409 = vmatpush1.xpose.msra.mxu0 0.0
  %410 = vmatprep.subr.mxu0 0.0
  %411 = vmatpush1.xpose.msra.mxu0 0.0
  %412 = vmatprep.subr.mxu0 0.0
  %413 = vmatpush1.xpose.msra.mxu0 0.0
  %414 = vmatprep.subr.mxu0 0.0
  %415 = vmatpush1.xpose.msra.mxu0 0.0
  %416 = vmatprep.subr.mxu0 0.0
  %417 = vmatpush1.xpose.msra.mxu0 0.0
  %418 = vmatprep.subr.mxu0 0.0
  %419 = vmatpush1.xpose.msra.mxu0 0.0
  %420 = vmatprep.subr.mxu0 0.0
  %421 = vmatpush1.xpose.msra.mxu0 0.0
  %422 = vmatprep.subr.mxu0 0.0
  %423 = vmatpush1.xpose.msra.mxu0 0.0
  %424 = vmatprep.subr.mxu0 0.0
  %425 = vmatpush1.xpose.msra.mxu0 0.0
  %426 = vmatprep.subr.mxu0 0.0
  %427 = vmatpush1.xpose.msra.mxu0 0.0
  %428 = vmatprep.subr.mxu0 0.0
  %429 = vmatpush1.xpose.msra.mxu0 0.0
  %430 = vmatprep.subr.mxu0 0.0
  %431 = vmatpush1.xpose.msra.mxu0 0.0
  %432 = vmatprep.subr.mxu0 0.0
  %433 = vmatpush1.xpose.msra.mxu0 0.0
  %434 = vmatprep.subr.mxu0 0.0
  %435 = vmatpush1.xpose.msra.mxu0 0.0
  %436 = vmatprep.subr.mxu0 0.0
  %437 = vmatpush1.xpose.msra.mxu0 0.0
  %438 = vmatprep.subr.mxu0 0.0
  %439 = vmatpush1.xpose.msra.mxu0 0.0
  %440 = vmatprep.subr.mxu0 0.0
  %441 = vmatpush1.xpose.msra.mxu0 0.0
  %442 = vmatprep.subr.mxu0 0.0
  %443 = vmatpush1.xpose.msra.mxu0 0.0
  %444 = vmatprep.subr.mxu0 0.0
  %445 = vmatpush1.xpose.msra.mxu0 0.0
  %446 = vmatprep.subr.mxu0 0.0
  %447 = vmatpush1.xpose.msra.mxu0 0.0
  %448 = vmatprep.subr.mxu0 0.0
  %449 = vmatpush1.xpose.msra.mxu0 0.0
  %450 = vmatprep.subr.mxu0 0.0
  %451 = vmatpush1.xpose.msra.mxu0 0.0
  %452 = vmatprep.subr.mxu0 0.0
  %453 = vmatpush1.xpose.msra.mxu0 0.0
  %454 = vmatprep.subr.mxu0 0.0
  %455 = vmatpush1.xpose.msra.mxu0 0.0
  %456 = vmatprep.subr.mxu0 0.0
  %457 = vmatpush1.xpose.msra.mxu0 0.0
  %458 = vmatprep.mubr.f32.mxu0 0.0
  %459 = vmatmul.mubr.f32.gmra.mrb[0].mxu0 %v240
  %v460 = vpop.f32.mrb[0].mxu0
  %v461 = vadd.f32 %v217, %v460
  %v462 = vpop.f32.mrb[0].mxu0
  %463 = vdwg.mxu0
  %v465 = vsel %vm134, %v185, 0
  %467 = vmatprep.subr.mxu0 0.0
  %468 = vmatpush1.xpose.msra.mxu0 %v465
  %469 = vmatprep.subr.mxu0 0.0
  %470 = vmatpush1.xpose.msra.mxu0 0.0
  %471 = vmatprep.subr.mxu0 0.0
  %472 = vmatpush1.xpose.msra.mxu0 0.0
  %473 = vmatprep.subr.mxu0 0.0
  %474 = vmatpush1.xpose.msra.mxu0 0.0
  %475 = vmatprep.subr.mxu0 0.0
  %476 = vmatpush1.xpose.msra.mxu0 0.0
  %477 = vmatprep.subr.mxu0 0.0
  %478 = vmatpush1.xpose.msra.mxu0 0.0
  %479 = vmatprep.subr.mxu0 0.0
  %480 = vmatpush1.xpose.msra.mxu0 0.0
  %481 = vmatprep.subr.mxu0 0.0
  %482 = vmatpush1.xpose.msra.mxu0 0.0
  %483 = vmatprep.subr.mxu0 0.0
  %484 = vmatpush1.xpose.msra.mxu0 0.0
  %485 = vmatprep.subr.mxu0 0.0
  %486 = vmatpush1.xpose.msra.mxu0 0.0
  %487 = vmatprep.subr.mxu0 0.0
  %488 = vmatpush1.xpose.msra.mxu0 0.0
  %489 = vmatprep.subr.mxu0 0.0
  %490 = vmatpush1.xpose.msra.mxu0 0.0
  %491 = vmatprep.subr.mxu0 0.0
  %492 = vmatpush1.xpose.msra.mxu0 0.0
  %493 = vmatprep.subr.mxu0 0.0
  %494 = vmatpush1.xpose.msra.mxu0 0.0
  %495 = vmatprep.subr.mxu0 0.0
  %496 = vmatpush1.xpose.msra.mxu0 0.0
  %497 = vmatprep.subr.mxu0 0.0
  %498 = vmatpush1.xpose.msra.mxu0 0.0
  %499 = vmatprep.subr.mxu0 0.0
  %500 = vmatpush1.xpose.msra.mxu0 0.0
  %501 = vmatprep.subr.mxu0 0.0
  %502 = vmatpush1.xpose.msra.mxu0 0.0
  %503 = vmatprep.subr.mxu0 0.0
  %504 = vmatpush1.xpose.msra.mxu0 0.0
  %505 = vmatprep.subr.mxu0 0.0
  %506 = vmatpush1.xpose.msra.mxu0 0.0
  %507 = vmatprep.subr.mxu0 0.0
  %508 = vmatpush1.xpose.msra.mxu0 0.0
  %509 = vmatprep.subr.mxu0 0.0
  %510 = vmatpush1.xpose.msra.mxu0 0.0
  %511 = vmatprep.subr.mxu0 0.0
  %512 = vmatpush1.xpose.msra.mxu0 0.0
  %513 = vmatprep.subr.mxu0 0.0
  %514 = vmatpush1.xpose.msra.mxu0 0.0
  %515 = vmatprep.subr.mxu0 0.0
  %516 = vmatpush1.xpose.msra.mxu0 0.0
  %517 = vmatprep.subr.mxu0 0.0
  %518 = vmatpush1.xpose.msra.mxu0 0.0
  %519 = vmatprep.subr.mxu0 0.0
  %520 = vmatpush1.xpose.msra.mxu0 0.0
  %521 = vmatprep.subr.mxu0 0.0
  %522 = vmatpush1.xpose.msra.mxu0 0.0
  %523 = vmatprep.subr.mxu0 0.0
  %524 = vmatpush1.xpose.msra.mxu0 0.0
  %525 = vmatprep.subr.mxu0 0.0
  %526 = vmatpush1.xpose.msra.mxu0 0.0
  %527 = vmatprep.subr.mxu0 0.0
  %528 = vmatpush1.xpose.msra.mxu0 0.0
  %529 = vmatprep.subr.mxu0 0.0
  %530 = vmatpush1.xpose.msra.mxu0 0.0
  %531 = vmatprep.mubr.f32.mxu0 0.0
  %532 = vmatmul.mubr.f32.gmra.mrb[0].mxu0 %v316
  %v533 = vpop.f32.mrb[0].mxu0
  %v534 = vadd.f32 %v218, %v533
  %v535 = vpop.f32.mrb[0].mxu0
  %536 = vdwg.mxu0
  %v538 = vsel %vm134, %v186, 0
  %540 = vmatprep.subr.mxu0 0.0
  %541 = vmatpush1.xpose.msra.mxu0 %v538
  %542 = vmatprep.subr.mxu0 0.0
  %543 = vmatpush1.xpose.msra.mxu0 0.0
  %544 = vmatprep.subr.mxu0 0.0
  %545 = vmatpush1.xpose.msra.mxu0 0.0
  %546 = vmatprep.subr.mxu0 0.0
  %547 = vmatpush1.xpose.msra.mxu0 0.0
  %548 = vmatprep.subr.mxu0 0.0
  %549 = vmatpush1.xpose.msra.mxu0 0.0
  %550 = vmatprep.subr.mxu0 0.0
  %551 = vmatpush1.xpose.msra.mxu0 0.0
  %552 = vmatprep.subr.mxu0 0.0
  %553 = vmatpush1.xpose.msra.mxu0 0.0
  %554 = vmatprep.subr.mxu0 0.0
  %555 = vmatpush1.xpose.msra.mxu0 0.0
  %556 = vmatprep.subr.mxu0 0.0
  %557 = vmatpush1.xpose.msra.mxu0 0.0
  %558 = vmatprep.subr.mxu0 0.0
  %559 = vmatpush1.xpose.msra.mxu0 0.0
  %560 = vmatprep.subr.mxu0 0.0
  %561 = vmatpush1.xpose.msra.mxu0 0.0
  %562 = vmatprep.subr.mxu0 0.0
  %563 = vmatpush1.xpose.msra.mxu0 0.0
  %564 = vmatprep.subr.mxu0 0.0
  %565 = vmatpush1.xpose.msra.mxu0 0.0
  %566 = vmatprep.subr.mxu0 0.0
  %567 = vmatpush1.xpose.msra.mxu0 0.0
  %568 = vmatprep.subr.mxu0 0.0
  %569 = vmatpush1.xpose.msra.mxu0 0.0
  %570 = vmatprep.subr.mxu0 0.0
  %571 = vmatpush1.xpose.msra.mxu0 0.0
  %572 = vmatprep.subr.mxu0 0.0
  %573 = vmatpush1.xpose.msra.mxu0 0.0
  %574 = vmatprep.subr.mxu0 0.0
  %575 = vmatpush1.xpose.msra.mxu0 0.0
  %576 = vmatprep.subr.mxu0 0.0
  %577 = vmatpush1.xpose.msra.mxu0 0.0
  %578 = vmatprep.subr.mxu0 0.0
  %579 = vmatpush1.xpose.msra.mxu0 0.0
  %580 = vmatprep.subr.mxu0 0.0
  %581 = vmatpush1.xpose.msra.mxu0 0.0
  %582 = vmatprep.subr.mxu0 0.0
  %583 = vmatpush1.xpose.msra.mxu0 0.0
  %584 = vmatprep.subr.mxu0 0.0
  %585 = vmatpush1.xpose.msra.mxu0 0.0
  %586 = vmatprep.subr.mxu0 0.0
  %587 = vmatpush1.xpose.msra.mxu0 0.0
  %588 = vmatprep.subr.mxu0 0.0
  %589 = vmatpush1.xpose.msra.mxu0 0.0
  %590 = vmatprep.subr.mxu0 0.0
  %591 = vmatpush1.xpose.msra.mxu0 0.0
  %592 = vmatprep.subr.mxu0 0.0
  %593 = vmatpush1.xpose.msra.mxu0 0.0
  %594 = vmatprep.subr.mxu0 0.0
  %595 = vmatpush1.xpose.msra.mxu0 0.0
  %596 = vmatprep.subr.mxu0 0.0
  %597 = vmatpush1.xpose.msra.mxu0 0.0
  %598 = vmatprep.subr.mxu0 0.0
  %599 = vmatpush1.xpose.msra.mxu0 0.0
  %600 = vmatprep.subr.mxu0 0.0
  %601 = vmatpush1.xpose.msra.mxu0 0.0
  %602 = vmatprep.subr.mxu0 0.0
  %603 = vmatpush1.xpose.msra.mxu0 0.0
  %604 = vmatprep.mubr.f32.mxu0 0.0
  %605 = vmatmul.mubr.f32.gmra.mrb[0].mxu0 %v240
  %v606 = vpop.f32.mrb[0].mxu0
  %v607 = vadd.f32 %v219, %v606
  %v608 = vpop.f32.mrb[0].mxu0
  %609 = vdwg.mxu0
  %v611 = vsel %vm134, %v187, 0
  %613 = vmatprep.subr.mxu0 0.0
  %614 = vmatpush1.xpose.msra.mxu0 %v611
  %615 = vmatprep.subr.mxu0 0.0
  %616 = vmatpush1.xpose.msra.mxu0 0.0
  %617 = vmatprep.subr.mxu0 0.0
  %618 = vmatpush1.xpose.msra.mxu0 0.0
  %619 = vmatprep.subr.mxu0 0.0
  %620 = vmatpush1.xpose.msra.mxu0 0.0
  %621 = vmatprep.subr.mxu0 0.0
  %622 = vmatpush1.xpose.msra.mxu0 0.0
  %623 = vmatprep.subr.mxu0 0.0
  %624 = vmatpush1.xpose.msra.mxu0 0.0
  %625 = vmatprep.subr.mxu0 0.0
  %626 = vmatpush1.xpose.msra.mxu0 0.0
  %627 = vmatprep.subr.mxu0 0.0
  %628 = vmatpush1.xpose.msra.mxu0 0.0
  %629 = vmatprep.subr.mxu0 0.0
  %630 = vmatpush1.xpose.msra.mxu0 0.0
  %631 = vmatprep.subr.mxu0 0.0
  %632 = vmatpush1.xpose.msra.mxu0 0.0
  %633 = vmatprep.subr.mxu0 0.0
  %634 = vmatpush1.xpose.msra.mxu0 0.0
  %635 = vmatprep.subr.mxu0 0.0
  %636 = vmatpush1.xpose.msra.mxu0 0.0
  %637 = vmatprep.subr.mxu0 0.0
  %638 = vmatpush1.xpose.msra.mxu0 0.0
  %639 = vmatprep.subr.mxu0 0.0
  %640 = vmatpush1.xpose.msra.mxu0 0.0
  %641 = vmatprep.subr.mxu0 0.0
  %642 = vmatpush1.xpose.msra.mxu0 0.0
  %643 = vmatprep.subr.mxu0 0.0
  %644 = vmatpush1.xpose.msra.mxu0 0.0
  %645 = vmatprep.subr.mxu0 0.0
  %646 = vmatpush1.xpose.msra.mxu0 0.0
  %647 = vmatprep.subr.mxu0 0.0
  %648 = vmatpush1.xpose.msra.mxu0 0.0
  %649 = vmatprep.subr.mxu0 0.0
  %650 = vmatpush1.xpose.msra.mxu0 0.0
  %651 = vmatprep.subr.mxu0 0.0
  %652 = vmatpush1.xpose.msra.mxu0 0.0
  %653 = vmatprep.subr.mxu0 0.0
  %654 = vmatpush1.xpose.msra.mxu0 0.0
  %655 = vmatprep.subr.mxu0 0.0
  %656 = vmatpush1.xpose.msra.mxu0 0.0
  %657 = vmatprep.subr.mxu0 0.0
  %658 = vmatpush1.xpose.msra.mxu0 0.0
  %659 = vmatprep.subr.mxu0 0.0
  %660 = vmatpush1.xpose.msra.mxu0 0.0
  %661 = vmatprep.subr.mxu0 0.0
  %662 = vmatpush1.xpose.msra.mxu0 0.0
  %663 = vmatprep.subr.mxu0 0.0
  %664 = vmatpush1.xpose.msra.mxu0 0.0
  %665 = vmatprep.subr.mxu0 0.0
  %666 = vmatpush1.xpose.msra.mxu0 0.0
  %667 = vmatprep.subr.mxu0 0.0
  %668 = vmatpush1.xpose.msra.mxu0 0.0
  %669 = vmatprep.subr.mxu0 0.0
  %670 = vmatpush1.xpose.msra.mxu0 0.0
  %671 = vmatprep.subr.mxu0 0.0
  %672 = vmatpush1.xpose.msra.mxu0 0.0
  %673 = vmatprep.subr.mxu0 0.0
  %674 = vmatpush1.xpose.msra.mxu0 0.0
  %675 = vmatprep.subr.mxu0 0.0
  %676 = vmatpush1.xpose.msra.mxu0 0.0
  %677 = vmatprep.mubr.f32.mxu0 0.0
  %678 = vmatmul.mubr.f32.gmra.mrb[0].mxu0 %v316
  %v679 = vpop.f32.mrb[0].mxu0
  %v680 = vadd.f32 %v220, %v679
  %v681 = vpop.f32.mrb[0].mxu0
  %682 = vdwg.mxu0
  %v684 = vsel %vm134, %v188, 0
  %686 = vmatprep.subr.mxu0 0.0
  %687 = vmatpush1.xpose.msra.mxu0 %v684
  %688 = vmatprep.subr.mxu0 0.0
  %689 = vmatpush1.xpose.msra.mxu0 0.0
  %690 = vmatprep.subr.mxu0 0.0
  %691 = vmatpush1.xpose.msra.mxu0 0.0
  %692 = vmatprep.subr.mxu0 0.0
  %693 = vmatpush1.xpose.msra.mxu0 0.0
  %694 = vmatprep.subr.mxu0 0.0
  %695 = vmatpush1.xpose.msra.mxu0 0.0
  %696 = vmatprep.subr.mxu0 0.0
  %697 = vmatpush1.xpose.msra.mxu0 0.0
  %698 = vmatprep.subr.mxu0 0.0
  %699 = vmatpush1.xpose.msra.mxu0 0.0
  %700 = vmatprep.subr.mxu0 0.0
  %701 = vmatpush1.xpose.msra.mxu0 0.0
  %702 = vmatprep.subr.mxu0 0.0
  %703 = vmatpush1.xpose.msra.mxu0 0.0
  %704 = vmatprep.subr.mxu0 0.0
  %705 = vmatpush1.xpose.msra.mxu0 0.0
  %706 = vmatprep.subr.mxu0 0.0
  %707 = vmatpush1.xpose.msra.mxu0 0.0
  %708 = vmatprep.subr.mxu0 0.0
  %709 = vmatpush1.xpose.msra.mxu0 0.0
  %710 = vmatprep.subr.mxu0 0.0
  %711 = vmatpush1.xpose.msra.mxu0 0.0
  %712 = vmatprep.subr.mxu0 0.0
  %713 = vmatpush1.xpose.msra.mxu0 0.0
  %714 = vmatprep.subr.mxu0 0.0
  %715 = vmatpush1.xpose.msra.mxu0 0.0
  %716 = vmatprep.subr.mxu0 0.0
  %717 = vmatpush1.xpose.msra.mxu0 0.0
  %718 = vmatprep.subr.mxu0 0.0
  %719 = vmatpush1.xpose.msra.mxu0 0.0
  %720 = vmatprep.subr.mxu0 0.0
  %721 = vmatpush1.xpose.msra.mxu0 0.0
  %722 = vmatprep.subr.mxu0 0.0
  %723 = vmatpush1.xpose.msra.mxu0 0.0
  %724 = vmatprep.subr.mxu0 0.0
  %725 = vmatpush1.xpose.msra.mxu0 0.0
  %726 = vmatprep.subr.mxu0 0.0
  %727 = vmatpush1.xpose.msra.mxu0 0.0
  %728 = vmatprep.subr.mxu0 0.0
  %729 = vmatpush1.xpose.msra.mxu0 0.0
  %730 = vmatprep.subr.mxu0 0.0
  %731 = vmatpush1.xpose.msra.mxu0 0.0
  %732 = vmatprep.subr.mxu0 0.0
  %733 = vmatpush1.xpose.msra.mxu0 0.0
  %734 = vmatprep.subr.mxu0 0.0
  %735 = vmatpush1.xpose.msra.mxu0 0.0
  %736 = vmatprep.subr.mxu0 0.0
  %737 = vmatpush1.xpose.msra.mxu0 0.0
  %738 = vmatprep.subr.mxu0 0.0
  %739 = vmatpush1.xpose.msra.mxu0 0.0
  %740 = vmatprep.subr.mxu0 0.0
  %741 = vmatpush1.xpose.msra.mxu0 0.0
  %742 = vmatprep.subr.mxu0 0.0
  %743 = vmatpush1.xpose.msra.mxu0 0.0
  %744 = vmatprep.subr.mxu0 0.0
  %745 = vmatpush1.xpose.msra.mxu0 0.0
  %746 = vmatprep.subr.mxu0 0.0
  %747 = vmatpush1.xpose.msra.mxu0 0.0
  %748 = vmatprep.subr.mxu0 0.0
  %749 = vmatpush1.xpose.msra.mxu0 0.0
  %750 = vmatprep.mubr.f32.mxu0 0.0
  %751 = vmatmul.mubr.f32.gmra.mrb[0].mxu0 %v240
  %v752 = vpop.f32.mrb[0].mxu0
  %v753 = vadd.f32 %v221, %v752
  %v754 = vpop.f32.mrb[0].mxu0
  %755 = vdwg.mxu0
  %v757 = vsel %vm134, %v189, 0
  %759 = vmatprep.subr.mxu0 0.0
  %760 = vmatpush1.xpose.msra.mxu0 %v757
  %761 = vmatprep.subr.mxu0 0.0
  %762 = vmatpush1.xpose.msra.mxu0 0.0
  %763 = vmatprep.subr.mxu0 0.0
  %764 = vmatpush1.xpose.msra.mxu0 0.0
  %765 = vmatprep.subr.mxu0 0.0
  %766 = vmatpush1.xpose.msra.mxu0 0.0
  %767 = vmatprep.subr.mxu0 0.0
  %768 = vmatpush1.xpose.msra.mxu0 0.0
  %769 = vmatprep.subr.mxu0 0.0
  %770 = vmatpush1.xpose.msra.mxu0 0.0
  %771 = vmatprep.subr.mxu0 0.0
  %772 = vmatpush1.xpose.msra.mxu0 0.0
  %773 = vmatprep.subr.mxu0 0.0
  %774 = vmatpush1.xpose.msra.mxu0 0.0
  %775 = vmatprep.subr.mxu0 0.0
  %776 = vmatpush1.xpose.msra.mxu0 0.0
  %777 = vmatprep.subr.mxu0 0.0
  %778 = vmatpush1.xpose.msra.mxu0 0.0
  %779 = vmatprep.subr.mxu0 0.0
  %780 = vmatpush1.xpose.msra.mxu0 0.0
  %781 = vmatprep.subr.mxu0 0.0
  %782 = vmatpush1.xpose.msra.mxu0 0.0
  %783 = vmatprep.subr.mxu0 0.0
  %784 = vmatpush1.xpose.msra.mxu0 0.0
  %785 = vmatprep.subr.mxu0 0.0
  %786 = vmatpush1.xpose.msra.mxu0 0.0
  %787 = vmatprep.subr.mxu0 0.0
  %788 = vmatpush1.xpose.msra.mxu0 0.0
  %789 = vmatprep.subr.mxu0 0.0
  %790 = vmatpush1.xpose.msra.mxu0 0.0
  %791 = vmatprep.subr.mxu0 0.0
  %792 = vmatpush1.xpose.msra.mxu0 0.0
  %793 = vmatprep.subr.mxu0 0.0
  %794 = vmatpush1.xpose.msra.mxu0 0.0
  %795 = vmatprep.subr.mxu0 0.0
  %796 = vmatpush1.xpose.msra.mxu0 0.0
  %797 = vmatprep.subr.mxu0 0.0
  %798 = vmatpush1.xpose.msra.mxu0 0.0
  %799 = vmatprep.subr.mxu0 0.0
  %800 = vmatpush1.xpose.msra.mxu0 0.0
  %801 = vmatprep.subr.mxu0 0.0
  %802 = vmatpush1.xpose.msra.mxu0 0.0
  %803 = vmatprep.subr.mxu0 0.0
  %804 = vmatpush1.xpose.msra.mxu0 0.0
  %805 = vmatprep.subr.mxu0 0.0
  %806 = vmatpush1.xpose.msra.mxu0 0.0
  %807 = vmatprep.subr.mxu0 0.0
  %808 = vmatpush1.xpose.msra.mxu0 0.0
  %809 = vmatprep.subr.mxu0 0.0
  %810 = vmatpush1.xpose.msra.mxu0 0.0
  %811 = vmatprep.subr.mxu0 0.0
  %812 = vmatpush1.xpose.msra.mxu0 0.0
  %813 = vmatprep.subr.mxu0 0.0
  %814 = vmatpush1.xpose.msra.mxu0 0.0
  %815 = vmatprep.subr.mxu0 0.0
  %816 = vmatpush1.xpose.msra.mxu0 0.0
  %817 = vmatprep.subr.mxu0 0.0
  %818 = vmatpush1.xpose.msra.mxu0 0.0
  %819 = vmatprep.subr.mxu0 0.0
  %820 = vmatpush1.xpose.msra.mxu0 0.0
  %821 = vmatprep.subr.mxu0 0.0
  %822 = vmatpush1.xpose.msra.mxu0 0.0
  %823 = vmatprep.mubr.f32.mxu0 0.0
  %824 = vmatmul.mubr.f32.gmra.mrb[0].mxu0 %v316
  %v825 = vpop.f32.mrb[0].mxu0
  %v826 = vadd.f32 %v222, %v825
  %v827 = vpop.f32.mrb[0].mxu0
  %828 = vdwg.mxu0
  %v830 = vsel %vm134, %v190, 0
  %832 = vmatprep.subr.mxu0 0.0
  %833 = vmatpush1.xpose.msra.mxu0 %v830
  %834 = vmatprep.subr.mxu0 0.0
  %835 = vmatpush1.xpose.msra.mxu0 0.0
  %836 = vmatprep.subr.mxu0 0.0
  %837 = vmatpush1.xpose.msra.mxu0 0.0
  %838 = vmatprep.subr.mxu0 0.0
  %839 = vmatpush1.xpose.msra.mxu0 0.0
  %840 = vmatprep.subr.mxu0 0.0
  %841 = vmatpush1.xpose.msra.mxu0 0.0
  %842 = vmatprep.subr.mxu0 0.0
  %843 = vmatpush1.xpose.msra.mxu0 0.0
  %844 = vmatprep.subr.mxu0 0.0
  %845 = vmatpush1.xpose.msra.mxu0 0.0
  %846 = vmatprep.subr.mxu0 0.0
  %847 = vmatpush1.xpose.msra.mxu0 0.0
  %848 = vmatprep.subr.mxu0 0.0
  %849 = vmatpush1.xpose.msra.mxu0 0.0
  %850 = vmatprep.subr.mxu0 0.0
  %851 = vmatpush1.xpose.msra.mxu0 0.0
  %852 = vmatprep.subr.mxu0 0.0
  %853 = vmatpush1.xpose.msra.mxu0 0.0
  %854 = vmatprep.subr.mxu0 0.0
  %855 = vmatpush1.xpose.msra.mxu0 0.0
  %856 = vmatprep.subr.mxu0 0.0
  %857 = vmatpush1.xpose.msra.mxu0 0.0
  %858 = vmatprep.subr.mxu0 0.0
  %859 = vmatpush1.xpose.msra.mxu0 0.0
  %860 = vmatprep.subr.mxu0 0.0
  %861 = vmatpush1.xpose.msra.mxu0 0.0
  %862 = vmatprep.subr.mxu0 0.0
  %863 = vmatpush1.xpose.msra.mxu0 0.0
  %864 = vmatprep.subr.mxu0 0.0
  %865 = vmatpush1.xpose.msra.mxu0 0.0
  %866 = vmatprep.subr.mxu0 0.0
  %867 = vmatpush1.xpose.msra.mxu0 0.0
  %868 = vmatprep.subr.mxu0 0.0
  %869 = vmatpush1.xpose.msra.mxu0 0.0
  %870 = vmatprep.subr.mxu0 0.0
  %871 = vmatpush1.xpose.msra.mxu0 0.0
  %872 = vmatprep.subr.mxu0 0.0
  %873 = vmatpush1.xpose.msra.mxu0 0.0
  %874 = vmatprep.subr.mxu0 0.0
  %875 = vmatpush1.xpose.msra.mxu0 0.0
  %876 = vmatprep.subr.mxu0 0.0
  %877 = vmatpush1.xpose.msra.mxu0 0.0
  %878 = vmatprep.subr.mxu0 0.0
  %879 = vmatpush1.xpose.msra.mxu0 0.0
  %880 = vmatprep.subr.mxu0 0.0
  %881 = vmatpush1.xpose.msra.mxu0 0.0
  %882 = vmatprep.subr.mxu0 0.0
  %883 = vmatpush1.xpose.msra.mxu0 0.0
  %884 = vmatprep.subr.mxu0 0.0
  %885 = vmatpush1.xpose.msra.mxu0 0.0
  %886 = vmatprep.subr.mxu0 0.0
  %887 = vmatpush1.xpose.msra.mxu0 0.0
  %888 = vmatprep.subr.mxu0 0.0
  %889 = vmatpush1.xpose.msra.mxu0 0.0
  %890 = vmatprep.subr.mxu0 0.0
  %891 = vmatpush1.xpose.msra.mxu0 0.0
  %892 = vmatprep.subr.mxu0 0.0
  %893 = vmatpush1.xpose.msra.mxu0 0.0
  %894 = vmatprep.subr.mxu0 0.0
  %895 = vmatpush1.xpose.msra.mxu0 0.0
  %896 = vmatprep.mubr.f32.mxu0 0.0
  %897 = vmatmul.mubr.f32.gmra.mrb[0].mxu0 %v240
  %v898 = vpop.f32.mrb[0].mxu0
  %v899 = vadd.f32 %v223, %v898
  %v900 = vpop.f32.mrb[0].mxu0
  %901 = vdwg.mxu0
  %v903 = vsel %vm134, %v191, 0
  %905 = vmatprep.subr.mxu0 0.0
  %906 = vmatpush1.xpose.msra.mxu0 %v903
  %907 = vmatprep.subr.mxu0 0.0
  %908 = vmatpush1.xpose.msra.mxu0 0.0
  %909 = vmatprep.subr.mxu0 0.0
  %910 = vmatpush1.xpose.msra.mxu0 0.0
  %911 = vmatprep.subr.mxu0 0.0
  %912 = vmatpush1.xpose.msra.mxu0 0.0
  %913 = vmatprep.subr.mxu0 0.0
  %914 = vmatpush1.xpose.msra.mxu0 0.0
  %915 = vmatprep.subr.mxu0 0.0
  %916 = vmatpush1.xpose.msra.mxu0 0.0
  %917 = vmatprep.subr.mxu0 0.0
  %918 = vmatpush1.xpose.msra.mxu0 0.0
  %919 = vmatprep.subr.mxu0 0.0
  %920 = vmatpush1.xpose.msra.mxu0 0.0
  %921 = vmatprep.subr.mxu0 0.0
  %922 = vmatpush1.xpose.msra.mxu0 0.0
  %923 = vmatprep.subr.mxu0 0.0
  %924 = vmatpush1.xpose.msra.mxu0 0.0
  %925 = vmatprep.subr.mxu0 0.0
  %926 = vmatpush1.xpose.msra.mxu0 0.0
  %927 = vmatprep.subr.mxu0 0.0
  %928 = vmatpush1.xpose.msra.mxu0 0.0
  %929 = vmatprep.subr.mxu0 0.0
  %930 = vmatpush1.xpose.msra.mxu0 0.0
  %931 = vmatprep.subr.mxu0 0.0
  %932 = vmatpush1.xpose.msra.mxu0 0.0
  %933 = vmatprep.subr.mxu0 0.0
  %934 = vmatpush1.xpose.msra.mxu0 0.0
  %935 = vmatprep.subr.mxu0 0.0
  %936 = vmatpush1.xpose.msra.mxu0 0.0
  %937 = vmatprep.subr.mxu0 0.0
  %938 = vmatpush1.xpose.msra.mxu0 0.0
  %939 = vmatprep.subr.mxu0 0.0
  %940 = vmatpush1.xpose.msra.mxu0 0.0
  %941 = vmatprep.subr.mxu0 0.0
  %942 = vmatpush1.xpose.msra.mxu0 0.0
  %943 = vmatprep.subr.mxu0 0.0
  %944 = vmatpush1.xpose.msra.mxu0 0.0
  %945 = vmatprep.subr.mxu0 0.0
  %946 = vmatpush1.xpose.msra.mxu0 0.0
  %947 = vmatprep.subr.mxu0 0.0
  %948 = vmatpush1.xpose.msra.mxu0 0.0
  %949 = vmatprep.subr.mxu0 0.0
  %950 = vmatpush1.xpose.msra.mxu0 0.0
  %951 = vmatprep.subr.mxu0 0.0
  %952 = vmatpush1.xpose.msra.mxu0 0.0
  %953 = vmatprep.subr.mxu0 0.0
  %954 = vmatpush1.xpose.msra.mxu0 0.0
  %955 = vmatprep.subr.mxu0 0.0
  %956 = vmatpush1.xpose.msra.mxu0 0.0
  %957 = vmatprep.subr.mxu0 0.0
  %958 = vmatpush1.xpose.msra.mxu0 0.0
  %959 = vmatprep.subr.mxu0 0.0
  %960 = vmatpush1.xpose.msra.mxu0 0.0
  %961 = vmatprep.subr.mxu0 0.0
  %962 = vmatpush1.xpose.msra.mxu0 0.0
  %963 = vmatprep.subr.mxu0 0.0
  %964 = vmatpush1.xpose.msra.mxu0 0.0
  %965 = vmatprep.subr.mxu0 0.0
  %966 = vmatpush1.xpose.msra.mxu0 0.0
  %967 = vmatprep.subr.mxu0 0.0
  %968 = vmatpush1.xpose.msra.mxu0 0.0
  %969 = vmatprep.mubr.f32.mxu0 0.0
  %970 = vmatmul.mubr.f32.gmra.mrb[0].mxu0 %v316
  %v971 = vpop.f32.mrb[0].mxu0
  %v972 = vadd.f32 %v224, %v971
  %v973 = vpop.f32.mrb[0].mxu0
  %974 = vdwg.mxu0
  %v976 = vsel %vm134, %v192, 0
  %978 = vmatprep.subr.mxu0 0.0
  %979 = vmatpush1.xpose.msra.mxu0 %v976
  %980 = vmatprep.subr.mxu0 0.0
  %981 = vmatpush1.xpose.msra.mxu0 0.0
  %982 = vmatprep.subr.mxu0 0.0
  %983 = vmatpush1.xpose.msra.mxu0 0.0
  %984 = vmatprep.subr.mxu0 0.0
  %985 = vmatpush1.xpose.msra.mxu0 0.0
  %986 = vmatprep.subr.mxu0 0.0
  %987 = vmatpush1.xpose.msra.mxu0 0.0
  %988 = vmatprep.subr.mxu0 0.0
  %989 = vmatpush1.xpose.msra.mxu0 0.0
  %990 = vmatprep.subr.mxu0 0.0
  %991 = vmatpush1.xpose.msra.mxu0 0.0
  %992 = vmatprep.subr.mxu0 0.0
  %993 = vmatpush1.xpose.msra.mxu0 0.0
  %994 = vmatprep.subr.mxu0 0.0
  %995 = vmatpush1.xpose.msra.mxu0 0.0
  %996 = vmatprep.subr.mxu0 0.0
  %997 = vmatpush1.xpose.msra.mxu0 0.0
  %998 = vmatprep.subr.mxu0 0.0
  %999 = vmatpush1.xpose.msra.mxu0 0.0
  %1000 = vmatprep.subr.mxu0 0.0
  %1001 = vmatpush1.xpose.msra.mxu0 0.0
  %1002 = vmatprep.subr.mxu0 0.0
  %1003 = vmatpush1.xpose.msra.mxu0 0.0
  %1004 = vmatprep.subr.mxu0 0.0
  %1005 = vmatpush1.xpose.msra.mxu0 0.0
  %1006 = vmatprep.subr.mxu0 0.0
  %1007 = vmatpush1.xpose.msra.mxu0 0.0
  %1008 = vmatprep.subr.mxu0 0.0
  %1009 = vmatpush1.xpose.msra.mxu0 0.0
  %1010 = vmatprep.subr.mxu0 0.0
  %1011 = vmatpush1.xpose.msra.mxu0 0.0
  %1012 = vmatprep.subr.mxu0 0.0
  %1013 = vmatpush1.xpose.msra.mxu0 0.0
  %1014 = vmatprep.subr.mxu0 0.0
  %1015 = vmatpush1.xpose.msra.mxu0 0.0
  %1016 = vmatprep.subr.mxu0 0.0
  %1017 = vmatpush1.xpose.msra.mxu0 0.0
  %1018 = vmatprep.subr.mxu0 0.0
  %1019 = vmatpush1.xpose.msra.mxu0 0.0
  %1020 = vmatprep.subr.mxu0 0.0
  %1021 = vmatpush1.xpose.msra.mxu0 0.0
  %1022 = vmatprep.subr.mxu0 0.0
  %1023 = vmatpush1.xpose.msra.mxu0 0.0
  %1024 = vmatprep.subr.mxu0 0.0
  %1025 = vmatpush1.xpose.msra.mxu0 0.0
  %1026 = vmatprep.subr.mxu0 0.0
  %1027 = vmatpush1.xpose.msra.mxu0 0.0
  %1028 = vmatprep.subr.mxu0 0.0
  %1029 = vmatpush1.xpose.msra.mxu0 0.0
  %1030 = vmatprep.subr.mxu0 0.0
  %1031 = vmatpush1.xpose.msra.mxu0 0.0
  %1032 = vmatprep.subr.mxu0 0.0
  %1033 = vmatpush1.xpose.msra.mxu0 0.0
  %1034 = vmatprep.subr.mxu0 0.0
  %1035 = vmatpush1.xpose.msra.mxu0 0.0
  %1036 = vmatprep.subr.mxu0 0.0
  %1037 = vmatpush1.xpose.msra.mxu0 0.0
  %1038 = vmatprep.subr.mxu0 0.0
  %1039 = vmatpush1.xpose.msra.mxu0 0.0
  %1040 = vmatprep.subr.mxu0 0.0
  %1041 = vmatpush1.xpose.msra.mxu0 0.0
  %1042 = vmatprep.mubr.f32.mxu0 0.0
  %1043 = vmatmul.mubr.f32.gmra.mrb[0].mxu0 %v240
  %v1044 = vpop.f32.mrb[0].mxu0
  %v1045 = vadd.f32 %v225, %v1044
  %v1046 = vpop.f32.mrb[0].mxu0
  %1047 = vdwg.mxu0
  %v1049 = vsel %vm134, %v193, 0
  %1051 = vmatprep.subr.mxu0 0.0
  %1052 = vmatpush1.xpose.msra.mxu0 %v1049
  %1053 = vmatprep.subr.mxu0 0.0
  %1054 = vmatpush1.xpose.msra.mxu0 0.0
  %1055 = vmatprep.subr.mxu0 0.0
  %1056 = vmatpush1.xpose.msra.mxu0 0.0
  %1057 = vmatprep.subr.mxu0 0.0
  %1058 = vmatpush1.xpose.msra.mxu0 0.0
  %1059 = vmatprep.subr.mxu0 0.0
  %1060 = vmatpush1.xpose.msra.mxu0 0.0
  %1061 = vmatprep.subr.mxu0 0.0
  %1062 = vmatpush1.xpose.msra.mxu0 0.0
  %1063 = vmatprep.subr.mxu0 0.0
  %1064 = vmatpush1.xpose.msra.mxu0 0.0
  %1065 = vmatprep.subr.mxu0 0.0
  %1066 = vmatpush1.xpose.msra.mxu0 0.0
  %1067 = vmatprep.subr.mxu0 0.0
  %1068 = vmatpush1.xpose.msra.mxu0 0.0
  %1069 = vmatprep.subr.mxu0 0.0
  %1070 = vmatpush1.xpose.msra.mxu0 0.0
  %1071 = vmatprep.subr.mxu0 0.0
  %1072 = vmatpush1.xpose.msra.mxu0 0.0
  %1073 = vmatprep.subr.mxu0 0.0
  %1074 = vmatpush1.xpose.msra.mxu0 0.0
  %1075 = vmatprep.subr.mxu0 0.0
  %1076 = vmatpush1.xpose.msra.mxu0 0.0
  %1077 = vmatprep.subr.mxu0 0.0
  %1078 = vmatpush1.xpose.msra.mxu0 0.0
  %1079 = vmatprep.subr.mxu0 0.0
  %1080 = vmatpush1.xpose.msra.mxu0 0.0
  %1081 = vmatprep.subr.mxu0 0.0
  %1082 = vmatpush1.xpose.msra.mxu0 0.0
  %1083 = vmatprep.subr.mxu0 0.0
  %1084 = vmatpush1.xpose.msra.mxu0 0.0
  %1085 = vmatprep.subr.mxu0 0.0
  %1086 = vmatpush1.xpose.msra.mxu0 0.0
  %1087 = vmatprep.subr.mxu0 0.0
  %1088 = vmatpush1.xpose.msra.mxu0 0.0
  %1089 = vmatprep.subr.mxu0 0.0
  %1090 = vmatpush1.xpose.msra.mxu0 0.0
  %1091 = vmatprep.subr.mxu0 0.0
  %1092 = vmatpush1.xpose.msra.mxu0 0.0
  %1093 = vmatprep.subr.mxu0 0.0
  %1094 = vmatpush1.xpose.msra.mxu0 0.0
  %1095 = vmatprep.subr.mxu0 0.0
  %1096 = vmatpush1.xpose.msra.mxu0 0.0
  %1097 = vmatprep.subr.mxu0 0.0
  %1098 = vmatpush1.xpose.msra.mxu0 0.0
  %1099 = vmatprep.subr.mxu0 0.0
  %1100 = vmatpush1.xpose.msra.mxu0 0.0
  %1101 = vmatprep.subr.mxu0 0.0
  %1102 = vmatpush1.xpose.msra.mxu0 0.0
  %1103 = vmatprep.subr.mxu0 0.0
  %1104 = vmatpush1.xpose.msra.mxu0 0.0
  %1105 = vmatprep.subr.mxu0 0.0
  %1106 = vmatpush1.xpose.msra.mxu0 0.0
  %1107 = vmatprep.subr.mxu0 0.0
  %1108 = vmatpush1.xpose.msra.mxu0 0.0
  %1109 = vmatprep.subr.mxu0 0.0
  %1110 = vmatpush1.xpose.msra.mxu0 0.0
  %1111 = vmatprep.subr.mxu0 0.0
  %1112 = vmatpush1.xpose.msra.mxu0 0.0
  %1113 = vmatprep.subr.mxu0 0.0
  %1114 = vmatpush1.xpose.msra.mxu0 0.0
  %1115 = vmatprep.mubr.f32.mxu0 0.0
  %1116 = vmatmul.mubr.f32.gmra.mrb[0].mxu0 %v316
  %v1117 = vpop.f32.mrb[0].mxu0
  %v1118 = vadd.f32 %v226, %v1117
  %v1119 = vpop.f32.mrb[0].mxu0
  %1120 = vdwg.mxu0
  %v1122 = vsel %vm134, %v194, 0
  %1124 = vmatprep.subr.mxu0 0.0
  %1125 = vmatpush1.xpose.msra.mxu0 %v1122
  %1126 = vmatprep.subr.mxu0 0.0
  %1127 = vmatpush1.xpose.msra.mxu0 0.0
  %1128 = vmatprep.subr.mxu0 0.0
  %1129 = vmatpush1.xpose.msra.mxu0 0.0
  %1130 = vmatprep.subr.mxu0 0.0
  %1131 = vmatpush1.xpose.msra.mxu0 0.0
  %1132 = vmatprep.subr.mxu0 0.0
  %1133 = vmatpush1.xpose.msra.mxu0 0.0
  %1134 = vmatprep.subr.mxu0 0.0
  %1135 = vmatpush1.xpose.msra.mxu0 0.0
  %1136 = vmatprep.subr.mxu0 0.0
  %1137 = vmatpush1.xpose.msra.mxu0 0.0
  %1138 = vmatprep.subr.mxu0 0.0
  %1139 = vmatpush1.xpose.msra.mxu0 0.0
  %1140 = vmatprep.subr.mxu0 0.0
  %1141 = vmatpush1.xpose.msra.mxu0 0.0
  %1142 = vmatprep.subr.mxu0 0.0
  %1143 = vmatpush1.xpose.msra.mxu0 0.0
  %1144 = vmatprep.subr.mxu0 0.0
  %1145 = vmatpush1.xpose.msra.mxu0 0.0
  %1146 = vmatprep.subr.mxu0 0.0
  %1147 = vmatpush1.xpose.msra.mxu0 0.0
  %1148 = vmatprep.subr.mxu0 0.0
  %1149 = vmatpush1.xpose.msra.mxu0 0.0
  %1150 = vmatprep.subr.mxu0 0.0
  %1151 = vmatpush1.xpose.msra.mxu0 0.0
  %1152 = vmatprep.subr.mxu0 0.0
  %1153 = vmatpush1.xpose.msra.mxu0 0.0
  %1154 = vmatprep.subr.mxu0 0.0
  %1155 = vmatpush1.xpose.msra.mxu0 0.0
  %1156 = vmatprep.subr.mxu0 0.0
  %1157 = vmatpush1.xpose.msra.mxu0 0.0
  %1158 = vmatprep.subr.mxu0 0.0
  %1159 = vmatpush1.xpose.msra.mxu0 0.0
  %1160 = vmatprep.subr.mxu0 0.0
  %1161 = vmatpush1.xpose.msra.mxu0 0.0
  %1162 = vmatprep.subr.mxu0 0.0
  %1163 = vmatpush1.xpose.msra.mxu0 0.0
  %1164 = vmatprep.subr.mxu0 0.0
  %1165 = vmatpush1.xpose.msra.mxu0 0.0
  %1166 = vmatprep.subr.mxu0 0.0
  %1167 = vmatpush1.xpose.msra.mxu0 0.0
  %1168 = vmatprep.subr.mxu0 0.0
  %1169 = vmatpush1.xpose.msra.mxu0 0.0
  %1170 = vmatprep.subr.mxu0 0.0
  %1171 = vmatpush1.xpose.msra.mxu0 0.0
  %1172 = vmatprep.subr.mxu0 0.0
  %1173 = vmatpush1.xpose.msra.mxu0 0.0
  %1174 = vmatprep.subr.mxu0 0.0
  %1175 = vmatpush1.xpose.msra.mxu0 0.0
  %1176 = vmatprep.subr.mxu0 0.0
  %1177 = vmatpush1.xpose.msra.mxu0 0.0
  %1178 = vmatprep.subr.mxu0 0.0
  %1179 = vmatpush1.xpose.msra.mxu0 0.0
  %1180 = vmatprep.subr.mxu0 0.0
  %1181 = vmatpush1.xpose.msra.mxu0 0.0
  %1182 = vmatprep.subr.mxu0 0.0
  %1183 = vmatpush1.xpose.msra.mxu0 0.0
  %1184 = vmatprep.subr.mxu0 0.0
  %1185 = vmatpush1.xpose.msra.mxu0 0.0
  %1186 = vmatprep.subr.mxu0 0.0
  %1187 = vmatpush1.xpose.msra.mxu0 0.0
  %1188 = vmatprep.mubr.f32.mxu0 0.0
  %1189 = vmatmul.mubr.f32.gmra.mrb[0].mxu0 %v240
  %v1190 = vpop.f32.mrb[0].mxu0
  %v1191 = vadd.f32 %v227, %v1190
  %v1192 = vpop.f32.mrb[0].mxu0
  %1193 = vdwg.mxu0
  %v1195 = vsel %vm134, %v195, 0
  %1197 = vmatprep.subr.mxu0 0.0
  %1198 = vmatpush1.xpose.msra.mxu0 %v1195
  %1199 = vmatprep.subr.mxu0 0.0
  %1200 = vmatpush1.xpose.msra.mxu0 0.0
  %1201 = vmatprep.subr.mxu0 0.0
  %1202 = vmatpush1.xpose.msra.mxu0 0.0
  %1203 = vmatprep.subr.mxu0 0.0
  %1204 = vmatpush1.xpose.msra.mxu0 0.0
  %1205 = vmatprep.subr.mxu0 0.0
  %1206 = vmatpush1.xpose.msra.mxu0 0.0
  %1207 = vmatprep.subr.mxu0 0.0
  %1208 = vmatpush1.xpose.msra.mxu0 0.0
  %1209 = vmatprep.subr.mxu0 0.0
  %1210 = vmatpush1.xpose.msra.mxu0 0.0
  %1211 = vmatprep.subr.mxu0 0.0
  %1212 = vmatpush1.xpose.msra.mxu0 0.0
  %1213 = vmatprep.subr.mxu0 0.0
  %1214 = vmatpush1.xpose.msra.mxu0 0.0
  %1215 = vmatprep.subr.mxu0 0.0
  %1216 = vmatpush1.xpose.msra.mxu0 0.0
  %1217 = vmatprep.subr.mxu0 0.0
  %1218 = vmatpush1.xpose.msra.mxu0 0.0
  %1219 = vmatprep.subr.mxu0 0.0
  %1220 = vmatpush1.xpose.msra.mxu0 0.0
  %1221 = vmatprep.subr.mxu0 0.0
  %1222 = vmatpush1.xpose.msra.mxu0 0.0
  %1223 = vmatprep.subr.mxu0 0.0
  %1224 = vmatpush1.xpose.msra.mxu0 0.0
  %1225 = vmatprep.subr.mxu0 0.0
  %1226 = vmatpush1.xpose.msra.mxu0 0.0
  %1227 = vmatprep.subr.mxu0 0.0
  %1228 = vmatpush1.xpose.msra.mxu0 0.0
  %1229 = vmatprep.subr.mxu0 0.0
  %1230 = vmatpush1.xpose.msra.mxu0 0.0
  %1231 = vmatprep.subr.mxu0 0.0
  %1232 = vmatpush1.xpose.msra.mxu0 0.0
  %1233 = vmatprep.subr.mxu0 0.0
  %1234 = vmatpush1.xpose.msra.mxu0 0.0
  %1235 = vmatprep.subr.mxu0 0.0
  %1236 = vmatpush1.xpose.msra.mxu0 0.0
  %1237 = vmatprep.subr.mxu0 0.0
  %1238 = vmatpush1.xpose.msra.mxu0 0.0
  %1239 = vmatprep.subr.mxu0 0.0
  %1240 = vmatpush1.xpose.msra.mxu0 0.0
  %1241 = vmatprep.subr.mxu0 0.0
  %1242 = vmatpush1.xpose.msra.mxu0 0.0
  %1243 = vmatprep.subr.mxu0 0.0
  %1244 = vmatpush1.xpose.msra.mxu0 0.0
  %1245 = vmatprep.subr.mxu0 0.0
  %1246 = vmatpush1.xpose.msra.mxu0 0.0
  %1247 = vmatprep.subr.mxu0 0.0
  %1248 = vmatpush1.xpose.msra.mxu0 0.0
  %1249 = vmatprep.subr.mxu0 0.0
  %1250 = vmatpush1.xpose.msra.mxu0 0.0
  %1251 = vmatprep.subr.mxu0 0.0
  %1252 = vmatpush1.xpose.msra.mxu0 0.0
  %1253 = vmatprep.subr.mxu0 0.0
  %1254 = vmatpush1.xpose.msra.mxu0 0.0
  %1255 = vmatprep.subr.mxu0 0.0
  %1256 = vmatpush1.xpose.msra.mxu0 0.0
  %1257 = vmatprep.subr.mxu0 0.0
  %1258 = vmatpush1.xpose.msra.mxu0 0.0
  %1259 = vmatprep.subr.mxu0 0.0
  %1260 = vmatpush1.xpose.msra.mxu0 0.0
  %1261 = vmatprep.mubr.f32.mxu0 0.0
  %1262 = vmatmul.mubr.f32.gmra.mrb[0].mxu0 %v316
  %v1263 = vpop.f32.mrb[0].mxu0
  %v1264 = vadd.f32 %v228, %v1263
  %v1265 = vpop.f32.mrb[0].mxu0
  %1266 = vdwg.mxu0
  %v1268 = vsel %vm134, %v196, 0
  %1270 = vmatprep.subr.mxu0 0.0
  %1271 = vmatpush1.xpose.msra.mxu0 %v1268
  %1272 = vmatprep.subr.mxu0 0.0
  %1273 = vmatpush1.xpose.msra.mxu0 0.0
  %1274 = vmatprep.subr.mxu0 0.0
  %1275 = vmatpush1.xpose.msra.mxu0 0.0
  %1276 = vmatprep.subr.mxu0 0.0
  %1277 = vmatpush1.xpose.msra.mxu0 0.0
  %1278 = vmatprep.subr.mxu0 0.0
  %1279 = vmatpush1.xpose.msra.mxu0 0.0
  %1280 = vmatprep.subr.mxu0 0.0
  %1281 = vmatpush1.xpose.msra.mxu0 0.0
  %1282 = vmatprep.subr.mxu0 0.0
  %1283 = vmatpush1.xpose.msra.mxu0 0.0
  %1284 = vmatprep.subr.mxu0 0.0
  %1285 = vmatpush1.xpose.msra.mxu0 0.0
  %1286 = vmatprep.subr.mxu0 0.0
  %1287 = vmatpush1.xpose.msra.mxu0 0.0
  %1288 = vmatprep.subr.mxu0 0.0
  %1289 = vmatpush1.xpose.msra.mxu0 0.0
  %1290 = vmatprep.subr.mxu0 0.0
  %1291 = vmatpush1.xpose.msra.mxu0 0.0
  %1292 = vmatprep.subr.mxu0 0.0
  %1293 = vmatpush1.xpose.msra.mxu0 0.0
  %1294 = vmatprep.subr.mxu0 0.0
  %1295 = vmatpush1.xpose.msra.mxu0 0.0
  %1296 = vmatprep.subr.mxu0 0.0
  %1297 = vmatpush1.xpose.msra.mxu0 0.0
  %1298 = vmatprep.subr.mxu0 0.0
  %1299 = vmatpush1.xpose.msra.mxu0 0.0
  %1300 = vmatprep.subr.mxu0 0.0
  %1301 = vmatpush1.xpose.msra.mxu0 0.0
  %1302 = vmatprep.subr.mxu0 0.0
  %1303 = vmatpush1.xpose.msra.mxu0 0.0
  %1304 = vmatprep.subr.mxu0 0.0
  %1305 = vmatpush1.xpose.msra.mxu0 0.0
  %1306 = vmatprep.subr.mxu0 0.0
  %1307 = vmatpush1.xpose.msra.mxu0 0.0
  %1308 = vmatprep.subr.mxu0 0.0
  %1309 = vmatpush1.xpose.msra.mxu0 0.0
  %1310 = vmatprep.subr.mxu0 0.0
  %1311 = vmatpush1.xpose.msra.mxu0 0.0
  %1312 = vmatprep.subr.mxu0 0.0
  %1313 = vmatpush1.xpose.msra.mxu0 0.0
  %1314 = vmatprep.subr.mxu0 0.0
  %1315 = vmatpush1.xpose.msra.mxu0 0.0
  %1316 = vmatprep.subr.mxu0 0.0
  %1317 = vmatpush1.xpose.msra.mxu0 0.0
  %1318 = vmatprep.subr.mxu0 0.0
  %1319 = vmatpush1.xpose.msra.mxu0 0.0
  %1320 = vmatprep.subr.mxu0 0.0
  %1321 = vmatpush1.xpose.msra.mxu0 0.0
  %1322 = vmatprep.subr.mxu0 0.0
  %1323 = vmatpush1.xpose.msra.mxu0 0.0
  %1324 = vmatprep.subr.mxu0 0.0
  %1325 = vmatpush1.xpose.msra.mxu0 0.0
  %1326 = vmatprep.subr.mxu0 0.0
  %1327 = vmatpush1.xpose.msra.mxu0 0.0
  %1328 = vmatprep.subr.mxu0 0.0
  %1329 = vmatpush1.xpose.msra.mxu0 0.0
  %1330 = vmatprep.subr.mxu0 0.0
  %1331 = vmatpush1.xpose.msra.mxu0 0.0
  %1332 = vmatprep.subr.mxu0 0.0
  %1333 = vmatpush1.xpose.msra.mxu0 0.0
  %1334 = vmatprep.mubr.f32.mxu0 0.0
  %1335 = vmatmul.mubr.f32.gmra.mrb[0].mxu0 %v240
  %v1336 = vpop.f32.mrb[0].mxu0
  %v1337 = vadd.f32 %v229, %v1336
  %v1338 = vpop.f32.mrb[0].mxu0
  %1339 = vdwg.mxu0
  %v1341 = vsel %vm134, %v197, 0
  %1343 = vmatprep.subr.mxu0 0.0
  %1344 = vmatpush1.xpose.msra.mxu0 %v1341
  %1345 = vmatprep.subr.mxu0 0.0
  %1346 = vmatpush1.xpose.msra.mxu0 0.0
  %1347 = vmatprep.subr.mxu0 0.0
  %1348 = vmatpush1.xpose.msra.mxu0 0.0
  %1349 = vmatprep.subr.mxu0 0.0
  %1350 = vmatpush1.xpose.msra.mxu0 0.0
  %1351 = vmatprep.subr.mxu0 0.0
  %1352 = vmatpush1.xpose.msra.mxu0 0.0
  %1353 = vmatprep.subr.mxu0 0.0
  %1354 = vmatpush1.xpose.msra.mxu0 0.0
  %1355 = vmatprep.subr.mxu0 0.0
  %1356 = vmatpush1.xpose.msra.mxu0 0.0
  %1357 = vmatprep.subr.mxu0 0.0
  %1358 = vmatpush1.xpose.msra.mxu0 0.0
  %1359 = vmatprep.subr.mxu0 0.0
  %1360 = vmatpush1.xpose.msra.mxu0 0.0
  %1361 = vmatprep.subr.mxu0 0.0
  %1362 = vmatpush1.xpose.msra.mxu0 0.0
  %1363 = vmatprep.subr.mxu0 0.0
  %1364 = vmatpush1.xpose.msra.mxu0 0.0
  %1365 = vmatprep.subr.mxu0 0.0
  %1366 = vmatpush1.xpose.msra.mxu0 0.0
  %1367 = vmatprep.subr.mxu0 0.0
  %1368 = vmatpush1.xpose.msra.mxu0 0.0
  %1369 = vmatprep.subr.mxu0 0.0
  %1370 = vmatpush1.xpose.msra.mxu0 0.0
  %1371 = vmatprep.subr.mxu0 0.0
  %1372 = vmatpush1.xpose.msra.mxu0 0.0
  %1373 = vmatprep.subr.mxu0 0.0
  %1374 = vmatpush1.xpose.msra.mxu0 0.0
  %1375 = vmatprep.subr.mxu0 0.0
  %1376 = vmatpush1.xpose.msra.mxu0 0.0
  %1377 = vmatprep.subr.mxu0 0.0
  %1378 = vmatpush1.xpose.msra.mxu0 0.0
  %1379 = vmatprep.subr.mxu0 0.0
  %1380 = vmatpush1.xpose.msra.mxu0 0.0
  %1381 = vmatprep.subr.mxu0 0.0
  %1382 = vmatpush1.xpose.msra.mxu0 0.0
  %1383 = vmatprep.subr.mxu0 0.0
  %1384 = vmatpush1.xpose.msra.mxu0 0.0
  %1385 = vmatprep.subr.mxu0 0.0
  %1386 = vmatpush1.xpose.msra.mxu0 0.0
  %1387 = vmatprep.subr.mxu0 0.0
  %1388 = vmatpush1.xpose.msra.mxu0 0.0
  %1389 = vmatprep.subr.mxu0 0.0
  %1390 = vmatpush1.xpose.msra.mxu0 0.0
  %1391 = vmatprep.subr.mxu0 0.0
  %1392 = vmatpush1.xpose.msra.mxu0 0.0
  %1393 = vmatprep.subr.mxu0 0.0
  %1394 = vmatpush1.xpose.msra.mxu0 0.0
  %1395 = vmatprep.subr.mxu0 0.0
  %1396 = vmatpush1.xpose.msra.mxu0 0.0
  %1397 = vmatprep.subr.mxu0 0.0
  %1398 = vmatpush1.xpose.msra.mxu0 0.0
  %1399 = vmatprep.subr.mxu0 0.0
  %1400 = vmatpush1.xpose.msra.mxu0 0.0
  %1401 = vmatprep.subr.mxu0 0.0
  %1402 = vmatpush1.xpose.msra.mxu0 0.0
  %1403 = vmatprep.subr.mxu0 0.0
  %1404 = vmatpush1.xpose.msra.mxu0 0.0
  %1405 = vmatprep.subr.mxu0 0.0
  %1406 = vmatpush1.xpose.msra.mxu0 0.0
  %1407 = vmatprep.mubr.f32.mxu0 0.0
  %1408 = vmatmul.mubr.f32.gmra.mrb[0].mxu0 %v316
  %v1409 = vpop.f32.mrb[0].mxu0
  %v1410 = vadd.f32 %v230, %v1409
  %v1411 = vpop.f32.mrb[0].mxu0
  %1412 = vdwg.mxu0
  %v1414 = vsel %vm134, %v198, 0
  %1416 = vmatprep.subr.mxu0 0.0
  %1417 = vmatpush1.xpose.msra.mxu0 %v1414
  %1418 = vmatprep.subr.mxu0 0.0
  %1419 = vmatpush1.xpose.msra.mxu0 0.0
  %1420 = vmatprep.subr.mxu0 0.0
  %1421 = vmatpush1.xpose.msra.mxu0 0.0
  %1422 = vmatprep.subr.mxu0 0.0
  %1423 = vmatpush1.xpose.msra.mxu0 0.0
  %1424 = vmatprep.subr.mxu0 0.0
  %1425 = vmatpush1.xpose.msra.mxu0 0.0
  %1426 = vmatprep.subr.mxu0 0.0
  %1427 = vmatpush1.xpose.msra.mxu0 0.0
  %1428 = vmatprep.subr.mxu0 0.0
  %1429 = vmatpush1.xpose.msra.mxu0 0.0
  %1430 = vmatprep.subr.mxu0 0.0
  %1431 = vmatpush1.xpose.msra.mxu0 0.0
  %1432 = vmatprep.subr.mxu0 0.0
  %1433 = vmatpush1.xpose.msra.mxu0 0.0
  %1434 = vmatprep.subr.mxu0 0.0
  %1435 = vmatpush1.xpose.msra.mxu0 0.0
  %1436 = vmatprep.subr.mxu0 0.0
  %1437 = vmatpush1.xpose.msra.mxu0 0.0
  %1438 = vmatprep.subr.mxu0 0.0
  %1439 = vmatpush1.xpose.msra.mxu0 0.0
  %1440 = vmatprep.subr.mxu0 0.0
  %1441 = vmatpush1.xpose.msra.mxu0 0.0
  %1442 = vmatprep.subr.mxu0 0.0
  %1443 = vmatpush1.xpose.msra.mxu0 0.0
  %1444 = vmatprep.subr.mxu0 0.0
  %1445 = vmatpush1.xpose.msra.mxu0 0.0
  %1446 = vmatprep.subr.mxu0 0.0
  %1447 = vmatpush1.xpose.msra.mxu0 0.0
  %1448 = vmatprep.subr.mxu0 0.0
  %1449 = vmatpush1.xpose.msra.mxu0 0.0
  %1450 = vmatprep.subr.mxu0 0.0
  %1451 = vmatpush1.xpose.msra.mxu0 0.0
  %1452 = vmatprep.subr.mxu0 0.0
  %1453 = vmatpush1.xpose.msra.mxu0 0.0
  %1454 = vmatprep.subr.mxu0 0.0
  %1455 = vmatpush1.xpose.msra.mxu0 0.0
  %1456 = vmatprep.subr.mxu0 0.0
  %1457 = vmatpush1.xpose.msra.mxu0 0.0
  %1458 = vmatprep.subr.mxu0 0.0
  %1459 = vmatpush1.xpose.msra.mxu0 0.0
  %1460 = vmatprep.subr.mxu0 0.0
  %1461 = vmatpush1.xpose.msra.mxu0 0.0
  %1462 = vmatprep.subr.mxu0 0.0
  %1463 = vmatpush1.xpose.msra.mxu0 0.0
  %1464 = vmatprep.subr.mxu0 0.0
  %1465 = vmatpush1.xpose.msra.mxu0 0.0
  %1466 = vmatprep.subr.mxu0 0.0
  %1467 = vmatpush1.xpose.msra.mxu0 0.0
  %1468 = vmatprep.subr.mxu0 0.0
  %1469 = vmatpush1.xpose.msra.mxu0 0.0
  %1470 = vmatprep.subr.mxu0 0.0
  %1471 = vmatpush1.xpose.msra.mxu0 0.0
  %1472 = vmatprep.subr.mxu0 0.0
  %1473 = vmatpush1.xpose.msra.mxu0 0.0
  %1474 = vmatprep.subr.mxu0 0.0
  %1475 = vmatpush1.xpose.msra.mxu0 0.0
  %1476 = vmatprep.subr.mxu0 0.0
  %1477 = vmatpush1.xpose.msra.mxu0 0.0
  %1478 = vmatprep.subr.mxu0 0.0
  %1479 = vmatpush1.xpose.msra.mxu0 0.0
  %1480 = vmatprep.mubr.f32.mxu0 0.0
  %1481 = vmatmul.mubr.f32.gmra.mrb[0].mxu0 %v240
  %v1482 = vpop.f32.mrb[0].mxu0
  %v1483 = vadd.f32 %v231, %v1482
  %v1484 = vpop.f32.mrb[0].mxu0
  %1485 = vdwg.mxu0
  %v1487 = vsel %vm134, %v199, 0
  %1489 = vmatprep.subr.mxu0 0.0
  %1490 = vmatpush1.xpose.msra.mxu0 %v1487
  %1491 = vmatprep.subr.mxu0 0.0
  %1492 = vmatpush1.xpose.msra.mxu0 0.0
  %1493 = vmatprep.subr.mxu0 0.0
  %1494 = vmatpush1.xpose.msra.mxu0 0.0
  %1495 = vmatprep.subr.mxu0 0.0
  %1496 = vmatpush1.xpose.msra.mxu0 0.0
  %1497 = vmatprep.subr.mxu0 0.0
  %1498 = vmatpush1.xpose.msra.mxu0 0.0
  %1499 = vmatprep.subr.mxu0 0.0
  %1500 = vmatpush1.xpose.msra.mxu0 0.0
  %1501 = vmatprep.subr.mxu0 0.0
  %1502 = vmatpush1.xpose.msra.mxu0 0.0
  %1503 = vmatprep.subr.mxu0 0.0
  %1504 = vmatpush1.xpose.msra.mxu0 0.0
  %1505 = vmatprep.subr.mxu0 0.0
  %1506 = vmatpush1.xpose.msra.mxu0 0.0
  %1507 = vmatprep.subr.mxu0 0.0
  %1508 = vmatpush1.xpose.msra.mxu0 0.0
  %1509 = vmatprep.subr.mxu0 0.0
  %1510 = vmatpush1.xpose.msra.mxu0 0.0
  %1511 = vmatprep.subr.mxu0 0.0
  %1512 = vmatpush1.xpose.msra.mxu0 0.0
  %1513 = vmatprep.subr.mxu0 0.0
  %1514 = vmatpush1.xpose.msra.mxu0 0.0
  %1515 = vmatprep.subr.mxu0 0.0
  %1516 = vmatpush1.xpose.msra.mxu0 0.0
  %1517 = vmatprep.subr.mxu0 0.0
  %1518 = vmatpush1.xpose.msra.mxu0 0.0
  %1519 = vmatprep.subr.mxu0 0.0
  %1520 = vmatpush1.xpose.msra.mxu0 0.0
  %1521 = vmatprep.subr.mxu0 0.0
  %1522 = vmatpush1.xpose.msra.mxu0 0.0
  %1523 = vmatprep.subr.mxu0 0.0
  %1524 = vmatpush1.xpose.msra.mxu0 0.0
  %1525 = vmatprep.subr.mxu0 0.0
  %1526 = vmatpush1.xpose.msra.mxu0 0.0
  %1527 = vmatprep.subr.mxu0 0.0
  %1528 = vmatpush1.xpose.msra.mxu0 0.0
  %1529 = vmatprep.subr.mxu0 0.0
  %1530 = vmatpush1.xpose.msra.mxu0 0.0
  %1531 = vmatprep.subr.mxu0 0.0
  %1532 = vmatpush1.xpose.msra.mxu0 0.0
  %1533 = vmatprep.subr.mxu0 0.0
  %1534 = vmatpush1.xpose.msra.mxu0 0.0
  %1535 = vmatprep.subr.mxu0 0.0
  %1536 = vmatpush1.xpose.msra.mxu0 0.0
  %1537 = vmatprep.subr.mxu0 0.0
  %1538 = vmatpush1.xpose.msra.mxu0 0.0
  %1539 = vmatprep.subr.mxu0 0.0
  %1540 = vmatpush1.xpose.msra.mxu0 0.0
  %1541 = vmatprep.subr.mxu0 0.0
  %1542 = vmatpush1.xpose.msra.mxu0 0.0
  %1543 = vmatprep.subr.mxu0 0.0
  %1544 = vmatpush1.xpose.msra.mxu0 0.0
  %1545 = vmatprep.subr.mxu0 0.0
  %1546 = vmatpush1.xpose.msra.mxu0 0.0
  %1547 = vmatprep.subr.mxu0 0.0
  %1548 = vmatpush1.xpose.msra.mxu0 0.0
  %1549 = vmatprep.subr.mxu0 0.0
  %1550 = vmatpush1.xpose.msra.mxu0 0.0
  %1551 = vmatprep.subr.mxu0 0.0
  %1552 = vmatpush1.xpose.msra.mxu0 0.0
  %1553 = vmatprep.mubr.f32.mxu0 0.0
  %1554 = vmatmul.mubr.f32.gmra.mrb[0].mxu0 %v316
  %v1555 = vpop.f32.mrb[0].mxu0
  %v1556 = vadd.f32 %v232, %v1555
  %v1557 = vpop.f32.mrb[0].mxu0
  %1558 = vdwg.mxu0
  %v1560 = vsel %vm134, %v200, 0
  %1562 = vmatprep.subr.mxu0 0.0
  %1563 = vmatpush1.xpose.msra.mxu0 %v1560
  %1564 = vmatprep.subr.mxu0 0.0
  %1565 = vmatpush1.xpose.msra.mxu0 0.0
  %1566 = vmatprep.subr.mxu0 0.0
  %1567 = vmatpush1.xpose.msra.mxu0 0.0
  %1568 = vmatprep.subr.mxu0 0.0
  %1569 = vmatpush1.xpose.msra.mxu0 0.0
  %1570 = vmatprep.subr.mxu0 0.0
  %1571 = vmatpush1.xpose.msra.mxu0 0.0
  %1572 = vmatprep.subr.mxu0 0.0
  %1573 = vmatpush1.xpose.msra.mxu0 0.0
  %1574 = vmatprep.subr.mxu0 0.0
  %1575 = vmatpush1.xpose.msra.mxu0 0.0
  %1576 = vmatprep.subr.mxu0 0.0
  %1577 = vmatpush1.xpose.msra.mxu0 0.0
  %1578 = vmatprep.subr.mxu0 0.0
  %1579 = vmatpush1.xpose.msra.mxu0 0.0
  %1580 = vmatprep.subr.mxu0 0.0
  %1581 = vmatpush1.xpose.msra.mxu0 0.0
  %1582 = vmatprep.subr.mxu0 0.0
  %1583 = vmatpush1.xpose.msra.mxu0 0.0
  %1584 = vmatprep.subr.mxu0 0.0
  %1585 = vmatpush1.xpose.msra.mxu0 0.0
  %1586 = vmatprep.subr.mxu0 0.0
  %1587 = vmatpush1.xpose.msra.mxu0 0.0
  %1588 = vmatprep.subr.mxu0 0.0
  %1589 = vmatpush1.xpose.msra.mxu0 0.0
  %1590 = vmatprep.subr.mxu0 0.0
  %1591 = vmatpush1.xpose.msra.mxu0 0.0
  %1592 = vmatprep.subr.mxu0 0.0
  %1593 = vmatpush1.xpose.msra.mxu0 0.0
  %1594 = vmatprep.subr.mxu0 0.0
  %1595 = vmatpush1.xpose.msra.mxu0 0.0
  %1596 = vmatprep.subr.mxu0 0.0
  %1597 = vmatpush1.xpose.msra.mxu0 0.0
  %1598 = vmatprep.subr.mxu0 0.0
  %1599 = vmatpush1.xpose.msra.mxu0 0.0
  %1600 = vmatprep.subr.mxu0 0.0
  %1601 = vmatpush1.xpose.msra.mxu0 0.0
  %1602 = vmatprep.subr.mxu0 0.0
  %1603 = vmatpush1.xpose.msra.mxu0 0.0
  %1604 = vmatprep.subr.mxu0 0.0
  %1605 = vmatpush1.xpose.msra.mxu0 0.0
  %1606 = vmatprep.subr.mxu0 0.0
  %1607 = vmatpush1.xpose.msra.mxu0 0.0
  %1608 = vmatprep.subr.mxu0 0.0
  %1609 = vmatpush1.xpose.msra.mxu0 0.0
  %1610 = vmatprep.subr.mxu0 0.0
  %1611 = vmatpush1.xpose.msra.mxu0 0.0
  %1612 = vmatprep.subr.mxu0 0.0
  %1613 = vmatpush1.xpose.msra.mxu0 0.0
  %1614 = vmatprep.subr.mxu0 0.0
  %1615 = vmatpush1.xpose.msra.mxu0 0.0
  %1616 = vmatprep.subr.mxu0 0.0
  %1617 = vmatpush1.xpose.msra.mxu0 0.0
  %1618 = vmatprep.subr.mxu0 0.0
  %1619 = vmatpush1.xpose.msra.mxu0 0.0
  %1620 = vmatprep.subr.mxu0 0.0
  %1621 = vmatpush1.xpose.msra.mxu0 0.0
  %1622 = vmatprep.subr.mxu0 0.0
  %1623 = vmatpush1.xpose.msra.mxu0 0.0
  %1624 = vmatprep.subr.mxu0 0.0
  %1625 = vmatpush1.xpose.msra.mxu0 0.0
  %1626 = vmatprep.mubr.f32.mxu0 0.0
  %1627 = vmatmul.mubr.f32.gmra.mrb[0].mxu0 %v240
  %v1628 = vpop.f32.mrb[0].mxu0
  %v1629 = vadd.f32 %v233, %v1628
  %v1630 = vpop.f32.mrb[0].mxu0
  %1631 = vdwg.mxu0
  %v1633 = vsel %vm134, %v201, 0
  %1635 = vmatprep.subr.mxu0 0.0
  %1636 = vmatpush1.xpose.msra.mxu0 %v1633
  %1637 = vmatprep.subr.mxu0 0.0
  %1638 = vmatpush1.xpose.msra.mxu0 0.0
  %1639 = vmatprep.subr.mxu0 0.0
  %1640 = vmatpush1.xpose.msra.mxu0 0.0
  %1641 = vmatprep.subr.mxu0 0.0
  %1642 = vmatpush1.xpose.msra.mxu0 0.0
  %1643 = vmatprep.subr.mxu0 0.0
  %1644 = vmatpush1.xpose.msra.mxu0 0.0
  %1645 = vmatprep.subr.mxu0 0.0
  %1646 = vmatpush1.xpose.msra.mxu0 0.0
  %1647 = vmatprep.subr.mxu0 0.0
  %1648 = vmatpush1.xpose.msra.mxu0 0.0
  %1649 = vmatprep.subr.mxu0 0.0
  %1650 = vmatpush1.xpose.msra.mxu0 0.0
  %1651 = vmatprep.subr.mxu0 0.0
  %1652 = vmatpush1.xpose.msra.mxu0 0.0
  %1653 = vmatprep.subr.mxu0 0.0
  %1654 = vmatpush1.xpose.msra.mxu0 0.0
  %1655 = vmatprep.subr.mxu0 0.0
  %1656 = vmatpush1.xpose.msra.mxu0 0.0
  %1657 = vmatprep.subr.mxu0 0.0
  %1658 = vmatpush1.xpose.msra.mxu0 0.0
  %1659 = vmatprep.subr.mxu0 0.0
  %1660 = vmatpush1.xpose.msra.mxu0 0.0
  %1661 = vmatprep.subr.mxu0 0.0
  %1662 = vmatpush1.xpose.msra.mxu0 0.0
  %1663 = vmatprep.subr.mxu0 0.0
  %1664 = vmatpush1.xpose.msra.mxu0 0.0
  %1665 = vmatprep.subr.mxu0 0.0
  %1666 = vmatpush1.xpose.msra.mxu0 0.0
  %1667 = vmatprep.subr.mxu0 0.0
  %1668 = vmatpush1.xpose.msra.mxu0 0.0
  %1669 = vmatprep.subr.mxu0 0.0
  %1670 = vmatpush1.xpose.msra.mxu0 0.0
  %1671 = vmatprep.subr.mxu0 0.0
  %1672 = vmatpush1.xpose.msra.mxu0 0.0
  %1673 = vmatprep.subr.mxu0 0.0
  %1674 = vmatpush1.xpose.msra.mxu0 0.0
  %1675 = vmatprep.subr.mxu0 0.0
  %1676 = vmatpush1.xpose.msra.mxu0 0.0
  %1677 = vmatprep.subr.mxu0 0.0
  %1678 = vmatpush1.xpose.msra.mxu0 0.0
  %1679 = vmatprep.subr.mxu0 0.0
  %1680 = vmatpush1.xpose.msra.mxu0 0.0
  %1681 = vmatprep.subr.mxu0 0.0
  %1682 = vmatpush1.xpose.msra.mxu0 0.0
  %1683 = vmatprep.subr.mxu0 0.0
  %1684 = vmatpush1.xpose.msra.mxu0 0.0
  %1685 = vmatprep.subr.mxu0 0.0
  %1686 = vmatpush1.xpose.msra.mxu0 0.0
  %1687 = vmatprep.subr.mxu0 0.0
  %1688 = vmatpush1.xpose.msra.mxu0 0.0
  %1689 = vmatprep.subr.mxu0 0.0
  %1690 = vmatpush1.xpose.msra.mxu0 0.0
  %1691 = vmatprep.subr.mxu0 0.0
  %1692 = vmatpush1.xpose.msra.mxu0 0.0
  %1693 = vmatprep.subr.mxu0 0.0
  %1694 = vmatpush1.xpose.msra.mxu0 0.0
  %1695 = vmatprep.subr.mxu0 0.0
  %1696 = vmatpush1.xpose.msra.mxu0 0.0
  %1697 = vmatprep.subr.mxu0 0.0
  %1698 = vmatpush1.xpose.msra.mxu0 0.0
  %1699 = vmatprep.mubr.f32.mxu0 0.0
  %1700 = vmatmul.mubr.f32.gmra.mrb[0].mxu0 %v316
  %v1701 = vpop.f32.mrb[0].mxu0
  %v1702 = vadd.f32 %v234, %v1701
  %v1703 = vpop.f32.mrb[0].mxu0
  %1704 = vdwg.mxu0
  %v1706 = vsel %vm134, %v202, 0
  %1708 = vmatprep.subr.mxu0 0.0
  %1709 = vmatpush1.xpose.msra.mxu0 %v1706
  %1710 = vmatprep.subr.mxu0 0.0
  %1711 = vmatpush1.xpose.msra.mxu0 0.0
  %1712 = vmatprep.subr.mxu0 0.0
  %1713 = vmatpush1.xpose.msra.mxu0 0.0
  %1714 = vmatprep.subr.mxu0 0.0
  %1715 = vmatpush1.xpose.msra.mxu0 0.0
  %1716 = vmatprep.subr.mxu0 0.0
  %1717 = vmatpush1.xpose.msra.mxu0 0.0
  %1718 = vmatprep.subr.mxu0 0.0
  %1719 = vmatpush1.xpose.msra.mxu0 0.0
  %1720 = vmatprep.subr.mxu0 0.0
  %1721 = vmatpush1.xpose.msra.mxu0 0.0
  %1722 = vmatprep.subr.mxu0 0.0
  %1723 = vmatpush1.xpose.msra.mxu0 0.0
  %1724 = vmatprep.subr.mxu0 0.0
  %1725 = vmatpush1.xpose.msra.mxu0 0.0
  %1726 = vmatprep.subr.mxu0 0.0
  %1727 = vmatpush1.xpose.msra.mxu0 0.0
  %1728 = vmatprep.subr.mxu0 0.0
  %1729 = vmatpush1.xpose.msra.mxu0 0.0
  %1730 = vmatprep.subr.mxu0 0.0
  %1731 = vmatpush1.xpose.msra.mxu0 0.0
  %1732 = vmatprep.subr.mxu0 0.0
  %1733 = vmatpush1.xpose.msra.mxu0 0.0
  %1734 = vmatprep.subr.mxu0 0.0
  %1735 = vmatpush1.xpose.msra.mxu0 0.0
  %1736 = vmatprep.subr.mxu0 0.0
  %1737 = vmatpush1.xpose.msra.mxu0 0.0
  %1738 = vmatprep.subr.mxu0 0.0
  %1739 = vmatpush1.xpose.msra.mxu0 0.0
  %1740 = vmatprep.subr.mxu0 0.0
  %1741 = vmatpush1.xpose.msra.mxu0 0.0
  %1742 = vmatprep.subr.mxu0 0.0
  %1743 = vmatpush1.xpose.msra.mxu0 0.0
  %1744 = vmatprep.subr.mxu0 0.0
  %1745 = vmatpush1.xpose.msra.mxu0 0.0
  %1746 = vmatprep.subr.mxu0 0.0
  %1747 = vmatpush1.xpose.msra.mxu0 0.0
  %1748 = vmatprep.subr.mxu0 0.0
  %1749 = vmatpush1.xpose.msra.mxu0 0.0
  %1750 = vmatprep.subr.mxu0 0.0
  %1751 = vmatpush1.xpose.msra.mxu0 0.0
  %1752 = vmatprep.subr.mxu0 0.0
  %1753 = vmatpush1.xpose.msra.mxu0 0.0
  %1754 = vmatprep.subr.mxu0 0.0
  %1755 = vmatpush1.xpose.msra.mxu0 0.0
  %1756 = vmatprep.subr.mxu0 0.0
  %1757 = vmatpush1.xpose.msra.mxu0 0.0
  %1758 = vmatprep.subr.mxu0 0.0
  %1759 = vmatpush1.xpose.msra.mxu0 0.0
  %1760 = vmatprep.subr.mxu0 0.0
  %1761 = vmatpush1.xpose.msra.mxu0 0.0
  %1762 = vmatprep.subr.mxu0 0.0
  %1763 = vmatpush1.xpose.msra.mxu0 0.0
  %1764 = vmatprep.subr.mxu0 0.0
  %1765 = vmatpush1.xpose.msra.mxu0 0.0
  %1766 = vmatprep.subr.mxu0 0.0
  %1767 = vmatpush1.xpose.msra.mxu0 0.0
  %1768 = vmatprep.subr.mxu0 0.0
  %1769 = vmatpush1.xpose.msra.mxu0 0.0
  %1770 = vmatprep.subr.mxu0 0.0
  %1771 = vmatpush1.xpose.msra.mxu0 0.0
  %1772 = vmatprep.mubr.f32.mxu0 0.0
  %1773 = vmatmul.mubr.f32.gmra.mrb[0].mxu0 %v240
  %v1774 = vpop.f32.mrb[0].mxu0
  %v1775 = vadd.f32 %v235, %v1774
  %v1776 = vpop.f32.mrb[0].mxu0
  %1777 = vdwg.mxu0
  %v1779 = vsel %vm134, %v203, 0
  %1781 = vmatprep.subr.mxu0 0.0
  %1782 = vmatpush1.xpose.msra.mxu0 %v1779
  %1783 = vmatprep.subr.mxu0 0.0
  %1784 = vmatpush1.xpose.msra.mxu0 0.0
  %1785 = vmatprep.subr.mxu0 0.0
  %1786 = vmatpush1.xpose.msra.mxu0 0.0
  %1787 = vmatprep.subr.mxu0 0.0
  %1788 = vmatpush1.xpose.msra.mxu0 0.0
  %1789 = vmatprep.subr.mxu0 0.0
  %1790 = vmatpush1.xpose.msra.mxu0 0.0
  %1791 = vmatprep.subr.mxu0 0.0
  %1792 = vmatpush1.xpose.msra.mxu0 0.0
  %1793 = vmatprep.subr.mxu0 0.0
  %1794 = vmatpush1.xpose.msra.mxu0 0.0
  %1795 = vmatprep.subr.mxu0 0.0
  %1796 = vmatpush1.xpose.msra.mxu0 0.0
  %1797 = vmatprep.subr.mxu0 0.0
  %1798 = vmatpush1.xpose.msra.mxu0 0.0
  %1799 = vmatprep.subr.mxu0 0.0
  %1800 = vmatpush1.xpose.msra.mxu0 0.0
  %1801 = vmatprep.subr.mxu0 0.0
  %1802 = vmatpush1.xpose.msra.mxu0 0.0
  %1803 = vmatprep.subr.mxu0 0.0
  %1804 = vmatpush1.xpose.msra.mxu0 0.0
  %1805 = vmatprep.subr.mxu0 0.0
  %1806 = vmatpush1.xpose.msra.mxu0 0.0
  %1807 = vmatprep.subr.mxu0 0.0
  %1808 = vmatpush1.xpose.msra.mxu0 0.0
  %1809 = vmatprep.subr.mxu0 0.0
  %1810 = vmatpush1.xpose.msra.mxu0 0.0
  %1811 = vmatprep.subr.mxu0 0.0
  %1812 = vmatpush1.xpose.msra.mxu0 0.0
  %1813 = vmatprep.subr.mxu0 0.0
  %1814 = vmatpush1.xpose.msra.mxu0 0.0
  %1815 = vmatprep.subr.mxu0 0.0
  %1816 = vmatpush1.xpose.msra.mxu0 0.0
  %1817 = vmatprep.subr.mxu0 0.0
  %1818 = vmatpush1.xpose.msra.mxu0 0.0
  %1819 = vmatprep.subr.mxu0 0.0
  %1820 = vmatpush1.xpose.msra.mxu0 0.0
  %1821 = vmatprep.subr.mxu0 0.0
  %1822 = vmatpush1.xpose.msra.mxu0 0.0
  %1823 = vmatprep.subr.mxu0 0.0
  %1824 = vmatpush1.xpose.msra.mxu0 0.0
  %1825 = vmatprep.subr.mxu0 0.0
  %1826 = vmatpush1.xpose.msra.mxu0 0.0
  %1827 = vmatprep.subr.mxu0 0.0
  %1828 = vmatpush1.xpose.msra.mxu0 0.0
  %1829 = vmatprep.subr.mxu0 0.0
  %1830 = vmatpush1.xpose.msra.mxu0 0.0
  %1831 = vmatprep.subr.mxu0 0.0
  %1832 = vmatpush1.xpose.msra.mxu0 0.0
  %1833 = vmatprep.subr.mxu0 0.0
  %1834 = vmatpush1.xpose.msra.mxu0 0.0
  %1835 = vmatprep.subr.mxu0 0.0
  %1836 = vmatpush1.xpose.msra.mxu0 0.0
  %1837 = vmatprep.subr.mxu0 0.0
  %1838 = vmatpush1.xpose.msra.mxu0 0.0
  %1839 = vmatprep.subr.mxu0 0.0
  %1840 = vmatpush1.xpose.msra.mxu0 0.0
  %1841 = vmatprep.subr.mxu0 0.0
  %1842 = vmatpush1.xpose.msra.mxu0 0.0
  %1843 = vmatprep.subr.mxu0 0.0
  %1844 = vmatpush1.xpose.msra.mxu0 0.0
  %1845 = vmatprep.mubr.f32.mxu0 0.0
  %1846 = vmatmul.mubr.f32.gmra.mrb[0].mxu0 %v316
  %v1847 = vpop.f32.mrb[0].mxu0
  %v1848 = vadd.f32 %v236, %v1847
  %v1849 = vpop.f32.mrb[0].mxu0
  %1850 = vdwg.mxu0
  %v1852 = vsel %vm134, %v204, 0
  %1854 = vmatprep.subr.mxu0 0.0
  %1855 = vmatpush1.xpose.msra.mxu0 %v1852
  %1856 = vmatprep.subr.mxu0 0.0
  %1857 = vmatpush1.xpose.msra.mxu0 0.0
  %1858 = vmatprep.subr.mxu0 0.0
  %1859 = vmatpush1.xpose.msra.mxu0 0.0
  %1860 = vmatprep.subr.mxu0 0.0
  %1861 = vmatpush1.xpose.msra.mxu0 0.0
  %1862 = vmatprep.subr.mxu0 0.0
  %1863 = vmatpush1.xpose.msra.mxu0 0.0
  %1864 = vmatprep.subr.mxu0 0.0
  %1865 = vmatpush1.xpose.msra.mxu0 0.0
  %1866 = vmatprep.subr.mxu0 0.0
  %1867 = vmatpush1.xpose.msra.mxu0 0.0
  %1868 = vmatprep.subr.mxu0 0.0
  %1869 = vmatpush1.xpose.msra.mxu0 0.0
  %1870 = vmatprep.subr.mxu0 0.0
  %1871 = vmatpush1.xpose.msra.mxu0 0.0
  %1872 = vmatprep.subr.mxu0 0.0
  %1873 = vmatpush1.xpose.msra.mxu0 0.0
  %1874 = vmatprep.subr.mxu0 0.0
  %1875 = vmatpush1.xpose.msra.mxu0 0.0
  %1876 = vmatprep.subr.mxu0 0.0
  %1877 = vmatpush1.xpose.msra.mxu0 0.0
  %1878 = vmatprep.subr.mxu0 0.0
  %1879 = vmatpush1.xpose.msra.mxu0 0.0
  %1880 = vmatprep.subr.mxu0 0.0
  %1881 = vmatpush1.xpose.msra.mxu0 0.0
  %1882 = vmatprep.subr.mxu0 0.0
  %1883 = vmatpush1.xpose.msra.mxu0 0.0
  %1884 = vmatprep.subr.mxu0 0.0
  %1885 = vmatpush1.xpose.msra.mxu0 0.0
  %1886 = vmatprep.subr.mxu0 0.0
  %1887 = vmatpush1.xpose.msra.mxu0 0.0
  %1888 = vmatprep.subr.mxu0 0.0
  %1889 = vmatpush1.xpose.msra.mxu0 0.0
  %1890 = vmatprep.subr.mxu0 0.0
  %1891 = vmatpush1.xpose.msra.mxu0 0.0
  %1892 = vmatprep.subr.mxu0 0.0
  %1893 = vmatpush1.xpose.msra.mxu0 0.0
  %1894 = vmatprep.subr.mxu0 0.0
  %1895 = vmatpush1.xpose.msra.mxu0 0.0
  %1896 = vmatprep.subr.mxu0 0.0
  %1897 = vmatpush1.xpose.msra.mxu0 0.0
  %1898 = vmatprep.subr.mxu0 0.0
  %1899 = vmatpush1.xpose.msra.mxu0 0.0
  %1900 = vmatprep.subr.mxu0 0.0
  %1901 = vmatpush1.xpose.msra.mxu0 0.0
  %1902 = vmatprep.subr.mxu0 0.0
  %1903 = vmatpush1.xpose.msra.mxu0 0.0
  %1904 = vmatprep.subr.mxu0 0.0
  %1905 = vmatpush1.xpose.msra.mxu0 0.0
  %1906 = vmatprep.subr.mxu0 0.0
  %1907 = vmatpush1.xpose.msra.mxu0 0.0
  %1908 = vmatprep.subr.mxu0 0.0
  %1909 = vmatpush1.xpose.msra.mxu0 0.0
  %1910 = vmatprep.subr.mxu0 0.0
  %1911 = vmatpush1.xpose.msra.mxu0 0.0
  %1912 = vmatprep.subr.mxu0 0.0
  %1913 = vmatpush1.xpose.msra.mxu0 0.0
  %1914 = vmatprep.subr.mxu0 0.0
  %1915 = vmatpush1.xpose.msra.mxu0 0.0
  %1916 = vmatprep.subr.mxu0 0.0
  %1917 = vmatpush1.xpose.msra.mxu0 0.0
  %1918 = vmatprep.mubr.f32.mxu0 0.0
  %1919 = vmatmul.mubr.f32.gmra.mrb[0].mxu0 %v240
  %v1920 = vpop.f32.mrb[0].mxu0
  %v1921 = vadd.f32 %v237, %v1920
  %v1922 = vpop.f32.mrb[0].mxu0
  %1923 = vdwg.mxu0
  %v1925 = vsel %vm134, %v205, 0
  %1927 = vmatprep.subr.mxu0 0.0
  %1928 = vmatpush1.xpose.msra.mxu0 %v1925
  %1929 = vmatprep.subr.mxu0 0.0
  %1930 = vmatpush1.xpose.msra.mxu0 0.0
  %1931 = vmatprep.subr.mxu0 0.0
  %1932 = vmatpush1.xpose.msra.mxu0 0.0
  %1933 = vmatprep.subr.mxu0 0.0
  %1934 = vmatpush1.xpose.msra.mxu0 0.0
  %1935 = vmatprep.subr.mxu0 0.0
  %1936 = vmatpush1.xpose.msra.mxu0 0.0
  %1937 = vmatprep.subr.mxu0 0.0
  %1938 = vmatpush1.xpose.msra.mxu0 0.0
  %1939 = vmatprep.subr.mxu0 0.0
  %1940 = vmatpush1.xpose.msra.mxu0 0.0
  %1941 = vmatprep.subr.mxu0 0.0
  %1942 = vmatpush1.xpose.msra.mxu0 0.0
  %1943 = vmatprep.subr.mxu0 0.0
  %1944 = vmatpush1.xpose.msra.mxu0 0.0
  %1945 = vmatprep.subr.mxu0 0.0
  %1946 = vmatpush1.xpose.msra.mxu0 0.0
  %1947 = vmatprep.subr.mxu0 0.0
  %1948 = vmatpush1.xpose.msra.mxu0 0.0
  %1949 = vmatprep.subr.mxu0 0.0
  %1950 = vmatpush1.xpose.msra.mxu0 0.0
  %1951 = vmatprep.subr.mxu0 0.0
  %1952 = vmatpush1.xpose.msra.mxu0 0.0
  %1953 = vmatprep.subr.mxu0 0.0
  %1954 = vmatpush1.xpose.msra.mxu0 0.0
  %1955 = vmatprep.subr.mxu0 0.0
  %1956 = vmatpush1.xpose.msra.mxu0 0.0
  %1957 = vmatprep.subr.mxu0 0.0
  %1958 = vmatpush1.xpose.msra.mxu0 0.0
  %1959 = vmatprep.subr.mxu0 0.0
  %1960 = vmatpush1.xpose.msra.mxu0 0.0
  %1961 = vmatprep.subr.mxu0 0.0
  %1962 = vmatpush1.xpose.msra.mxu0 0.0
  %1963 = vmatprep.subr.mxu0 0.0
  %1964 = vmatpush1.xpose.msra.mxu0 0.0
  %1965 = vmatprep.subr.mxu0 0.0
  %1966 = vmatpush1.xpose.msra.mxu0 0.0
  %1967 = vmatprep.subr.mxu0 0.0
  %1968 = vmatpush1.xpose.msra.mxu0 0.0
  %1969 = vmatprep.subr.mxu0 0.0
  %1970 = vmatpush1.xpose.msra.mxu0 0.0
  %1971 = vmatprep.subr.mxu0 0.0
  %1972 = vmatpush1.xpose.msra.mxu0 0.0
  %1973 = vmatprep.subr.mxu0 0.0
  %1974 = vmatpush1.xpose.msra.mxu0 0.0
  %1975 = vmatprep.subr.mxu0 0.0
  %1976 = vmatpush1.xpose.msra.mxu0 0.0
  %1977 = vmatprep.subr.mxu0 0.0
  %1978 = vmatpush1.xpose.msra.mxu0 0.0
  %1979 = vmatprep.subr.mxu0 0.0
  %1980 = vmatpush1.xpose.msra.mxu0 0.0
  %1981 = vmatprep.subr.mxu0 0.0
  %1982 = vmatpush1.xpose.msra.mxu0 0.0
  %1983 = vmatprep.subr.mxu0 0.0
  %1984 = vmatpush1.xpose.msra.mxu0 0.0
  %1985 = vmatprep.subr.mxu0 0.0
  %1986 = vmatpush1.xpose.msra.mxu0 0.0
  %1987 = vmatprep.subr.mxu0 0.0
  %1988 = vmatpush1.xpose.msra.mxu0 0.0
  %1989 = vmatprep.subr.mxu0 0.0
  %1990 = vmatpush1.xpose.msra.mxu0 0.0
  %1991 = vmatprep.mubr.f32.mxu0 0.0
  %1992 = vmatmul.mubr.f32.gmra.mrb[0].mxu0 %v316
  %v1993 = vpop.f32.mrb[0].mxu0
  %v1994 = vadd.f32 %v238, %v1993
  %v1995 = vpop.f32.mrb[0].mxu0
  %1996 = vdwg.mxu0
  %v1999 = vlaneseq
  %v2000 = vshrl.u32 %v1999, 7
  %v2001 = vsub.s32 0, %v2000
  %v2002 = vrot.slane %v180, %v2001
  %v2003 = vlaneseq
  %v2004 = vshrl.u32 %v2003, 7
  %v2005 = vsub.s32 0, %v2004
  %v2006 = vrot.slane %v181, %v2005
  %vm2009 = vcmask 64512
  %v2011 = vsel %vm2009, %v312, 0
  %v2014 = vsel %vm2009, %v899, 0
  %2016 = vmatprep.subr.mxu0 0.0
  %2017 = vmatpush1.xpose.msra.mxu0 %v2014
  %2018 = vmatprep.subr.mxu0 0.0
  %2019 = vmatpush1.xpose.msra.mxu0 0.0
  %2020 = vmatprep.subr.mxu0 0.0
  %2021 = vmatpush1.xpose.msra.mxu0 0.0
  %2022 = vmatprep.subr.mxu0 0.0
  %2023 = vmatpush1.xpose.msra.mxu0 0.0
  %2024 = vmatprep.subr.mxu0 0.0
  %2025 = vmatpush1.xpose.msra.mxu0 0.0
  %2026 = vmatprep.subr.mxu0 0.0
  %2027 = vmatpush1.xpose.msra.mxu0 0.0
  %2028 = vmatprep.subr.mxu0 0.0
  %2029 = vmatpush1.xpose.msra.mxu0 0.0
  %2030 = vmatprep.subr.mxu0 0.0
  %2031 = vmatpush1.xpose.msra.mxu0 0.0
  %2032 = vmatprep.subr.mxu0 0.0
  %2033 = vmatpush1.xpose.msra.mxu0 0.0
  %2034 = vmatprep.subr.mxu0 0.0
  %2035 = vmatpush1.xpose.msra.mxu0 0.0
  %2036 = vmatprep.subr.mxu0 0.0
  %2037 = vmatpush1.xpose.msra.mxu0 0.0
  %2038 = vmatprep.subr.mxu0 0.0
  %2039 = vmatpush1.xpose.msra.mxu0 0.0
  %2040 = vmatprep.subr.mxu0 0.0
  %2041 = vmatpush1.xpose.msra.mxu0 0.0
  %2042 = vmatprep.subr.mxu0 0.0
  %2043 = vmatpush1.xpose.msra.mxu0 0.0
  %2044 = vmatprep.subr.mxu0 0.0
  %2045 = vmatpush1.xpose.msra.mxu0 0.0
  %2046 = vmatprep.subr.mxu0 0.0
  %2047 = vmatpush1.xpose.msra.mxu0 0.0
  %2048 = vmatprep.subr.mxu0 0.0
  %2049 = vmatpush1.xpose.msra.mxu0 0.0
  %2050 = vmatprep.subr.mxu0 0.0
  %2051 = vmatpush1.xpose.msra.mxu0 0.0
  %2052 = vmatprep.subr.mxu0 0.0
  %2053 = vmatpush1.xpose.msra.mxu0 0.0
  %2054 = vmatprep.subr.mxu0 0.0
  %2055 = vmatpush1.xpose.msra.mxu0 0.0
  %2056 = vmatprep.subr.mxu0 0.0
  %2057 = vmatpush1.xpose.msra.mxu0 0.0
  %2058 = vmatprep.subr.mxu0 0.0
  %2059 = vmatpush1.xpose.msra.mxu0 0.0
  %2060 = vmatprep.subr.mxu0 0.0
  %2061 = vmatpush1.xpose.msra.mxu0 0.0
  %2062 = vmatprep.subr.mxu0 0.0
  %2063 = vmatpush1.xpose.msra.mxu0 0.0
  %2064 = vmatprep.subr.mxu0 0.0
  %2065 = vmatpush1.xpose.msra.mxu0 0.0
  %2066 = vmatprep.subr.mxu0 0.0
  %2067 = vmatpush1.xpose.msra.mxu0 0.0
  %2068 = vmatprep.subr.mxu0 0.0
  %2069 = vmatpush1.xpose.msra.mxu0 0.0
  %2070 = vmatprep.subr.mxu0 0.0
  %2071 = vmatpush1.xpose.msra.mxu0 0.0
  %2072 = vmatprep.subr.mxu0 0.0
  %2073 = vmatpush1.xpose.msra.mxu0 0.0
  %2074 = vmatprep.subr.mxu0 0.0
  %2075 = vmatpush1.xpose.msra.mxu0 0.0
  %2076 = vmatprep.subr.mxu0 0.0
  %2077 = vmatpush1.xpose.msra.mxu0 0.0
  %2078 = vmatprep.subr.mxu0 0.0
  %2079 = vmatpush1.xpose.msra.mxu0 0.0
  %2080 = vmatprep.mubr.f32.mxu0 0.0
  %2081 = vmatmul.mubr.f32.gmra.mrb[0].mxu0 %v2011
  %v2082 = vpop.f32.mrb[0].mxu0
  %v2083 = vadd.f32 %v2002, %v2082
  %v2084 = vpop.f32.mrb[0].mxu0
  %2085 = vdwg.mxu0
  %v2087 = vsel %vm2009, %v388, 0
  %v2090 = vsel %vm2009, %v972, 0
  %2092 = vmatprep.subr.mxu0 0.0
  %2093 = vmatpush1.xpose.msra.mxu0 %v2090
  %2094 = vmatprep.subr.mxu0 0.0
  %2095 = vmatpush1.xpose.msra.mxu0 0.0
  %2096 = vmatprep.subr.mxu0 0.0
  %2097 = vmatpush1.xpose.msra.mxu0 0.0
  %2098 = vmatprep.subr.mxu0 0.0
  %2099 = vmatpush1.xpose.msra.mxu0 0.0
  %2100 = vmatprep.subr.mxu0 0.0
  %2101 = vmatpush1.xpose.msra.mxu0 0.0
  %2102 = vmatprep.subr.mxu0 0.0
  %2103 = vmatpush1.xpose.msra.mxu0 0.0
  %2104 = vmatprep.subr.mxu0 0.0
  %2105 = vmatpush1.xpose.msra.mxu0 0.0
  %2106 = vmatprep.subr.mxu0 0.0
  %2107 = vmatpush1.xpose.msra.mxu0 0.0
  %2108 = vmatprep.subr.mxu0 0.0
  %2109 = vmatpush1.xpose.msra.mxu0 0.0
  %2110 = vmatprep.subr.mxu0 0.0
  %2111 = vmatpush1.xpose.msra.mxu0 0.0
  %2112 = vmatprep.subr.mxu0 0.0
  %2113 = vmatpush1.xpose.msra.mxu0 0.0
  %2114 = vmatprep.subr.mxu0 0.0
  %2115 = vmatpush1.xpose.msra.mxu0 0.0
  %2116 = vmatprep.subr.mxu0 0.0
  %2117 = vmatpush1.xpose.msra.mxu0 0.0
  %2118 = vmatprep.subr.mxu0 0.0
  %2119 = vmatpush1.xpose.msra.mxu0 0.0
  %2120 = vmatprep.subr.mxu0 0.0
  %2121 = vmatpush1.xpose.msra.mxu0 0.0
  %2122 = vmatprep.subr.mxu0 0.0
  %2123 = vmatpush1.xpose.msra.mxu0 0.0
  %2124 = vmatprep.subr.mxu0 0.0
  %2125 = vmatpush1.xpose.msra.mxu0 0.0
  %2126 = vmatprep.subr.mxu0 0.0
  %2127 = vmatpush1.xpose.msra.mxu0 0.0
  %2128 = vmatprep.subr.mxu0 0.0
  %2129 = vmatpush1.xpose.msra.mxu0 0.0
  %2130 = vmatprep.subr.mxu0 0.0
  %2131 = vmatpush1.xpose.msra.mxu0 0.0
  %2132 = vmatprep.subr.mxu0 0.0
  %2133 = vmatpush1.xpose.msra.mxu0 0.0
  %2134 = vmatprep.subr.mxu0 0.0
  %2135 = vmatpush1.xpose.msra.mxu0 0.0
  %2136 = vmatprep.subr.mxu0 0.0
  %2137 = vmatpush1.xpose.msra.mxu0 0.0
  %2138 = vmatprep.subr.mxu0 0.0
  %2139 = vmatpush1.xpose.msra.mxu0 0.0
  %2140 = vmatprep.subr.mxu0 0.0
  %2141 = vmatpush1.xpose.msra.mxu0 0.0
  %2142 = vmatprep.subr.mxu0 0.0
  %2143 = vmatpush1.xpose.msra.mxu0 0.0
  %2144 = vmatprep.subr.mxu0 0.0
  %2145 = vmatpush1.xpose.msra.mxu0 0.0
  %2146 = vmatprep.subr.mxu0 0.0
  %2147 = vmatpush1.xpose.msra.mxu0 0.0
  %2148 = vmatprep.subr.mxu0 0.0
  %2149 = vmatpush1.xpose.msra.mxu0 0.0
  %2150 = vmatprep.subr.mxu0 0.0
  %2151 = vmatpush1.xpose.msra.mxu0 0.0
  %2152 = vmatprep.subr.mxu0 0.0
  %2153 = vmatpush1.xpose.msra.mxu0 0.0
  %2154 = vmatprep.subr.mxu0 0.0
  %2155 = vmatpush1.xpose.msra.mxu0 0.0
  %2156 = vmatprep.mubr.f32.mxu0 0.0
  %2157 = vmatmul.mubr.f32.gmra.mrb[0].mxu0 %v2087
  %v2158 = vpop.f32.mrb[0].mxu0
  %v2159 = vadd.f32 %v2006, %v2158
  %v2160 = vpop.f32.mrb[0].mxu0
  %2161 = vdwg.mxu0
  %v2163 = vsel %vm2009, %v461, 0
  %v2166 = vsel %vm2009, %v1045, 0
  %2168 = vmatprep.subr.mxu0 0.0
  %2169 = vmatpush1.xpose.msra.mxu0 %v2166
  %2170 = vmatprep.subr.mxu0 0.0
  %2171 = vmatpush1.xpose.msra.mxu0 0.0
  %2172 = vmatprep.subr.mxu0 0.0
  %2173 = vmatpush1.xpose.msra.mxu0 0.0
  %2174 = vmatprep.subr.mxu0 0.0
  %2175 = vmatpush1.xpose.msra.mxu0 0.0
  %2176 = vmatprep.subr.mxu0 0.0
  %2177 = vmatpush1.xpose.msra.mxu0 0.0
  %2178 = vmatprep.subr.mxu0 0.0
  %2179 = vmatpush1.xpose.msra.mxu0 0.0
  %2180 = vmatprep.subr.mxu0 0.0
  %2181 = vmatpush1.xpose.msra.mxu0 0.0
  %2182 = vmatprep.subr.mxu0 0.0
  %2183 = vmatpush1.xpose.msra.mxu0 0.0
  %2184 = vmatprep.subr.mxu0 0.0
  %2185 = vmatpush1.xpose.msra.mxu0 0.0
  %2186 = vmatprep.subr.mxu0 0.0
  %2187 = vmatpush1.xpose.msra.mxu0 0.0
  %2188 = vmatprep.subr.mxu0 0.0
  %2189 = vmatpush1.xpose.msra.mxu0 0.0
  %2190 = vmatprep.subr.mxu0 0.0
  %2191 = vmatpush1.xpose.msra.mxu0 0.0
  %2192 = vmatprep.subr.mxu0 0.0
  %2193 = vmatpush1.xpose.msra.mxu0 0.0
  %2194 = vmatprep.subr.mxu0 0.0
  %2195 = vmatpush1.xpose.msra.mxu0 0.0
  %2196 = vmatprep.subr.mxu0 0.0
  %2197 = vmatpush1.xpose.msra.mxu0 0.0
  %2198 = vmatprep.subr.mxu0 0.0
  %2199 = vmatpush1.xpose.msra.mxu0 0.0
  %2200 = vmatprep.subr.mxu0 0.0
  %2201 = vmatpush1.xpose.msra.mxu0 0.0
  %2202 = vmatprep.subr.mxu0 0.0
  %2203 = vmatpush1.xpose.msra.mxu0 0.0
  %2204 = vmatprep.subr.mxu0 0.0
  %2205 = vmatpush1.xpose.msra.mxu0 0.0
  %2206 = vmatprep.subr.mxu0 0.0
  %2207 = vmatpush1.xpose.msra.mxu0 0.0
  %2208 = vmatprep.subr.mxu0 0.0
  %2209 = vmatpush1.xpose.msra.mxu0 0.0
  %2210 = vmatprep.subr.mxu0 0.0
  %2211 = vmatpush1.xpose.msra.mxu0 0.0
  %2212 = vmatprep.subr.mxu0 0.0
  %2213 = vmatpush1.xpose.msra.mxu0 0.0
  %2214 = vmatprep.subr.mxu0 0.0
  %2215 = vmatpush1.xpose.msra.mxu0 0.0
  %2216 = vmatprep.subr.mxu0 0.0
  %2217 = vmatpush1.xpose.msra.mxu0 0.0
  %2218 = vmatprep.subr.mxu0 0.0
  %2219 = vmatpush1.xpose.msra.mxu0 0.0
  %2220 = vmatprep.subr.mxu0 0.0
  %2221 = vmatpush1.xpose.msra.mxu0 0.0
  %2222 = vmatprep.subr.mxu0 0.0
  %2223 = vmatpush1.xpose.msra.mxu0 0.0
  %2224 = vmatprep.subr.mxu0 0.0
  %2225 = vmatpush1.xpose.msra.mxu0 0.0
  %2226 = vmatprep.subr.mxu0 0.0
  %2227 = vmatpush1.xpose.msra.mxu0 0.0
  %2228 = vmatprep.subr.mxu0 0.0
  %2229 = vmatpush1.xpose.msra.mxu0 0.0
  %2230 = vmatprep.subr.mxu0 0.0
  %2231 = vmatpush1.xpose.msra.mxu0 0.0
  %2232 = vmatprep.mubr.f32.mxu0 0.0
  %2233 = vmatmul.mubr.f32.gmra.mrb[0].mxu0 %v2163
  %v2234 = vpop.f32.mrb[0].mxu0
  %v2235 = vadd.f32 %v2002, %v2234
  %v2236 = vpop.f32.mrb[0].mxu0
  %2237 = vdwg.mxu0
  %v2239 = vsel %vm2009, %v534, 0
  %v2242 = vsel %vm2009, %v1118, 0
  %2244 = vmatprep.subr.mxu0 0.0
  %2245 = vmatpush1.xpose.msra.mxu0 %v2242
  %2246 = vmatprep.subr.mxu0 0.0
  %2247 = vmatpush1.xpose.msra.mxu0 0.0
  %2248 = vmatprep.subr.mxu0 0.0
  %2249 = vmatpush1.xpose.msra.mxu0 0.0
  %2250 = vmatprep.subr.mxu0 0.0
  %2251 = vmatpush1.xpose.msra.mxu0 0.0
  %2252 = vmatprep.subr.mxu0 0.0
  %2253 = vmatpush1.xpose.msra.mxu0 0.0
  %2254 = vmatprep.subr.mxu0 0.0
  %2255 = vmatpush1.xpose.msra.mxu0 0.0
  %2256 = vmatprep.subr.mxu0 0.0
  %2257 = vmatpush1.xpose.msra.mxu0 0.0
  %2258 = vmatprep.subr.mxu0 0.0
  %2259 = vmatpush1.xpose.msra.mxu0 0.0
  %2260 = vmatprep.subr.mxu0 0.0
  %2261 = vmatpush1.xpose.msra.mxu0 0.0
  %2262 = vmatprep.subr.mxu0 0.0
  %2263 = vmatpush1.xpose.msra.mxu0 0.0
  %2264 = vmatprep.subr.mxu0 0.0
  %2265 = vmatpush1.xpose.msra.mxu0 0.0
  %2266 = vmatprep.subr.mxu0 0.0
  %2267 = vmatpush1.xpose.msra.mxu0 0.0
  %2268 = vmatprep.subr.mxu0 0.0
  %2269 = vmatpush1.xpose.msra.mxu0 0.0
  %2270 = vmatprep.subr.mxu0 0.0
  %2271 = vmatpush1.xpose.msra.mxu0 0.0
  %2272 = vmatprep.subr.mxu0 0.0
  %2273 = vmatpush1.xpose.msra.mxu0 0.0
  %2274 = vmatprep.subr.mxu0 0.0
  %2275 = vmatpush1.xpose.msra.mxu0 0.0
  %2276 = vmatprep.subr.mxu0 0.0
  %2277 = vmatpush1.xpose.msra.mxu0 0.0
  %2278 = vmatprep.subr.mxu0 0.0
  %2279 = vmatpush1.xpose.msra.mxu0 0.0
  %2280 = vmatprep.subr.mxu0 0.0
  %2281 = vmatpush1.xpose.msra.mxu0 0.0
  %2282 = vmatprep.subr.mxu0 0.0
  %2283 = vmatpush1.xpose.msra.mxu0 0.0
  %2284 = vmatprep.subr.mxu0 0.0
  %2285 = vmatpush1.xpose.msra.mxu0 0.0
  %2286 = vmatprep.subr.mxu0 0.0
  %2287 = vmatpush1.xpose.msra.mxu0 0.0
  %2288 = vmatprep.subr.mxu0 0.0
  %2289 = vmatpush1.xpose.msra.mxu0 0.0
  %2290 = vmatprep.subr.mxu0 0.0
  %2291 = vmatpush1.xpose.msra.mxu0 0.0
  %2292 = vmatprep.subr.mxu0 0.0
  %2293 = vmatpush1.xpose.msra.mxu0 0.0
  %2294 = vmatprep.subr.mxu0 0.0
  %2295 = vmatpush1.xpose.msra.mxu0 0.0
  %2296 = vmatprep.subr.mxu0 0.0
  %2297 = vmatpush1.xpose.msra.mxu0 0.0
  %2298 = vmatprep.subr.mxu0 0.0
  %2299 = vmatpush1.xpose.msra.mxu0 0.0
  %2300 = vmatprep.subr.mxu0 0.0
  %2301 = vmatpush1.xpose.msra.mxu0 0.0
  %2302 = vmatprep.subr.mxu0 0.0
  %2303 = vmatpush1.xpose.msra.mxu0 0.0
  %2304 = vmatprep.subr.mxu0 0.0
  %2305 = vmatpush1.xpose.msra.mxu0 0.0
  %2306 = vmatprep.subr.mxu0 0.0
  %2307 = vmatpush1.xpose.msra.mxu0 0.0
  %2308 = vmatprep.mubr.f32.mxu0 0.0
  %2309 = vmatmul.mubr.f32.gmra.mrb[0].mxu0 %v2239
  %v2310 = vpop.f32.mrb[0].mxu0
  %v2311 = vadd.f32 %v2006, %v2310
  %v2312 = vpop.f32.mrb[0].mxu0
  %2313 = vdwg.mxu0
  %v2315 = vsel %vm2009, %v607, 0
  %v2318 = vsel %vm2009, %v1191, 0
  %2320 = vmatprep.subr.mxu0 0.0
  %2321 = vmatpush1.xpose.msra.mxu0 %v2318
  %2322 = vmatprep.subr.mxu0 0.0
  %2323 = vmatpush1.xpose.msra.mxu0 0.0
  %2324 = vmatprep.subr.mxu0 0.0
  %2325 = vmatpush1.xpose.msra.mxu0 0.0
  %2326 = vmatprep.subr.mxu0 0.0
  %2327 = vmatpush1.xpose.msra.mxu0 0.0
  %2328 = vmatprep.subr.mxu0 0.0
  %2329 = vmatpush1.xpose.msra.mxu0 0.0
  %2330 = vmatprep.subr.mxu0 0.0
  %2331 = vmatpush1.xpose.msra.mxu0 0.0
  %2332 = vmatprep.subr.mxu0 0.0
  %2333 = vmatpush1.xpose.msra.mxu0 0.0
  %2334 = vmatprep.subr.mxu0 0.0
  %2335 = vmatpush1.xpose.msra.mxu0 0.0
  %2336 = vmatprep.subr.mxu0 0.0
  %2337 = vmatpush1.xpose.msra.mxu0 0.0
  %2338 = vmatprep.subr.mxu0 0.0
  %2339 = vmatpush1.xpose.msra.mxu0 0.0
  %2340 = vmatprep.subr.mxu0 0.0
  %2341 = vmatpush1.xpose.msra.mxu0 0.0
  %2342 = vmatprep.subr.mxu0 0.0
  %2343 = vmatpush1.xpose.msra.mxu0 0.0
  %2344 = vmatprep.subr.mxu0 0.0
  %2345 = vmatpush1.xpose.msra.mxu0 0.0
  %2346 = vmatprep.subr.mxu0 0.0
  %2347 = vmatpush1.xpose.msra.mxu0 0.0
  %2348 = vmatprep.subr.mxu0 0.0
  %2349 = vmatpush1.xpose.msra.mxu0 0.0
  %2350 = vmatprep.subr.mxu0 0.0
  %2351 = vmatpush1.xpose.msra.mxu0 0.0
  %2352 = vmatprep.subr.mxu0 0.0
  %2353 = vmatpush1.xpose.msra.mxu0 0.0
  %2354 = vmatprep.subr.mxu0 0.0
  %2355 = vmatpush1.xpose.msra.mxu0 0.0
  %2356 = vmatprep.subr.mxu0 0.0
  %2357 = vmatpush1.xpose.msra.mxu0 0.0
  %2358 = vmatprep.subr.mxu0 0.0
  %2359 = vmatpush1.xpose.msra.mxu0 0.0
  %2360 = vmatprep.subr.mxu0 0.0
  %2361 = vmatpush1.xpose.msra.mxu0 0.0
  %2362 = vmatprep.subr.mxu0 0.0
  %2363 = vmatpush1.xpose.msra.mxu0 0.0
  %2364 = vmatprep.subr.mxu0 0.0
  %2365 = vmatpush1.xpose.msra.mxu0 0.0
  %2366 = vmatprep.subr.mxu0 0.0
  %2367 = vmatpush1.xpose.msra.mxu0 0.0
  %2368 = vmatprep.subr.mxu0 0.0
  %2369 = vmatpush1.xpose.msra.mxu0 0.0
  %2370 = vmatprep.subr.mxu0 0.0
  %2371 = vmatpush1.xpose.msra.mxu0 0.0
  %2372 = vmatprep.subr.mxu0 0.0
  %2373 = vmatpush1.xpose.msra.mxu0 0.0
  %2374 = vmatprep.subr.mxu0 0.0
  %2375 = vmatpush1.xpose.msra.mxu0 0.0
  %2376 = vmatprep.subr.mxu0 0.0
  %2377 = vmatpush1.xpose.msra.mxu0 0.0
  %2378 = vmatprep.subr.mxu0 0.0
  %2379 = vmatpush1.xpose.msra.mxu0 0.0
  %2380 = vmatprep.subr.mxu0 0.0
  %2381 = vmatpush1.xpose.msra.mxu0 0.0
  %2382 = vmatprep.subr.mxu0 0.0
  %2383 = vmatpush1.xpose.msra.mxu0 0.0
  %2384 = vmatprep.mubr.f32.mxu0 0.0
  %2385 = vmatmul.mubr.f32.gmra.mrb[0].mxu0 %v2315
  %v2386 = vpop.f32.mrb[0].mxu0
  %v2387 = vadd.f32 %v2002, %v2386
  %v2388 = vpop.f32.mrb[0].mxu0
  %2389 = vdwg.mxu0
  %v2391 = vsel %vm2009, %v680, 0
  %v2394 = vsel %vm2009, %v1264, 0
  %2396 = vmatprep.subr.mxu0 0.0
  %2397 = vmatpush1.xpose.msra.mxu0 %v2394
  %2398 = vmatprep.subr.mxu0 0.0
  %2399 = vmatpush1.xpose.msra.mxu0 0.0
  %2400 = vmatprep.subr.mxu0 0.0
  %2401 = vmatpush1.xpose.msra.mxu0 0.0
  %2402 = vmatprep.subr.mxu0 0.0
  %2403 = vmatpush1.xpose.msra.mxu0 0.0
  %2404 = vmatprep.subr.mxu0 0.0
  %2405 = vmatpush1.xpose.msra.mxu0 0.0
  %2406 = vmatprep.subr.mxu0 0.0
  %2407 = vmatpush1.xpose.msra.mxu0 0.0
  %2408 = vmatprep.subr.mxu0 0.0
  %2409 = vmatpush1.xpose.msra.mxu0 0.0
  %2410 = vmatprep.subr.mxu0 0.0
  %2411 = vmatpush1.xpose.msra.mxu0 0.0
  %2412 = vmatprep.subr.mxu0 0.0
  %2413 = vmatpush1.xpose.msra.mxu0 0.0
  %2414 = vmatprep.subr.mxu0 0.0
  %2415 = vmatpush1.xpose.msra.mxu0 0.0
  %2416 = vmatprep.subr.mxu0 0.0
  %2417 = vmatpush1.xpose.msra.mxu0 0.0
  %2418 = vmatprep.subr.mxu0 0.0
  %2419 = vmatpush1.xpose.msra.mxu0 0.0
  %2420 = vmatprep.subr.mxu0 0.0
  %2421 = vmatpush1.xpose.msra.mxu0 0.0
  %2422 = vmatprep.subr.mxu0 0.0
  %2423 = vmatpush1.xpose.msra.mxu0 0.0
  %2424 = vmatprep.subr.mxu0 0.0
  %2425 = vmatpush1.xpose.msra.mxu0 0.0
  %2426 = vmatprep.subr.mxu0 0.0
  %2427 = vmatpush1.xpose.msra.mxu0 0.0
  %2428 = vmatprep.subr.mxu0 0.0
  %2429 = vmatpush1.xpose.msra.mxu0 0.0
  %2430 = vmatprep.subr.mxu0 0.0
  %2431 = vmatpush1.xpose.msra.mxu0 0.0
  %2432 = vmatprep.subr.mxu0 0.0
  %2433 = vmatpush1.xpose.msra.mxu0 0.0
  %2434 = vmatprep.subr.mxu0 0.0
  %2435 = vmatpush1.xpose.msra.mxu0 0.0
  %2436 = vmatprep.subr.mxu0 0.0
  %2437 = vmatpush1.xpose.msra.mxu0 0.0
  %2438 = vmatprep.subr.mxu0 0.0
  %2439 = vmatpush1.xpose.msra.mxu0 0.0
  %2440 = vmatprep.subr.mxu0 0.0
  %2441 = vmatpush1.xpose.msra.mxu0 0.0
  %2442 = vmatprep.subr.mxu0 0.0
  %2443 = vmatpush1.xpose.msra.mxu0 0.0
  %2444 = vmatprep.subr.mxu0 0.0
  %2445 = vmatpush1.xpose.msra.mxu0 0.0
  %2446 = vmatprep.subr.mxu0 0.0
  %2447 = vmatpush1.xpose.msra.mxu0 0.0
  %2448 = vmatprep.subr.mxu0 0.0
  %2449 = vmatpush1.xpose.msra.mxu0 0.0
  %2450 = vmatprep.subr.mxu0 0.0
  %2451 = vmatpush1.xpose.msra.mxu0 0.0
  %2452 = vmatprep.subr.mxu0 0.0
  %2453 = vmatpush1.xpose.msra.mxu0 0.0
  %2454 = vmatprep.subr.mxu0 0.0
  %2455 = vmatpush1.xpose.msra.mxu0 0.0
  %2456 = vmatprep.subr.mxu0 0.0
  %2457 = vmatpush1.xpose.msra.mxu0 0.0
  %2458 = vmatprep.subr.mxu0 0.0
  %2459 = vmatpush1.xpose.msra.mxu0 0.0
  %2460 = vmatprep.mubr.f32.mxu0 0.0
  %2461 = vmatmul.mubr.f32.gmra.mrb[0].mxu0 %v2391
  %v2462 = vpop.f32.mrb[0].mxu0
  %v2463 = vadd.f32 %v2006, %v2462
  %v2464 = vpop.f32.mrb[0].mxu0
  %2465 = vdwg.mxu0
  %v2467 = vsel %vm2009, %v753, 0
  %v2470 = vsel %vm2009, %v1337, 0
  %2472 = vmatprep.subr.mxu0 0.0
  %2473 = vmatpush1.xpose.msra.mxu0 %v2470
  %2474 = vmatprep.subr.mxu0 0.0
  %2475 = vmatpush1.xpose.msra.mxu0 0.0
  %2476 = vmatprep.subr.mxu0 0.0
  %2477 = vmatpush1.xpose.msra.mxu0 0.0
  %2478 = vmatprep.subr.mxu0 0.0
  %2479 = vmatpush1.xpose.msra.mxu0 0.0
  %2480 = vmatprep.subr.mxu0 0.0
  %2481 = vmatpush1.xpose.msra.mxu0 0.0
  %2482 = vmatprep.subr.mxu0 0.0
  %2483 = vmatpush1.xpose.msra.mxu0 0.0
  %2484 = vmatprep.subr.mxu0 0.0
  %2485 = vmatpush1.xpose.msra.mxu0 0.0
  %2486 = vmatprep.subr.mxu0 0.0
  %2487 = vmatpush1.xpose.msra.mxu0 0.0
  %2488 = vmatprep.subr.mxu0 0.0
  %2489 = vmatpush1.xpose.msra.mxu0 0.0
  %2490 = vmatprep.subr.mxu0 0.0
  %2491 = vmatpush1.xpose.msra.mxu0 0.0
  %2492 = vmatprep.subr.mxu0 0.0
  %2493 = vmatpush1.xpose.msra.mxu0 0.0
  %2494 = vmatprep.subr.mxu0 0.0
  %2495 = vmatpush1.xpose.msra.mxu0 0.0
  %2496 = vmatprep.subr.mxu0 0.0
  %2497 = vmatpush1.xpose.msra.mxu0 0.0
  %2498 = vmatprep.subr.mxu0 0.0
  %2499 = vmatpush1.xpose.msra.mxu0 0.0
  %2500 = vmatprep.subr.mxu0 0.0
  %2501 = vmatpush1.xpose.msra.mxu0 0.0
  %2502 = vmatprep.subr.mxu0 0.0
  %2503 = vmatpush1.xpose.msra.mxu0 0.0
  %2504 = vmatprep.subr.mxu0 0.0
  %2505 = vmatpush1.xpose.msra.mxu0 0.0
  %2506 = vmatprep.subr.mxu0 0.0
  %2507 = vmatpush1.xpose.msra.mxu0 0.0
  %2508 = vmatprep.subr.mxu0 0.0
  %2509 = vmatpush1.xpose.msra.mxu0 0.0
  %2510 = vmatprep.subr.mxu0 0.0
  %2511 = vmatpush1.xpose.msra.mxu0 0.0
  %2512 = vmatprep.subr.mxu0 0.0
  %2513 = vmatpush1.xpose.msra.mxu0 0.0
  %2514 = vmatprep.subr.mxu0 0.0
  %2515 = vmatpush1.xpose.msra.mxu0 0.0
  %2516 = vmatprep.subr.mxu0 0.0
  %2517 = vmatpush1.xpose.msra.mxu0 0.0
  %2518 = vmatprep.subr.mxu0 0.0
  %2519 = vmatpush1.xpose.msra.mxu0 0.0
  %2520 = vmatprep.subr.mxu0 0.0
  %2521 = vmatpush1.xpose.msra.mxu0 0.0
  %2522 = vmatprep.subr.mxu0 0.0
  %2523 = vmatpush1.xpose.msra.mxu0 0.0
  %2524 = vmatprep.subr.mxu0 0.0
  %2525 = vmatpush1.xpose.msra.mxu0 0.0
  %2526 = vmatprep.subr.mxu0 0.0
  %2527 = vmatpush1.xpose.msra.mxu0 0.0
  %2528 = vmatprep.subr.mxu0 0.0
  %2529 = vmatpush1.xpose.msra.mxu0 0.0
  %2530 = vmatprep.subr.mxu0 0.0
  %2531 = vmatpush1.xpose.msra.mxu0 0.0
  %2532 = vmatprep.subr.mxu0 0.0
  %2533 = vmatpush1.xpose.msra.mxu0 0.0
  %2534 = vmatprep.subr.mxu0 0.0
  %2535 = vmatpush1.xpose.msra.mxu0 0.0
  %2536 = vmatprep.mubr.f32.mxu0 0.0
  %2537 = vmatmul.mubr.f32.gmra.mrb[0].mxu0 %v2467
  %v2538 = vpop.f32.mrb[0].mxu0
  %v2539 = vadd.f32 %v2002, %v2538
  %v2540 = vpop.f32.mrb[0].mxu0
  %2541 = vdwg.mxu0
  %v2543 = vsel %vm2009, %v826, 0
  %v2546 = vsel %vm2009, %v1410, 0
  %2548 = vmatprep.subr.mxu0 0.0
  %2549 = vmatpush1.xpose.msra.mxu0 %v2546
  %2550 = vmatprep.subr.mxu0 0.0
  %2551 = vmatpush1.xpose.msra.mxu0 0.0
  %2552 = vmatprep.subr.mxu0 0.0
  %2553 = vmatpush1.xpose.msra.mxu0 0.0
  %2554 = vmatprep.subr.mxu0 0.0
  %2555 = vmatpush1.xpose.msra.mxu0 0.0
  %2556 = vmatprep.subr.mxu0 0.0
  %2557 = vmatpush1.xpose.msra.mxu0 0.0
  %2558 = vmatprep.subr.mxu0 0.0
  %2559 = vmatpush1.xpose.msra.mxu0 0.0
  %2560 = vmatprep.subr.mxu0 0.0
  %2561 = vmatpush1.xpose.msra.mxu0 0.0
  %2562 = vmatprep.subr.mxu0 0.0
  %2563 = vmatpush1.xpose.msra.mxu0 0.0
  %2564 = vmatprep.subr.mxu0 0.0
  %2565 = vmatpush1.xpose.msra.mxu0 0.0
  %2566 = vmatprep.subr.mxu0 0.0
  %2567 = vmatpush1.xpose.msra.mxu0 0.0
  %2568 = vmatprep.subr.mxu0 0.0
  %2569 = vmatpush1.xpose.msra.mxu0 0.0
  %2570 = vmatprep.subr.mxu0 0.0
  %2571 = vmatpush1.xpose.msra.mxu0 0.0
  %2572 = vmatprep.subr.mxu0 0.0
  %2573 = vmatpush1.xpose.msra.mxu0 0.0
  %2574 = vmatprep.subr.mxu0 0.0
  %2575 = vmatpush1.xpose.msra.mxu0 0.0
  %2576 = vmatprep.subr.mxu0 0.0
  %2577 = vmatpush1.xpose.msra.mxu0 0.0
  %2578 = vmatprep.subr.mxu0 0.0
  %2579 = vmatpush1.xpose.msra.mxu0 0.0
  %2580 = vmatprep.subr.mxu0 0.0
  %2581 = vmatpush1.xpose.msra.mxu0 0.0
  %2582 = vmatprep.subr.mxu0 0.0
  %2583 = vmatpush1.xpose.msra.mxu0 0.0
  %2584 = vmatprep.subr.mxu0 0.0
  %2585 = vmatpush1.xpose.msra.mxu0 0.0
  %2586 = vmatprep.subr.mxu0 0.0
  %2587 = vmatpush1.xpose.msra.mxu0 0.0
  %2588 = vmatprep.subr.mxu0 0.0
  %2589 = vmatpush1.xpose.msra.mxu0 0.0
  %2590 = vmatprep.subr.mxu0 0.0
  %2591 = vmatpush1.xpose.msra.mxu0 0.0
  %2592 = vmatprep.subr.mxu0 0.0
  %2593 = vmatpush1.xpose.msra.mxu0 0.0
  %2594 = vmatprep.subr.mxu0 0.0
  %2595 = vmatpush1.xpose.msra.mxu0 0.0
  %2596 = vmatprep.subr.mxu0 0.0
  %2597 = vmatpush1.xpose.msra.mxu0 0.0
  %2598 = vmatprep.subr.mxu0 0.0
  %2599 = vmatpush1.xpose.msra.mxu0 0.0
  %2600 = vmatprep.subr.mxu0 0.0
  %2601 = vmatpush1.xpose.msra.mxu0 0.0
  %2602 = vmatprep.subr.mxu0 0.0
  %2603 = vmatpush1.xpose.msra.mxu0 0.0
  %2604 = vmatprep.subr.mxu0 0.0
  %2605 = vmatpush1.xpose.msra.mxu0 0.0
  %2606 = vmatprep.subr.mxu0 0.0
  %2607 = vmatpush1.xpose.msra.mxu0 0.0
  %2608 = vmatprep.subr.mxu0 0.0
  %2609 = vmatpush1.xpose.msra.mxu0 0.0
  %2610 = vmatprep.subr.mxu0 0.0
  %2611 = vmatpush1.xpose.msra.mxu0 0.0
  %2612 = vmatprep.mubr.f32.mxu0 0.0
  %2613 = vmatmul.mubr.f32.gmra.mrb[0].mxu0 %v2543
  %v2614 = vpop.f32.mrb[0].mxu0
  %v2615 = vadd.f32 %v2006, %v2614
  %v2616 = vpop.f32.mrb[0].mxu0
  %2617 = vdwg.mxu0
  %v2618 = vsel %vm2009, %v2083, -inf
  %2619 = vmax.xlane.f32.xlu0 %v2618
  %v2620 = vpop.xlane.xlu0 %2619
  %v2621 = vsel %vm2009, %v2159, -inf
  %2622 = vmax.xlane.f32.xlu0 %v2621
  %v2623 = vpop.xlane.xlu0 %2622
  %v2624 = vsel %vm2009, %v2235, -inf
  %2625 = vmax.xlane.f32.xlu0 %v2624
  %v2626 = vpop.xlane.xlu0 %2625
  %v2627 = vsel %vm2009, %v2311, -inf
  %2628 = vmax.xlane.f32.xlu0 %v2627
  %v2629 = vpop.xlane.xlu0 %2628
  %v2630 = vsel %vm2009, %v2387, -inf
  %2631 = vmax.xlane.f32.xlu0 %v2630
  %v2632 = vpop.xlane.xlu0 %2631
  %v2633 = vsel %vm2009, %v2463, -inf
  %2634 = vmax.xlane.f32.xlu0 %v2633
  %v2635 = vpop.xlane.xlu0 %2634
  %v2636 = vsel %vm2009, %v2539, -inf
  %2637 = vmax.xlane.f32.xlu0 %v2636
  %v2638 = vpop.xlane.xlu0 %2637
  %v2639 = vsel %vm2009, %v2615, -inf
  %2640 = vmax.xlane.f32.xlu0 %v2639
  %v2641 = vpop.xlane.xlu0 %2640
  %v2642 = vsub.f32 %v2083, %v2620
  %v2643 = vsub.f32 %v2159, %v2623
  %v2644 = vsub.f32 %v2235, %v2626
  %v2645 = vsub.f32 %v2311, %v2629
  %v2646 = vsub.f32 %v2387, %v2632
  %v2647 = vsub.f32 %v2463, %v2635
  %v2648 = vsub.f32 %v2539, %v2638
  %v2649 = vsub.f32 %v2615, %v2641
  %v2650 = vmul.f32 %v2642, 1.442695
  %v2651 = vpow.pop %v2650
  %v2652 = vmul.f32 %v2643, 1.442695
  %v2653 = vpow.pop %v2652
  %v2654 = vmul.f32 %v2644, 1.442695
  %v2655 = vpow.pop %v2654
  %v2656 = vmul.f32 %v2645, 1.442695
  %v2657 = vpow.pop %v2656
  %v2658 = vmul.f32 %v2646, 1.442695
  %v2659 = vpow.pop %v2658
  %v2660 = vmul.f32 %v2647, 1.442695
  %v2661 = vpow.pop %v2660
  %v2662 = vmul.f32 %v2648, 1.442695
  %v2663 = vpow.pop %v2662
  %v2664 = vmul.f32 %v2649, 1.442695
  %v2665 = vpow.pop %v2664
  %v2666 = vsel %vm2009, %v2651, 0.0
  %2667 = vadd.xlane.f32.xlu0 %v2666
  %v2668 = vpop.xlane.xlu0 %2667
  %v2669 = vsel %vm2009, %v2653, 0.0
  %2670 = vadd.xlane.f32.xlu0 %v2669
  %v2671 = vpop.xlane.xlu0 %2670
  %v2672 = vsel %vm2009, %v2655, 0.0
  %2673 = vadd.xlane.f32.xlu0 %v2672
  %v2674 = vpop.xlane.xlu0 %2673
  %v2675 = vsel %vm2009, %v2657, 0.0
  %2676 = vadd.xlane.f32.xlu0 %v2675
  %v2677 = vpop.xlane.xlu0 %2676
  %v2678 = vsel %vm2009, %v2659, 0.0
  %2679 = vadd.xlane.f32.xlu0 %v2678
  %v2680 = vpop.xlane.xlu0 %2679
  %v2681 = vsel %vm2009, %v2661, 0.0
  %2682 = vadd.xlane.f32.xlu0 %v2681
  %v2683 = vpop.xlane.xlu0 %2682
  %v2684 = vsel %vm2009, %v2663, 0.0
  %2685 = vadd.xlane.f32.xlu0 %v2684
  %v2686 = vpop.xlane.xlu0 %2685
  %v2687 = vsel %vm2009, %v2665, 0.0
  %2688 = vadd.xlane.f32.xlu0 %v2687
  %v2689 = vpop.xlane.xlu0 %2688
  %v2690 = vrcp.pop %v2668
  %v2691 = vrcp.pop %v2671
  %v2692 = vrcp.pop %v2674
  %v2693 = vrcp.pop %v2677
  %v2694 = vrcp.pop %v2680
  %v2695 = vrcp.pop %v2683
  %v2696 = vrcp.pop %v2686
  %v2697 = vrcp.pop %v2689
  %v2698 = vmul.f32 %v2651, %v2690
  %v2699 = vmul.f32 %v2653, %v2691
  %v2700 = vmul.f32 %v2655, %v2692
  %v2701 = vmul.f32 %v2657, %v2693
  %v2702 = vmul.f32 %v2659, %v2694
  %v2703 = vmul.f32 %v2661, %v2695
  %v2704 = vmul.f32 %v2663, %v2696
  %v2705 = vmul.f32 %v2665, %v2697
  %v2707 = vsel %vm2009, %v2698, 0
  %2709 = vmatprep.subr.mxu0 0.0
  %2710 = vmatpush1.msra.mxu0 %v1483
  %2711 = vmatprep.subr.mxu0 0.0
  %2712 = vmatpush1.msra.mxu0 0.0
  %2713 = vmatprep.subr.mxu0 0.0
  %2714 = vmatpush1.msra.mxu0 0.0
  %2715 = vmatprep.subr.mxu0 0.0
  %2716 = vmatpush1.msra.mxu0 0.0
  %2717 = vmatprep.subr.mxu0 0.0
  %2718 = vmatpush1.msra.mxu0 0.0
  %2719 = vmatprep.subr.mxu0 0.0
  %2720 = vmatpush1.msra.mxu0 0.0
  %2721 = vmatprep.subr.mxu0 0.0
  %2722 = vmatpush1.msra.mxu0 0.0
  %2723 = vmatprep.subr.mxu0 0.0
  %2724 = vmatpush1.msra.mxu0 0.0
  %2725 = vmatprep.subr.mxu0 0.0
  %2726 = vmatpush1.msra.mxu0 0.0
  %2727 = vmatprep.subr.mxu0 0.0
  %2728 = vmatpush1.msra.mxu0 0.0
  %2729 = vmatprep.subr.mxu0 0.0
  %2730 = vmatpush1.msra.mxu0 0.0
  %2731 = vmatprep.subr.mxu0 0.0
  %2732 = vmatpush1.msra.mxu0 0.0
  %2733 = vmatprep.subr.mxu0 0.0
  %2734 = vmatpush1.msra.mxu0 0.0
  %2735 = vmatprep.subr.mxu0 0.0
  %2736 = vmatpush1.msra.mxu0 0.0
  %2737 = vmatprep.subr.mxu0 0.0
  %2738 = vmatpush1.msra.mxu0 0.0
  %2739 = vmatprep.subr.mxu0 0.0
  %2740 = vmatpush1.msra.mxu0 0.0
  %2741 = vmatprep.subr.mxu0 0.0
  %2742 = vmatpush1.msra.mxu0 0.0
  %2743 = vmatprep.subr.mxu0 0.0
  %2744 = vmatpush1.msra.mxu0 0.0
  %2745 = vmatprep.subr.mxu0 0.0
  %2746 = vmatpush1.msra.mxu0 0.0
  %2747 = vmatprep.subr.mxu0 0.0
  %2748 = vmatpush1.msra.mxu0 0.0
  %2749 = vmatprep.subr.mxu0 0.0
  %2750 = vmatpush1.msra.mxu0 0.0
  %2751 = vmatprep.subr.mxu0 0.0
  %2752 = vmatpush1.msra.mxu0 0.0
  %2753 = vmatprep.subr.mxu0 0.0
  %2754 = vmatpush1.msra.mxu0 0.0
  %2755 = vmatprep.subr.mxu0 0.0
  %2756 = vmatpush1.msra.mxu0 0.0
  %2757 = vmatprep.subr.mxu0 0.0
  %2758 = vmatpush1.msra.mxu0 0.0
  %2759 = vmatprep.subr.mxu0 0.0
  %2760 = vmatpush1.msra.mxu0 0.0
  %2761 = vmatprep.subr.mxu0 0.0
  %2762 = vmatpush1.msra.mxu0 0.0
  %2763 = vmatprep.subr.mxu0 0.0
  %2764 = vmatpush1.msra.mxu0 0.0
  %2765 = vmatprep.subr.mxu0 0.0
  %2766 = vmatpush1.msra.mxu0 0.0
  %2767 = vmatprep.subr.mxu0 0.0
  %2768 = vmatpush1.msra.mxu0 0.0
  %2769 = vmatprep.subr.mxu0 0.0
  %2770 = vmatpush1.msra.mxu0 0.0
  %2771 = vmatprep.subr.mxu0 0.0
  %2772 = vmatpush1.msra.mxu0 0.0
  %2773 = vmatprep.mubr.f32.mxu0 0.0
  %2774 = vmatmul.mubr.f32.gmra.mrb[0].mxu0 %v2707
  %v2775 = vpop.f32.mrb[0].mxu0
  %v2776 = vadd.f32 0.0, %v2775
  %v2777 = vpop.f32.mrb[0].mxu0
  %2778 = vdwg.mxu0
  %v2780 = vsel %vm2009, %v2699, 0
  %2782 = vmatprep.subr.mxu0 0.0
  %2783 = vmatpush1.msra.mxu0 %v1556
  %2784 = vmatprep.subr.mxu0 0.0
  %2785 = vmatpush1.msra.mxu0 0.0
  %2786 = vmatprep.subr.mxu0 0.0
  %2787 = vmatpush1.msra.mxu0 0.0
  %2788 = vmatprep.subr.mxu0 0.0
  %2789 = vmatpush1.msra.mxu0 0.0
  %2790 = vmatprep.subr.mxu0 0.0
  %2791 = vmatpush1.msra.mxu0 0.0
  %2792 = vmatprep.subr.mxu0 0.0
  %2793 = vmatpush1.msra.mxu0 0.0
  %2794 = vmatprep.subr.mxu0 0.0
  %2795 = vmatpush1.msra.mxu0 0.0
  %2796 = vmatprep.subr.mxu0 0.0
  %2797 = vmatpush1.msra.mxu0 0.0
  %2798 = vmatprep.subr.mxu0 0.0
  %2799 = vmatpush1.msra.mxu0 0.0
  %2800 = vmatprep.subr.mxu0 0.0
  %2801 = vmatpush1.msra.mxu0 0.0
  %2802 = vmatprep.subr.mxu0 0.0
  %2803 = vmatpush1.msra.mxu0 0.0
  %2804 = vmatprep.subr.mxu0 0.0
  %2805 = vmatpush1.msra.mxu0 0.0
  %2806 = vmatprep.subr.mxu0 0.0
  %2807 = vmatpush1.msra.mxu0 0.0
  %2808 = vmatprep.subr.mxu0 0.0
  %2809 = vmatpush1.msra.mxu0 0.0
  %2810 = vmatprep.subr.mxu0 0.0
  %2811 = vmatpush1.msra.mxu0 0.0
  %2812 = vmatprep.subr.mxu0 0.0
  %2813 = vmatpush1.msra.mxu0 0.0
  %2814 = vmatprep.subr.mxu0 0.0
  %2815 = vmatpush1.msra.mxu0 0.0
  %2816 = vmatprep.subr.mxu0 0.0
  %2817 = vmatpush1.msra.mxu0 0.0
  %2818 = vmatprep.subr.mxu0 0.0
  %2819 = vmatpush1.msra.mxu0 0.0
  %2820 = vmatprep.subr.mxu0 0.0
  %2821 = vmatpush1.msra.mxu0 0.0
  %2822 = vmatprep.subr.mxu0 0.0
  %2823 = vmatpush1.msra.mxu0 0.0
  %2824 = vmatprep.subr.mxu0 0.0
  %2825 = vmatpush1.msra.mxu0 0.0
  %2826 = vmatprep.subr.mxu0 0.0
  %2827 = vmatpush1.msra.mxu0 0.0
  %2828 = vmatprep.subr.mxu0 0.0
  %2829 = vmatpush1.msra.mxu0 0.0
  %2830 = vmatprep.subr.mxu0 0.0
  %2831 = vmatpush1.msra.mxu0 0.0
  %2832 = vmatprep.subr.mxu0 0.0
  %2833 = vmatpush1.msra.mxu0 0.0
  %2834 = vmatprep.subr.mxu0 0.0
  %2835 = vmatpush1.msra.mxu0 0.0
  %2836 = vmatprep.subr.mxu0 0.0
  %2837 = vmatpush1.msra.mxu0 0.0
  %2838 = vmatprep.subr.mxu0 0.0
  %2839 = vmatpush1.msra.mxu0 0.0
  %2840 = vmatprep.subr.mxu0 0.0
  %2841 = vmatpush1.msra.mxu0 0.0
  %2842 = vmatprep.subr.mxu0 0.0
  %2843 = vmatpush1.msra.mxu0 0.0
  %2844 = vmatprep.subr.mxu0 0.0
  %2845 = vmatpush1.msra.mxu0 0.0
  %2846 = vmatprep.mubr.f32.mxu0 0.0
  %2847 = vmatmul.mubr.f32.gmra.mrb[0].mxu0 %v2780
  %v2848 = vpop.f32.mrb[0].mxu0
  %v2849 = vadd.f32 0.0, %v2848
  %v2850 = vpop.f32.mrb[0].mxu0
  %2851 = vdwg.mxu0
  %v2853 = vsel %vm2009, %v2700, 0
  %2855 = vmatprep.subr.mxu0 0.0
  %2856 = vmatpush1.msra.mxu0 %v1629
  %2857 = vmatprep.subr.mxu0 0.0
  %2858 = vmatpush1.msra.mxu0 0.0
  %2859 = vmatprep.subr.mxu0 0.0
  %2860 = vmatpush1.msra.mxu0 0.0
  %2861 = vmatprep.subr.mxu0 0.0
  %2862 = vmatpush1.msra.mxu0 0.0
  %2863 = vmatprep.subr.mxu0 0.0
  %2864 = vmatpush1.msra.mxu0 0.0
  %2865 = vmatprep.subr.mxu0 0.0
  %2866 = vmatpush1.msra.mxu0 0.0
  %2867 = vmatprep.subr.mxu0 0.0
  %2868 = vmatpush1.msra.mxu0 0.0
  %2869 = vmatprep.subr.mxu0 0.0
  %2870 = vmatpush1.msra.mxu0 0.0
  %2871 = vmatprep.subr.mxu0 0.0
  %2872 = vmatpush1.msra.mxu0 0.0
  %2873 = vmatprep.subr.mxu0 0.0
  %2874 = vmatpush1.msra.mxu0 0.0
  %2875 = vmatprep.subr.mxu0 0.0
  %2876 = vmatpush1.msra.mxu0 0.0
  %2877 = vmatprep.subr.mxu0 0.0
  %2878 = vmatpush1.msra.mxu0 0.0
  %2879 = vmatprep.subr.mxu0 0.0
  %2880 = vmatpush1.msra.mxu0 0.0
  %2881 = vmatprep.subr.mxu0 0.0
  %2882 = vmatpush1.msra.mxu0 0.0
  %2883 = vmatprep.subr.mxu0 0.0
  %2884 = vmatpush1.msra.mxu0 0.0
  %2885 = vmatprep.subr.mxu0 0.0
  %2886 = vmatpush1.msra.mxu0 0.0
  %2887 = vmatprep.subr.mxu0 0.0
  %2888 = vmatpush1.msra.mxu0 0.0
  %2889 = vmatprep.subr.mxu0 0.0
  %2890 = vmatpush1.msra.mxu0 0.0
  %2891 = vmatprep.subr.mxu0 0.0
  %2892 = vmatpush1.msra.mxu0 0.0
  %2893 = vmatprep.subr.mxu0 0.0
  %2894 = vmatpush1.msra.mxu0 0.0
  %2895 = vmatprep.subr.mxu0 0.0
  %2896 = vmatpush1.msra.mxu0 0.0
  %2897 = vmatprep.subr.mxu0 0.0
  %2898 = vmatpush1.msra.mxu0 0.0
  %2899 = vmatprep.subr.mxu0 0.0
  %2900 = vmatpush1.msra.mxu0 0.0
  %2901 = vmatprep.subr.mxu0 0.0
  %2902 = vmatpush1.msra.mxu0 0.0
  %2903 = vmatprep.subr.mxu0 0.0
  %2904 = vmatpush1.msra.mxu0 0.0
  %2905 = vmatprep.subr.mxu0 0.0
  %2906 = vmatpush1.msra.mxu0 0.0
  %2907 = vmatprep.subr.mxu0 0.0
  %2908 = vmatpush1.msra.mxu0 0.0
  %2909 = vmatprep.subr.mxu0 0.0
  %2910 = vmatpush1.msra.mxu0 0.0
  %2911 = vmatprep.subr.mxu0 0.0
  %2912 = vmatpush1.msra.mxu0 0.0
  %2913 = vmatprep.subr.mxu0 0.0
  %2914 = vmatpush1.msra.mxu0 0.0
  %2915 = vmatprep.subr.mxu0 0.0
  %2916 = vmatpush1.msra.mxu0 0.0
  %2917 = vmatprep.subr.mxu0 0.0
  %2918 = vmatpush1.msra.mxu0 0.0
  %2919 = vmatprep.mubr.f32.mxu0 0.0
  %2920 = vmatmul.mubr.f32.gmra.mrb[0].mxu0 %v2853
  %v2921 = vpop.f32.mrb[0].mxu0
  %v2922 = vadd.f32 0.0, %v2921
  %v2923 = vpop.f32.mrb[0].mxu0
  %2924 = vdwg.mxu0
  %v2926 = vsel %vm2009, %v2701, 0
  %2928 = vmatprep.subr.mxu0 0.0
  %2929 = vmatpush1.msra.mxu0 %v1702
  %2930 = vmatprep.subr.mxu0 0.0
  %2931 = vmatpush1.msra.mxu0 0.0
  %2932 = vmatprep.subr.mxu0 0.0
  %2933 = vmatpush1.msra.mxu0 0.0
  %2934 = vmatprep.subr.mxu0 0.0
  %2935 = vmatpush1.msra.mxu0 0.0
  %2936 = vmatprep.subr.mxu0 0.0
  %2937 = vmatpush1.msra.mxu0 0.0
  %2938 = vmatprep.subr.mxu0 0.0
  %2939 = vmatpush1.msra.mxu0 0.0
  %2940 = vmatprep.subr.mxu0 0.0
  %2941 = vmatpush1.msra.mxu0 0.0
  %2942 = vmatprep.subr.mxu0 0.0
  %2943 = vmatpush1.msra.mxu0 0.0
  %2944 = vmatprep.subr.mxu0 0.0
  %2945 = vmatpush1.msra.mxu0 0.0
  %2946 = vmatprep.subr.mxu0 0.0
  %2947 = vmatpush1.msra.mxu0 0.0
  %2948 = vmatprep.subr.mxu0 0.0
  %2949 = vmatpush1.msra.mxu0 0.0
  %2950 = vmatprep.subr.mxu0 0.0
  %2951 = vmatpush1.msra.mxu0 0.0
  %2952 = vmatprep.subr.mxu0 0.0
  %2953 = vmatpush1.msra.mxu0 0.0
  %2954 = vmatprep.subr.mxu0 0.0
  %2955 = vmatpush1.msra.mxu0 0.0
  %2956 = vmatprep.subr.mxu0 0.0
  %2957 = vmatpush1.msra.mxu0 0.0
  %2958 = vmatprep.subr.mxu0 0.0
  %2959 = vmatpush1.msra.mxu0 0.0
  %2960 = vmatprep.subr.mxu0 0.0
  %2961 = vmatpush1.msra.mxu0 0.0
  %2962 = vmatprep.subr.mxu0 0.0
  %2963 = vmatpush1.msra.mxu0 0.0
  %2964 = vmatprep.subr.mxu0 0.0
  %2965 = vmatpush1.msra.mxu0 0.0
  %2966 = vmatprep.subr.mxu0 0.0
  %2967 = vmatpush1.msra.mxu0 0.0
  %2968 = vmatprep.subr.mxu0 0.0
  %2969 = vmatpush1.msra.mxu0 0.0
  %2970 = vmatprep.subr.mxu0 0.0
  %2971 = vmatpush1.msra.mxu0 0.0
  %2972 = vmatprep.subr.mxu0 0.0
  %2973 = vmatpush1.msra.mxu0 0.0
  %2974 = vmatprep.subr.mxu0 0.0
  %2975 = vmatpush1.msra.mxu0 0.0
  %2976 = vmatprep.subr.mxu0 0.0
  %2977 = vmatpush1.msra.mxu0 0.0
  %2978 = vmatprep.subr.mxu0 0.0
  %2979 = vmatpush1.msra.mxu0 0.0
  %2980 = vmatprep.subr.mxu0 0.0
  %2981 = vmatpush1.msra.mxu0 0.0
  %2982 = vmatprep.subr.mxu0 0.0
  %2983 = vmatpush1.msra.mxu0 0.0
  %2984 = vmatprep.subr.mxu0 0.0
  %2985 = vmatpush1.msra.mxu0 0.0
  %2986 = vmatprep.subr.mxu0 0.0
  %2987 = vmatpush1.msra.mxu0 0.0
  %2988 = vmatprep.subr.mxu0 0.0
  %2989 = vmatpush1.msra.mxu0 0.0
  %2990 = vmatprep.subr.mxu0 0.0
  %2991 = vmatpush1.msra.mxu0 0.0
  %2992 = vmatprep.mubr.f32.mxu0 0.0
  %2993 = vmatmul.mubr.f32.gmra.mrb[0].mxu0 %v2926
  %v2994 = vpop.f32.mrb[0].mxu0
  %v2995 = vadd.f32 0.0, %v2994
  %v2996 = vpop.f32.mrb[0].mxu0
  %2997 = vdwg.mxu0
  %v2999 = vsel %vm2009, %v2702, 0
  %3001 = vmatprep.subr.mxu0 0.0
  %3002 = vmatpush1.msra.mxu0 %v1775
  %3003 = vmatprep.subr.mxu0 0.0
  %3004 = vmatpush1.msra.mxu0 0.0
  %3005 = vmatprep.subr.mxu0 0.0
  %3006 = vmatpush1.msra.mxu0 0.0
  %3007 = vmatprep.subr.mxu0 0.0
  %3008 = vmatpush1.msra.mxu0 0.0
  %3009 = vmatprep.subr.mxu0 0.0
  %3010 = vmatpush1.msra.mxu0 0.0
  %3011 = vmatprep.subr.mxu0 0.0
  %3012 = vmatpush1.msra.mxu0 0.0
  %3013 = vmatprep.subr.mxu0 0.0
  %3014 = vmatpush1.msra.mxu0 0.0
  %3015 = vmatprep.subr.mxu0 0.0
  %3016 = vmatpush1.msra.mxu0 0.0
  %3017 = vmatprep.subr.mxu0 0.0
  %3018 = vmatpush1.msra.mxu0 0.0
  %3019 = vmatprep.subr.mxu0 0.0
  %3020 = vmatpush1.msra.mxu0 0.0
  %3021 = vmatprep.subr.mxu0 0.0
  %3022 = vmatpush1.msra.mxu0 0.0
  %3023 = vmatprep.subr.mxu0 0.0
  %3024 = vmatpush1.msra.mxu0 0.0
  %3025 = vmatprep.subr.mxu0 0.0
  %3026 = vmatpush1.msra.mxu0 0.0
  %3027 = vmatprep.subr.mxu0 0.0
  %3028 = vmatpush1.msra.mxu0 0.0
  %3029 = vmatprep.subr.mxu0 0.0
  %3030 = vmatpush1.msra.mxu0 0.0
  %3031 = vmatprep.subr.mxu0 0.0
  %3032 = vmatpush1.msra.mxu0 0.0
  %3033 = vmatprep.subr.mxu0 0.0
  %3034 = vmatpush1.msra.mxu0 0.0
  %3035 = vmatprep.subr.mxu0 0.0
  %3036 = vmatpush1.msra.mxu0 0.0
  %3037 = vmatprep.subr.mxu0 0.0
  %3038 = vmatpush1.msra.mxu0 0.0
  %3039 = vmatprep.subr.mxu0 0.0
  %3040 = vmatpush1.msra.mxu0 0.0
  %3041 = vmatprep.subr.mxu0 0.0
  %3042 = vmatpush1.msra.mxu0 0.0
  %3043 = vmatprep.subr.mxu0 0.0
  %3044 = vmatpush1.msra.mxu0 0.0
  %3045 = vmatprep.subr.mxu0 0.0
  %3046 = vmatpush1.msra.mxu0 0.0
  %3047 = vmatprep.subr.mxu0 0.0
  %3048 = vmatpush1.msra.mxu0 0.0
  %3049 = vmatprep.subr.mxu0 0.0
  %3050 = vmatpush1.msra.mxu0 0.0
  %3051 = vmatprep.subr.mxu0 0.0
  %3052 = vmatpush1.msra.mxu0 0.0
  %3053 = vmatprep.subr.mxu0 0.0
  %3054 = vmatpush1.msra.mxu0 0.0
  %3055 = vmatprep.subr.mxu0 0.0
  %3056 = vmatpush1.msra.mxu0 0.0
  %3057 = vmatprep.subr.mxu0 0.0
  %3058 = vmatpush1.msra.mxu0 0.0
  %3059 = vmatprep.subr.mxu0 0.0
  %3060 = vmatpush1.msra.mxu0 0.0
  %3061 = vmatprep.subr.mxu0 0.0
  %3062 = vmatpush1.msra.mxu0 0.0
  %3063 = vmatprep.subr.mxu0 0.0
  %3064 = vmatpush1.msra.mxu0 0.0
  %3065 = vmatprep.mubr.f32.mxu0 0.0
  %3066 = vmatmul.mubr.f32.gmra.mrb[0].mxu0 %v2999
  %v3067 = vpop.f32.mrb[0].mxu0
  %v3068 = vadd.f32 0.0, %v3067
  %v3069 = vpop.f32.mrb[0].mxu0
  %3070 = vdwg.mxu0
  %v3072 = vsel %vm2009, %v2703, 0
  %3074 = vmatprep.subr.mxu0 0.0
  %3075 = vmatpush1.msra.mxu0 %v1848
  %3076 = vmatprep.subr.mxu0 0.0
  %3077 = vmatpush1.msra.mxu0 0.0
  %3078 = vmatprep.subr.mxu0 0.0
  %3079 = vmatpush1.msra.mxu0 0.0
  %3080 = vmatprep.subr.mxu0 0.0
  %3081 = vmatpush1.msra.mxu0 0.0
  %3082 = vmatprep.subr.mxu0 0.0
  %3083 = vmatpush1.msra.mxu0 0.0
  %3084 = vmatprep.subr.mxu0 0.0
  %3085 = vmatpush1.msra.mxu0 0.0
  %3086 = vmatprep.subr.mxu0 0.0
  %3087 = vmatpush1.msra.mxu0 0.0
  %3088 = vmatprep.subr.mxu0 0.0
  %3089 = vmatpush1.msra.mxu0 0.0
  %3090 = vmatprep.subr.mxu0 0.0
  %3091 = vmatpush1.msra.mxu0 0.0
  %3092 = vmatprep.subr.mxu0 0.0
  %3093 = vmatpush1.msra.mxu0 0.0
  %3094 = vmatprep.subr.mxu0 0.0
  %3095 = vmatpush1.msra.mxu0 0.0
  %3096 = vmatprep.subr.mxu0 0.0
  %3097 = vmatpush1.msra.mxu0 0.0
  %3098 = vmatprep.subr.mxu0 0.0
  %3099 = vmatpush1.msra.mxu0 0.0
  %3100 = vmatprep.subr.mxu0 0.0
  %3101 = vmatpush1.msra.mxu0 0.0
  %3102 = vmatprep.subr.mxu0 0.0
  %3103 = vmatpush1.msra.mxu0 0.0
  %3104 = vmatprep.subr.mxu0 0.0
  %3105 = vmatpush1.msra.mxu0 0.0
  %3106 = vmatprep.subr.mxu0 0.0
  %3107 = vmatpush1.msra.mxu0 0.0
  %3108 = vmatprep.subr.mxu0 0.0
  %3109 = vmatpush1.msra.mxu0 0.0
  %3110 = vmatprep.subr.mxu0 0.0
  %3111 = vmatpush1.msra.mxu0 0.0
  %3112 = vmatprep.subr.mxu0 0.0
  %3113 = vmatpush1.msra.mxu0 0.0
  %3114 = vmatprep.subr.mxu0 0.0
  %3115 = vmatpush1.msra.mxu0 0.0
  %3116 = vmatprep.subr.mxu0 0.0
  %3117 = vmatpush1.msra.mxu0 0.0
  %3118 = vmatprep.subr.mxu0 0.0
  %3119 = vmatpush1.msra.mxu0 0.0
  %3120 = vmatprep.subr.mxu0 0.0
  %3121 = vmatpush1.msra.mxu0 0.0
  %3122 = vmatprep.subr.mxu0 0.0
  %3123 = vmatpush1.msra.mxu0 0.0
  %3124 = vmatprep.subr.mxu0 0.0
  %3125 = vmatpush1.msra.mxu0 0.0
  %3126 = vmatprep.subr.mxu0 0.0
  %3127 = vmatpush1.msra.mxu0 0.0
  %3128 = vmatprep.subr.mxu0 0.0
  %3129 = vmatpush1.msra.mxu0 0.0
  %3130 = vmatprep.subr.mxu0 0.0
  %3131 = vmatpush1.msra.mxu0 0.0
  %3132 = vmatprep.subr.mxu0 0.0
  %3133 = vmatpush1.msra.mxu0 0.0
  %3134 = vmatprep.subr.mxu0 0.0
  %3135 = vmatpush1.msra.mxu0 0.0
  %3136 = vmatprep.subr.mxu0 0.0
  %3137 = vmatpush1.msra.mxu0 0.0
  %3138 = vmatprep.mubr.f32.mxu0 0.0
  %3139 = vmatmul.mubr.f32.gmra.mrb[0].mxu0 %v3072
  %v3140 = vpop.f32.mrb[0].mxu0
  %v3141 = vadd.f32 0.0, %v3140
  %v3142 = vpop.f32.mrb[0].mxu0
  %3143 = vdwg.mxu0
  %v3145 = vsel %vm2009, %v2704, 0
  %3147 = vmatprep.subr.mxu0 0.0
  %3148 = vmatpush1.msra.mxu0 %v1921
  %3149 = vmatprep.subr.mxu0 0.0
  %3150 = vmatpush1.msra.mxu0 0.0
  %3151 = vmatprep.subr.mxu0 0.0
  %3152 = vmatpush1.msra.mxu0 0.0
  %3153 = vmatprep.subr.mxu0 0.0
  %3154 = vmatpush1.msra.mxu0 0.0
  %3155 = vmatprep.subr.mxu0 0.0
  %3156 = vmatpush1.msra.mxu0 0.0
  %3157 = vmatprep.subr.mxu0 0.0
  %3158 = vmatpush1.msra.mxu0 0.0
  %3159 = vmatprep.subr.mxu0 0.0
  %3160 = vmatpush1.msra.mxu0 0.0
  %3161 = vmatprep.subr.mxu0 0.0
  %3162 = vmatpush1.msra.mxu0 0.0
  %3163 = vmatprep.subr.mxu0 0.0
  %3164 = vmatpush1.msra.mxu0 0.0
  %3165 = vmatprep.subr.mxu0 0.0
  %3166 = vmatpush1.msra.mxu0 0.0
  %3167 = vmatprep.subr.mxu0 0.0
  %3168 = vmatpush1.msra.mxu0 0.0
  %3169 = vmatprep.subr.mxu0 0.0
  %3170 = vmatpush1.msra.mxu0 0.0
  %3171 = vmatprep.subr.mxu0 0.0
  %3172 = vmatpush1.msra.mxu0 0.0
  %3173 = vmatprep.subr.mxu0 0.0
  %3174 = vmatpush1.msra.mxu0 0.0
  %3175 = vmatprep.subr.mxu0 0.0
  %3176 = vmatpush1.msra.mxu0 0.0
  %3177 = vmatprep.subr.mxu0 0.0
  %3178 = vmatpush1.msra.mxu0 0.0
  %3179 = vmatprep.subr.mxu0 0.0
  %3180 = vmatpush1.msra.mxu0 0.0
  %3181 = vmatprep.subr.mxu0 0.0
  %3182 = vmatpush1.msra.mxu0 0.0
  %3183 = vmatprep.subr.mxu0 0.0
  %3184 = vmatpush1.msra.mxu0 0.0
  %3185 = vmatprep.subr.mxu0 0.0
  %3186 = vmatpush1.msra.mxu0 0.0
  %3187 = vmatprep.subr.mxu0 0.0
  %3188 = vmatpush1.msra.mxu0 0.0
  %3189 = vmatprep.subr.mxu0 0.0
  %3190 = vmatpush1.msra.mxu0 0.0
  %3191 = vmatprep.subr.mxu0 0.0
  %3192 = vmatpush1.msra.mxu0 0.0
  %3193 = vmatprep.subr.mxu0 0.0
  %3194 = vmatpush1.msra.mxu0 0.0
  %3195 = vmatprep.subr.mxu0 0.0
  %3196 = vmatpush1.msra.mxu0 0.0
  %3197 = vmatprep.subr.mxu0 0.0
  %3198 = vmatpush1.msra.mxu0 0.0
  %3199 = vmatprep.subr.mxu0 0.0
  %3200 = vmatpush1.msra.mxu0 0.0
  %3201 = vmatprep.subr.mxu0 0.0
  %3202 = vmatpush1.msra.mxu0 0.0
  %3203 = vmatprep.subr.mxu0 0.0
  %3204 = vmatpush1.msra.mxu0 0.0
  %3205 = vmatprep.subr.mxu0 0.0
  %3206 = vmatpush1.msra.mxu0 0.0
  %3207 = vmatprep.subr.mxu0 0.0
  %3208 = vmatpush1.msra.mxu0 0.0
  %3209 = vmatprep.subr.mxu0 0.0
  %3210 = vmatpush1.msra.mxu0 0.0
  %3211 = vmatprep.mubr.f32.mxu0 0.0
  %3212 = vmatmul.mubr.f32.gmra.mrb[0].mxu0 %v3145
  %v3213 = vpop.f32.mrb[0].mxu0
  %v3214 = vadd.f32 0.0, %v3213
  %v3215 = vpop.f32.mrb[0].mxu0
  %3216 = vdwg.mxu0
  %v3218 = vsel %vm2009, %v2705, 0
  %3220 = vmatprep.subr.mxu0 0.0
  %3221 = vmatpush1.msra.mxu0 %v1994
  %3222 = vmatprep.subr.mxu0 0.0
  %3223 = vmatpush1.msra.mxu0 0.0
  %3224 = vmatprep.subr.mxu0 0.0
  %3225 = vmatpush1.msra.mxu0 0.0
  %3226 = vmatprep.subr.mxu0 0.0
  %3227 = vmatpush1.msra.mxu0 0.0
  %3228 = vmatprep.subr.mxu0 0.0
  %3229 = vmatpush1.msra.mxu0 0.0
  %3230 = vmatprep.subr.mxu0 0.0
  %3231 = vmatpush1.msra.mxu0 0.0
  %3232 = vmatprep.subr.mxu0 0.0
  %3233 = vmatpush1.msra.mxu0 0.0
  %3234 = vmatprep.subr.mxu0 0.0
  %3235 = vmatpush1.msra.mxu0 0.0
  %3236 = vmatprep.subr.mxu0 0.0
  %3237 = vmatpush1.msra.mxu0 0.0
  %3238 = vmatprep.subr.mxu0 0.0
  %3239 = vmatpush1.msra.mxu0 0.0
  %3240 = vmatprep.subr.mxu0 0.0
  %3241 = vmatpush1.msra.mxu0 0.0
  %3242 = vmatprep.subr.mxu0 0.0
  %3243 = vmatpush1.msra.mxu0 0.0
  %3244 = vmatprep.subr.mxu0 0.0
  %3245 = vmatpush1.msra.mxu0 0.0
  %3246 = vmatprep.subr.mxu0 0.0
  %3247 = vmatpush1.msra.mxu0 0.0
  %3248 = vmatprep.subr.mxu0 0.0
  %3249 = vmatpush1.msra.mxu0 0.0
  %3250 = vmatprep.subr.mxu0 0.0
  %3251 = vmatpush1.msra.mxu0 0.0
  %3252 = vmatprep.subr.mxu0 0.0
  %3253 = vmatpush1.msra.mxu0 0.0
  %3254 = vmatprep.subr.mxu0 0.0
  %3255 = vmatpush1.msra.mxu0 0.0
  %3256 = vmatprep.subr.mxu0 0.0
  %3257 = vmatpush1.msra.mxu0 0.0
  %3258 = vmatprep.subr.mxu0 0.0
  %3259 = vmatpush1.msra.mxu0 0.0
  %3260 = vmatprep.subr.mxu0 0.0
  %3261 = vmatpush1.msra.mxu0 0.0
  %3262 = vmatprep.subr.mxu0 0.0
  %3263 = vmatpush1.msra.mxu0 0.0
  %3264 = vmatprep.subr.mxu0 0.0
  %3265 = vmatpush1.msra.mxu0 0.0
  %3266 = vmatprep.subr.mxu0 0.0
  %3267 = vmatpush1.msra.mxu0 0.0
  %3268 = vmatprep.subr.mxu0 0.0
  %3269 = vmatpush1.msra.mxu0 0.0
  %3270 = vmatprep.subr.mxu0 0.0
  %3271 = vmatpush1.msra.mxu0 0.0
  %3272 = vmatprep.subr.mxu0 0.0
  %3273 = vmatpush1.msra.mxu0 0.0
  %3274 = vmatprep.subr.mxu0 0.0
  %3275 = vmatpush1.msra.mxu0 0.0
  %3276 = vmatprep.subr.mxu0 0.0
  %3277 = vmatpush1.msra.mxu0 0.0
  %3278 = vmatprep.subr.mxu0 0.0
  %3279 = vmatpush1.msra.mxu0 0.0
  %3280 = vmatprep.subr.mxu0 0.0
  %3281 = vmatpush1.msra.mxu0 0.0
  %3282 = vmatprep.subr.mxu0 0.0
  %3283 = vmatpush1.msra.mxu0 0.0
  %3284 = vmatprep.mubr.f32.mxu0 0.0
  %3285 = vmatmul.mubr.f32.gmra.mrb[0].mxu0 %v3218
  %v3286 = vpop.f32.mrb[0].mxu0
  %v3287 = vadd.f32 0.0, %v3286
  %v3288 = vpop.f32.mrb[0].mxu0
  %3289 = vdwg.mxu0
  %v3291 = vsel %vm2009, %v2776, 0
  %3293 = vmatprep.subr.mxu0 0.0
  %3294 = vmatpush1.msra.mxu0 %v207
  %3295 = vmatprep.subr.mxu0 0.0
  %3296 = vmatpush1.msra.mxu0 0.0
  %3297 = vmatprep.subr.mxu0 0.0
  %3298 = vmatpush1.msra.mxu0 0.0
  %3299 = vmatprep.subr.mxu0 0.0
  %3300 = vmatpush1.msra.mxu0 0.0
  %3301 = vmatprep.subr.mxu0 0.0
  %3302 = vmatpush1.msra.mxu0 0.0
  %3303 = vmatprep.subr.mxu0 0.0
  %3304 = vmatpush1.msra.mxu0 0.0
  %3305 = vmatprep.subr.mxu0 0.0
  %3306 = vmatpush1.msra.mxu0 0.0
  %3307 = vmatprep.subr.mxu0 0.0
  %3308 = vmatpush1.msra.mxu0 0.0
  %3309 = vmatprep.subr.mxu0 0.0
  %3310 = vmatpush1.msra.mxu0 0.0
  %3311 = vmatprep.subr.mxu0 0.0
  %3312 = vmatpush1.msra.mxu0 0.0
  %3313 = vmatprep.subr.mxu0 0.0
  %3314 = vmatpush1.msra.mxu0 0.0
  %3315 = vmatprep.subr.mxu0 0.0
  %3316 = vmatpush1.msra.mxu0 0.0
  %3317 = vmatprep.subr.mxu0 0.0
  %3318 = vmatpush1.msra.mxu0 0.0
  %3319 = vmatprep.subr.mxu0 0.0
  %3320 = vmatpush1.msra.mxu0 0.0
  %3321 = vmatprep.subr.mxu0 0.0
  %3322 = vmatpush1.msra.mxu0 0.0
  %3323 = vmatprep.subr.mxu0 0.0
  %3324 = vmatpush1.msra.mxu0 0.0
  %3325 = vmatprep.subr.mxu0 0.0
  %3326 = vmatpush1.msra.mxu0 0.0
  %3327 = vmatprep.subr.mxu0 0.0
  %3328 = vmatpush1.msra.mxu0 0.0
  %3329 = vmatprep.subr.mxu0 0.0
  %3330 = vmatpush1.msra.mxu0 0.0
  %3331 = vmatprep.subr.mxu0 0.0
  %3332 = vmatpush1.msra.mxu0 0.0
  %3333 = vmatprep.subr.mxu0 0.0
  %3334 = vmatpush1.msra.mxu0 0.0
  %3335 = vmatprep.subr.mxu0 0.0
  %3336 = vmatpush1.msra.mxu0 0.0
  %3337 = vmatprep.subr.mxu0 0.0
  %3338 = vmatpush1.msra.mxu0 0.0
  %3339 = vmatprep.subr.mxu0 0.0
  %3340 = vmatpush1.msra.mxu0 0.0
  %3341 = vmatprep.subr.mxu0 0.0
  %3342 = vmatpush1.msra.mxu0 0.0
  %3343 = vmatprep.subr.mxu0 0.0
  %3344 = vmatpush1.msra.mxu0 0.0
  %3345 = vmatprep.subr.mxu0 0.0
  %3346 = vmatpush1.msra.mxu0 0.0
  %3347 = vmatprep.subr.mxu0 0.0
  %3348 = vmatpush1.msra.mxu0 0.0
  %3349 = vmatprep.subr.mxu0 0.0
  %3350 = vmatpush1.msra.mxu0 0.0
  %3351 = vmatprep.subr.mxu0 0.0
  %3352 = vmatpush1.msra.mxu0 0.0
  %3353 = vmatprep.subr.mxu0 0.0
  %3354 = vmatpush1.msra.mxu0 0.0
  %3355 = vmatprep.subr.mxu0 0.0
  %3356 = vmatpush1.msra.mxu0 0.0
  %3357 = vmatprep.mubr.f32.mxu0 0.0
  %3358 = vmatmul.mubr.f32.gmra.mrb[0].mxu0 %v3291
  %v3359 = vpop.f32.mrb[0].mxu0
  %v3360 = vadd.f32 0.0, %v3359
  %v3361 = vpop.f32.mrb[0].mxu0
  %3362 = vdwg.mxu0
  %v3364 = vsel %vm2009, %v2849, 0
  %3366 = vmatprep.subr.mxu0 0.0
  %3367 = vmatpush1.msra.mxu0 %v208
  %3368 = vmatprep.subr.mxu0 0.0
  %3369 = vmatpush1.msra.mxu0 0.0
  %3370 = vmatprep.subr.mxu0 0.0
  %3371 = vmatpush1.msra.mxu0 0.0
  %3372 = vmatprep.subr.mxu0 0.0
  %3373 = vmatpush1.msra.mxu0 0.0
  %3374 = vmatprep.subr.mxu0 0.0
  %3375 = vmatpush1.msra.mxu0 0.0
  %3376 = vmatprep.subr.mxu0 0.0
  %3377 = vmatpush1.msra.mxu0 0.0
  %3378 = vmatprep.subr.mxu0 0.0
  %3379 = vmatpush1.msra.mxu0 0.0
  %3380 = vmatprep.subr.mxu0 0.0
  %3381 = vmatpush1.msra.mxu0 0.0
  %3382 = vmatprep.subr.mxu0 0.0
  %3383 = vmatpush1.msra.mxu0 0.0
  %3384 = vmatprep.subr.mxu0 0.0
  %3385 = vmatpush1.msra.mxu0 0.0
  %3386 = vmatprep.subr.mxu0 0.0
  %3387 = vmatpush1.msra.mxu0 0.0
  %3388 = vmatprep.subr.mxu0 0.0
  %3389 = vmatpush1.msra.mxu0 0.0
  %3390 = vmatprep.subr.mxu0 0.0
  %3391 = vmatpush1.msra.mxu0 0.0
  %3392 = vmatprep.subr.mxu0 0.0
  %3393 = vmatpush1.msra.mxu0 0.0
  %3394 = vmatprep.subr.mxu0 0.0
  %3395 = vmatpush1.msra.mxu0 0.0
  %3396 = vmatprep.subr.mxu0 0.0
  %3397 = vmatpush1.msra.mxu0 0.0
  %3398 = vmatprep.subr.mxu0 0.0
  %3399 = vmatpush1.msra.mxu0 0.0
  %3400 = vmatprep.subr.mxu0 0.0
  %3401 = vmatpush1.msra.mxu0 0.0
  %3402 = vmatprep.subr.mxu0 0.0
  %3403 = vmatpush1.msra.mxu0 0.0
  %3404 = vmatprep.subr.mxu0 0.0
  %3405 = vmatpush1.msra.mxu0 0.0
  %3406 = vmatprep.subr.mxu0 0.0
  %3407 = vmatpush1.msra.mxu0 0.0
  %3408 = vmatprep.subr.mxu0 0.0
  %3409 = vmatpush1.msra.mxu0 0.0
  %3410 = vmatprep.subr.mxu0 0.0
  %3411 = vmatpush1.msra.mxu0 0.0
  %3412 = vmatprep.subr.mxu0 0.0
  %3413 = vmatpush1.msra.mxu0 0.0
  %3414 = vmatprep.subr.mxu0 0.0
  %3415 = vmatpush1.msra.mxu0 0.0
  %3416 = vmatprep.subr.mxu0 0.0
  %3417 = vmatpush1.msra.mxu0 0.0
  %3418 = vmatprep.subr.mxu0 0.0
  %3419 = vmatpush1.msra.mxu0 0.0
  %3420 = vmatprep.subr.mxu0 0.0
  %3421 = vmatpush1.msra.mxu0 0.0
  %3422 = vmatprep.subr.mxu0 0.0
  %3423 = vmatpush1.msra.mxu0 0.0
  %3424 = vmatprep.subr.mxu0 0.0
  %3425 = vmatpush1.msra.mxu0 0.0
  %3426 = vmatprep.subr.mxu0 0.0
  %3427 = vmatpush1.msra.mxu0 0.0
  %3428 = vmatprep.subr.mxu0 0.0
  %3429 = vmatpush1.msra.mxu0 0.0
  %3430 = vmatprep.mubr.f32.mxu0 0.0
  %3431 = vmatmul.mubr.f32.gmra.mrb[0].mxu0 %v3364
  %v3432 = vpop.f32.mrb[0].mxu0
  %v3433 = vadd.f32 0.0, %v3432
  %v3434 = vpop.f32.mrb[0].mxu0
  %3435 = vdwg.mxu0
  %v3437 = vsel %vm2009, %v2922, 0
  %3439 = vmatprep.subr.mxu0 0.0
  %3440 = vmatpush1.msra.mxu0 %v209
  %3441 = vmatprep.subr.mxu0 0.0
  %3442 = vmatpush1.msra.mxu0 0.0
  %3443 = vmatprep.subr.mxu0 0.0
  %3444 = vmatpush1.msra.mxu0 0.0
  %3445 = vmatprep.subr.mxu0 0.0
  %3446 = vmatpush1.msra.mxu0 0.0
  %3447 = vmatprep.subr.mxu0 0.0
  %3448 = vmatpush1.msra.mxu0 0.0
  %3449 = vmatprep.subr.mxu0 0.0
  %3450 = vmatpush1.msra.mxu0 0.0
  %3451 = vmatprep.subr.mxu0 0.0
  %3452 = vmatpush1.msra.mxu0 0.0
  %3453 = vmatprep.subr.mxu0 0.0
  %3454 = vmatpush1.msra.mxu0 0.0
  %3455 = vmatprep.subr.mxu0 0.0
  %3456 = vmatpush1.msra.mxu0 0.0
  %3457 = vmatprep.subr.mxu0 0.0
  %3458 = vmatpush1.msra.mxu0 0.0
  %3459 = vmatprep.subr.mxu0 0.0
  %3460 = vmatpush1.msra.mxu0 0.0
  %3461 = vmatprep.subr.mxu0 0.0
  %3462 = vmatpush1.msra.mxu0 0.0
  %3463 = vmatprep.subr.mxu0 0.0
  %3464 = vmatpush1.msra.mxu0 0.0
  %3465 = vmatprep.subr.mxu0 0.0
  %3466 = vmatpush1.msra.mxu0 0.0
  %3467 = vmatprep.subr.mxu0 0.0
  %3468 = vmatpush1.msra.mxu0 0.0
  %3469 = vmatprep.subr.mxu0 0.0
  %3470 = vmatpush1.msra.mxu0 0.0
  %3471 = vmatprep.subr.mxu0 0.0
  %3472 = vmatpush1.msra.mxu0 0.0
  %3473 = vmatprep.subr.mxu0 0.0
  %3474 = vmatpush1.msra.mxu0 0.0
  %3475 = vmatprep.subr.mxu0 0.0
  %3476 = vmatpush1.msra.mxu0 0.0
  %3477 = vmatprep.subr.mxu0 0.0
  %3478 = vmatpush1.msra.mxu0 0.0
  %3479 = vmatprep.subr.mxu0 0.0
  %3480 = vmatpush1.msra.mxu0 0.0
  %3481 = vmatprep.subr.mxu0 0.0
  %3482 = vmatpush1.msra.mxu0 0.0
  %3483 = vmatprep.subr.mxu0 0.0
  %3484 = vmatpush1.msra.mxu0 0.0
  %3485 = vmatprep.subr.mxu0 0.0
  %3486 = vmatpush1.msra.mxu0 0.0
  %3487 = vmatprep.subr.mxu0 0.0
  %3488 = vmatpush1.msra.mxu0 0.0
  %3489 = vmatprep.subr.mxu0 0.0
  %3490 = vmatpush1.msra.mxu0 0.0
  %3491 = vmatprep.subr.mxu0 0.0
  %3492 = vmatpush1.msra.mxu0 0.0
  %3493 = vmatprep.subr.mxu0 0.0
  %3494 = vmatpush1.msra.mxu0 0.0
  %3495 = vmatprep.subr.mxu0 0.0
  %3496 = vmatpush1.msra.mxu0 0.0
  %3497 = vmatprep.subr.mxu0 0.0
  %3498 = vmatpush1.msra.mxu0 0.0
  %3499 = vmatprep.subr.mxu0 0.0
  %3500 = vmatpush1.msra.mxu0 0.0
  %3501 = vmatprep.subr.mxu0 0.0
  %3502 = vmatpush1.msra.mxu0 0.0
  %3503 = vmatprep.mubr.f32.mxu0 0.0
  %3504 = vmatmul.mubr.f32.gmra.mrb[0].mxu0 %v3437
  %v3505 = vpop.f32.mrb[0].mxu0
  %v3506 = vadd.f32 0.0, %v3505
  %v3507 = vpop.f32.mrb[0].mxu0
  %3508 = vdwg.mxu0
  %v3510 = vsel %vm2009, %v2995, 0
  %3512 = vmatprep.subr.mxu0 0.0
  %3513 = vmatpush1.msra.mxu0 %v210
  %3514 = vmatprep.subr.mxu0 0.0
  %3515 = vmatpush1.msra.mxu0 0.0
  %3516 = vmatprep.subr.mxu0 0.0
  %3517 = vmatpush1.msra.mxu0 0.0
  %3518 = vmatprep.subr.mxu0 0.0
  %3519 = vmatpush1.msra.mxu0 0.0
  %3520 = vmatprep.subr.mxu0 0.0
  %3521 = vmatpush1.msra.mxu0 0.0
  %3522 = vmatprep.subr.mxu0 0.0
  %3523 = vmatpush1.msra.mxu0 0.0
  %3524 = vmatprep.subr.mxu0 0.0
  %3525 = vmatpush1.msra.mxu0 0.0
  %3526 = vmatprep.subr.mxu0 0.0
  %3527 = vmatpush1.msra.mxu0 0.0
  %3528 = vmatprep.subr.mxu0 0.0
  %3529 = vmatpush1.msra.mxu0 0.0
  %3530 = vmatprep.subr.mxu0 0.0
  %3531 = vmatpush1.msra.mxu0 0.0
  %3532 = vmatprep.subr.mxu0 0.0
  %3533 = vmatpush1.msra.mxu0 0.0
  %3534 = vmatprep.subr.mxu0 0.0
  %3535 = vmatpush1.msra.mxu0 0.0
  %3536 = vmatprep.subr.mxu0 0.0
  %3537 = vmatpush1.msra.mxu0 0.0
  %3538 = vmatprep.subr.mxu0 0.0
  %3539 = vmatpush1.msra.mxu0 0.0
  %3540 = vmatprep.subr.mxu0 0.0
  %3541 = vmatpush1.msra.mxu0 0.0
  %3542 = vmatprep.subr.mxu0 0.0
  %3543 = vmatpush1.msra.mxu0 0.0
  %3544 = vmatprep.subr.mxu0 0.0
  %3545 = vmatpush1.msra.mxu0 0.0
  %3546 = vmatprep.subr.mxu0 0.0
  %3547 = vmatpush1.msra.mxu0 0.0
  %3548 = vmatprep.subr.mxu0 0.0
  %3549 = vmatpush1.msra.mxu0 0.0
  %3550 = vmatprep.subr.mxu0 0.0
  %3551 = vmatpush1.msra.mxu0 0.0
  %3552 = vmatprep.subr.mxu0 0.0
  %3553 = vmatpush1.msra.mxu0 0.0
  %3554 = vmatprep.subr.mxu0 0.0
  %3555 = vmatpush1.msra.mxu0 0.0
  %3556 = vmatprep.subr.mxu0 0.0
  %3557 = vmatpush1.msra.mxu0 0.0
  %3558 = vmatprep.subr.mxu0 0.0
  %3559 = vmatpush1.msra.mxu0 0.0
  %3560 = vmatprep.subr.mxu0 0.0
  %3561 = vmatpush1.msra.mxu0 0.0
  %3562 = vmatprep.subr.mxu0 0.0
  %3563 = vmatpush1.msra.mxu0 0.0
  %3564 = vmatprep.subr.mxu0 0.0
  %3565 = vmatpush1.msra.mxu0 0.0
  %3566 = vmatprep.subr.mxu0 0.0
  %3567 = vmatpush1.msra.mxu0 0.0
  %3568 = vmatprep.subr.mxu0 0.0
  %3569 = vmatpush1.msra.mxu0 0.0
  %3570 = vmatprep.subr.mxu0 0.0
  %3571 = vmatpush1.msra.mxu0 0.0
  %3572 = vmatprep.subr.mxu0 0.0
  %3573 = vmatpush1.msra.mxu0 0.0
  %3574 = vmatprep.subr.mxu0 0.0
  %3575 = vmatpush1.msra.mxu0 0.0
  %3576 = vmatprep.mubr.f32.mxu0 0.0
  %3577 = vmatmul.mubr.f32.gmra.mrb[0].mxu0 %v3510
  %v3578 = vpop.f32.mrb[0].mxu0
  %v3579 = vadd.f32 0.0, %v3578
  %v3580 = vpop.f32.mrb[0].mxu0
  %3581 = vdwg.mxu0
  %v3583 = vsel %vm2009, %v3068, 0
  %3585 = vmatprep.subr.mxu0 0.0
  %3586 = vmatpush1.msra.mxu0 %v211
  %3587 = vmatprep.subr.mxu0 0.0
  %3588 = vmatpush1.msra.mxu0 0.0
  %3589 = vmatprep.subr.mxu0 0.0
  %3590 = vmatpush1.msra.mxu0 0.0
  %3591 = vmatprep.subr.mxu0 0.0
  %3592 = vmatpush1.msra.mxu0 0.0
  %3593 = vmatprep.subr.mxu0 0.0
  %3594 = vmatpush1.msra.mxu0 0.0
  %3595 = vmatprep.subr.mxu0 0.0
  %3596 = vmatpush1.msra.mxu0 0.0
  %3597 = vmatprep.subr.mxu0 0.0
  %3598 = vmatpush1.msra.mxu0 0.0
  %3599 = vmatprep.subr.mxu0 0.0
  %3600 = vmatpush1.msra.mxu0 0.0
  %3601 = vmatprep.subr.mxu0 0.0
  %3602 = vmatpush1.msra.mxu0 0.0
  %3603 = vmatprep.subr.mxu0 0.0
  %3604 = vmatpush1.msra.mxu0 0.0
  %3605 = vmatprep.subr.mxu0 0.0
  %3606 = vmatpush1.msra.mxu0 0.0
  %3607 = vmatprep.subr.mxu0 0.0
  %3608 = vmatpush1.msra.mxu0 0.0
  %3609 = vmatprep.subr.mxu0 0.0
  %3610 = vmatpush1.msra.mxu0 0.0
  %3611 = vmatprep.subr.mxu0 0.0
  %3612 = vmatpush1.msra.mxu0 0.0
  %3613 = vmatprep.subr.mxu0 0.0
  %3614 = vmatpush1.msra.mxu0 0.0
  %3615 = vmatprep.subr.mxu0 0.0
  %3616 = vmatpush1.msra.mxu0 0.0
  %3617 = vmatprep.subr.mxu0 0.0
  %3618 = vmatpush1.msra.mxu0 0.0
  %3619 = vmatprep.subr.mxu0 0.0
  %3620 = vmatpush1.msra.mxu0 0.0
  %3621 = vmatprep.subr.mxu0 0.0
  %3622 = vmatpush1.msra.mxu0 0.0
  %3623 = vmatprep.subr.mxu0 0.0
  %3624 = vmatpush1.msra.mxu0 0.0
  %3625 = vmatprep.subr.mxu0 0.0
  %3626 = vmatpush1.msra.mxu0 0.0
  %3627 = vmatprep.subr.mxu0 0.0
  %3628 = vmatpush1.msra.mxu0 0.0
  %3629 = vmatprep.subr.mxu0 0.0
  %3630 = vmatpush1.msra.mxu0 0.0
  %3631 = vmatprep.subr.mxu0 0.0
  %3632 = vmatpush1.msra.mxu0 0.0
  %3633 = vmatprep.subr.mxu0 0.0
  %3634 = vmatpush1.msra.mxu0 0.0
  %3635 = vmatprep.subr.mxu0 0.0
  %3636 = vmatpush1.msra.mxu0 0.0
  %3637 = vmatprep.subr.mxu0 0.0
  %3638 = vmatpush1.msra.mxu0 0.0
  %3639 = vmatprep.subr.mxu0 0.0
  %3640 = vmatpush1.msra.mxu0 0.0
  %3641 = vmatprep.subr.mxu0 0.0
  %3642 = vmatpush1.msra.mxu0 0.0
  %3643 = vmatprep.subr.mxu0 0.0
  %3644 = vmatpush1.msra.mxu0 0.0
  %3645 = vmatprep.subr.mxu0 0.0
  %3646 = vmatpush1.msra.mxu0 0.0
  %3647 = vmatprep.subr.mxu0 0.0
  %3648 = vmatpush1.msra.mxu0 0.0
  %3649 = vmatprep.mubr.f32.mxu0 0.0
  %3650 = vmatmul.mubr.f32.gmra.mrb[0].mxu0 %v3583
  %v3651 = vpop.f32.mrb[0].mxu0
  %v3652 = vadd.f32 0.0, %v3651
  %v3653 = vpop.f32.mrb[0].mxu0
  %3654 = vdwg.mxu0
  %v3656 = vsel %vm2009, %v3141, 0
  %3658 = vmatprep.subr.mxu0 0.0
  %3659 = vmatpush1.msra.mxu0 %v212
  %3660 = vmatprep.subr.mxu0 0.0
  %3661 = vmatpush1.msra.mxu0 0.0
  %3662 = vmatprep.subr.mxu0 0.0
  %3663 = vmatpush1.msra.mxu0 0.0
  %3664 = vmatprep.subr.mxu0 0.0
  %3665 = vmatpush1.msra.mxu0 0.0
  %3666 = vmatprep.subr.mxu0 0.0
  %3667 = vmatpush1.msra.mxu0 0.0
  %3668 = vmatprep.subr.mxu0 0.0
  %3669 = vmatpush1.msra.mxu0 0.0
  %3670 = vmatprep.subr.mxu0 0.0
  %3671 = vmatpush1.msra.mxu0 0.0
  %3672 = vmatprep.subr.mxu0 0.0
  %3673 = vmatpush1.msra.mxu0 0.0
  %3674 = vmatprep.subr.mxu0 0.0
  %3675 = vmatpush1.msra.mxu0 0.0
  %3676 = vmatprep.subr.mxu0 0.0
  %3677 = vmatpush1.msra.mxu0 0.0
  %3678 = vmatprep.subr.mxu0 0.0
  %3679 = vmatpush1.msra.mxu0 0.0
  %3680 = vmatprep.subr.mxu0 0.0
  %3681 = vmatpush1.msra.mxu0 0.0
  %3682 = vmatprep.subr.mxu0 0.0
  %3683 = vmatpush1.msra.mxu0 0.0
  %3684 = vmatprep.subr.mxu0 0.0
  %3685 = vmatpush1.msra.mxu0 0.0
  %3686 = vmatprep.subr.mxu0 0.0
  %3687 = vmatpush1.msra.mxu0 0.0
  %3688 = vmatprep.subr.mxu0 0.0
  %3689 = vmatpush1.msra.mxu0 0.0
  %3690 = vmatprep.subr.mxu0 0.0
  %3691 = vmatpush1.msra.mxu0 0.0
  %3692 = vmatprep.subr.mxu0 0.0
  %3693 = vmatpush1.msra.mxu0 0.0
  %3694 = vmatprep.subr.mxu0 0.0
  %3695 = vmatpush1.msra.mxu0 0.0
  %3696 = vmatprep.subr.mxu0 0.0
  %3697 = vmatpush1.msra.mxu0 0.0
  %3698 = vmatprep.subr.mxu0 0.0
  %3699 = vmatpush1.msra.mxu0 0.0
  %3700 = vmatprep.subr.mxu0 0.0
  %3701 = vmatpush1.msra.mxu0 0.0
  %3702 = vmatprep.subr.mxu0 0.0
  %3703 = vmatpush1.msra.mxu0 0.0
  %3704 = vmatprep.subr.mxu0 0.0
  %3705 = vmatpush1.msra.mxu0 0.0
  %3706 = vmatprep.subr.mxu0 0.0
  %3707 = vmatpush1.msra.mxu0 0.0
  %3708 = vmatprep.subr.mxu0 0.0
  %3709 = vmatpush1.msra.mxu0 0.0
  %3710 = vmatprep.subr.mxu0 0.0
  %3711 = vmatpush1.msra.mxu0 0.0
  %3712 = vmatprep.subr.mxu0 0.0
  %3713 = vmatpush1.msra.mxu0 0.0
  %3714 = vmatprep.subr.mxu0 0.0
  %3715 = vmatpush1.msra.mxu0 0.0
  %3716 = vmatprep.subr.mxu0 0.0
  %3717 = vmatpush1.msra.mxu0 0.0
  %3718 = vmatprep.subr.mxu0 0.0
  %3719 = vmatpush1.msra.mxu0 0.0
  %3720 = vmatprep.subr.mxu0 0.0
  %3721 = vmatpush1.msra.mxu0 0.0
  %3722 = vmatprep.mubr.f32.mxu0 0.0
  %3723 = vmatmul.mubr.f32.gmra.mrb[0].mxu0 %v3656
  %v3724 = vpop.f32.mrb[0].mxu0
  %v3725 = vadd.f32 0.0, %v3724
  %v3726 = vpop.f32.mrb[0].mxu0
  %3727 = vdwg.mxu0
  %v3729 = vsel %vm2009, %v3214, 0
  %3731 = vmatprep.subr.mxu0 0.0
  %3732 = vmatpush1.msra.mxu0 %v213
  %3733 = vmatprep.subr.mxu0 0.0
  %3734 = vmatpush1.msra.mxu0 0.0
  %3735 = vmatprep.subr.mxu0 0.0
  %3736 = vmatpush1.msra.mxu0 0.0
  %3737 = vmatprep.subr.mxu0 0.0
  %3738 = vmatpush1.msra.mxu0 0.0
  %3739 = vmatprep.subr.mxu0 0.0
  %3740 = vmatpush1.msra.mxu0 0.0
  %3741 = vmatprep.subr.mxu0 0.0
  %3742 = vmatpush1.msra.mxu0 0.0
  %3743 = vmatprep.subr.mxu0 0.0
  %3744 = vmatpush1.msra.mxu0 0.0
  %3745 = vmatprep.subr.mxu0 0.0
  %3746 = vmatpush1.msra.mxu0 0.0
  %3747 = vmatprep.subr.mxu0 0.0
  %3748 = vmatpush1.msra.mxu0 0.0
  %3749 = vmatprep.subr.mxu0 0.0
  %3750 = vmatpush1.msra.mxu0 0.0
  %3751 = vmatprep.subr.mxu0 0.0
  %3752 = vmatpush1.msra.mxu0 0.0
  %3753 = vmatprep.subr.mxu0 0.0
  %3754 = vmatpush1.msra.mxu0 0.0
  %3755 = vmatprep.subr.mxu0 0.0
  %3756 = vmatpush1.msra.mxu0 0.0
  %3757 = vmatprep.subr.mxu0 0.0
  %3758 = vmatpush1.msra.mxu0 0.0
  %3759 = vmatprep.subr.mxu0 0.0
  %3760 = vmatpush1.msra.mxu0 0.0
  %3761 = vmatprep.subr.mxu0 0.0
  %3762 = vmatpush1.msra.mxu0 0.0
  %3763 = vmatprep.subr.mxu0 0.0
  %3764 = vmatpush1.msra.mxu0 0.0
  %3765 = vmatprep.subr.mxu0 0.0
  %3766 = vmatpush1.msra.mxu0 0.0
  %3767 = vmatprep.subr.mxu0 0.0
  %3768 = vmatpush1.msra.mxu0 0.0
  %3769 = vmatprep.subr.mxu0 0.0
  %3770 = vmatpush1.msra.mxu0 0.0
  %3771 = vmatprep.subr.mxu0 0.0
  %3772 = vmatpush1.msra.mxu0 0.0
  %3773 = vmatprep.subr.mxu0 0.0
  %3774 = vmatpush1.msra.mxu0 0.0
  %3775 = vmatprep.subr.mxu0 0.0
  %3776 = vmatpush1.msra.mxu0 0.0
  %3777 = vmatprep.subr.mxu0 0.0
  %3778 = vmatpush1.msra.mxu0 0.0
  %3779 = vmatprep.subr.mxu0 0.0
  %3780 = vmatpush1.msra.mxu0 0.0
  %3781 = vmatprep.subr.mxu0 0.0
  %3782 = vmatpush1.msra.mxu0 0.0
  %3783 = vmatprep.subr.mxu0 0.0
  %3784 = vmatpush1.msra.mxu0 0.0
  %3785 = vmatprep.subr.mxu0 0.0
  %3786 = vmatpush1.msra.mxu0 0.0
  %3787 = vmatprep.subr.mxu0 0.0
  %3788 = vmatpush1.msra.mxu0 0.0
  %3789 = vmatprep.subr.mxu0 0.0
  %3790 = vmatpush1.msra.mxu0 0.0
  %3791 = vmatprep.subr.mxu0 0.0
  %3792 = vmatpush1.msra.mxu0 0.0
  %3793 = vmatprep.subr.mxu0 0.0
  %3794 = vmatpush1.msra.mxu0 0.0
  %3795 = vmatprep.mubr.f32.mxu0 0.0
  %3796 = vmatmul.mubr.f32.gmra.mrb[0].mxu0 %v3729
  %v3797 = vpop.f32.mrb[0].mxu0
  %v3798 = vadd.f32 0.0, %v3797
  %v3799 = vpop.f32.mrb[0].mxu0
  %3800 = vdwg.mxu0
  %v3802 = vsel %vm2009, %v3287, 0
  %3804 = vmatprep.subr.mxu0 0.0
  %3805 = vmatpush1.msra.mxu0 %v214
  %3806 = vmatprep.subr.mxu0 0.0
  %3807 = vmatpush1.msra.mxu0 0.0
  %3808 = vmatprep.subr.mxu0 0.0
  %3809 = vmatpush1.msra.mxu0 0.0
  %3810 = vmatprep.subr.mxu0 0.0
  %3811 = vmatpush1.msra.mxu0 0.0
  %3812 = vmatprep.subr.mxu0 0.0
  %3813 = vmatpush1.msra.mxu0 0.0
  %3814 = vmatprep.subr.mxu0 0.0
  %3815 = vmatpush1.msra.mxu0 0.0
  %3816 = vmatprep.subr.mxu0 0.0
  %3817 = vmatpush1.msra.mxu0 0.0
  %3818 = vmatprep.subr.mxu0 0.0
  %3819 = vmatpush1.msra.mxu0 0.0
  %3820 = vmatprep.subr.mxu0 0.0
  %3821 = vmatpush1.msra.mxu0 0.0
  %3822 = vmatprep.subr.mxu0 0.0
  %3823 = vmatpush1.msra.mxu0 0.0
  %3824 = vmatprep.subr.mxu0 0.0
  %3825 = vmatpush1.msra.mxu0 0.0
  %3826 = vmatprep.subr.mxu0 0.0
  %3827 = vmatpush1.msra.mxu0 0.0
  %3828 = vmatprep.subr.mxu0 0.0
  %3829 = vmatpush1.msra.mxu0 0.0
  %3830 = vmatprep.subr.mxu0 0.0
  %3831 = vmatpush1.msra.mxu0 0.0
  %3832 = vmatprep.subr.mxu0 0.0
  %3833 = vmatpush1.msra.mxu0 0.0
  %3834 = vmatprep.subr.mxu0 0.0
  %3835 = vmatpush1.msra.mxu0 0.0
  %3836 = vmatprep.subr.mxu0 0.0
  %3837 = vmatpush1.msra.mxu0 0.0
  %3838 = vmatprep.subr.mxu0 0.0
  %3839 = vmatpush1.msra.mxu0 0.0
  %3840 = vmatprep.subr.mxu0 0.0
  %3841 = vmatpush1.msra.mxu0 0.0
  %3842 = vmatprep.subr.mxu0 0.0
  %3843 = vmatpush1.msra.mxu0 0.0
  %3844 = vmatprep.subr.mxu0 0.0
  %3845 = vmatpush1.msra.mxu0 0.0
  %3846 = vmatprep.subr.mxu0 0.0
  %3847 = vmatpush1.msra.mxu0 0.0
  %3848 = vmatprep.subr.mxu0 0.0
  %3849 = vmatpush1.msra.mxu0 0.0
  %3850 = vmatprep.subr.mxu0 0.0
  %3851 = vmatpush1.msra.mxu0 0.0
  %3852 = vmatprep.subr.mxu0 0.0
  %3853 = vmatpush1.msra.mxu0 0.0
  %3854 = vmatprep.subr.mxu0 0.0
  %3855 = vmatpush1.msra.mxu0 0.0
  %3856 = vmatprep.subr.mxu0 0.0
  %3857 = vmatpush1.msra.mxu0 0.0
  %3858 = vmatprep.subr.mxu0 0.0
  %3859 = vmatpush1.msra.mxu0 0.0
  %3860 = vmatprep.subr.mxu0 0.0
  %3861 = vmatpush1.msra.mxu0 0.0
  %3862 = vmatprep.subr.mxu0 0.0
  %3863 = vmatpush1.msra.mxu0 0.0
  %3864 = vmatprep.subr.mxu0 0.0
  %3865 = vmatpush1.msra.mxu0 0.0
  %3866 = vmatprep.subr.mxu0 0.0
  %3867 = vmatpush1.msra.mxu0 0.0
  %3868 = vmatprep.mubr.f32.mxu0 0.0
  %3869 = vmatmul.mubr.f32.gmra.mrb[0].mxu0 %v3802
  %v3870 = vpop.f32.mrb[0].mxu0
  %v3871 = vadd.f32 0.0, %v3870
  %v3872 = vpop.f32.mrb[0].mxu0
  %3873 = vdwg.mxu0
  %v3874 = vadd.f32 %v3360, %v3506
  %v3875 = vadd.f32 %v3433, %v3579
  %v3876 = vadd.f32 %v3874, %v3652
  %v3877 = vadd.f32 %v3875, %v3725
  %v3878 = vadd.f32 %v3876, %v3798
  %v3879 = vadd.f32 %v3877, %v3871
  %v3880 = vld [vmem:[%s5 + $0x75] sm:$0x1]
  %v3881 = vlaneseq
  %v3882 = vshrl.u32 %v3881, 7
  %v3883 = vsub.s32 0, %v3882
  %v3884 = vrot.slane %v3880, %v3883
  %v3885 = vadd.f32 %v3878, %v3884
  %v3886 = vadd.f32 %v3879, %v3884
  %v3887 = vadd.f32 %v172, %v3885
  %v3888 = vadd.f32 %v173, %v3886
  %v3889 = vld [vmem:[%s5 + $0x76] sm:$0x1]
  %v3890 = vld [vmem:[%s5 + $0x77] sm:$0x1]
  %v3891 = vsel %vm134, %v3887, 0.0
  %3892 = vadd.xlane.f32.xlu0 %v3891
  %v3893 = vpop.xlane.xlu0 %3892
  %v3894 = vsel %vm134, %v3888, 0.0
  %3895 = vadd.xlane.f32.xlu0 %v3894
  %v3896 = vpop.xlane.xlu0 %3895
  %v3897 = vmul.f32 %v3893, %v141
  %v3898 = vmul.f32 %v3896, %v141
  %v3899 = vsub.f32 %v3887, %v3897
  %v3900 = vsub.f32 %v3888, %v3898
  %v3901 = vmul.f32 %v3899, %v3899
  %v3902 = vmul.f32 %v3900, %v3900
  %v3903 = vsel %vm134, %v3901, 0.0
  %3904 = vadd.xlane.f32.xlu0 %v3903
  %v3905 = vpop.xlane.xlu0 %3904
  %v3906 = vsel %vm134, %v3902, 0.0
  %3907 = vadd.xlane.f32.xlu0 %v3906
  %v3908 = vpop.xlane.xlu0 %3907
  %v3909 = vmul.f32 %v3905, %v141
  %v3910 = vmul.f32 %v3908, %v141
  %v3911 = vadd.f32 %v3909, 1e-12
  %v3912 = vadd.f32 %v3910, 1e-12
  %v3913 = vrsqrt.pop %v3911
  %v3914 = vrsqrt.pop %v3912
  %v3915 = vmul.f32 %v3899, %v3913
  %v3916 = vmul.f32 %v3900, %v3914
  %v3917 = vlaneseq
  %v3918 = vshrl.u32 %v3917, 7
  %v3919 = vsub.s32 0, %v3918
  %v3920 = vrot.slane %v3889, %v3919
  %v3921 = vmul.f32 %v3915, %v3920
  %v3922 = vmul.f32 %v3916, %v3920
  %v3923 = vlaneseq
  %v3924 = vshrl.u32 %v3923, 7
  %v3925 = vsub.s32 0, %v3924
  %v3926 = vrot.slane %v3890, %v3925
  %v3927 = vadd.f32 %v3921, %v3926
  %v3928 = vadd.f32 %v3922, %v3926
  %v3929 = vld [vmem:[%s4] sm:$0xff]
  %v3930 = vld [vmem:[%s4 + $0x8] sm:$0xff]
  %v3931 = vld [vmem:[%s4 + $0x10] sm:$0xff]
  %v3932 = vld [vmem:[%s4 + $0x18] sm:$0xff]
  %v3933 = vld [vmem:[%s4 + $0x20] sm:$0xff]
  %v3934 = vld [vmem:[%s4 + $0x28] sm:$0xff]
  %v3935 = vld [vmem:[%s4 + $0x30] sm:$0xff]
  %v3936 = vld [vmem:[%s4 + $0x38] sm:$0xff]
  %v3937 = vld [vmem:[%s4 + $0x40] sm:$0x1]
  %v3938 = vlaneseq
  %v3939 = vshrl.u32 %v3938, 7
  %v3940 = vsub.s32 0, %v3939
  %v3941 = vrot.slane %v3937, %v3940
  %v3943 = vsel %vm134, %v3927, 0
  %v3946 = vsel %vm134, %v3928, 0
  %3948 = vmatprep.subr.mxu0 0.0
  %3949 = vmatpush1.msra.mxu0 %v3929
  %3950 = vmatprep.subr.mxu0 0.0
  %3951 = vmatpush1.msra.mxu0 %v3930
  %3952 = vmatprep.subr.mxu0 0.0
  %3953 = vmatpush1.msra.mxu0 %v3931
  %3954 = vmatprep.subr.mxu0 0.0
  %3955 = vmatpush1.msra.mxu0 %v3932
  %3956 = vmatprep.subr.mxu0 0.0
  %3957 = vmatpush1.msra.mxu0 0.0
  %3958 = vmatprep.subr.mxu0 0.0
  %3959 = vmatpush1.msra.mxu0 0.0
  %3960 = vmatprep.subr.mxu0 0.0
  %3961 = vmatpush1.msra.mxu0 0.0
  %3962 = vmatprep.subr.mxu0 0.0
  %3963 = vmatpush1.msra.mxu0 0.0
  %3964 = vmatprep.subr.mxu0 0.0
  %3965 = vmatpush1.msra.mxu0 0.0
  %3966 = vmatprep.subr.mxu0 0.0
  %3967 = vmatpush1.msra.mxu0 0.0
  %3968 = vmatprep.subr.mxu0 0.0
  %3969 = vmatpush1.msra.mxu0 0.0
  %3970 = vmatprep.subr.mxu0 0.0
  %3971 = vmatpush1.msra.mxu0 0.0
  %3972 = vmatprep.subr.mxu0 0.0
  %3973 = vmatpush1.msra.mxu0 0.0
  %3974 = vmatprep.subr.mxu0 0.0
  %3975 = vmatpush1.msra.mxu0 0.0
  %3976 = vmatprep.subr.mxu0 0.0
  %3977 = vmatpush1.msra.mxu0 0.0
  %3978 = vmatprep.subr.mxu0 0.0
  %3979 = vmatpush1.msra.mxu0 0.0
  %3980 = vmatprep.subr.mxu0 0.0
  %3981 = vmatpush1.msra.mxu0 0.0
  %3982 = vmatprep.subr.mxu0 0.0
  %3983 = vmatpush1.msra.mxu0 0.0
  %3984 = vmatprep.subr.mxu0 0.0
  %3985 = vmatpush1.msra.mxu0 0.0
  %3986 = vmatprep.subr.mxu0 0.0
  %3987 = vmatpush1.msra.mxu0 0.0
  %3988 = vmatprep.subr.mxu0 0.0
  %3989 = vmatpush1.msra.mxu0 0.0
  %3990 = vmatprep.subr.mxu0 0.0
  %3991 = vmatpush1.msra.mxu0 0.0
  %3992 = vmatprep.subr.mxu0 0.0
  %3993 = vmatpush1.msra.mxu0 0.0
  %3994 = vmatprep.subr.mxu0 0.0
  %3995 = vmatpush1.msra.mxu0 0.0
  %3996 = vmatprep.subr.mxu0 0.0
  %3997 = vmatpush1.msra.mxu0 0.0
  %3998 = vmatprep.subr.mxu0 0.0
  %3999 = vmatpush1.msra.mxu0 0.0
  %4000 = vmatprep.subr.mxu0 0.0
  %4001 = vmatpush1.msra.mxu0 0.0
  %4002 = vmatprep.subr.mxu0 0.0
  %4003 = vmatpush1.msra.mxu0 0.0
  %4004 = vmatprep.subr.mxu0 0.0
  %4005 = vmatpush1.msra.mxu0 0.0
  %4006 = vmatprep.subr.mxu0 0.0
  %4007 = vmatpush1.msra.mxu0 0.0
  %4008 = vmatprep.subr.mxu0 0.0
  %4009 = vmatpush1.msra.mxu0 0.0
  %4010 = vmatprep.subr.mxu0 0.0
  %4011 = vmatpush1.msra.mxu0 0.0
  %4012 = vmatprep.mubr.f32.mxu0 0.0
  %4013 = vmatmul.mubr.f32.gmra.mrb[0].mxu0 %v3943
  %v4014 = vpop.f32.mrb[0].mxu0
  %v4015 = vadd.f32 %v3941, %v4014
  %v4016 = vpop.f32.mrb[0].mxu0
  %4017 = vmatprep.mubr.f32.mxu0 0.0
  %4018 = vmatmul.mubr.f32.gmra.mrb[0].mxu0 %v3946
  %v4019 = vpop.f32.mrb[0].mxu0
  %v4020 = vadd.f32 %v3941, %v4019
  %v4021 = vpop.f32.mrb[0].mxu0
  %4022 = vdwg.mxu0
  %v4023 = vmul.f32 %v4015, 0.5
  %v4024 = vmul.f32 %v4020, 0.5
  %v4025 = vmul.f32 %v4015, 0.044715
  %v4026 = vmul.f32 %v4020, 0.044715
  %v4027 = vmul.f32 %v4025, %v4015
  %v4028 = vmul.f32 %v4026, %v4020
  %v4029 = vmul.f32 %v4027, %v4015
  %v4030 = vmul.f32 %v4028, %v4020
  %v4031 = vadd.f32 %v4015, %v4029
  %v4032 = vadd.f32 %v4020, %v4030
  %v4033 = vmul.f32 %v4031, 0.7978846
  %v4034 = vmul.f32 %v4032, 0.7978846
  %v4035 = vtanh.pop %v4033
  %v4036 = vtanh.pop %v4034
  %v4037 = vadd.f32 %v4035, 1.0
  %v4038 = vadd.f32 %v4036, 1.0
  %v4039 = vmul.f32 %v4023, %v4037
  %v4040 = vmul.f32 %v4024, %v4038
  %v4041 = vld [vmem:[%s5 + $0x78] sm:$0x1]
  %v4042 = vlaneseq
  %v4043 = vshrl.u32 %v4042, 7
  %v4044 = vsub.s32 0, %v4043
  %v4045 = vrot.slane %v4041, %v4044
  %vm4046 = vcmask 523264
  %v4048 = vsel %vm4046, %v4039, 0
  %v4051 = vsel %vm4046, %v4040, 0
  %v4054 = vsel %vm4046, %v3933, 0
  %v4057 = vsel %vm4046, %v3934, 0
  %v4060 = vsel %vm4046, %v3935, 0
  %v4063 = vsel %vm4046, %v3936, 0
  %4065 = vmatprep.subr.mxu0 0.0
  %4066 = vmatpush1.xpose.msra.mxu0 %v4054
  %4067 = vmatprep.subr.mxu0 0.0
  %4068 = vmatpush1.xpose.msra.mxu0 %v4057
  %4069 = vmatprep.subr.mxu0 0.0
  %4070 = vmatpush1.xpose.msra.mxu0 %v4060
  %4071 = vmatprep.subr.mxu0 0.0
  %4072 = vmatpush1.xpose.msra.mxu0 %v4063
  %4073 = vmatprep.subr.mxu0 0.0
  %4074 = vmatpush1.xpose.msra.mxu0 0.0
  %4075 = vmatprep.subr.mxu0 0.0
  %4076 = vmatpush1.xpose.msra.mxu0 0.0
  %4077 = vmatprep.subr.mxu0 0.0
  %4078 = vmatpush1.xpose.msra.mxu0 0.0
  %4079 = vmatprep.subr.mxu0 0.0
  %4080 = vmatpush1.xpose.msra.mxu0 0.0
  %4081 = vmatprep.subr.mxu0 0.0
  %4082 = vmatpush1.xpose.msra.mxu0 0.0
  %4083 = vmatprep.subr.mxu0 0.0
  %4084 = vmatpush1.xpose.msra.mxu0 0.0
  %4085 = vmatprep.subr.mxu0 0.0
  %4086 = vmatpush1.xpose.msra.mxu0 0.0
  %4087 = vmatprep.subr.mxu0 0.0
  %4088 = vmatpush1.xpose.msra.mxu0 0.0
  %4089 = vmatprep.subr.mxu0 0.0
  %4090 = vmatpush1.xpose.msra.mxu0 0.0
  %4091 = vmatprep.subr.mxu0 0.0
  %4092 = vmatpush1.xpose.msra.mxu0 0.0
  %4093 = vmatprep.subr.mxu0 0.0
  %4094 = vmatpush1.xpose.msra.mxu0 0.0
  %4095 = vmatprep.subr.mxu0 0.0
  %4096 = vmatpush1.xpose.msra.mxu0 0.0
  %4097 = vmatprep.subr.mxu0 0.0
  %4098 = vmatpush1.xpose.msra.mxu0 0.0
  %4099 = vmatprep.subr.mxu0 0.0
  %4100 = vmatpush1.xpose.msra.mxu0 0.0
  %4101 = vmatprep.subr.mxu0 0.0
  %4102 = vmatpush1.xpose.msra.mxu0 0.0
  %4103 = vmatprep.subr.mxu0 0.0
  %4104 = vmatpush1.xpose.msra.mxu0 0.0
  %4105 = vmatprep.subr.mxu0 0.0
  %4106 = vmatpush1.xpose.msra.mxu0 0.0
  %4107 = vmatprep.subr.mxu0 0.0
  %4108 = vmatpush1.xpose.msra.mxu0 0.0
  %4109 = vmatprep.subr.mxu0 0.0
  %4110 = vmatpush1.xpose.msra.mxu0 0.0
  %4111 = vmatprep.subr.mxu0 0.0
  %4112 = vmatpush1.xpose.msra.mxu0 0.0
  %4113 = vmatprep.subr.mxu0 0.0
  %4114 = vmatpush1.xpose.msra.mxu0 0.0
  %4115 = vmatprep.subr.mxu0 0.0
  %4116 = vmatpush1.xpose.msra.mxu0 0.0
  %4117 = vmatprep.subr.mxu0 0.0
  %4118 = vmatpush1.xpose.msra.mxu0 0.0
  %4119 = vmatprep.subr.mxu0 0.0
  %4120 = vmatpush1.xpose.msra.mxu0 0.0
  %4121 = vmatprep.subr.mxu0 0.0
  %4122 = vmatpush1.xpose.msra.mxu0 0.0
  %4123 = vmatprep.subr.mxu0 0.0
  %4124 = vmatpush1.xpose.msra.mxu0 0.0
  %4125 = vmatprep.subr.mxu0 0.0
  %4126 = vmatpush1.xpose.msra.mxu0 0.0
  %4127 = vmatprep.subr.mxu0 0.0
  %4128 = vmatpush1.xpose.msra.mxu0 0.0
  %4129 = vmatprep.mubr.f32.mxu0 0.0
  %4130 = vmatmul.mubr.f32.gmra.mrb[0].mxu0 %v4048
  %v4131 = vpop.f32.mrb[0].mxu0
  %v4132 = vadd.f32 %v4045, %v4131
  %v4133 = vpop.f32.mrb[0].mxu0
  %4134 = vmatprep.mubr.f32.mxu0 0.0
  %4135 = vmatmul.mubr.f32.gmra.mrb[0].mxu0 %v4051
  %v4136 = vpop.f32.mrb[0].mxu0
  %v4137 = vadd.f32 %v4045, %v4136
  %v4138 = vpop.f32.mrb[0].mxu0
  %4139 = vdwg.mxu0
  %v4140 = vadd.f32 %v3927, %v4132
  %v4141 = vadd.f32 %v3928, %v4137
  %v4142 = vld [vmem:[%s5 + $0x79] sm:$0x1]
  %v4143 = vld [vmem:[%s5 + $0x7a] sm:$0x1]
  %v4144 = vsel %vm134, %v4140, 0.0
  %4145 = vadd.xlane.f32.xlu0 %v4144
  %v4146 = vpop.xlane.xlu0 %4145
  %v4147 = vsel %vm134, %v4141, 0.0
  %4148 = vadd.xlane.f32.xlu0 %v4147
  %v4149 = vpop.xlane.xlu0 %4148
  %v4150 = vmul.f32 %v4146, %v141
  %v4151 = vmul.f32 %v4149, %v141
  %v4152 = vsub.f32 %v4140, %v4150
  %v4153 = vsub.f32 %v4141, %v4151
  %v4154 = vmul.f32 %v4152, %v4152
  %v4155 = vmul.f32 %v4153, %v4153
  %v4156 = vsel %vm134, %v4154, 0.0
  %4157 = vadd.xlane.f32.xlu0 %v4156
  %v4158 = vpop.xlane.xlu0 %4157
  %v4159 = vsel %vm134, %v4155, 0.0
  %4160 = vadd.xlane.f32.xlu0 %v4159
  %v4161 = vpop.xlane.xlu0 %4160
  %v4162 = vmul.f32 %v4158, %v141
  %v4163 = vmul.f32 %v4161, %v141
  %v4164 = vadd.f32 %v4162, 1e-12
  %v4165 = vadd.f32 %v4163, 1e-12
  %v4166 = vrsqrt.pop %v4164
  %v4167 = vrsqrt.pop %v4165
  %v4168 = vmul.f32 %v4152, %v4166
  %v4169 = vmul.f32 %v4153, %v4167
  %v4170 = vlaneseq
  %v4171 = vshrl.u32 %v4170, 7
  %v4172 = vsub.s32 0, %v4171
  %v4173 = vrot.slane %v4142, %v4172
  %v4174 = vmul.f32 %v4168, %v4173
  %v4175 = vmul.f32 %v4169, %v4173
  %v4176 = vlaneseq
  %v4177 = vshrl.u32 %v4176, 7
  %v4178 = vsub.s32 0, %v4177
  %v4179 = vrot.slane %v4143, %v4178
  %v4180 = vadd.f32 %v4174, %v4179
  %v4181 = vadd.f32 %v4175, %v4179
  %s4182 = scalar_lea.vmem %s2, 256
  %v4183 = vld [vmem:[%s4182] sm:$0xff]
  %v4184 = vld [vmem:[%s4182 + $0x8] sm:$0xff]
  %v4185 = vld [vmem:[%s4182 + $0x10] sm:$0xff]
  %v4186 = vld [vmem:[%s4182 + $0x18] sm:$0xff]
  %v4187 = vld [vmem:[%s4182 + $0x20] sm:$0xff]
  %v4188 = vld [vmem:[%s4182 + $0x28] sm:$0xff]
  %v4189 = vld [vmem:[%s4182 + $0x30] sm:$0xff]
  %v4190 = vld [vmem:[%s4182 + $0x38] sm:$0xff]
  %v4191 = vld [vmem:[%s4182 + $0x40] sm:$0xff]
  %v4192 = vld [vmem:[%s4182 + $0x48] sm:$0xff]
  %v4193 = vld [vmem:[%s4182 + $0x50] sm:$0xff]
  %v4194 = vld [vmem:[%s4182 + $0x58] sm:$0xff]
  %v4195 = vld [vmem:[%s4182 + $0x60] sm:$0xff]
  %v4196 = vld [vmem:[%s4182 + $0x68] sm:$0xff]
  %v4197 = vld [vmem:[%s4182 + $0x70] sm:$0xff]
  %v4198 = vld [vmem:[%s4182 + $0x78] sm:$0xff]
  %v4199 = vld [vmem:[%s4182 + $0x80] sm:$0xff]
  %v4200 = vld [vmem:[%s4182 + $0x88] sm:$0xff]
  %v4201 = vld [vmem:[%s4182 + $0x90] sm:$0xff]
  %v4202 = vld [vmem:[%s4182 + $0x98] sm:$0xff]
  %v4203 = vld [vmem:[%s4182 + $0xa0] sm:$0xff]
  %v4204 = vld [vmem:[%s4182 + $0xa8] sm:$0xff]
  %v4205 = vld [vmem:[%s4182 + $0xb0] sm:$0xff]
  %v4206 = vld [vmem:[%s4182 + $0xb8] sm:$0xff]
  %s4207 = scalar_lea.vmem %s2, 448
  %v4208 = vld [vmem:[%s4207] sm:$0xff]
  %v4209 = vld [vmem:[%s4207 + $0x8] sm:$0xff]
  %v4210 = vld [vmem:[%s4207 + $0x10] sm:$0xff]
  %v4211 = vld [vmem:[%s4207 + $0x18] sm:$0xff]
  %v4212 = vld [vmem:[%s4207 + $0x20] sm:$0xff]
  %v4213 = vld [vmem:[%s4207 + $0x28] sm:$0xff]
  %v4214 = vld [vmem:[%s4207 + $0x30] sm:$0xff]
  %v4215 = vld [vmem:[%s4207 + $0x38] sm:$0xff]
  %s4216 = scalar_lea.vmem %s3, 192
  %v4217 = vld [vmem:[%s4216] sm:$0xff]
  %v4218 = vld [vmem:[%s4216 + $0x8] sm:$0xff]
  %v4219 = vld [vmem:[%s4216 + $0x10] sm:$0xff]
  %v4220 = vld [vmem:[%s4216 + $0x18] sm:$0xff]
  %v4221 = vld [vmem:[%s4216 + $0x20] sm:$0xff]
  %v4222 = vld [vmem:[%s4216 + $0x28] sm:$0xff]
  %v4223 = vld [vmem:[%s4216 + $0x30] sm:$0xff]
  %v4224 = vld [vmem:[%s4216 + $0x38] sm:$0xff]
  %v4225 = vld [vmem:[%s4216 + $0x40] sm:$0xff]
  %v4226 = vld [vmem:[%s4216 + $0x48] sm:$0xff]
  %v4227 = vld [vmem:[%s4216 + $0x50] sm:$0xff]
  %v4228 = vld [vmem:[%s4216 + $0x58] sm:$0xff]
  %v4229 = vld [vmem:[%s4216 + $0x60] sm:$0xff]
  %v4230 = vld [vmem:[%s4216 + $0x68] sm:$0xff]
  %v4231 = vld [vmem:[%s4216 + $0x70] sm:$0xff]
  %v4232 = vld [vmem:[%s4216 + $0x78] sm:$0xff]
  %v4233 = vld [vmem:[%s4216 + $0x80] sm:$0xff]
  %v4234 = vld [vmem:[%s4216 + $0x88] sm:$0xff]
  %v4235 = vld [vmem:[%s4216 + $0x90] sm:$0xff]
  %v4236 = vld [vmem:[%s4216 + $0x98] sm:$0xff]
  %v4237 = vld [vmem:[%s4216 + $0xa0] sm:$0xff]
  %v4238 = vld [vmem:[%s4216 + $0xa8] sm:$0xff]
  %v4239 = vld [vmem:[%s4216 + $0xb0] sm:$0xff]
  %v4240 = vld [vmem:[%s4216 + $0xb8] sm:$0xff]
  %v4242 = vsel %vm134, %v4180, 0
  %v4245 = vsel %vm134, %v4183, 0
  %4247 = vmatprep.subr.mxu0 0.0
  %4248 = vmatpush1.xpose.msra.mxu0 %v4245
  %4249 = vmatprep.subr.mxu0 0.0
  %4250 = vmatpush1.xpose.msra.mxu0 0.0
  %4251 = vmatprep.subr.mxu0 0.0
  %4252 = vmatpush1.xpose.msra.mxu0 0.0
  %4253 = vmatprep.subr.mxu0 0.0
  %4254 = vmatpush1.xpose.msra.mxu0 0.0
  %4255 = vmatprep.subr.mxu0 0.0
  %4256 = vmatpush1.xpose.msra.mxu0 0.0
  %4257 = vmatprep.subr.mxu0 0.0
  %4258 = vmatpush1.xpose.msra.mxu0 0.0
  %4259 = vmatprep.subr.mxu0 0.0
  %4260 = vmatpush1.xpose.msra.mxu0 0.0
  %4261 = vmatprep.subr.mxu0 0.0
  %4262 = vmatpush1.xpose.msra.mxu0 0.0
  %4263 = vmatprep.subr.mxu0 0.0
  %4264 = vmatpush1.xpose.msra.mxu0 0.0
  %4265 = vmatprep.subr.mxu0 0.0
  %4266 = vmatpush1.xpose.msra.mxu0 0.0
  %4267 = vmatprep.subr.mxu0 0.0
  %4268 = vmatpush1.xpose.msra.mxu0 0.0
  %4269 = vmatprep.subr.mxu0 0.0
  %4270 = vmatpush1.xpose.msra.mxu0 0.0
  %4271 = vmatprep.subr.mxu0 0.0
  %4272 = vmatpush1.xpose.msra.mxu0 0.0
  %4273 = vmatprep.subr.mxu0 0.0
  %4274 = vmatpush1.xpose.msra.mxu0 0.0
  %4275 = vmatprep.subr.mxu0 0.0
  %4276 = vmatpush1.xpose.msra.mxu0 0.0
  %4277 = vmatprep.subr.mxu0 0.0
  %4278 = vmatpush1.xpose.msra.mxu0 0.0
  %4279 = vmatprep.subr.mxu0 0.0
  %4280 = vmatpush1.xpose.msra.mxu0 0.0
  %4281 = vmatprep.subr.mxu0 0.0
  %4282 = vmatpush1.xpose.msra.mxu0 0.0
  %4283 = vmatprep.subr.mxu0 0.0
  %4284 = vmatpush1.xpose.msra.mxu0 0.0
  %4285 = vmatprep.subr.mxu0 0.0
  %4286 = vmatpush1.xpose.msra.mxu0 0.0
  %4287 = vmatprep.subr.mxu0 0.0
  %4288 = vmatpush1.xpose.msra.mxu0 0.0
  %4289 = vmatprep.subr.mxu0 0.0
  %4290 = vmatpush1.xpose.msra.mxu0 0.0
  %4291 = vmatprep.subr.mxu0 0.0
  %4292 = vmatpush1.xpose.msra.mxu0 0.0
  %4293 = vmatprep.subr.mxu0 0.0
  %4294 = vmatpush1.xpose.msra.mxu0 0.0
  %4295 = vmatprep.subr.mxu0 0.0
  %4296 = vmatpush1.xpose.msra.mxu0 0.0
  %4297 = vmatprep.subr.mxu0 0.0
  %4298 = vmatpush1.xpose.msra.mxu0 0.0
  %4299 = vmatprep.subr.mxu0 0.0
  %4300 = vmatpush1.xpose.msra.mxu0 0.0
  %4301 = vmatprep.subr.mxu0 0.0
  %4302 = vmatpush1.xpose.msra.mxu0 0.0
  %4303 = vmatprep.subr.mxu0 0.0
  %4304 = vmatpush1.xpose.msra.mxu0 0.0
  %4305 = vmatprep.subr.mxu0 0.0
  %4306 = vmatpush1.xpose.msra.mxu0 0.0
  %4307 = vmatprep.subr.mxu0 0.0
  %4308 = vmatpush1.xpose.msra.mxu0 0.0
  %4309 = vmatprep.subr.mxu0 0.0
  %4310 = vmatpush1.xpose.msra.mxu0 0.0
  %4311 = vmatprep.mubr.f32.mxu0 0.0
  %4312 = vmatmul.mubr.f32.gmra.mrb[0].mxu0 %v4242
  %v4313 = vpop.f32.mrb[0].mxu0
  %v4314 = vadd.f32 %v4217, %v4313
  %v4315 = vpop.f32.mrb[0].mxu0
  %4316 = vdwg.mxu0
  %v4318 = vsel %vm134, %v4181, 0
  %v4321 = vsel %vm134, %v4184, 0
  %4323 = vmatprep.subr.mxu0 0.0
  %4324 = vmatpush1.xpose.msra.mxu0 %v4321
  %4325 = vmatprep.subr.mxu0 0.0
  %4326 = vmatpush1.xpose.msra.mxu0 0.0
  %4327 = vmatprep.subr.mxu0 0.0
  %4328 = vmatpush1.xpose.msra.mxu0 0.0
  %4329 = vmatprep.subr.mxu0 0.0
  %4330 = vmatpush1.xpose.msra.mxu0 0.0
  %4331 = vmatprep.subr.mxu0 0.0
  %4332 = vmatpush1.xpose.msra.mxu0 0.0
  %4333 = vmatprep.subr.mxu0 0.0
  %4334 = vmatpush1.xpose.msra.mxu0 0.0
  %4335 = vmatprep.subr.mxu0 0.0
  %4336 = vmatpush1.xpose.msra.mxu0 0.0
  %4337 = vmatprep.subr.mxu0 0.0
  %4338 = vmatpush1.xpose.msra.mxu0 0.0
  %4339 = vmatprep.subr.mxu0 0.0
  %4340 = vmatpush1.xpose.msra.mxu0 0.0
  %4341 = vmatprep.subr.mxu0 0.0
  %4342 = vmatpush1.xpose.msra.mxu0 0.0
  %4343 = vmatprep.subr.mxu0 0.0
  %4344 = vmatpush1.xpose.msra.mxu0 0.0
  %4345 = vmatprep.subr.mxu0 0.0
  %4346 = vmatpush1.xpose.msra.mxu0 0.0
  %4347 = vmatprep.subr.mxu0 0.0
  %4348 = vmatpush1.xpose.msra.mxu0 0.0
  %4349 = vmatprep.subr.mxu0 0.0
  %4350 = vmatpush1.xpose.msra.mxu0 0.0
  %4351 = vmatprep.subr.mxu0 0.0
  %4352 = vmatpush1.xpose.msra.mxu0 0.0
  %4353 = vmatprep.subr.mxu0 0.0
  %4354 = vmatpush1.xpose.msra.mxu0 0.0
  %4355 = vmatprep.subr.mxu0 0.0
  %4356 = vmatpush1.xpose.msra.mxu0 0.0
  %4357 = vmatprep.subr.mxu0 0.0
  %4358 = vmatpush1.xpose.msra.mxu0 0.0
  %4359 = vmatprep.subr.mxu0 0.0
  %4360 = vmatpush1.xpose.msra.mxu0 0.0
  %4361 = vmatprep.subr.mxu0 0.0
  %4362 = vmatpush1.xpose.msra.mxu0 0.0
  %4363 = vmatprep.subr.mxu0 0.0
  %4364 = vmatpush1.xpose.msra.mxu0 0.0
  %4365 = vmatprep.subr.mxu0 0.0
  %4366 = vmatpush1.xpose.msra.mxu0 0.0
  %4367 = vmatprep.subr.mxu0 0.0
  %4368 = vmatpush1.xpose.msra.mxu0 0.0
  %4369 = vmatprep.subr.mxu0 0.0
  %4370 = vmatpush1.xpose.msra.mxu0 0.0
  %4371 = vmatprep.subr.mxu0 0.0
  %4372 = vmatpush1.xpose.msra.mxu0 0.0
  %4373 = vmatprep.subr.mxu0 0.0
  %4374 = vmatpush1.xpose.msra.mxu0 0.0
  %4375 = vmatprep.subr.mxu0 0.0
  %4376 = vmatpush1.xpose.msra.mxu0 0.0
  %4377 = vmatprep.subr.mxu0 0.0
  %4378 = vmatpush1.xpose.msra.mxu0 0.0
  %4379 = vmatprep.subr.mxu0 0.0
  %4380 = vmatpush1.xpose.msra.mxu0 0.0
  %4381 = vmatprep.subr.mxu0 0.0
  %4382 = vmatpush1.xpose.msra.mxu0 0.0
  %4383 = vmatprep.subr.mxu0 0.0
  %4384 = vmatpush1.xpose.msra.mxu0 0.0
  %4385 = vmatprep.subr.mxu0 0.0
  %4386 = vmatpush1.xpose.msra.mxu0 0.0
  %4387 = vmatprep.mubr.f32.mxu0 0.0
  %4388 = vmatmul.mubr.f32.gmra.mrb[0].mxu0 %v4318
  %v4389 = vpop.f32.mrb[0].mxu0
  %v4390 = vadd.f32 %v4218, %v4389
  %v4391 = vpop.f32.mrb[0].mxu0
  %4392 = vdwg.mxu0
  %v4394 = vsel %vm134, %v4185, 0
  %4396 = vmatprep.subr.mxu0 0.0
  %4397 = vmatpush1.xpose.msra.mxu0 %v4394
  %4398 = vmatprep.subr.mxu0 0.0
  %4399 = vmatpush1.xpose.msra.mxu0 0.0
  %4400 = vmatprep.subr.mxu0 0.0
  %4401 = vmatpush1.xpose.msra.mxu0 0.0
  %4402 = vmatprep.subr.mxu0 0.0
  %4403 = vmatpush1.xpose.msra.mxu0 0.0
  %4404 = vmatprep.subr.mxu0 0.0
  %4405 = vmatpush1.xpose.msra.mxu0 0.0
  %4406 = vmatprep.subr.mxu0 0.0
  %4407 = vmatpush1.xpose.msra.mxu0 0.0
  %4408 = vmatprep.subr.mxu0 0.0
  %4409 = vmatpush1.xpose.msra.mxu0 0.0
  %4410 = vmatprep.subr.mxu0 0.0
  %4411 = vmatpush1.xpose.msra.mxu0 0.0
  %4412 = vmatprep.subr.mxu0 0.0
  %4413 = vmatpush1.xpose.msra.mxu0 0.0
  %4414 = vmatprep.subr.mxu0 0.0
  %4415 = vmatpush1.xpose.msra.mxu0 0.0
  %4416 = vmatprep.subr.mxu0 0.0
  %4417 = vmatpush1.xpose.msra.mxu0 0.0
  %4418 = vmatprep.subr.mxu0 0.0
  %4419 = vmatpush1.xpose.msra.mxu0 0.0
  %4420 = vmatprep.subr.mxu0 0.0
  %4421 = vmatpush1.xpose.msra.mxu0 0.0
  %4422 = vmatprep.subr.mxu0 0.0
  %4423 = vmatpush1.xpose.msra.mxu0 0.0
  %4424 = vmatprep.subr.mxu0 0.0
  %4425 = vmatpush1.xpose.msra.mxu0 0.0
  %4426 = vmatprep.subr.mxu0 0.0
  %4427 = vmatpush1.xpose.msra.mxu0 0.0
  %4428 = vmatprep.subr.mxu0 0.0
  %4429 = vmatpush1.xpose.msra.mxu0 0.0
  %4430 = vmatprep.subr.mxu0 0.0
  %4431 = vmatpush1.xpose.msra.mxu0 0.0
  %4432 = vmatprep.subr.mxu0 0.0
  %4433 = vmatpush1.xpose.msra.mxu0 0.0
  %4434 = vmatprep.subr.mxu0 0.0
  %4435 = vmatpush1.xpose.msra.mxu0 0.0
  %4436 = vmatprep.subr.mxu0 0.0
  %4437 = vmatpush1.xpose.msra.mxu0 0.0
  %4438 = vmatprep.subr.mxu0 0.0
  %4439 = vmatpush1.xpose.msra.mxu0 0.0
  %4440 = vmatprep.subr.mxu0 0.0
  %4441 = vmatpush1.xpose.msra.mxu0 0.0
  %4442 = vmatprep.subr.mxu0 0.0
  %4443 = vmatpush1.xpose.msra.mxu0 0.0
  %4444 = vmatprep.subr.mxu0 0.0
  %4445 = vmatpush1.xpose.msra.mxu0 0.0
  %4446 = vmatprep.subr.mxu0 0.0
  %4447 = vmatpush1.xpose.msra.mxu0 0.0
  %4448 = vmatprep.subr.mxu0 0.0
  %4449 = vmatpush1.xpose.msra.mxu0 0.0
  %4450 = vmatprep.subr.mxu0 0.0
  %4451 = vmatpush1.xpose.msra.mxu0 0.0
  %4452 = vmatprep.subr.mxu0 0.0
  %4453 = vmatpush1.xpose.msra.mxu0 0.0
  %4454 = vmatprep.subr.mxu0 0.0
  %4455 = vmatpush1.xpose.msra.mxu0 0.0
  %4456 = vmatprep.subr.mxu0 0.0
  %4457 = vmatpush1.xpose.msra.mxu0 0.0
  %4458 = vmatprep.subr.mxu0 0.0
  %4459 = vmatpush1.xpose.msra.mxu0 0.0
  %4460 = vmatprep.mubr.f32.mxu0 0.0
  %4461 = vmatmul.mubr.f32.gmra.mrb[0].mxu0 %v4242
  %v4462 = vpop.f32.mrb[0].mxu0
  %v4463 = vadd.f32 %v4219, %v4462
  %v4464 = vpop.f32.mrb[0].mxu0
  %4465 = vdwg.mxu0
  %v4467 = vsel %vm134, %v4186, 0
  %4469 = vmatprep.subr.mxu0 0.0
  %4470 = vmatpush1.xpose.msra.mxu0 %v4467
  %4471 = vmatprep.subr.mxu0 0.0
  %4472 = vmatpush1.xpose.msra.mxu0 0.0
  %4473 = vmatprep.subr.mxu0 0.0
  %4474 = vmatpush1.xpose.msra.mxu0 0.0
  %4475 = vmatprep.subr.mxu0 0.0
  %4476 = vmatpush1.xpose.msra.mxu0 0.0
  %4477 = vmatprep.subr.mxu0 0.0
  %4478 = vmatpush1.xpose.msra.mxu0 0.0
  %4479 = vmatprep.subr.mxu0 0.0
  %4480 = vmatpush1.xpose.msra.mxu0 0.0
  %4481 = vmatprep.subr.mxu0 0.0
  %4482 = vmatpush1.xpose.msra.mxu0 0.0
  %4483 = vmatprep.subr.mxu0 0.0
  %4484 = vmatpush1.xpose.msra.mxu0 0.0
  %4485 = vmatprep.subr.mxu0 0.0
  %4486 = vmatpush1.xpose.msra.mxu0 0.0
  %4487 = vmatprep.subr.mxu0 0.0
  %4488 = vmatpush1.xpose.msra.mxu0 0.0
  %4489 = vmatprep.subr.mxu0 0.0
  %4490 = vmatpush1.xpose.msra.mxu0 0.0
  %4491 = vmatprep.subr.mxu0 0.0
  %4492 = vmatpush1.xpose.msra.mxu0 0.0
  %4493 = vmatprep.subr.mxu0 0.0
  %4494 = vmatpush1.xpose.msra.mxu0 0.0
  %4495 = vmatprep.subr.mxu0 0.0
  %4496 = vmatpush1.xpose.msra.mxu0 0.0
  %4497 = vmatprep.subr.mxu0 0.0
  %4498 = vmatpush1.xpose.msra.mxu0 0.0
  %4499 = vmatprep.subr.mxu0 0.0
  %4500 = vmatpush1.xpose.msra.mxu0 0.0
  %4501 = vmatprep.subr.mxu0 0.0
  %4502 = vmatpush1.xpose.msra.mxu0 0.0
  %4503 = vmatprep.subr.mxu0 0.0
  %4504 = vmatpush1.xpose.msra.mxu0 0.0
  %4505 = vmatprep.subr.mxu0 0.0
  %4506 = vmatpush1.xpose.msra.mxu0 0.0
  %4507 = vmatprep.subr.mxu0 0.0
  %4508 = vmatpush1.xpose.msra.mxu0 0.0
  %4509 = vmatprep.subr.mxu0 0.0
  %4510 = vmatpush1.xpose.msra.mxu0 0.0
  %4511 = vmatprep.subr.mxu0 0.0
  %4512 = vmatpush1.xpose.msra.mxu0 0.0
  %4513 = vmatprep.subr.mxu0 0.0
  %4514 = vmatpush1.xpose.msra.mxu0 0.0
  %4515 = vmatprep.subr.mxu0 0.0
  %4516 = vmatpush1.xpose.msra.mxu0 0.0
  %4517 = vmatprep.subr.mxu0 0.0
  %4518 = vmatpush1.xpose.msra.mxu0 0.0
  %4519 = vmatprep.subr.mxu0 0.0
  %4520 = vmatpush1.xpose.msra.mxu0 0.0
  %4521 = vmatprep.subr.mxu0 0.0
  %4522 = vmatpush1.xpose.msra.mxu0 0.0
  %4523 = vmatprep.subr.mxu0 0.0
  %4524 = vmatpush1.xpose.msra.mxu0 0.0
  %4525 = vmatprep.subr.mxu0 0.0
  %4526 = vmatpush1.xpose.msra.mxu0 0.0
  %4527 = vmatprep.subr.mxu0 0.0
  %4528 = vmatpush1.xpose.msra.mxu0 0.0
  %4529 = vmatprep.subr.mxu0 0.0
  %4530 = vmatpush1.xpose.msra.mxu0 0.0
  %4531 = vmatprep.subr.mxu0 0.0
  %4532 = vmatpush1.xpose.msra.mxu0 0.0
  %4533 = vmatprep.mubr.f32.mxu0 0.0
  %4534 = vmatmul.mubr.f32.gmra.mrb[0].mxu0 %v4318
  %v4535 = vpop.f32.mrb[0].mxu0
  %v4536 = vadd.f32 %v4220, %v4535
  %v4537 = vpop.f32.mrb[0].mxu0
  %4538 = vdwg.mxu0
  %v4540 = vsel %vm134, %v4187, 0
  %4542 = vmatprep.subr.mxu0 0.0
  %4543 = vmatpush1.xpose.msra.mxu0 %v4540
  %4544 = vmatprep.subr.mxu0 0.0
  %4545 = vmatpush1.xpose.msra.mxu0 0.0
  %4546 = vmatprep.subr.mxu0 0.0
  %4547 = vmatpush1.xpose.msra.mxu0 0.0
  %4548 = vmatprep.subr.mxu0 0.0
  %4549 = vmatpush1.xpose.msra.mxu0 0.0
  %4550 = vmatprep.subr.mxu0 0.0
  %4551 = vmatpush1.xpose.msra.mxu0 0.0
  %4552 = vmatprep.subr.mxu0 0.0
  %4553 = vmatpush1.xpose.msra.mxu0 0.0
  %4554 = vmatprep.subr.mxu0 0.0
  %4555 = vmatpush1.xpose.msra.mxu0 0.0
  %4556 = vmatprep.subr.mxu0 0.0
  %4557 = vmatpush1.xpose.msra.mxu0 0.0
  %4558 = vmatprep.subr.mxu0 0.0
  %4559 = vmatpush1.xpose.msra.mxu0 0.0
  %4560 = vmatprep.subr.mxu0 0.0
  %4561 = vmatpush1.xpose.msra.mxu0 0.0
  %4562 = vmatprep.subr.mxu0 0.0
  %4563 = vmatpush1.xpose.msra.mxu0 0.0
  %4564 = vmatprep.subr.mxu0 0.0
  %4565 = vmatpush1.xpose.msra.mxu0 0.0
  %4566 = vmatprep.subr.mxu0 0.0
  %4567 = vmatpush1.xpose.msra.mxu0 0.0
  %4568 = vmatprep.subr.mxu0 0.0
  %4569 = vmatpush1.xpose.msra.mxu0 0.0
  %4570 = vmatprep.subr.mxu0 0.0
  %4571 = vmatpush1.xpose.msra.mxu0 0.0
  %4572 = vmatprep.subr.mxu0 0.0
  %4573 = vmatpush1.xpose.msra.mxu0 0.0
  %4574 = vmatprep.subr.mxu0 0.0
  %4575 = vmatpush1.xpose.msra.mxu0 0.0
  %4576 = vmatprep.subr.mxu0 0.0
  %4577 = vmatpush1.xpose.msra.mxu0 0.0
  %4578 = vmatprep.subr.mxu0 0.0
  %4579 = vmatpush1.xpose.msra.mxu0 0.0
  %4580 = vmatprep.subr.mxu0 0.0
  %4581 = vmatpush1.xpose.msra.mxu0 0.0
  %4582 = vmatprep.subr.mxu0 0.0
  %4583 = vmatpush1.xpose.msra.mxu0 0.0
  %4584 = vmatprep.subr.mxu0 0.0
  %4585 = vmatpush1.xpose.msra.mxu0 0.0
  %4586 = vmatprep.subr.mxu0 0.0
  %4587 = vmatpush1.xpose.msra.mxu0 0.0
  %4588 = vmatprep.subr.mxu0 0.0
  %4589 = vmatpush1.xpose.msra.mxu0 0.0
  %4590 = vmatprep.subr.mxu0 0.0
  %4591 = vmatpush1.xpose.msra.mxu0 0.0
  %4592 = vmatprep.subr.mxu0 0.0
  %4593 = vmatpush1.xpose.msra.mxu0 0.0
  %4594 = vmatprep.subr.mxu0 0.0
  %4595 = vmatpush1.xpose.msra.mxu0 0.0
  %4596 = vmatprep.subr.mxu0 0.0
  %4597 = vmatpush1.xpose.msra.mxu0 0.0
  %4598 = vmatprep.subr.mxu0 0.0
  %4599 = vmatpush1.xpose.msra.mxu0 0.0
  %4600 = vmatprep.subr.mxu0 0.0
  %4601 = vmatpush1.xpose.msra.mxu0 0.0
  %4602 = vmatprep.subr.mxu0 0.0
  %4603 = vmatpush1.xpose.msra.mxu0 0.0
  %4604 = vmatprep.subr.mxu0 0.0
  %4605 = vmatpush1.xpose.msra.mxu0 0.0
  %4606 = vmatprep.mubr.f32.mxu0 0.0
  %4607 = vmatmul.mubr.f32.gmra.mrb[0].mxu0 %v4242
  %v4608 = vpop.f32.mrb[0].mxu0
  %v4609 = vadd.f32 %v4221, %v4608
  %v4610 = vpop.f32.mrb[0].mxu0
  %4611 = vdwg.mxu0
  %v4613 = vsel %vm134, %v4188, 0
  %4615 = vmatprep.subr.mxu0 0.0
  %4616 = vmatpush1.xpose.msra.mxu0 %v4613
  %4617 = vmatprep.subr.mxu0 0.0
  %4618 = vmatpush1.xpose.msra.mxu0 0.0
  %4619 = vmatprep.subr.mxu0 0.0
  %4620 = vmatpush1.xpose.msra.mxu0 0.0
  %4621 = vmatprep.subr.mxu0 0.0
  %4622 = vmatpush1.xpose.msra.mxu0 0.0
  %4623 = vmatprep.subr.mxu0 0.0
  %4624 = vmatpush1.xpose.msra.mxu0 0.0
  %4625 = vmatprep.subr.mxu0 0.0
  %4626 = vmatpush1.xpose.msra.mxu0 0.0
  %4627 = vmatprep.subr.mxu0 0.0
  %4628 = vmatpush1.xpose.msra.mxu0 0.0
  %4629 = vmatprep.subr.mxu0 0.0
  %4630 = vmatpush1.xpose.msra.mxu0 0.0
  %4631 = vmatprep.subr.mxu0 0.0
  %4632 = vmatpush1.xpose.msra.mxu0 0.0
  %4633 = vmatprep.subr.mxu0 0.0
  %4634 = vmatpush1.xpose.msra.mxu0 0.0
  %4635 = vmatprep.subr.mxu0 0.0
  %4636 = vmatpush1.xpose.msra.mxu0 0.0
  %4637 = vmatprep.subr.mxu0 0.0
  %4638 = vmatpush1.xpose.msra.mxu0 0.0
  %4639 = vmatprep.subr.mxu0 0.0
  %4640 = vmatpush1.xpose.msra.mxu0 0.0
  %4641 = vmatprep.subr.mxu0 0.0
  %4642 = vmatpush1.xpose.msra.mxu0 0.0
  %4643 = vmatprep.subr.mxu0 0.0
  %4644 = vmatpush1.xpose.msra.mxu0 0.0
  %4645 = vmatprep.subr.mxu0 0.0
  %4646 = vmatpush1.xpose.msra.mxu0 0.0
  %4647 = vmatprep.subr.mxu0 0.0
  %4648 = vmatpush1.xpose.msra.mxu0 0.0
  %4649 = vmatprep.subr.mxu0 0.0
  %4650 = vmatpush1.xpose.msra.mxu0 0.0
  %4651 = vmatprep.subr.mxu0 0.0
  %4652 = vmatpush1.xpose.msra.mxu0 0.0
  %4653 = vmatprep.subr.mxu0 0.0
  %4654 = vmatpush1.xpose.msra.mxu0 0.0
  %4655 = vmatprep.subr.mxu0 0.0
  %4656 = vmatpush1.xpose.msra.mxu0 0.0
  %4657 = vmatprep.subr.mxu0 0.0
  %4658 = vmatpush1.xpose.msra.mxu0 0.0
  %4659 = vmatprep.subr.mxu0 0.0
  %4660 = vmatpush1.xpose.msra.mxu0 0.0
  %4661 = vmatprep.subr.mxu0 0.0
  %4662 = vmatpush1.xpose.msra.mxu0 0.0
  %4663 = vmatprep.subr.mxu0 0.0
  %4664 = vmatpush1.xpose.msra.mxu0 0.0
  %4665 = vmatprep.subr.mxu0 0.0
  %4666 = vmatpush1.xpose.msra.mxu0 0.0
  %4667 = vmatprep.subr.mxu0 0.0
  %4668 = vmatpush1.xpose.msra.mxu0 0.0
  %4669 = vmatprep.subr.mxu0 0.0
  %4670 = vmatpush1.xpose.msra.mxu0 0.0
  %4671 = vmatprep.subr.mxu0 0.0
  %4672 = vmatpush1.xpose.msra.mxu0 0.0
  %4673 = vmatprep.subr.mxu0 0.0
  %4674 = vmatpush1.xpose.msra.mxu0 0.0
  %4675 = vmatprep.subr.mxu0 0.0
  %4676 = vmatpush1.xpose.msra.mxu0 0.0
  %4677 = vmatprep.subr.mxu0 0.0
  %4678 = vmatpush1.xpose.msra.mxu0 0.0
  %4679 = vmatprep.mubr.f32.mxu0 0.0
  %4680 = vmatmul.mubr.f32.gmra.mrb[0].mxu0 %v4318
  %v4681 = vpop.f32.mrb[0].mxu0
  %v4682 = vadd.f32 %v4222, %v4681
  %v4683 = vpop.f32.mrb[0].mxu0
  %4684 = vdwg.mxu0
  %v4686 = vsel %vm134, %v4189, 0
  %4688 = vmatprep.subr.mxu0 0.0
  %4689 = vmatpush1.xpose.msra.mxu0 %v4686
  %4690 = vmatprep.subr.mxu0 0.0
  %4691 = vmatpush1.xpose.msra.mxu0 0.0
  %4692 = vmatprep.subr.mxu0 0.0
  %4693 = vmatpush1.xpose.msra.mxu0 0.0
  %4694 = vmatprep.subr.mxu0 0.0
  %4695 = vmatpush1.xpose.msra.mxu0 0.0
  %4696 = vmatprep.subr.mxu0 0.0
  %4697 = vmatpush1.xpose.msra.mxu0 0.0
  %4698 = vmatprep.subr.mxu0 0.0
  %4699 = vmatpush1.xpose.msra.mxu0 0.0
  %4700 = vmatprep.subr.mxu0 0.0
  %4701 = vmatpush1.xpose.msra.mxu0 0.0
  %4702 = vmatprep.subr.mxu0 0.0
  %4703 = vmatpush1.xpose.msra.mxu0 0.0
  %4704 = vmatprep.subr.mxu0 0.0
  %4705 = vmatpush1.xpose.msra.mxu0 0.0
  %4706 = vmatprep.subr.mxu0 0.0
  %4707 = vmatpush1.xpose.msra.mxu0 0.0
  %4708 = vmatprep.subr.mxu0 0.0
  %4709 = vmatpush1.xpose.msra.mxu0 0.0
  %4710 = vmatprep.subr.mxu0 0.0
  %4711 = vmatpush1.xpose.msra.mxu0 0.0
  %4712 = vmatprep.subr.mxu0 0.0
  %4713 = vmatpush1.xpose.msra.mxu0 0.0
  %4714 = vmatprep.subr.mxu0 0.0
  %4715 = vmatpush1.xpose.msra.mxu0 0.0
  %4716 = vmatprep.subr.mxu0 0.0
  %4717 = vmatpush1.xpose.msra.mxu0 0.0
  %4718 = vmatprep.subr.mxu0 0.0
  %4719 = vmatpush1.xpose.msra.mxu0 0.0
  %4720 = vmatprep.subr.mxu0 0.0
  %4721 = vmatpush1.xpose.msra.mxu0 0.0
  %4722 = vmatprep.subr.mxu0 0.0
  %4723 = vmatpush1.xpose.msra.mxu0 0.0
  %4724 = vmatprep.subr.mxu0 0.0
  %4725 = vmatpush1.xpose.msra.mxu0 0.0
  %4726 = vmatprep.subr.mxu0 0.0
  %4727 = vmatpush1.xpose.msra.mxu0 0.0
  %4728 = vmatprep.subr.mxu0 0.0
  %4729 = vmatpush1.xpose.msra.mxu0 0.0
  %4730 = vmatprep.subr.mxu0 0.0
  %4731 = vmatpush1.xpose.msra.mxu0 0.0
  %4732 = vmatprep.subr.mxu0 0.0
  %4733 = vmatpush1.xpose.msra.mxu0 0.0
  %4734 = vmatprep.subr.mxu0 0.0
  %4735 = vmatpush1.xpose.msra.mxu0 0.0
  %4736 = vmatprep.subr.mxu0 0.0
  %4737 = vmatpush1.xpose.msra.mxu0 0.0
  %4738 = vmatprep.subr.mxu0 0.0
  %4739 = vmatpush1.xpose.msra.mxu0 0.0
  %4740 = vmatprep.subr.mxu0 0.0
  %4741 = vmatpush1.xpose.msra.mxu0 0.0
  %4742 = vmatprep.subr.mxu0 0.0
  %4743 = vmatpush1.xpose.msra.mxu0 0.0
  %4744 = vmatprep.subr.mxu0 0.0
  %4745 = vmatpush1.xpose.msra.mxu0 0.0
  %4746 = vmatprep.subr.mxu0 0.0
  %4747 = vmatpush1.xpose.msra.mxu0 0.0
  %4748 = vmatprep.subr.mxu0 0.0
  %4749 = vmatpush1.xpose.msra.mxu0 0.0
  %4750 = vmatprep.subr.mxu0 0.0
  %4751 = vmatpush1.xpose.msra.mxu0 0.0
  %4752 = vmatprep.mubr.f32.mxu0 0.0
  %4753 = vmatmul.mubr.f32.gmra.mrb[0].mxu0 %v4242
  %v4754 = vpop.f32.mrb[0].mxu0
  %v4755 = vadd.f32 %v4223, %v4754
  %v4756 = vpop.f32.mrb[0].mxu0
  %4757 = vdwg.mxu0
  %v4759 = vsel %vm134, %v4190, 0
  %4761 = vmatprep.subr.mxu0 0.0
  %4762 = vmatpush1.xpose.msra.mxu0 %v4759
  %4763 = vmatprep.subr.mxu0 0.0
  %4764 = vmatpush1.xpose.msra.mxu0 0.0
  %4765 = vmatprep.subr.mxu0 0.0
  %4766 = vmatpush1.xpose.msra.mxu0 0.0
  %4767 = vmatprep.subr.mxu0 0.0
  %4768 = vmatpush1.xpose.msra.mxu0 0.0
  %4769 = vmatprep.subr.mxu0 0.0
  %4770 = vmatpush1.xpose.msra.mxu0 0.0
  %4771 = vmatprep.subr.mxu0 0.0
  %4772 = vmatpush1.xpose.msra.mxu0 0.0
  %4773 = vmatprep.subr.mxu0 0.0
  %4774 = vmatpush1.xpose.msra.mxu0 0.0
  %4775 = vmatprep.subr.mxu0 0.0
  %4776 = vmatpush1.xpose.msra.mxu0 0.0
  %4777 = vmatprep.subr.mxu0 0.0
  %4778 = vmatpush1.xpose.msra.mxu0 0.0
  %4779 = vmatprep.subr.mxu0 0.0
  %4780 = vmatpush1.xpose.msra.mxu0 0.0
  %4781 = vmatprep.subr.mxu0 0.0
  %4782 = vmatpush1.xpose.msra.mxu0 0.0
  %4783 = vmatprep.subr.mxu0 0.0
  %4784 = vmatpush1.xpose.msra.mxu0 0.0
  %4785 = vmatprep.subr.mxu0 0.0
  %4786 = vmatpush1.xpose.msra.mxu0 0.0
  %4787 = vmatprep.subr.mxu0 0.0
  %4788 = vmatpush1.xpose.msra.mxu0 0.0
  %4789 = vmatprep.subr.mxu0 0.0
  %4790 = vmatpush1.xpose.msra.mxu0 0.0
  %4791 = vmatprep.subr.mxu0 0.0
  %4792 = vmatpush1.xpose.msra.mxu0 0.0
  %4793 = vmatprep.subr.mxu0 0.0
  %4794 = vmatpush1.xpose.msra.mxu0 0.0
  %4795 = vmatprep.subr.mxu0 0.0
  %4796 = vmatpush1.xpose.msra.mxu0 0.0
  %4797 = vmatprep.subr.mxu0 0.0
  %4798 = vmatpush1.xpose.msra.mxu0 0.0
  %4799 = vmatprep.subr.mxu0 0.0
  %4800 = vmatpush1.xpose.msra.mxu0 0.0
  %4801 = vmatprep.subr.mxu0 0.0
  %4802 = vmatpush1.xpose.msra.mxu0 0.0
  %4803 = vmatprep.subr.mxu0 0.0
  %4804 = vmatpush1.xpose.msra.mxu0 0.0
  %4805 = vmatprep.subr.mxu0 0.0
  %4806 = vmatpush1.xpose.msra.mxu0 0.0
  %4807 = vmatprep.subr.mxu0 0.0
  %4808 = vmatpush1.xpose.msra.mxu0 0.0
  %4809 = vmatprep.subr.mxu0 0.0
  %4810 = vmatpush1.xpose.msra.mxu0 0.0
  %4811 = vmatprep.subr.mxu0 0.0
  %4812 = vmatpush1.xpose.msra.mxu0 0.0
  %4813 = vmatprep.subr.mxu0 0.0
  %4814 = vmatpush1.xpose.msra.mxu0 0.0
  %4815 = vmatprep.subr.mxu0 0.0
  %4816 = vmatpush1.xpose.msra.mxu0 0.0
  %4817 = vmatprep.subr.mxu0 0.0
  %4818 = vmatpush1.xpose.msra.mxu0 0.0
  %4819 = vmatprep.subr.mxu0 0.0
  %4820 = vmatpush1.xpose.msra.mxu0 0.0
  %4821 = vmatprep.subr.mxu0 0.0
  %4822 = vmatpush1.xpose.msra.mxu0 0.0
  %4823 = vmatprep.subr.mxu0 0.0
  %4824 = vmatpush1.xpose.msra.mxu0 0.0
  %4825 = vmatprep.mubr.f32.mxu0 0.0
  %4826 = vmatmul.mubr.f32.gmra.mrb[0].mxu0 %v4318
  %v4827 = vpop.f32.mrb[0].mxu0
  %v4828 = vadd.f32 %v4224, %v4827
  %v4829 = vpop.f32.mrb[0].mxu0
  %4830 = vdwg.mxu0
  %v4832 = vsel %vm134, %v4191, 0
  %4834 = vmatprep.subr.mxu0 0.0
  %4835 = vmatpush1.xpose.msra.mxu0 %v4832
  %4836 = vmatprep.subr.mxu0 0.0
  %4837 = vmatpush1.xpose.msra.mxu0 0.0
  %4838 = vmatprep.subr.mxu0 0.0
  %4839 = vmatpush1.xpose.msra.mxu0 0.0
  %4840 = vmatprep.subr.mxu0 0.0
  %4841 = vmatpush1.xpose.msra.mxu0 0.0
  %4842 = vmatprep.subr.mxu0 0.0
  %4843 = vmatpush1.xpose.msra.mxu0 0.0
  %4844 = vmatprep.subr.mxu0 0.0
  %4845 = vmatpush1.xpose.msra.mxu0 0.0
  %4846 = vmatprep.subr.mxu0 0.0
  %4847 = vmatpush1.xpose.msra.mxu0 0.0
  %4848 = vmatprep.subr.mxu0 0.0
  %4849 = vmatpush1.xpose.msra.mxu0 0.0
  %4850 = vmatprep.subr.mxu0 0.0
  %4851 = vmatpush1.xpose.msra.mxu0 0.0
  %4852 = vmatprep.subr.mxu0 0.0
  %4853 = vmatpush1.xpose.msra.mxu0 0.0
  %4854 = vmatprep.subr.mxu0 0.0
  %4855 = vmatpush1.xpose.msra.mxu0 0.0
  %4856 = vmatprep.subr.mxu0 0.0
  %4857 = vmatpush1.xpose.msra.mxu0 0.0
  %4858 = vmatprep.subr.mxu0 0.0
  %4859 = vmatpush1.xpose.msra.mxu0 0.0
  %4860 = vmatprep.subr.mxu0 0.0
  %4861 = vmatpush1.xpose.msra.mxu0 0.0
  %4862 = vmatprep.subr.mxu0 0.0
  %4863 = vmatpush1.xpose.msra.mxu0 0.0
  %4864 = vmatprep.subr.mxu0 0.0
  %4865 = vmatpush1.xpose.msra.mxu0 0.0
  %4866 = vmatprep.subr.mxu0 0.0
  %4867 = vmatpush1.xpose.msra.mxu0 0.0
  %4868 = vmatprep.subr.mxu0 0.0
  %4869 = vmatpush1.xpose.msra.mxu0 0.0
  %4870 = vmatprep.subr.mxu0 0.0
  %4871 = vmatpush1.xpose.msra.mxu0 0.0
  %4872 = vmatprep.subr.mxu0 0.0
  %4873 = vmatpush1.xpose.msra.mxu0 0.0
  %4874 = vmatprep.subr.mxu0 0.0
  %4875 = vmatpush1.xpose.msra.mxu0 0.0
  %4876 = vmatprep.subr.mxu0 0.0
  %4877 = vmatpush1.xpose.msra.mxu0 0.0
  %4878 = vmatprep.subr.mxu0 0.0
  %4879 = vmatpush1.xpose.msra.mxu0 0.0
  %4880 = vmatprep.subr.mxu0 0.0
  %4881 = vmatpush1.xpose.msra.mxu0 0.0
  %4882 = vmatprep.subr.mxu0 0.0
  %4883 = vmatpush1.xpose.msra.mxu0 0.0
  %4884 = vmatprep.subr.mxu0 0.0
  %4885 = vmatpush1.xpose.msra.mxu0 0.0
  %4886 = vmatprep.subr.mxu0 0.0
  %4887 = vmatpush1.xpose.msra.mxu0 0.0
  %4888 = vmatprep.subr.mxu0 0.0
  %4889 = vmatpush1.xpose.msra.mxu0 0.0
  %4890 = vmatprep.subr.mxu0 0.0
  %4891 = vmatpush1.xpose.msra.mxu0 0.0
  %4892 = vmatprep.subr.mxu0 0.0
  %4893 = vmatpush1.xpose.msra.mxu0 0.0
  %4894 = vmatprep.subr.mxu0 0.0
  %4895 = vmatpush1.xpose.msra.mxu0 0.0
  %4896 = vmatprep.subr.mxu0 0.0
  %4897 = vmatpush1.xpose.msra.mxu0 0.0
  %4898 = vmatprep.mubr.f32.mxu0 0.0
  %4899 = vmatmul.mubr.f32.gmra.mrb[0].mxu0 %v4242
  %v4900 = vpop.f32.mrb[0].mxu0
  %v4901 = vadd.f32 %v4225, %v4900
  %v4902 = vpop.f32.mrb[0].mxu0
  %4903 = vdwg.mxu0
  %v4905 = vsel %vm134, %v4192, 0
  %4907 = vmatprep.subr.mxu0 0.0
  %4908 = vmatpush1.xpose.msra.mxu0 %v4905
  %4909 = vmatprep.subr.mxu0 0.0
  %4910 = vmatpush1.xpose.msra.mxu0 0.0
  %4911 = vmatprep.subr.mxu0 0.0
  %4912 = vmatpush1.xpose.msra.mxu0 0.0
  %4913 = vmatprep.subr.mxu0 0.0
  %4914 = vmatpush1.xpose.msra.mxu0 0.0
  %4915 = vmatprep.subr.mxu0 0.0
  %4916 = vmatpush1.xpose.msra.mxu0 0.0
  %4917 = vmatprep.subr.mxu0 0.0
  %4918 = vmatpush1.xpose.msra.mxu0 0.0
  %4919 = vmatprep.subr.mxu0 0.0
  %4920 = vmatpush1.xpose.msra.mxu0 0.0
  %4921 = vmatprep.subr.mxu0 0.0
  %4922 = vmatpush1.xpose.msra.mxu0 0.0
  %4923 = vmatprep.subr.mxu0 0.0
  %4924 = vmatpush1.xpose.msra.mxu0 0.0
  %4925 = vmatprep.subr.mxu0 0.0
  %4926 = vmatpush1.xpose.msra.mxu0 0.0
  %4927 = vmatprep.subr.mxu0 0.0
  %4928 = vmatpush1.xpose.msra.mxu0 0.0
  %4929 = vmatprep.subr.mxu0 0.0
  %4930 = vmatpush1.xpose.msra.mxu0 0.0
  %4931 = vmatprep.subr.mxu0 0.0
  %4932 = vmatpush1.xpose.msra.mxu0 0.0
  %4933 = vmatprep.subr.mxu0 0.0
  %4934 = vmatpush1.xpose.msra.mxu0 0.0
  %4935 = vmatprep.subr.mxu0 0.0
  %4936 = vmatpush1.xpose.msra.mxu0 0.0
  %4937 = vmatprep.subr.mxu0 0.0
  %4938 = vmatpush1.xpose.msra.mxu0 0.0
  %4939 = vmatprep.subr.mxu0 0.0
  %4940 = vmatpush1.xpose.msra.mxu0 0.0
  %4941 = vmatprep.subr.mxu0 0.0
  %4942 = vmatpush1.xpose.msra.mxu0 0.0
  %4943 = vmatprep.subr.mxu0 0.0
  %4944 = vmatpush1.xpose.msra.mxu0 0.0
  %4945 = vmatprep.subr.mxu0 0.0
  %4946 = vmatpush1.xpose.msra.mxu0 0.0
  %4947 = vmatprep.subr.mxu0 0.0
  %4948 = vmatpush1.xpose.msra.mxu0 0.0
  %4949 = vmatprep.subr.mxu0 0.0
  %4950 = vmatpush1.xpose.msra.mxu0 0.0
  %4951 = vmatprep.subr.mxu0 0.0
  %4952 = vmatpush1.xpose.msra.mxu0 0.0
  %4953 = vmatprep.subr.mxu0 0.0
  %4954 = vmatpush1.xpose.msra.mxu0 0.0
  %4955 = vmatprep.subr.mxu0 0.0
  %4956 = vmatpush1.xpose.msra.mxu0 0.0
  %4957 = vmatprep.subr.mxu0 0.0
  %4958 = vmatpush1.xpose.msra.mxu0 0.0
  %4959 = vmatprep.subr.mxu0 0.0
  %4960 = vmatpush1.xpose.msra.mxu0 0.0
  %4961 = vmatprep.subr.mxu0 0.0
  %4962 = vmatpush1.xpose.msra.mxu0 0.0
  %4963 = vmatprep.subr.mxu0 0.0
  %4964 = vmatpush1.xpose.msra.mxu0 0.0
  %4965 = vmatprep.subr.mxu0 0.0
  %4966 = vmatpush1.xpose.msra.mxu0 0.0
  %4967 = vmatprep.subr.mxu0 0.0
  %4968 = vmatpush1.xpose.msra.mxu0 0.0
  %4969 = vmatprep.subr.mxu0 0.0
  %4970 = vmatpush1.xpose.msra.mxu0 0.0
  %4971 = vmatprep.mubr.f32.mxu0 0.0
  %4972 = vmatmul.mubr.f32.gmra.mrb[0].mxu0 %v4318
  %v4973 = vpop.f32.mrb[0].mxu0
  %v4974 = vadd.f32 %v4226, %v4973
  %v4975 = vpop.f32.mrb[0].mxu0
  %4976 = vdwg.mxu0
  %v4978 = vsel %vm134, %v4193, 0
  %4980 = vmatprep.subr.mxu0 0.0
  %4981 = vmatpush1.xpose.msra.mxu0 %v4978
  %4982 = vmatprep.subr.mxu0 0.0
  %4983 = vmatpush1.xpose.msra.mxu0 0.0
  %4984 = vmatprep.subr.mxu0 0.0
  %4985 = vmatpush1.xpose.msra.mxu0 0.0
  %4986 = vmatprep.subr.mxu0 0.0
  %4987 = vmatpush1.xpose.msra.mxu0 0.0
  %4988 = vmatprep.subr.mxu0 0.0
  %4989 = vmatpush1.xpose.msra.mxu0 0.0
  %4990 = vmatprep.subr.mxu0 0.0
  %4991 = vmatpush1.xpose.msra.mxu0 0.0
  %4992 = vmatprep.subr.mxu0 0.0
  %4993 = vmatpush1.xpose.msra.mxu0 0.0
  %4994 = vmatprep.subr.mxu0 0.0
  %4995 = vmatpush1.xpose.msra.mxu0 0.0
  %4996 = vmatprep.subr.mxu0 0.0
  %4997 = vmatpush1.xpose.msra.mxu0 0.0
  %4998 = vmatprep.subr.mxu0 0.0
  %4999 = vmatpush1.xpose.msra.mxu0 0.0
  %5000 = vmatprep.subr.mxu0 0.0
  %5001 = vmatpush1.xpose.msra.mxu0 0.0
  %5002 = vmatprep.subr.mxu0 0.0
  %5003 = vmatpush1.xpose.msra.mxu0 0.0
  %5004 = vmatprep.subr.mxu0 0.0
  %5005 = vmatpush1.xpose.msra.mxu0 0.0
  %5006 = vmatprep.subr.mxu0 0.0
  %5007 = vmatpush1.xpose.msra.mxu0 0.0
  %5008 = vmatprep.subr.mxu0 0.0
  %5009 = vmatpush1.xpose.msra.mxu0 0.0
  %5010 = vmatprep.subr.mxu0 0.0
  %5011 = vmatpush1.xpose.msra.mxu0 0.0
  %5012 = vmatprep.subr.mxu0 0.0
  %5013 = vmatpush1.xpose.msra.mxu0 0.0
  %5014 = vmatprep.subr.mxu0 0.0
  %5015 = vmatpush1.xpose.msra.mxu0 0.0
  %5016 = vmatprep.subr.mxu0 0.0
  %5017 = vmatpush1.xpose.msra.mxu0 0.0
  %5018 = vmatprep.subr.mxu0 0.0
  %5019 = vmatpush1.xpose.msra.mxu0 0.0
  %5020 = vmatprep.subr.mxu0 0.0
  %5021 = vmatpush1.xpose.msra.mxu0 0.0
  %5022 = vmatprep.subr.mxu0 0.0
  %5023 = vmatpush1.xpose.msra.mxu0 0.0
  %5024 = vmatprep.subr.mxu0 0.0
  %5025 = vmatpush1.xpose.msra.mxu0 0.0
  %5026 = vmatprep.subr.mxu0 0.0
  %5027 = vmatpush1.xpose.msra.mxu0 0.0
  %5028 = vmatprep.subr.mxu0 0.0
  %5029 = vmatpush1.xpose.msra.mxu0 0.0
  %5030 = vmatprep.subr.mxu0 0.0
  %5031 = vmatpush1.xpose.msra.mxu0 0.0
  %5032 = vmatprep.subr.mxu0 0.0
  %5033 = vmatpush1.xpose.msra.mxu0 0.0
  %5034 = vmatprep.subr.mxu0 0.0
  %5035 = vmatpush1.xpose.msra.mxu0 0.0
  %5036 = vmatprep.subr.mxu0 0.0
  %5037 = vmatpush1.xpose.msra.mxu0 0.0
  %5038 = vmatprep.subr.mxu0 0.0
  %5039 = vmatpush1.xpose.msra.mxu0 0.0
  %5040 = vmatprep.subr.mxu0 0.0
  %5041 = vmatpush1.xpose.msra.mxu0 0.0
  %5042 = vmatprep.subr.mxu0 0.0
  %5043 = vmatpush1.xpose.msra.mxu0 0.0
  %5044 = vmatprep.mubr.f32.mxu0 0.0
  %5045 = vmatmul.mubr.f32.gmra.mrb[0].mxu0 %v4242
  %v5046 = vpop.f32.mrb[0].mxu0
  %v5047 = vadd.f32 %v4227, %v5046
  %v5048 = vpop.f32.mrb[0].mxu0
  %5049 = vdwg.mxu0
  %v5051 = vsel %vm134, %v4194, 0
  %5053 = vmatprep.subr.mxu0 0.0
  %5054 = vmatpush1.xpose.msra.mxu0 %v5051
  %5055 = vmatprep.subr.mxu0 0.0
  %5056 = vmatpush1.xpose.msra.mxu0 0.0
  %5057 = vmatprep.subr.mxu0 0.0
  %5058 = vmatpush1.xpose.msra.mxu0 0.0
  %5059 = vmatprep.subr.mxu0 0.0
  %5060 = vmatpush1.xpose.msra.mxu0 0.0
  %5061 = vmatprep.subr.mxu0 0.0
  %5062 = vmatpush1.xpose.msra.mxu0 0.0
  %5063 = vmatprep.subr.mxu0 0.0
  %5064 = vmatpush1.xpose.msra.mxu0 0.0
  %5065 = vmatprep.subr.mxu0 0.0
  %5066 = vmatpush1.xpose.msra.mxu0 0.0
  %5067 = vmatprep.subr.mxu0 0.0
  %5068 = vmatpush1.xpose.msra.mxu0 0.0
  %5069 = vmatprep.subr.mxu0 0.0
  %5070 = vmatpush1.xpose.msra.mxu0 0.0
  %5071 = vmatprep.subr.mxu0 0.0
  %5072 = vmatpush1.xpose.msra.mxu0 0.0
  %5073 = vmatprep.subr.mxu0 0.0
  %5074 = vmatpush1.xpose.msra.mxu0 0.0
  %5075 = vmatprep.subr.mxu0 0.0
  %5076 = vmatpush1.xpose.msra.mxu0 0.0
  %5077 = vmatprep.subr.mxu0 0.0
  %5078 = vmatpush1.xpose.msra.mxu0 0.0
  %5079 = vmatprep.subr.mxu0 0.0
  %5080 = vmatpush1.xpose.msra.mxu0 0.0
  %5081 = vmatprep.subr.mxu0 0.0
  %5082 = vmatpush1.xpose.msra.mxu0 0.0
  %5083 = vmatprep.subr.mxu0 0.0
  %5084 = vmatpush1.xpose.msra.mxu0 0.0
  %5085 = vmatprep.subr.mxu0 0.0
  %5086 = vmatpush1.xpose.msra.mxu0 0.0
  %5087 = vmatprep.subr.mxu0 0.0
  %5088 = vmatpush1.xpose.msra.mxu0 0.0
  %5089 = vmatprep.subr.mxu0 0.0
  %5090 = vmatpush1.xpose.msra.mxu0 0.0
  %5091 = vmatprep.subr.mxu0 0.0
  %5092 = vmatpush1.xpose.msra.mxu0 0.0
  %5093 = vmatprep.subr.mxu0 0.0
  %5094 = vmatpush1.xpose.msra.mxu0 0.0
  %5095 = vmatprep.subr.mxu0 0.0
  %5096 = vmatpush1.xpose.msra.mxu0 0.0
  %5097 = vmatprep.subr.mxu0 0.0
  %5098 = vmatpush1.xpose.msra.mxu0 0.0
  %5099 = vmatprep.subr.mxu0 0.0
  %5100 = vmatpush1.xpose.msra.mxu0 0.0
  %5101 = vmatprep.subr.mxu0 0.0
  %5102 = vmatpush1.xpose.msra.mxu0 0.0
  %5103 = vmatprep.subr.mxu0 0.0
  %5104 = vmatpush1.xpose.msra.mxu0 0.0
  %5105 = vmatprep.subr.mxu0 0.0
  %5106 = vmatpush1.xpose.msra.mxu0 0.0
  %5107 = vmatprep.subr.mxu0 0.0
  %5108 = vmatpush1.xpose.msra.mxu0 0.0
  %5109 = vmatprep.subr.mxu0 0.0
  %5110 = vmatpush1.xpose.msra.mxu0 0.0
  %5111 = vmatprep.subr.mxu0 0.0
  %5112 = vmatpush1.xpose.msra.mxu0 0.0
  %5113 = vmatprep.subr.mxu0 0.0
  %5114 = vmatpush1.xpose.msra.mxu0 0.0
  %5115 = vmatprep.subr.mxu0 0.0
  %5116 = vmatpush1.xpose.msra.mxu0 0.0
  %5117 = vmatprep.mubr.f32.mxu0 0.0
  %5118 = vmatmul.mubr.f32.gmra.mrb[0].mxu0 %v4318
  %v5119 = vpop.f32.mrb[0].mxu0
  %v5120 = vadd.f32 %v4228, %v5119
  %v5121 = vpop.f32.mrb[0].mxu0
  %5122 = vdwg.mxu0
  %v5124 = vsel %vm134, %v4195, 0
  %5126 = vmatprep.subr.mxu0 0.0
  %5127 = vmatpush1.xpose.msra.mxu0 %v5124
  %5128 = vmatprep.subr.mxu0 0.0
  %5129 = vmatpush1.xpose.msra.mxu0 0.0
  %5130 = vmatprep.subr.mxu0 0.0
  %5131 = vmatpush1.xpose.msra.mxu0 0.0
  %5132 = vmatprep.subr.mxu0 0.0
  %5133 = vmatpush1.xpose.msra.mxu0 0.0
  %5134 = vmatprep.subr.mxu0 0.0
  %5135 = vmatpush1.xpose.msra.mxu0 0.0
  %5136 = vmatprep.subr.mxu0 0.0
  %5137 = vmatpush1.xpose.msra.mxu0 0.0
  %5138 = vmatprep.subr.mxu0 0.0
  %5139 = vmatpush1.xpose.msra.mxu0 0.0
  %5140 = vmatprep.subr.mxu0 0.0
  %5141 = vmatpush1.xpose.msra.mxu0 0.0
  %5142 = vmatprep.subr.mxu0 0.0
  %5143 = vmatpush1.xpose.msra.mxu0 0.0
  %5144 = vmatprep.subr.mxu0 0.0
  %5145 = vmatpush1.xpose.msra.mxu0 0.0
  %5146 = vmatprep.subr.mxu0 0.0
  %5147 = vmatpush1.xpose.msra.mxu0 0.0
  %5148 = vmatprep.subr.mxu0 0.0
  %5149 = vmatpush1.xpose.msra.mxu0 0.0
  %5150 = vmatprep.subr.mxu0 0.0
  %5151 = vmatpush1.xpose.msra.mxu0 0.0
  %5152 = vmatprep.subr.mxu0 0.0
  %5153 = vmatpush1.xpose.msra.mxu0 0.0
  %5154 = vmatprep.subr.mxu0 0.0
  %5155 = vmatpush1.xpose.msra.mxu0 0.0
  %5156 = vmatprep.subr.mxu0 0.0
  %5157 = vmatpush1.xpose.msra.mxu0 0.0
  %5158 = vmatprep.subr.mxu0 0.0
  %5159 = vmatpush1.xpose.msra.mxu0 0.0
  %5160 = vmatprep.subr.mxu0 0.0
  %5161 = vmatpush1.xpose.msra.mxu0 0.0
  %5162 = vmatprep.subr.mxu0 0.0
  %5163 = vmatpush1.xpose.msra.mxu0 0.0
  %5164 = vmatprep.subr.mxu0 0.0
  %5165 = vmatpush1.xpose.msra.mxu0 0.0
  %5166 = vmatprep.subr.mxu0 0.0
  %5167 = vmatpush1.xpose.msra.mxu0 0.0
  %5168 = vmatprep.subr.mxu0 0.0
  %5169 = vmatpush1.xpose.msra.mxu0 0.0
  %5170 = vmatprep.subr.mxu0 0.0
  %5171 = vmatpush1.xpose.msra.mxu0 0.0
  %5172 = vmatprep.subr.mxu0 0.0
  %5173 = vmatpush1.xpose.msra.mxu0 0.0
  %5174 = vmatprep.subr.mxu0 0.0
  %5175 = vmatpush1.xpose.msra.mxu0 0.0
  %5176 = vmatprep.subr.mxu0 0.0
  %5177 = vmatpush1.xpose.msra.mxu0 0.0
  %5178 = vmatprep.subr.mxu0 0.0
  %5179 = vmatpush1.xpose.msra.mxu0 0.0
  %5180 = vmatprep.subr.mxu0 0.0
  %5181 = vmatpush1.xpose.msra.mxu0 0.0
  %5182 = vmatprep.subr.mxu0 0.0
  %5183 = vmatpush1.xpose.msra.mxu0 0.0
  %5184 = vmatprep.subr.mxu0 0.0
  %5185 = vmatpush1.xpose.msra.mxu0 0.0
  %5186 = vmatprep.subr.mxu0 0.0
  %5187 = vmatpush1.xpose.msra.mxu0 0.0
  %5188 = vmatprep.subr.mxu0 0.0
  %5189 = vmatpush1.xpose.msra.mxu0 0.0
  %5190 = vmatprep.mubr.f32.mxu0 0.0
  %5191 = vmatmul.mubr.f32.gmra.mrb[0].mxu0 %v4242
  %v5192 = vpop.f32.mrb[0].mxu0
  %v5193 = vadd.f32 %v4229, %v5192
  %v5194 = vpop.f32.mrb[0].mxu0
  %5195 = vdwg.mxu0
  %v5197 = vsel %vm134, %v4196, 0
  %5199 = vmatprep.subr.mxu0 0.0
  %5200 = vmatpush1.xpose.msra.mxu0 %v5197
  %5201 = vmatprep.subr.mxu0 0.0
  %5202 = vmatpush1.xpose.msra.mxu0 0.0
  %5203 = vmatprep.subr.mxu0 0.0
  %5204 = vmatpush1.xpose.msra.mxu0 0.0
  %5205 = vmatprep.subr.mxu0 0.0
  %5206 = vmatpush1.xpose.msra.mxu0 0.0
  %5207 = vmatprep.subr.mxu0 0.0
  %5208 = vmatpush1.xpose.msra.mxu0 0.0
  %5209 = vmatprep.subr.mxu0 0.0
  %5210 = vmatpush1.xpose.msra.mxu0 0.0
  %5211 = vmatprep.subr.mxu0 0.0
  %5212 = vmatpush1.xpose.msra.mxu0 0.0
  %5213 = vmatprep.subr.mxu0 0.0
  %5214 = vmatpush1.xpose.msra.mxu0 0.0
  %5215 = vmatprep.subr.mxu0 0.0
  %5216 = vmatpush1.xpose.msra.mxu0 0.0
  %5217 = vmatprep.subr.mxu0 0.0
  %5218 = vmatpush1.xpose.msra.mxu0 0.0
  %5219 = vmatprep.subr.mxu0 0.0
  %5220 = vmatpush1.xpose.msra.mxu0 0.0
  %5221 = vmatprep.subr.mxu0 0.0
  %5222 = vmatpush1.xpose.msra.mxu0 0.0
  %5223 = vmatprep.subr.mxu0 0.0
  %5224 = vmatpush1.xpose.msra.mxu0 0.0
  %5225 = vmatprep.subr.mxu0 0.0
  %5226 = vmatpush1.xpose.msra.mxu0 0.0
  %5227 = vmatprep.subr.mxu0 0.0
  %5228 = vmatpush1.xpose.msra.mxu0 0.0
  %5229 = vmatprep.subr.mxu0 0.0
  %5230 = vmatpush1.xpose.msra.mxu0 0.0
  %5231 = vmatprep.subr.mxu0 0.0
  %5232 = vmatpush1.xpose.msra.mxu0 0.0
  %5233 = vmatprep.subr.mxu0 0.0
  %5234 = vmatpush1.xpose.msra.mxu0 0.0
  %5235 = vmatprep.subr.mxu0 0.0
  %5236 = vmatpush1.xpose.msra.mxu0 0.0
  %5237 = vmatprep.subr.mxu0 0.0
  %5238 = vmatpush1.xpose.msra.mxu0 0.0
  %5239 = vmatprep.subr.mxu0 0.0
  %5240 = vmatpush1.xpose.msra.mxu0 0.0
  %5241 = vmatprep.subr.mxu0 0.0
  %5242 = vmatpush1.xpose.msra.mxu0 0.0
  %5243 = vmatprep.subr.mxu0 0.0
  %5244 = vmatpush1.xpose.msra.mxu0 0.0
  %5245 = vmatprep.subr.mxu0 0.0
  %5246 = vmatpush1.xpose.msra.mxu0 0.0
  %5247 = vmatprep.subr.mxu0 0.0
  %5248 = vmatpush1.xpose.msra.mxu0 0.0
  %5249 = vmatprep.subr.mxu0 0.0
  %5250 = vmatpush1.xpose.msra.mxu0 0.0
  %5251 = vmatprep.subr.mxu0 0.0
  %5252 = vmatpush1.xpose.msra.mxu0 0.0
  %5253 = vmatprep.subr.mxu0 0.0
  %5254 = vmatpush1.xpose.msra.mxu0 0.0
  %5255 = vmatprep.subr.mxu0 0.0
  %5256 = vmatpush1.xpose.msra.mxu0 0.0
  %5257 = vmatprep.subr.mxu0 0.0
  %5258 = vmatpush1.xpose.msra.mxu0 0.0
  %5259 = vmatprep.subr.mxu0 0.0
  %5260 = vmatpush1.xpose.msra.mxu0 0.0
  %5261 = vmatprep.subr.mxu0 0.0
  %5262 = vmatpush1.xpose.msra.mxu0 0.0
  %5263 = vmatprep.mubr.f32.mxu0 0.0
  %5264 = vmatmul.mubr.f32.gmra.mrb[0].mxu0 %v4318
  %v5265 = vpop.f32.mrb[0].mxu0
  %v5266 = vadd.f32 %v4230, %v5265
  %v5267 = vpop.f32.mrb[0].mxu0
  %5268 = vdwg.mxu0
  %v5270 = vsel %vm134, %v4197, 0
  %5272 = vmatprep.subr.mxu0 0.0
  %5273 = vmatpush1.xpose.msra.mxu0 %v5270
  %5274 = vmatprep.subr.mxu0 0.0
  %5275 = vmatpush1.xpose.msra.mxu0 0.0
  %5276 = vmatprep.subr.mxu0 0.0
  %5277 = vmatpush1.xpose.msra.mxu0 0.0
  %5278 = vmatprep.subr.mxu0 0.0
  %5279 = vmatpush1.xpose.msra.mxu0 0.0
  %5280 = vmatprep.subr.mxu0 0.0
  %5281 = vmatpush1.xpose.msra.mxu0 0.0
  %5282 = vmatprep.subr.mxu0 0.0
  %5283 = vmatpush1.xpose.msra.mxu0 0.0
  %5284 = vmatprep.subr.mxu0 0.0
  %5285 = vmatpush1.xpose.msra.mxu0 0.0
  %5286 = vmatprep.subr.mxu0 0.0
  %5287 = vmatpush1.xpose.msra.mxu0 0.0
  %5288 = vmatprep.subr.mxu0 0.0
  %5289 = vmatpush1.xpose.msra.mxu0 0.0
  %5290 = vmatprep.subr.mxu0 0.0
  %5291 = vmatpush1.xpose.msra.mxu0 0.0
  %5292 = vmatprep.subr.mxu0 0.0
  %5293 = vmatpush1.xpose.msra.mxu0 0.0
  %5294 = vmatprep.subr.mxu0 0.0
  %5295 = vmatpush1.xpose.msra.mxu0 0.0
  %5296 = vmatprep.subr.mxu0 0.0
  %5297 = vmatpush1.xpose.msra.mxu0 0.0
  %5298 = vmatprep.subr.mxu0 0.0
  %5299 = vmatpush1.xpose.msra.mxu0 0.0
  %5300 = vmatprep.subr.mxu0 0.0
  %5301 = vmatpush1.xpose.msra.mxu0 0.0
  %5302 = vmatprep.subr.mxu0 0.0
  %5303 = vmatpush1.xpose.msra.mxu0 0.0
  %5304 = vmatprep.subr.mxu0 0.0
  %5305 = vmatpush1.xpose.msra.mxu0 0.0
  %5306 = vmatprep.subr.mxu0 0.0
  %5307 = vmatpush1.xpose.msra.mxu0 0.0
  %5308 = vmatprep.subr.mxu0 0.0
  %5309 = vmatpush1.xpose.msra.mxu0 0.0
  %5310 = vmatprep.subr.mxu0 0.0
  %5311 = vmatpush1.xpose.msra.mxu0 0.0
  %5312 = vmatprep.subr.mxu0 0.0
  %5313 = vmatpush1.xpose.msra.mxu0 0.0
  %5314 = vmatprep.subr.mxu0 0.0
  %5315 = vmatpush1.xpose.msra.mxu0 0.0
  %5316 = vmatprep.subr.mxu0 0.0
  %5317 = vmatpush1.xpose.msra.mxu0 0.0
  %5318 = vmatprep.subr.mxu0 0.0
  %5319 = vmatpush1.xpose.msra.mxu0 0.0
  %5320 = vmatprep.subr.mxu0 0.0
  %5321 = vmatpush1.xpose.msra.mxu0 0.0
  %5322 = vmatprep.subr.mxu0 0.0
  %5323 = vmatpush1.xpose.msra.mxu0 0.0
  %5324 = vmatprep.subr.mxu0 0.0
  %5325 = vmatpush1.xpose.msra.mxu0 0.0
  %5326 = vmatprep.subr.mxu0 0.0
  %5327 = vmatpush1.xpose.msra.mxu0 0.0
  %5328 = vmatprep.subr.mxu0 0.0
  %5329 = vmatpush1.xpose.msra.mxu0 0.0
  %5330 = vmatprep.subr.mxu0 0.0
  %5331 = vmatpush1.xpose.msra.mxu0 0.0
  %5332 = vmatprep.subr.mxu0 0.0
  %5333 = vmatpush1.xpose.msra.mxu0 0.0
  %5334 = vmatprep.subr.mxu0 0.0
  %5335 = vmatpush1.xpose.msra.mxu0 0.0
  %5336 = vmatprep.mubr.f32.mxu0 0.0
  %5337 = vmatmul.mubr.f32.gmra.mrb[0].mxu0 %v4242
  %v5338 = vpop.f32.mrb[0].mxu0
  %v5339 = vadd.f32 %v4231, %v5338
  %v5340 = vpop.f32.mrb[0].mxu0
  %5341 = vdwg.mxu0
  %v5343 = vsel %vm134, %v4198, 0
  %5345 = vmatprep.subr.mxu0 0.0
  %5346 = vmatpush1.xpose.msra.mxu0 %v5343
  %5347 = vmatprep.subr.mxu0 0.0
  %5348 = vmatpush1.xpose.msra.mxu0 0.0
  %5349 = vmatprep.subr.mxu0 0.0
  %5350 = vmatpush1.xpose.msra.mxu0 0.0
  %5351 = vmatprep.subr.mxu0 0.0
  %5352 = vmatpush1.xpose.msra.mxu0 0.0
  %5353 = vmatprep.subr.mxu0 0.0
  %5354 = vmatpush1.xpose.msra.mxu0 0.0
  %5355 = vmatprep.subr.mxu0 0.0
  %5356 = vmatpush1.xpose.msra.mxu0 0.0
  %5357 = vmatprep.subr.mxu0 0.0
  %5358 = vmatpush1.xpose.msra.mxu0 0.0
  %5359 = vmatprep.subr.mxu0 0.0
  %5360 = vmatpush1.xpose.msra.mxu0 0.0
  %5361 = vmatprep.subr.mxu0 0.0
  %5362 = vmatpush1.xpose.msra.mxu0 0.0
  %5363 = vmatprep.subr.mxu0 0.0
  %5364 = vmatpush1.xpose.msra.mxu0 0.0
  %5365 = vmatprep.subr.mxu0 0.0
  %5366 = vmatpush1.xpose.msra.mxu0 0.0
  %5367 = vmatprep.subr.mxu0 0.0
  %5368 = vmatpush1.xpose.msra.mxu0 0.0
  %5369 = vmatprep.subr.mxu0 0.0
  %5370 = vmatpush1.xpose.msra.mxu0 0.0
  %5371 = vmatprep.subr.mxu0 0.0
  %5372 = vmatpush1.xpose.msra.mxu0 0.0
  %5373 = vmatprep.subr.mxu0 0.0
  %5374 = vmatpush1.xpose.msra.mxu0 0.0
  %5375 = vmatprep.subr.mxu0 0.0
  %5376 = vmatpush1.xpose.msra.mxu0 0.0
  %5377 = vmatprep.subr.mxu0 0.0
  %5378 = vmatpush1.xpose.msra.mxu0 0.0
  %5379 = vmatprep.subr.mxu0 0.0
  %5380 = vmatpush1.xpose.msra.mxu0 0.0
  %5381 = vmatprep.subr.mxu0 0.0
  %5382 = vmatpush1.xpose.msra.mxu0 0.0
  %5383 = vmatprep.subr.mxu0 0.0
  %5384 = vmatpush1.xpose.msra.mxu0 0.0
  %5385 = vmatprep.subr.mxu0 0.0
  %5386 = vmatpush1.xpose.msra.mxu0 0.0
  %5387 = vmatprep.subr.mxu0 0.0
  %5388 = vmatpush1.xpose.msra.mxu0 0.0
  %5389 = vmatprep.subr.mxu0 0.0
  %5390 = vmatpush1.xpose.msra.mxu0 0.0
  %5391 = vmatprep.subr.mxu0 0.0
  %5392 = vmatpush1.xpose.msra.mxu0 0.0
  %5393 = vmatprep.subr.mxu0 0.0
  %5394 = vmatpush1.xpose.msra.mxu0 0.0
  %5395 = vmatprep.subr.mxu0 0.0
  %5396 = vmatpush1.xpose.msra.mxu0 0.0
  %5397 = vmatprep.subr.mxu0 0.0
  %5398 = vmatpush1.xpose.msra.mxu0 0.0
  %5399 = vmatprep.subr.mxu0 0.0
  %5400 = vmatpush1.xpose.msra.mxu0 0.0
  %5401 = vmatprep.subr.mxu0 0.0
  %5402 = vmatpush1.xpose.msra.mxu0 0.0
  %5403 = vmatprep.subr.mxu0 0.0
  %5404 = vmatpush1.xpose.msra.mxu0 0.0
  %5405 = vmatprep.subr.mxu0 0.0
  %5406 = vmatpush1.xpose.msra.mxu0 0.0
  %5407 = vmatprep.subr.mxu0 0.0
  %5408 = vmatpush1.xpose.msra.mxu0 0.0
  %5409 = vmatprep.mubr.f32.mxu0 0.0
  %5410 = vmatmul.mubr.f32.gmra.mrb[0].mxu0 %v4318
  %v5411 = vpop.f32.mrb[0].mxu0
  %v5412 = vadd.f32 %v4232, %v5411
  %v5413 = vpop.f32.mrb[0].mxu0
  %5414 = vdwg.mxu0
  %v5416 = vsel %vm134, %v4199, 0
  %5418 = vmatprep.subr.mxu0 0.0
  %5419 = vmatpush1.xpose.msra.mxu0 %v5416
  %5420 = vmatprep.subr.mxu0 0.0
  %5421 = vmatpush1.xpose.msra.mxu0 0.0
  %5422 = vmatprep.subr.mxu0 0.0
  %5423 = vmatpush1.xpose.msra.mxu0 0.0
  %5424 = vmatprep.subr.mxu0 0.0
  %5425 = vmatpush1.xpose.msra.mxu0 0.0
  %5426 = vmatprep.subr.mxu0 0.0
  %5427 = vmatpush1.xpose.msra.mxu0 0.0
  %5428 = vmatprep.subr.mxu0 0.0
  %5429 = vmatpush1.xpose.msra.mxu0 0.0
  %5430 = vmatprep.subr.mxu0 0.0
  %5431 = vmatpush1.xpose.msra.mxu0 0.0
  %5432 = vmatprep.subr.mxu0 0.0
  %5433 = vmatpush1.xpose.msra.mxu0 0.0
  %5434 = vmatprep.subr.mxu0 0.0
  %5435 = vmatpush1.xpose.msra.mxu0 0.0
  %5436 = vmatprep.subr.mxu0 0.0
  %5437 = vmatpush1.xpose.msra.mxu0 0.0
  %5438 = vmatprep.subr.mxu0 0.0
  %5439 = vmatpush1.xpose.msra.mxu0 0.0
  %5440 = vmatprep.subr.mxu0 0.0
  %5441 = vmatpush1.xpose.msra.mxu0 0.0
  %5442 = vmatprep.subr.mxu0 0.0
  %5443 = vmatpush1.xpose.msra.mxu0 0.0
  %5444 = vmatprep.subr.mxu0 0.0
  %5445 = vmatpush1.xpose.msra.mxu0 0.0
  %5446 = vmatprep.subr.mxu0 0.0
  %5447 = vmatpush1.xpose.msra.mxu0 0.0
  %5448 = vmatprep.subr.mxu0 0.0
  %5449 = vmatpush1.xpose.msra.mxu0 0.0
  %5450 = vmatprep.subr.mxu0 0.0
  %5451 = vmatpush1.xpose.msra.mxu0 0.0
  %5452 = vmatprep.subr.mxu0 0.0
  %5453 = vmatpush1.xpose.msra.mxu0 0.0
  %5454 = vmatprep.subr.mxu0 0.0
  %5455 = vmatpush1.xpose.msra.mxu0 0.0
  %5456 = vmatprep.subr.mxu0 0.0
  %5457 = vmatpush1.xpose.msra.mxu0 0.0
  %5458 = vmatprep.subr.mxu0 0.0
  %5459 = vmatpush1.xpose.msra.mxu0 0.0
  %5460 = vmatprep.subr.mxu0 0.0
  %5461 = vmatpush1.xpose.msra.mxu0 0.0
  %5462 = vmatprep.subr.mxu0 0.0
  %5463 = vmatpush1.xpose.msra.mxu0 0.0
  %5464 = vmatprep.subr.mxu0 0.0
  %5465 = vmatpush1.xpose.msra.mxu0 0.0
  %5466 = vmatprep.subr.mxu0 0.0
  %5467 = vmatpush1.xpose.msra.mxu0 0.0
  %5468 = vmatprep.subr.mxu0 0.0
  %5469 = vmatpush1.xpose.msra.mxu0 0.0
  %5470 = vmatprep.subr.mxu0 0.0
  %5471 = vmatpush1.xpose.msra.mxu0 0.0
  %5472 = vmatprep.subr.mxu0 0.0
  %5473 = vmatpush1.xpose.msra.mxu0 0.0
  %5474 = vmatprep.subr.mxu0 0.0
  %5475 = vmatpush1.xpose.msra.mxu0 0.0
  %5476 = vmatprep.subr.mxu0 0.0
  %5477 = vmatpush1.xpose.msra.mxu0 0.0
  %5478 = vmatprep.subr.mxu0 0.0
  %5479 = vmatpush1.xpose.msra.mxu0 0.0
  %5480 = vmatprep.subr.mxu0 0.0
  %5481 = vmatpush1.xpose.msra.mxu0 0.0
  %5482 = vmatprep.mubr.f32.mxu0 0.0
  %5483 = vmatmul.mubr.f32.gmra.mrb[0].mxu0 %v4242
  %v5484 = vpop.f32.mrb[0].mxu0
  %v5485 = vadd.f32 %v4233, %v5484
  %v5486 = vpop.f32.mrb[0].mxu0
  %5487 = vdwg.mxu0
  %v5489 = vsel %vm134, %v4200, 0
  %5491 = vmatprep.subr.mxu0 0.0
  %5492 = vmatpush1.xpose.msra.mxu0 %v5489
  %5493 = vmatprep.subr.mxu0 0.0
  %5494 = vmatpush1.xpose.msra.mxu0 0.0
  %5495 = vmatprep.subr.mxu0 0.0
  %5496 = vmatpush1.xpose.msra.mxu0 0.0
  %5497 = vmatprep.subr.mxu0 0.0
  %5498 = vmatpush1.xpose.msra.mxu0 0.0
  %5499 = vmatprep.subr.mxu0 0.0
  %5500 = vmatpush1.xpose.msra.mxu0 0.0
  %5501 = vmatprep.subr.mxu0 0.0
  %5502 = vmatpush1.xpose.msra.mxu0 0.0
  %5503 = vmatprep.subr.mxu0 0.0
  %5504 = vmatpush1.xpose.msra.mxu0 0.0
  %5505 = vmatprep.subr.mxu0 0.0
  %5506 = vmatpush1.xpose.msra.mxu0 0.0
  %5507 = vmatprep.subr.mxu0 0.0
  %5508 = vmatpush1.xpose.msra.mxu0 0.0
  %5509 = vmatprep.subr.mxu0 0.0
  %5510 = vmatpush1.xpose.msra.mxu0 0.0
  %5511 = vmatprep.subr.mxu0 0.0
  %5512 = vmatpush1.xpose.msra.mxu0 0.0
  %5513 = vmatprep.subr.mxu0 0.0
  %5514 = vmatpush1.xpose.msra.mxu0 0.0
  %5515 = vmatprep.subr.mxu0 0.0
  %5516 = vmatpush1.xpose.msra.mxu0 0.0
  %5517 = vmatprep.subr.mxu0 0.0
  %5518 = vmatpush1.xpose.msra.mxu0 0.0
  %5519 = vmatprep.subr.mxu0 0.0
  %5520 = vmatpush1.xpose.msra.mxu0 0.0
  %5521 = vmatprep.subr.mxu0 0.0
  %5522 = vmatpush1.xpose.msra.mxu0 0.0
  %5523 = vmatprep.subr.mxu0 0.0
  %5524 = vmatpush1.xpose.msra.mxu0 0.0
  %5525 = vmatprep.subr.mxu0 0.0
  %5526 = vmatpush1.xpose.msra.mxu0 0.0
  %5527 = vmatprep.subr.mxu0 0.0
  %5528 = vmatpush1.xpose.msra.mxu0 0.0
  %5529 = vmatprep.subr.mxu0 0.0
  %5530 = vmatpush1.xpose.msra.mxu0 0.0
  %5531 = vmatprep.subr.mxu0 0.0
  %5532 = vmatpush1.xpose.msra.mxu0 0.0
  %5533 = vmatprep.subr.mxu0 0.0
  %5534 = vmatpush1.xpose.msra.mxu0 0.0
  %5535 = vmatprep.subr.mxu0 0.0
  %5536 = vmatpush1.xpose.msra.mxu0 0.0
  %5537 = vmatprep.subr.mxu0 0.0
  %5538 = vmatpush1.xpose.msra.mxu0 0.0
  %5539 = vmatprep.subr.mxu0 0.0
  %5540 = vmatpush1.xpose.msra.mxu0 0.0
  %5541 = vmatprep.subr.mxu0 0.0
  %5542 = vmatpush1.xpose.msra.mxu0 0.0
  %5543 = vmatprep.subr.mxu0 0.0
  %5544 = vmatpush1.xpose.msra.mxu0 0.0
  %5545 = vmatprep.subr.mxu0 0.0
  %5546 = vmatpush1.xpose.msra.mxu0 0.0
  %5547 = vmatprep.subr.mxu0 0.0
  %5548 = vmatpush1.xpose.msra.mxu0 0.0
  %5549 = vmatprep.subr.mxu0 0.0
  %5550 = vmatpush1.xpose.msra.mxu0 0.0
  %5551 = vmatprep.subr.mxu0 0.0
  %5552 = vmatpush1.xpose.msra.mxu0 0.0
  %5553 = vmatprep.subr.mxu0 0.0
  %5554 = vmatpush1.xpose.msra.mxu0 0.0
  %5555 = vmatprep.mubr.f32.mxu0 0.0
  %5556 = vmatmul.mubr.f32.gmra.mrb[0].mxu0 %v4318
  %v5557 = vpop.f32.mrb[0].mxu0
  %v5558 = vadd.f32 %v4234, %v5557
  %v5559 = vpop.f32.mrb[0].mxu0
  %5560 = vdwg.mxu0
  %v5562 = vsel %vm134, %v4201, 0
  %5564 = vmatprep.subr.mxu0 0.0
  %5565 = vmatpush1.xpose.msra.mxu0 %v5562
  %5566 = vmatprep.subr.mxu0 0.0
  %5567 = vmatpush1.xpose.msra.mxu0 0.0
  %5568 = vmatprep.subr.mxu0 0.0
  %5569 = vmatpush1.xpose.msra.mxu0 0.0
  %5570 = vmatprep.subr.mxu0 0.0
  %5571 = vmatpush1.xpose.msra.mxu0 0.0
  %5572 = vmatprep.subr.mxu0 0.0
  %5573 = vmatpush1.xpose.msra.mxu0 0.0
  %5574 = vmatprep.subr.mxu0 0.0
  %5575 = vmatpush1.xpose.msra.mxu0 0.0
  %5576 = vmatprep.subr.mxu0 0.0
  %5577 = vmatpush1.xpose.msra.mxu0 0.0
  %5578 = vmatprep.subr.mxu0 0.0
  %5579 = vmatpush1.xpose.msra.mxu0 0.0
  %5580 = vmatprep.subr.mxu0 0.0
  %5581 = vmatpush1.xpose.msra.mxu0 0.0
  %5582 = vmatprep.subr.mxu0 0.0
  %5583 = vmatpush1.xpose.msra.mxu0 0.0
  %5584 = vmatprep.subr.mxu0 0.0
  %5585 = vmatpush1.xpose.msra.mxu0 0.0
  %5586 = vmatprep.subr.mxu0 0.0
  %5587 = vmatpush1.xpose.msra.mxu0 0.0
  %5588 = vmatprep.subr.mxu0 0.0
  %5589 = vmatpush1.xpose.msra.mxu0 0.0
  %5590 = vmatprep.subr.mxu0 0.0
  %5591 = vmatpush1.xpose.msra.mxu0 0.0
  %5592 = vmatprep.subr.mxu0 0.0
  %5593 = vmatpush1.xpose.msra.mxu0 0.0
  %5594 = vmatprep.subr.mxu0 0.0
  %5595 = vmatpush1.xpose.msra.mxu0 0.0
  %5596 = vmatprep.subr.mxu0 0.0
  %5597 = vmatpush1.xpose.msra.mxu0 0.0
  %5598 = vmatprep.subr.mxu0 0.0
  %5599 = vmatpush1.xpose.msra.mxu0 0.0
  %5600 = vmatprep.subr.mxu0 0.0
  %5601 = vmatpush1.xpose.msra.mxu0 0.0
  %5602 = vmatprep.subr.mxu0 0.0
  %5603 = vmatpush1.xpose.msra.mxu0 0.0
  %5604 = vmatprep.subr.mxu0 0.0
  %5605 = vmatpush1.xpose.msra.mxu0 0.0
  %5606 = vmatprep.subr.mxu0 0.0
  %5607 = vmatpush1.xpose.msra.mxu0 0.0
  %5608 = vmatprep.subr.mxu0 0.0
  %5609 = vmatpush1.xpose.msra.mxu0 0.0
  %5610 = vmatprep.subr.mxu0 0.0
  %5611 = vmatpush1.xpose.msra.mxu0 0.0
  %5612 = vmatprep.subr.mxu0 0.0
  %5613 = vmatpush1.xpose.msra.mxu0 0.0
  %5614 = vmatprep.subr.mxu0 0.0
  %5615 = vmatpush1.xpose.msra.mxu0 0.0
  %5616 = vmatprep.subr.mxu0 0.0
  %5617 = vmatpush1.xpose.msra.mxu0 0.0
  %5618 = vmatprep.subr.mxu0 0.0
  %5619 = vmatpush1.xpose.msra.mxu0 0.0
  %5620 = vmatprep.subr.mxu0 0.0
  %5621 = vmatpush1.xpose.msra.mxu0 0.0
  %5622 = vmatprep.subr.mxu0 0.0
  %5623 = vmatpush1.xpose.msra.mxu0 0.0
  %5624 = vmatprep.subr.mxu0 0.0
  %5625 = vmatpush1.xpose.msra.mxu0 0.0
  %5626 = vmatprep.subr.mxu0 0.0
  %5627 = vmatpush1.xpose.msra.mxu0 0.0
  %5628 = vmatprep.mubr.f32.mxu0 0.0
  %5629 = vmatmul.mubr.f32.gmra.mrb[0].mxu0 %v4242
  %v5630 = vpop.f32.mrb[0].mxu0
  %v5631 = vadd.f32 %v4235, %v5630
  %v5632 = vpop.f32.mrb[0].mxu0
  %5633 = vdwg.mxu0
  %v5635 = vsel %vm134, %v4202, 0
  %5637 = vmatprep.subr.mxu0 0.0
  %5638 = vmatpush1.xpose.msra.mxu0 %v5635
  %5639 = vmatprep.subr.mxu0 0.0
  %5640 = vmatpush1.xpose.msra.mxu0 0.0
  %5641 = vmatprep.subr.mxu0 0.0
  %5642 = vmatpush1.xpose.msra.mxu0 0.0
  %5643 = vmatprep.subr.mxu0 0.0
  %5644 = vmatpush1.xpose.msra.mxu0 0.0
  %5645 = vmatprep.subr.mxu0 0.0
  %5646 = vmatpush1.xpose.msra.mxu0 0.0
  %5647 = vmatprep.subr.mxu0 0.0
  %5648 = vmatpush1.xpose.msra.mxu0 0.0
  %5649 = vmatprep.subr.mxu0 0.0
  %5650 = vmatpush1.xpose.msra.mxu0 0.0
  %5651 = vmatprep.subr.mxu0 0.0
  %5652 = vmatpush1.xpose.msra.mxu0 0.0
  %5653 = vmatprep.subr.mxu0 0.0
  %5654 = vmatpush1.xpose.msra.mxu0 0.0
  %5655 = vmatprep.subr.mxu0 0.0
  %5656 = vmatpush1.xpose.msra.mxu0 0.0
  %5657 = vmatprep.subr.mxu0 0.0
  %5658 = vmatpush1.xpose.msra.mxu0 0.0
  %5659 = vmatprep.subr.mxu0 0.0
  %5660 = vmatpush1.xpose.msra.mxu0 0.0
  %5661 = vmatprep.subr.mxu0 0.0
  %5662 = vmatpush1.xpose.msra.mxu0 0.0
  %5663 = vmatprep.subr.mxu0 0.0
  %5664 = vmatpush1.xpose.msra.mxu0 0.0
  %5665 = vmatprep.subr.mxu0 0.0
  %5666 = vmatpush1.xpose.msra.mxu0 0.0
  %5667 = vmatprep.subr.mxu0 0.0
  %5668 = vmatpush1.xpose.msra.mxu0 0.0
  %5669 = vmatprep.subr.mxu0 0.0
  %5670 = vmatpush1.xpose.msra.mxu0 0.0
  %5671 = vmatprep.subr.mxu0 0.0
  %5672 = vmatpush1.xpose.msra.mxu0 0.0
  %5673 = vmatprep.subr.mxu0 0.0
  %5674 = vmatpush1.xpose.msra.mxu0 0.0
  %5675 = vmatprep.subr.mxu0 0.0
  %5676 = vmatpush1.xpose.msra.mxu0 0.0
  %5677 = vmatprep.subr.mxu0 0.0
  %5678 = vmatpush1.xpose.msra.mxu0 0.0
  %5679 = vmatprep.subr.mxu0 0.0
  %5680 = vmatpush1.xpose.msra.mxu0 0.0
  %5681 = vmatprep.subr.mxu0 0.0
  %5682 = vmatpush1.xpose.msra.mxu0 0.0
  %5683 = vmatprep.subr.mxu0 0.0
  %5684 = vmatpush1.xpose.msra.mxu0 0.0
  %5685 = vmatprep.subr.mxu0 0.0
  %5686 = vmatpush1.xpose.msra.mxu0 0.0
  %5687 = vmatprep.subr.mxu0 0.0
  %5688 = vmatpush1.xpose.msra.mxu0 0.0
  %5689 = vmatprep.subr.mxu0 0.0
  %5690 = vmatpush1.xpose.msra.mxu0 0.0
  %5691 = vmatprep.subr.mxu0 0.0
  %5692 = vmatpush1.xpose.msra.mxu0 0.0
  %5693 = vmatprep.subr.mxu0 0.0
  %5694 = vmatpush1.xpose.msra.mxu0 0.0
  %5695 = vmatprep.subr.mxu0 0.0
  %5696 = vmatpush1.xpose.msra.mxu0 0.0
  %5697 = vmatprep.subr.mxu0 0.0
  %5698 = vmatpush1.xpose.msra.mxu0 0.0
  %5699 = vmatprep.subr.mxu0 0.0
  %5700 = vmatpush1.xpose.msra.mxu0 0.0
  %5701 = vmatprep.mubr.f32.mxu0 0.0
  %5702 = vmatmul.mubr.f32.gmra.mrb[0].mxu0 %v4318
  %v5703 = vpop.f32.mrb[0].mxu0
  %v5704 = vadd.f32 %v4236, %v5703
  %v5705 = vpop.f32.mrb[0].mxu0
  %5706 = vdwg.mxu0
  %v5708 = vsel %vm134, %v4203, 0
  %5710 = vmatprep.subr.mxu0 0.0
  %5711 = vmatpush1.xpose.msra.mxu0 %v5708
  %5712 = vmatprep.subr.mxu0 0.0
  %5713 = vmatpush1.xpose.msra.mxu0 0.0
  %5714 = vmatprep.subr.mxu0 0.0
  %5715 = vmatpush1.xpose.msra.mxu0 0.0
  %5716 = vmatprep.subr.mxu0 0.0
  %5717 = vmatpush1.xpose.msra.mxu0 0.0
  %5718 = vmatprep.subr.mxu0 0.0
  %5719 = vmatpush1.xpose.msra.mxu0 0.0
  %5720 = vmatprep.subr.mxu0 0.0
  %5721 = vmatpush1.xpose.msra.mxu0 0.0
  %5722 = vmatprep.subr.mxu0 0.0
  %5723 = vmatpush1.xpose.msra.mxu0 0.0
  %5724 = vmatprep.subr.mxu0 0.0
  %5725 = vmatpush1.xpose.msra.mxu0 0.0
  %5726 = vmatprep.subr.mxu0 0.0
  %5727 = vmatpush1.xpose.msra.mxu0 0.0
  %5728 = vmatprep.subr.mxu0 0.0
  %5729 = vmatpush1.xpose.msra.mxu0 0.0
  %5730 = vmatprep.subr.mxu0 0.0
  %5731 = vmatpush1.xpose.msra.mxu0 0.0
  %5732 = vmatprep.subr.mxu0 0.0
  %5733 = vmatpush1.xpose.msra.mxu0 0.0
  %5734 = vmatprep.subr.mxu0 0.0
  %5735 = vmatpush1.xpose.msra.mxu0 0.0
  %5736 = vmatprep.subr.mxu0 0.0
  %5737 = vmatpush1.xpose.msra.mxu0 0.0
  %5738 = vmatprep.subr.mxu0 0.0
  %5739 = vmatpush1.xpose.msra.mxu0 0.0
  %5740 = vmatprep.subr.mxu0 0.0
  %5741 = vmatpush1.xpose.msra.mxu0 0.0
  %5742 = vmatprep.subr.mxu0 0.0
  %5743 = vmatpush1.xpose.msra.mxu0 0.0
  %5744 = vmatprep.subr.mxu0 0.0
  %5745 = vmatpush1.xpose.msra.mxu0 0.0
  %5746 = vmatprep.subr.mxu0 0.0
  %5747 = vmatpush1.xpose.msra.mxu0 0.0
  %5748 = vmatprep.subr.mxu0 0.0
  %5749 = vmatpush1.xpose.msra.mxu0 0.0
  %5750 = vmatprep.subr.mxu0 0.0
  %5751 = vmatpush1.xpose.msra.mxu0 0.0
  %5752 = vmatprep.subr.mxu0 0.0
  %5753 = vmatpush1.xpose.msra.mxu0 0.0
  %5754 = vmatprep.subr.mxu0 0.0
  %5755 = vmatpush1.xpose.msra.mxu0 0.0
  %5756 = vmatprep.subr.mxu0 0.0
  %5757 = vmatpush1.xpose.msra.mxu0 0.0
  %5758 = vmatprep.subr.mxu0 0.0
  %5759 = vmatpush1.xpose.msra.mxu0 0.0
  %5760 = vmatprep.subr.mxu0 0.0
  %5761 = vmatpush1.xpose.msra.mxu0 0.0
  %5762 = vmatprep.subr.mxu0 0.0
  %5763 = vmatpush1.xpose.msra.mxu0 0.0
  %5764 = vmatprep.subr.mxu0 0.0
  %5765 = vmatpush1.xpose.msra.mxu0 0.0
  %5766 = vmatprep.subr.mxu0 0.0
  %5767 = vmatpush1.xpose.msra.mxu0 0.0
  %5768 = vmatprep.subr.mxu0 0.0
  %5769 = vmatpush1.xpose.msra.mxu0 0.0
  %5770 = vmatprep.subr.mxu0 0.0
  %5771 = vmatpush1.xpose.msra.mxu0 0.0
  %5772 = vmatprep.subr.mxu0 0.0
  %5773 = vmatpush1.xpose.msra.mxu0 0.0
  %5774 = vmatprep.mubr.f32.mxu0 0.0
  %5775 = vmatmul.mubr.f32.gmra.mrb[0].mxu0 %v4242
  %v5776 = vpop.f32.mrb[0].mxu0
  %v5777 = vadd.f32 %v4237, %v5776
  %v5778 = vpop.f32.mrb[0].mxu0
  %5779 = vdwg.mxu0
  %v5781 = vsel %vm134, %v4204, 0
  %5783 = vmatprep.subr.mxu0 0.0
  %5784 = vmatpush1.xpose.msra.mxu0 %v5781
  %5785 = vmatprep.subr.mxu0 0.0
  %5786 = vmatpush1.xpose.msra.mxu0 0.0
  %5787 = vmatprep.subr.mxu0 0.0
  %5788 = vmatpush1.xpose.msra.mxu0 0.0
  %5789 = vmatprep.subr.mxu0 0.0
  %5790 = vmatpush1.xpose.msra.mxu0 0.0
  %5791 = vmatprep.subr.mxu0 0.0
  %5792 = vmatpush1.xpose.msra.mxu0 0.0
  %5793 = vmatprep.subr.mxu0 0.0
  %5794 = vmatpush1.xpose.msra.mxu0 0.0
  %5795 = vmatprep.subr.mxu0 0.0
  %5796 = vmatpush1.xpose.msra.mxu0 0.0
  %5797 = vmatprep.subr.mxu0 0.0
  %5798 = vmatpush1.xpose.msra.mxu0 0.0
  %5799 = vmatprep.subr.mxu0 0.0
  %5800 = vmatpush1.xpose.msra.mxu0 0.0
  %5801 = vmatprep.subr.mxu0 0.0
  %5802 = vmatpush1.xpose.msra.mxu0 0.0
  %5803 = vmatprep.subr.mxu0 0.0
  %5804 = vmatpush1.xpose.msra.mxu0 0.0
  %5805 = vmatprep.subr.mxu0 0.0
  %5806 = vmatpush1.xpose.msra.mxu0 0.0
  %5807 = vmatprep.subr.mxu0 0.0
  %5808 = vmatpush1.xpose.msra.mxu0 0.0
  %5809 = vmatprep.subr.mxu0 0.0
  %5810 = vmatpush1.xpose.msra.mxu0 0.0
  %5811 = vmatprep.subr.mxu0 0.0
  %5812 = vmatpush1.xpose.msra.mxu0 0.0
  %5813 = vmatprep.subr.mxu0 0.0
  %5814 = vmatpush1.xpose.msra.mxu0 0.0
  %5815 = vmatprep.subr.mxu0 0.0
  %5816 = vmatpush1.xpose.msra.mxu0 0.0
  %5817 = vmatprep.subr.mxu0 0.0
  %5818 = vmatpush1.xpose.msra.mxu0 0.0
  %5819 = vmatprep.subr.mxu0 0.0
  %5820 = vmatpush1.xpose.msra.mxu0 0.0
  %5821 = vmatprep.subr.mxu0 0.0
  %5822 = vmatpush1.xpose.msra.mxu0 0.0
  %5823 = vmatprep.subr.mxu0 0.0
  %5824 = vmatpush1.xpose.msra.mxu0 0.0
  %5825 = vmatprep.subr.mxu0 0.0
  %5826 = vmatpush1.xpose.msra.mxu0 0.0
  %5827 = vmatprep.subr.mxu0 0.0
  %5828 = vmatpush1.xpose.msra.mxu0 0.0
  %5829 = vmatprep.subr.mxu0 0.0
  %5830 = vmatpush1.xpose.msra.mxu0 0.0
  %5831 = vmatprep.subr.mxu0 0.0
  %5832 = vmatpush1.xpose.msra.mxu0 0.0
  %5833 = vmatprep.subr.mxu0 0.0
  %5834 = vmatpush1.xpose.msra.mxu0 0.0
  %5835 = vmatprep.subr.mxu0 0.0
  %5836 = vmatpush1.xpose.msra.mxu0 0.0
  %5837 = vmatprep.subr.mxu0 0.0
  %5838 = vmatpush1.xpose.msra.mxu0 0.0
  %5839 = vmatprep.subr.mxu0 0.0
  %5840 = vmatpush1.xpose.msra.mxu0 0.0
  %5841 = vmatprep.subr.mxu0 0.0
  %5842 = vmatpush1.xpose.msra.mxu0 0.0
  %5843 = vmatprep.subr.mxu0 0.0
  %5844 = vmatpush1.xpose.msra.mxu0 0.0
  %5845 = vmatprep.subr.mxu0 0.0
  %5846 = vmatpush1.xpose.msra.mxu0 0.0
  %5847 = vmatprep.mubr.f32.mxu0 0.0
  %5848 = vmatmul.mubr.f32.gmra.mrb[0].mxu0 %v4318
  %v5849 = vpop.f32.mrb[0].mxu0
  %v5850 = vadd.f32 %v4238, %v5849
  %v5851 = vpop.f32.mrb[0].mxu0
  %5852 = vdwg.mxu0
  %v5854 = vsel %vm134, %v4205, 0
  %5856 = vmatprep.subr.mxu0 0.0
  %5857 = vmatpush1.xpose.msra.mxu0 %v5854
  %5858 = vmatprep.subr.mxu0 0.0
  %5859 = vmatpush1.xpose.msra.mxu0 0.0
  %5860 = vmatprep.subr.mxu0 0.0
  %5861 = vmatpush1.xpose.msra.mxu0 0.0
  %5862 = vmatprep.subr.mxu0 0.0
  %5863 = vmatpush1.xpose.msra.mxu0 0.0
  %5864 = vmatprep.subr.mxu0 0.0
  %5865 = vmatpush1.xpose.msra.mxu0 0.0
  %5866 = vmatprep.subr.mxu0 0.0
  %5867 = vmatpush1.xpose.msra.mxu0 0.0
  %5868 = vmatprep.subr.mxu0 0.0
  %5869 = vmatpush1.xpose.msra.mxu0 0.0
  %5870 = vmatprep.subr.mxu0 0.0
  %5871 = vmatpush1.xpose.msra.mxu0 0.0
  %5872 = vmatprep.subr.mxu0 0.0
  %5873 = vmatpush1.xpose.msra.mxu0 0.0
  %5874 = vmatprep.subr.mxu0 0.0
  %5875 = vmatpush1.xpose.msra.mxu0 0.0
  %5876 = vmatprep.subr.mxu0 0.0
  %5877 = vmatpush1.xpose.msra.mxu0 0.0
  %5878 = vmatprep.subr.mxu0 0.0
  %5879 = vmatpush1.xpose.msra.mxu0 0.0
  %5880 = vmatprep.subr.mxu0 0.0
  %5881 = vmatpush1.xpose.msra.mxu0 0.0
  %5882 = vmatprep.subr.mxu0 0.0
  %5883 = vmatpush1.xpose.msra.mxu0 0.0
  %5884 = vmatprep.subr.mxu0 0.0
  %5885 = vmatpush1.xpose.msra.mxu0 0.0
  %5886 = vmatprep.subr.mxu0 0.0
  %5887 = vmatpush1.xpose.msra.mxu0 0.0
  %5888 = vmatprep.subr.mxu0 0.0
  %5889 = vmatpush1.xpose.msra.mxu0 0.0
  %5890 = vmatprep.subr.mxu0 0.0
  %5891 = vmatpush1.xpose.msra.mxu0 0.0
  %5892 = vmatprep.subr.mxu0 0.0
  %5893 = vmatpush1.xpose.msra.mxu0 0.0
  %5894 = vmatprep.subr.mxu0 0.0
  %5895 = vmatpush1.xpose.msra.mxu0 0.0
  %5896 = vmatprep.subr.mxu0 0.0
  %5897 = vmatpush1.xpose.msra.mxu0 0.0
  %5898 = vmatprep.subr.mxu0 0.0
  %5899 = vmatpush1.xpose.msra.mxu0 0.0
  %5900 = vmatprep.subr.mxu0 0.0
  %5901 = vmatpush1.xpose.msra.mxu0 0.0
  %5902 = vmatprep.subr.mxu0 0.0
  %5903 = vmatpush1.xpose.msra.mxu0 0.0
  %5904 = vmatprep.subr.mxu0 0.0
  %5905 = vmatpush1.xpose.msra.mxu0 0.0
  %5906 = vmatprep.subr.mxu0 0.0
  %5907 = vmatpush1.xpose.msra.mxu0 0.0
  %5908 = vmatprep.subr.mxu0 0.0
  %5909 = vmatpush1.xpose.msra.mxu0 0.0
  %5910 = vmatprep.subr.mxu0 0.0
  %5911 = vmatpush1.xpose.msra.mxu0 0.0
  %5912 = vmatprep.subr.mxu0 0.0
  %5913 = vmatpush1.xpose.msra.mxu0 0.0
  %5914 = vmatprep.subr.mxu0 0.0
  %5915 = vmatpush1.xpose.msra.mxu0 0.0
  %5916 = vmatprep.subr.mxu0 0.0
  %5917 = vmatpush1.xpose.msra.mxu0 0.0
  %5918 = vmatprep.subr.mxu0 0.0
  %5919 = vmatpush1.xpose.msra.mxu0 0.0
  %5920 = vmatprep.mubr.f32.mxu0 0.0
  %5921 = vmatmul.mubr.f32.gmra.mrb[0].mxu0 %v4242
  %v5922 = vpop.f32.mrb[0].mxu0
  %v5923 = vadd.f32 %v4239, %v5922
  %v5924 = vpop.f32.mrb[0].mxu0
  %5925 = vdwg.mxu0
  %v5927 = vsel %vm134, %v4206, 0
  %5929 = vmatprep.subr.mxu0 0.0
  %5930 = vmatpush1.xpose.msra.mxu0 %v5927
  %5931 = vmatprep.subr.mxu0 0.0
  %5932 = vmatpush1.xpose.msra.mxu0 0.0
  %5933 = vmatprep.subr.mxu0 0.0
  %5934 = vmatpush1.xpose.msra.mxu0 0.0
  %5935 = vmatprep.subr.mxu0 0.0
  %5936 = vmatpush1.xpose.msra.mxu0 0.0
  %5937 = vmatprep.subr.mxu0 0.0
  %5938 = vmatpush1.xpose.msra.mxu0 0.0
  %5939 = vmatprep.subr.mxu0 0.0
  %5940 = vmatpush1.xpose.msra.mxu0 0.0
  %5941 = vmatprep.subr.mxu0 0.0
  %5942 = vmatpush1.xpose.msra.mxu0 0.0
  %5943 = vmatprep.subr.mxu0 0.0
  %5944 = vmatpush1.xpose.msra.mxu0 0.0
  %5945 = vmatprep.subr.mxu0 0.0
  %5946 = vmatpush1.xpose.msra.mxu0 0.0
  %5947 = vmatprep.subr.mxu0 0.0
  %5948 = vmatpush1.xpose.msra.mxu0 0.0
  %5949 = vmatprep.subr.mxu0 0.0
  %5950 = vmatpush1.xpose.msra.mxu0 0.0
  %5951 = vmatprep.subr.mxu0 0.0
  %5952 = vmatpush1.xpose.msra.mxu0 0.0
  %5953 = vmatprep.subr.mxu0 0.0
  %5954 = vmatpush1.xpose.msra.mxu0 0.0
  %5955 = vmatprep.subr.mxu0 0.0
  %5956 = vmatpush1.xpose.msra.mxu0 0.0
  %5957 = vmatprep.subr.mxu0 0.0
  %5958 = vmatpush1.xpose.msra.mxu0 0.0
  %5959 = vmatprep.subr.mxu0 0.0
  %5960 = vmatpush1.xpose.msra.mxu0 0.0
  %5961 = vmatprep.subr.mxu0 0.0
  %5962 = vmatpush1.xpose.msra.mxu0 0.0
  %5963 = vmatprep.subr.mxu0 0.0
  %5964 = vmatpush1.xpose.msra.mxu0 0.0
  %5965 = vmatprep.subr.mxu0 0.0
  %5966 = vmatpush1.xpose.msra.mxu0 0.0
  %5967 = vmatprep.subr.mxu0 0.0
  %5968 = vmatpush1.xpose.msra.mxu0 0.0
  %5969 = vmatprep.subr.mxu0 0.0
  %5970 = vmatpush1.xpose.msra.mxu0 0.0
  %5971 = vmatprep.subr.mxu0 0.0
  %5972 = vmatpush1.xpose.msra.mxu0 0.0
  %5973 = vmatprep.subr.mxu0 0.0
  %5974 = vmatpush1.xpose.msra.mxu0 0.0
  %5975 = vmatprep.subr.mxu0 0.0
  %5976 = vmatpush1.xpose.msra.mxu0 0.0
  %5977 = vmatprep.subr.mxu0 0.0
  %5978 = vmatpush1.xpose.msra.mxu0 0.0
  %5979 = vmatprep.subr.mxu0 0.0
  %5980 = vmatpush1.xpose.msra.mxu0 0.0
  %5981 = vmatprep.subr.mxu0 0.0
  %5982 = vmatpush1.xpose.msra.mxu0 0.0
  %5983 = vmatprep.subr.mxu0 0.0
  %5984 = vmatpush1.xpose.msra.mxu0 0.0
  %5985 = vmatprep.subr.mxu0 0.0
  %5986 = vmatpush1.xpose.msra.mxu0 0.0
  %5987 = vmatprep.subr.mxu0 0.0
  %5988 = vmatpush1.xpose.msra.mxu0 0.0
  %5989 = vmatprep.subr.mxu0 0.0
  %5990 = vmatpush1.xpose.msra.mxu0 0.0
  %5991 = vmatprep.subr.mxu0 0.0
  %5992 = vmatpush1.xpose.msra.mxu0 0.0
  %5993 = vmatprep.mubr.f32.mxu0 0.0
  %5994 = vmatmul.mubr.f32.gmra.mrb[0].mxu0 %v4318
  %v5995 = vpop.f32.mrb[0].mxu0
  %v5996 = vadd.f32 %v4240, %v5995
  %v5997 = vpop.f32.mrb[0].mxu0
  %5998 = vdwg.mxu0
  %v6000 = vsel %vm2009, %v4314, 0
  %v6003 = vsel %vm2009, %v4901, 0
  %6005 = vmatprep.subr.mxu0 0.0
  %6006 = vmatpush1.xpose.msra.mxu0 %v6003
  %6007 = vmatprep.subr.mxu0 0.0
  %6008 = vmatpush1.xpose.msra.mxu0 0.0
  %6009 = vmatprep.subr.mxu0 0.0
  %6010 = vmatpush1.xpose.msra.mxu0 0.0
  %6011 = vmatprep.subr.mxu0 0.0
  %6012 = vmatpush1.xpose.msra.mxu0 0.0
  %6013 = vmatprep.subr.mxu0 0.0
  %6014 = vmatpush1.xpose.msra.mxu0 0.0
  %6015 = vmatprep.subr.mxu0 0.0
  %6016 = vmatpush1.xpose.msra.mxu0 0.0
  %6017 = vmatprep.subr.mxu0 0.0
  %6018 = vmatpush1.xpose.msra.mxu0 0.0
  %6019 = vmatprep.subr.mxu0 0.0
  %6020 = vmatpush1.xpose.msra.mxu0 0.0
  %6021 = vmatprep.subr.mxu0 0.0
  %6022 = vmatpush1.xpose.msra.mxu0 0.0
  %6023 = vmatprep.subr.mxu0 0.0
  %6024 = vmatpush1.xpose.msra.mxu0 0.0
  %6025 = vmatprep.subr.mxu0 0.0
  %6026 = vmatpush1.xpose.msra.mxu0 0.0
  %6027 = vmatprep.subr.mxu0 0.0
  %6028 = vmatpush1.xpose.msra.mxu0 0.0
  %6029 = vmatprep.subr.mxu0 0.0
  %6030 = vmatpush1.xpose.msra.mxu0 0.0
  %6031 = vmatprep.subr.mxu0 0.0
  %6032 = vmatpush1.xpose.msra.mxu0 0.0
  %6033 = vmatprep.subr.mxu0 0.0
  %6034 = vmatpush1.xpose.msra.mxu0 0.0
  %6035 = vmatprep.subr.mxu0 0.0
  %6036 = vmatpush1.xpose.msra.mxu0 0.0
  %6037 = vmatprep.subr.mxu0 0.0
  %6038 = vmatpush1.xpose.msra.mxu0 0.0
  %6039 = vmatprep.subr.mxu0 0.0
  %6040 = vmatpush1.xpose.msra.mxu0 0.0
  %6041 = vmatprep.subr.mxu0 0.0
  %6042 = vmatpush1.xpose.msra.mxu0 0.0
  %6043 = vmatprep.subr.mxu0 0.0
  %6044 = vmatpush1.xpose.msra.mxu0 0.0
  %6045 = vmatprep.subr.mxu0 0.0
  %6046 = vmatpush1.xpose.msra.mxu0 0.0
  %6047 = vmatprep.subr.mxu0 0.0
  %6048 = vmatpush1.xpose.msra.mxu0 0.0
  %6049 = vmatprep.subr.mxu0 0.0
  %6050 = vmatpush1.xpose.msra.mxu0 0.0
  %6051 = vmatprep.subr.mxu0 0.0
  %6052 = vmatpush1.xpose.msra.mxu0 0.0
  %6053 = vmatprep.subr.mxu0 0.0
  %6054 = vmatpush1.xpose.msra.mxu0 0.0
  %6055 = vmatprep.subr.mxu0 0.0
  %6056 = vmatpush1.xpose.msra.mxu0 0.0
  %6057 = vmatprep.subr.mxu0 0.0
  %6058 = vmatpush1.xpose.msra.mxu0 0.0
  %6059 = vmatprep.subr.mxu0 0.0
  %6060 = vmatpush1.xpose.msra.mxu0 0.0
  %6061 = vmatprep.subr.mxu0 0.0
  %6062 = vmatpush1.xpose.msra.mxu0 0.0
  %6063 = vmatprep.subr.mxu0 0.0
  %6064 = vmatpush1.xpose.msra.mxu0 0.0
  %6065 = vmatprep.subr.mxu0 0.0
  %6066 = vmatpush1.xpose.msra.mxu0 0.0
  %6067 = vmatprep.subr.mxu0 0.0
  %6068 = vmatpush1.xpose.msra.mxu0 0.0
  %6069 = vmatprep.mubr.f32.mxu0 0.0
  %6070 = vmatmul.mubr.f32.gmra.mrb[0].mxu0 %v6000
  %v6071 = vpop.f32.mrb[0].mxu0
  %v6072 = vadd.f32 %v2002, %v6071
  %v6073 = vpop.f32.mrb[0].mxu0
  %6074 = vdwg.mxu0
  %v6076 = vsel %vm2009, %v4390, 0
  %v6079 = vsel %vm2009, %v4974, 0
  %6081 = vmatprep.subr.mxu0 0.0
  %6082 = vmatpush1.xpose.msra.mxu0 %v6079
  %6083 = vmatprep.subr.mxu0 0.0
  %6084 = vmatpush1.xpose.msra.mxu0 0.0
  %6085 = vmatprep.subr.mxu0 0.0
  %6086 = vmatpush1.xpose.msra.mxu0 0.0
  %6087 = vmatprep.subr.mxu0 0.0
  %6088 = vmatpush1.xpose.msra.mxu0 0.0
  %6089 = vmatprep.subr.mxu0 0.0
  %6090 = vmatpush1.xpose.msra.mxu0 0.0
  %6091 = vmatprep.subr.mxu0 0.0
  %6092 = vmatpush1.xpose.msra.mxu0 0.0
  %6093 = vmatprep.subr.mxu0 0.0
  %6094 = vmatpush1.xpose.msra.mxu0 0.0
  %6095 = vmatprep.subr.mxu0 0.0
  %6096 = vmatpush1.xpose.msra.mxu0 0.0
  %6097 = vmatprep.subr.mxu0 0.0
  %6098 = vmatpush1.xpose.msra.mxu0 0.0
  %6099 = vmatprep.subr.mxu0 0.0
  %6100 = vmatpush1.xpose.msra.mxu0 0.0
  %6101 = vmatprep.subr.mxu0 0.0
  %6102 = vmatpush1.xpose.msra.mxu0 0.0
  %6103 = vmatprep.subr.mxu0 0.0
  %6104 = vmatpush1.xpose.msra.mxu0 0.0
  %6105 = vmatprep.subr.mxu0 0.0
  %6106 = vmatpush1.xpose.msra.mxu0 0.0
  %6107 = vmatprep.subr.mxu0 0.0
  %6108 = vmatpush1.xpose.msra.mxu0 0.0
  %6109 = vmatprep.subr.mxu0 0.0
  %6110 = vmatpush1.xpose.msra.mxu0 0.0
  %6111 = vmatprep.subr.mxu0 0.0
  %6112 = vmatpush1.xpose.msra.mxu0 0.0
  %6113 = vmatprep.subr.mxu0 0.0
  %6114 = vmatpush1.xpose.msra.mxu0 0.0
  %6115 = vmatprep.subr.mxu0 0.0
  %6116 = vmatpush1.xpose.msra.mxu0 0.0
  %6117 = vmatprep.subr.mxu0 0.0
  %6118 = vmatpush1.xpose.msra.mxu0 0.0
  %6119 = vmatprep.subr.mxu0 0.0
  %6120 = vmatpush1.xpose.msra.mxu0 0.0
  %6121 = vmatprep.subr.mxu0 0.0
  %6122 = vmatpush1.xpose.msra.mxu0 0.0
  %6123 = vmatprep.subr.mxu0 0.0
  %6124 = vmatpush1.xpose.msra.mxu0 0.0
  %6125 = vmatprep.subr.mxu0 0.0
  %6126 = vmatpush1.xpose.msra.mxu0 0.0
  %6127 = vmatprep.subr.mxu0 0.0
  %6128 = vmatpush1.xpose.msra.mxu0 0.0
  %6129 = vmatprep.subr.mxu0 0.0
  %6130 = vmatpush1.xpose.msra.mxu0 0.0
  %6131 = vmatprep.subr.mxu0 0.0
  %6132 = vmatpush1.xpose.msra.mxu0 0.0
  %6133 = vmatprep.subr.mxu0 0.0
  %6134 = vmatpush1.xpose.msra.mxu0 0.0
  %6135 = vmatprep.subr.mxu0 0.0
  %6136 = vmatpush1.xpose.msra.mxu0 0.0
  %6137 = vmatprep.subr.mxu0 0.0
  %6138 = vmatpush1.xpose.msra.mxu0 0.0
  %6139 = vmatprep.subr.mxu0 0.0
  %6140 = vmatpush1.xpose.msra.mxu0 0.0
  %6141 = vmatprep.subr.mxu0 0.0
  %6142 = vmatpush1.xpose.msra.mxu0 0.0
  %6143 = vmatprep.subr.mxu0 0.0
  %6144 = vmatpush1.xpose.msra.mxu0 0.0
  %6145 = vmatprep.mubr.f32.mxu0 0.0
  %6146 = vmatmul.mubr.f32.gmra.mrb[0].mxu0 %v6076
  %v6147 = vpop.f32.mrb[0].mxu0
  %v6148 = vadd.f32 %v2006, %v6147
  %v6149 = vpop.f32.mrb[0].mxu0
  %6150 = vdwg.mxu0
  %v6152 = vsel %vm2009, %v4463, 0
  %v6155 = vsel %vm2009, %v5047, 0
  %6157 = vmatprep.subr.mxu0 0.0
  %6158 = vmatpush1.xpose.msra.mxu0 %v6155
  %6159 = vmatprep.subr.mxu0 0.0
  %6160 = vmatpush1.xpose.msra.mxu0 0.0
  %6161 = vmatprep.subr.mxu0 0.0
  %6162 = vmatpush1.xpose.msra.mxu0 0.0
  %6163 = vmatprep.subr.mxu0 0.0
  %6164 = vmatpush1.xpose.msra.mxu0 0.0
  %6165 = vmatprep.subr.mxu0 0.0
  %6166 = vmatpush1.xpose.msra.mxu0 0.0
  %6167 = vmatprep.subr.mxu0 0.0
  %6168 = vmatpush1.xpose.msra.mxu0 0.0
  %6169 = vmatprep.subr.mxu0 0.0
  %6170 = vmatpush1.xpose.msra.mxu0 0.0
  %6171 = vmatprep.subr.mxu0 0.0
  %6172 = vmatpush1.xpose.msra.mxu0 0.0
  %6173 = vmatprep.subr.mxu0 0.0
  %6174 = vmatpush1.xpose.msra.mxu0 0.0
  %6175 = vmatprep.subr.mxu0 0.0
  %6176 = vmatpush1.xpose.msra.mxu0 0.0
  %6177 = vmatprep.subr.mxu0 0.0
  %6178 = vmatpush1.xpose.msra.mxu0 0.0
  %6179 = vmatprep.subr.mxu0 0.0
  %6180 = vmatpush1.xpose.msra.mxu0 0.0
  %6181 = vmatprep.subr.mxu0 0.0
  %6182 = vmatpush1.xpose.msra.mxu0 0.0
  %6183 = vmatprep.subr.mxu0 0.0
  %6184 = vmatpush1.xpose.msra.mxu0 0.0
  %6185 = vmatprep.subr.mxu0 0.0
  %6186 = vmatpush1.xpose.msra.mxu0 0.0
  %6187 = vmatprep.subr.mxu0 0.0
  %6188 = vmatpush1.xpose.msra.mxu0 0.0
  %6189 = vmatprep.subr.mxu0 0.0
  %6190 = vmatpush1.xpose.msra.mxu0 0.0
  %6191 = vmatprep.subr.mxu0 0.0
  %6192 = vmatpush1.xpose.msra.mxu0 0.0
  %6193 = vmatprep.subr.mxu0 0.0
  %6194 = vmatpush1.xpose.msra.mxu0 0.0
  %6195 = vmatprep.subr.mxu0 0.0
  %6196 = vmatpush1.xpose.msra.mxu0 0.0
  %6197 = vmatprep.subr.mxu0 0.0
  %6198 = vmatpush1.xpose.msra.mxu0 0.0
  %6199 = vmatprep.subr.mxu0 0.0
  %6200 = vmatpush1.xpose.msra.mxu0 0.0
  %6201 = vmatprep.subr.mxu0 0.0
  %6202 = vmatpush1.xpose.msra.mxu0 0.0
  %6203 = vmatprep.subr.mxu0 0.0
  %6204 = vmatpush1.xpose.msra.mxu0 0.0
  %6205 = vmatprep.subr.mxu0 0.0
  %6206 = vmatpush1.xpose.msra.mxu0 0.0
  %6207 = vmatprep.subr.mxu0 0.0
  %6208 = vmatpush1.xpose.msra.mxu0 0.0
  %6209 = vmatprep.subr.mxu0 0.0
  %6210 = vmatpush1.xpose.msra.mxu0 0.0
  %6211 = vmatprep.subr.mxu0 0.0
  %6212 = vmatpush1.xpose.msra.mxu0 0.0
  %6213 = vmatprep.subr.mxu0 0.0
  %6214 = vmatpush1.xpose.msra.mxu0 0.0
  %6215 = vmatprep.subr.mxu0 0.0
  %6216 = vmatpush1.xpose.msra.mxu0 0.0
  %6217 = vmatprep.subr.mxu0 0.0
  %6218 = vmatpush1.xpose.msra.mxu0 0.0
  %6219 = vmatprep.subr.mxu0 0.0
  %6220 = vmatpush1.xpose.msra.mxu0 0.0
  %6221 = vmatprep.mubr.f32.mxu0 0.0
  %6222 = vmatmul.mubr.f32.gmra.mrb[0].mxu0 %v6152
  %v6223 = vpop.f32.mrb[0].mxu0
  %v6224 = vadd.f32 %v2002, %v6223
  %v6225 = vpop.f32.mrb[0].mxu0
  %6226 = vdwg.mxu0
  %v6228 = vsel %vm2009, %v4536, 0
  %v6231 = vsel %vm2009, %v5120, 0
  %6233 = vmatprep.subr.mxu0 0.0
  %6234 = vmatpush1.xpose.msra.mxu0 %v6231
  %6235 = vmatprep.subr.mxu0 0.0
  %6236 = vmatpush1.xpose.msra.mxu0 0.0
  %6237 = vmatprep.subr.mxu0 0.0
  %6238 = vmatpush1.xpose.msra.mxu0 0.0
  %6239 = vmatprep.subr.mxu0 0.0
  %6240 = vmatpush1.xpose.msra.mxu0 0.0
  %6241 = vmatprep.subr.mxu0 0.0
  %6242 = vmatpush1.xpose.msra.mxu0 0.0
  %6243 = vmatprep.subr.mxu0 0.0
  %6244 = vmatpush1.xpose.msra.mxu0 0.0
  %6245 = vmatprep.subr.mxu0 0.0
  %6246 = vmatpush1.xpose.msra.mxu0 0.0
  %6247 = vmatprep.subr.mxu0 0.0
  %6248 = vmatpush1.xpose.msra.mxu0 0.0
  %6249 = vmatprep.subr.mxu0 0.0
  %6250 = vmatpush1.xpose.msra.mxu0 0.0
  %6251 = vmatprep.subr.mxu0 0.0
  %6252 = vmatpush1.xpose.msra.mxu0 0.0
  %6253 = vmatprep.subr.mxu0 0.0
  %6254 = vmatpush1.xpose.msra.mxu0 0.0
  %6255 = vmatprep.subr.mxu0 0.0
  %6256 = vmatpush1.xpose.msra.mxu0 0.0
  %6257 = vmatprep.subr.mxu0 0.0
  %6258 = vmatpush1.xpose.msra.mxu0 0.0
  %6259 = vmatprep.subr.mxu0 0.0
  %6260 = vmatpush1.xpose.msra.mxu0 0.0
  %6261 = vmatprep.subr.mxu0 0.0
  %6262 = vmatpush1.xpose.msra.mxu0 0.0
  %6263 = vmatprep.subr.mxu0 0.0
  %6264 = vmatpush1.xpose.msra.mxu0 0.0
  %6265 = vmatprep.subr.mxu0 0.0
  %6266 = vmatpush1.xpose.msra.mxu0 0.0
  %6267 = vmatprep.subr.mxu0 0.0
  %6268 = vmatpush1.xpose.msra.mxu0 0.0
  %6269 = vmatprep.subr.mxu0 0.0
  %6270 = vmatpush1.xpose.msra.mxu0 0.0
  %6271 = vmatprep.subr.mxu0 0.0
  %6272 = vmatpush1.xpose.msra.mxu0 0.0
  %6273 = vmatprep.subr.mxu0 0.0
  %6274 = vmatpush1.xpose.msra.mxu0 0.0
  %6275 = vmatprep.subr.mxu0 0.0
  %6276 = vmatpush1.xpose.msra.mxu0 0.0
  %6277 = vmatprep.subr.mxu0 0.0
  %6278 = vmatpush1.xpose.msra.mxu0 0.0
  %6279 = vmatprep.subr.mxu0 0.0
  %6280 = vmatpush1.xpose.msra.mxu0 0.0
  %6281 = vmatprep.subr.mxu0 0.0
  %6282 = vmatpush1.xpose.msra.mxu0 0.0
  %6283 = vmatprep.subr.mxu0 0.0
  %6284 = vmatpush1.xpose.msra.mxu0 0.0
  %6285 = vmatprep.subr.mxu0 0.0
  %6286 = vmatpush1.xpose.msra.mxu0 0.0
  %6287 = vmatprep.subr.mxu0 0.0
  %6288 = vmatpush1.xpose.msra.mxu0 0.0
  %6289 = vmatprep.subr.mxu0 0.0
  %6290 = vmatpush1.xpose.msra.mxu0 0.0
  %6291 = vmatprep.subr.mxu0 0.0
  %6292 = vmatpush1.xpose.msra.mxu0 0.0
  %6293 = vmatprep.subr.mxu0 0.0
  %6294 = vmatpush1.xpose.msra.mxu0 0.0
  %6295 = vmatprep.subr.mxu0 0.0
  %6296 = vmatpush1.xpose.msra.mxu0 0.0
  %6297 = vmatprep.mubr.f32.mxu0 0.0
  %6298 = vmatmul.mubr.f32.gmra.mrb[0].mxu0 %v6228
  %v6299 = vpop.f32.mrb[0].mxu0
  %v6300 = vadd.f32 %v2006, %v6299
  %v6301 = vpop.f32.mrb[0].mxu0
  %6302 = vdwg.mxu0
  %v6304 = vsel %vm2009, %v4609, 0
  %v6307 = vsel %vm2009, %v5193, 0
  %6309 = vmatprep.subr.mxu0 0.0
  %6310 = vmatpush1.xpose.msra.mxu0 %v6307
  %6311 = vmatprep.subr.mxu0 0.0
  %6312 = vmatpush1.xpose.msra.mxu0 0.0
  %6313 = vmatprep.subr.mxu0 0.0
  %6314 = vmatpush1.xpose.msra.mxu0 0.0
  %6315 = vmatprep.subr.mxu0 0.0
  %6316 = vmatpush1.xpose.msra.mxu0 0.0
  %6317 = vmatprep.subr.mxu0 0.0
  %6318 = vmatpush1.xpose.msra.mxu0 0.0
  %6319 = vmatprep.subr.mxu0 0.0
  %6320 = vmatpush1.xpose.msra.mxu0 0.0
  %6321 = vmatprep.subr.mxu0 0.0
  %6322 = vmatpush1.xpose.msra.mxu0 0.0
  %6323 = vmatprep.subr.mxu0 0.0
  %6324 = vmatpush1.xpose.msra.mxu0 0.0
  %6325 = vmatprep.subr.mxu0 0.0
  %6326 = vmatpush1.xpose.msra.mxu0 0.0
  %6327 = vmatprep.subr.mxu0 0.0
  %6328 = vmatpush1.xpose.msra.mxu0 0.0
  %6329 = vmatprep.subr.mxu0 0.0
  %6330 = vmatpush1.xpose.msra.mxu0 0.0
  %6331 = vmatprep.subr.mxu0 0.0
  %6332 = vmatpush1.xpose.msra.mxu0 0.0
  %6333 = vmatprep.subr.mxu0 0.0
  %6334 = vmatpush1.xpose.msra.mxu0 0.0
  %6335 = vmatprep.subr.mxu0 0.0
  %6336 = vmatpush1.xpose.msra.mxu0 0.0
  %6337 = vmatprep.subr.mxu0 0.0
  %6338 = vmatpush1.xpose.msra.mxu0 0.0
  %6339 = vmatprep.subr.mxu0 0.0
  %6340 = vmatpush1.xpose.msra.mxu0 0.0
  %6341 = vmatprep.subr.mxu0 0.0
  %6342 = vmatpush1.xpose.msra.mxu0 0.0
  %6343 = vmatprep.subr.mxu0 0.0
  %6344 = vmatpush1.xpose.msra.mxu0 0.0
  %6345 = vmatprep.subr.mxu0 0.0
  %6346 = vmatpush1.xpose.msra.mxu0 0.0
  %6347 = vmatprep.subr.mxu0 0.0
  %6348 = vmatpush1.xpose.msra.mxu0 0.0
  %6349 = vmatprep.subr.mxu0 0.0
  %6350 = vmatpush1.xpose.msra.mxu0 0.0
  %6351 = vmatprep.subr.mxu0 0.0
  %6352 = vmatpush1.xpose.msra.mxu0 0.0
  %6353 = vmatprep.subr.mxu0 0.0
  %6354 = vmatpush1.xpose.msra.mxu0 0.0
  %6355 = vmatprep.subr.mxu0 0.0
  %6356 = vmatpush1.xpose.msra.mxu0 0.0
  %6357 = vmatprep.subr.mxu0 0.0
  %6358 = vmatpush1.xpose.msra.mxu0 0.0
  %6359 = vmatprep.subr.mxu0 0.0
  %6360 = vmatpush1.xpose.msra.mxu0 0.0
  %6361 = vmatprep.subr.mxu0 0.0
  %6362 = vmatpush1.xpose.msra.mxu0 0.0
  %6363 = vmatprep.subr.mxu0 0.0
  %6364 = vmatpush1.xpose.msra.mxu0 0.0
  %6365 = vmatprep.subr.mxu0 0.0
  %6366 = vmatpush1.xpose.msra.mxu0 0.0
  %6367 = vmatprep.subr.mxu0 0.0
  %6368 = vmatpush1.xpose.msra.mxu0 0.0
  %6369 = vmatprep.subr.mxu0 0.0
  %6370 = vmatpush1.xpose.msra.mxu0 0.0
  %6371 = vmatprep.subr.mxu0 0.0
  %6372 = vmatpush1.xpose.msra.mxu0 0.0
  %6373 = vmatprep.mubr.f32.mxu0 0.0
  %6374 = vmatmul.mubr.f32.gmra.mrb[0].mxu0 %v6304
  %v6375 = vpop.f32.mrb[0].mxu0
  %v6376 = vadd.f32 %v2002, %v6375
  %v6377 = vpop.f32.mrb[0].mxu0
  %6378 = vdwg.mxu0
  %v6380 = vsel %vm2009, %v4682, 0
  %v6383 = vsel %vm2009, %v5266, 0
  %6385 = vmatprep.subr.mxu0 0.0
  %6386 = vmatpush1.xpose.msra.mxu0 %v6383
  %6387 = vmatprep.subr.mxu0 0.0
  %6388 = vmatpush1.xpose.msra.mxu0 0.0
  %6389 = vmatprep.subr.mxu0 0.0
  %6390 = vmatpush1.xpose.msra.mxu0 0.0
  %6391 = vmatprep.subr.mxu0 0.0
  %6392 = vmatpush1.xpose.msra.mxu0 0.0
  %6393 = vmatprep.subr.mxu0 0.0
  %6394 = vmatpush1.xpose.msra.mxu0 0.0
  %6395 = vmatprep.subr.mxu0 0.0
  %6396 = vmatpush1.xpose.msra.mxu0 0.0
  %6397 = vmatprep.subr.mxu0 0.0
  %6398 = vmatpush1.xpose.msra.mxu0 0.0
  %6399 = vmatprep.subr.mxu0 0.0
  %6400 = vmatpush1.xpose.msra.mxu0 0.0
  %6401 = vmatprep.subr.mxu0 0.0
  %6402 = vmatpush1.xpose.msra.mxu0 0.0
  %6403 = vmatprep.subr.mxu0 0.0
  %6404 = vmatpush1.xpose.msra.mxu0 0.0
  %6405 = vmatprep.subr.mxu0 0.0
  %6406 = vmatpush1.xpose.msra.mxu0 0.0
  %6407 = vmatprep.subr.mxu0 0.0
  %6408 = vmatpush1.xpose.msra.mxu0 0.0
  %6409 = vmatprep.subr.mxu0 0.0
  %6410 = vmatpush1.xpose.msra.mxu0 0.0
  %6411 = vmatprep.subr.mxu0 0.0
  %6412 = vmatpush1.xpose.msra.mxu0 0.0
  %6413 = vmatprep.subr.mxu0 0.0
  %6414 = vmatpush1.xpose.msra.mxu0 0.0
  %6415 = vmatprep.subr.mxu0 0.0
  %6416 = vmatpush1.xpose.msra.mxu0 0.0
  %6417 = vmatprep.subr.mxu0 0.0
  %6418 = vmatpush1.xpose.msra.mxu0 0.0
  %6419 = vmatprep.subr.mxu0 0.0
  %6420 = vmatpush1.xpose.msra.mxu0 0.0
  %6421 = vmatprep.subr.mxu0 0.0
  %6422 = vmatpush1.xpose.msra.mxu0 0.0
  %6423 = vmatprep.subr.mxu0 0.0
  %6424 = vmatpush1.xpose.msra.mxu0 0.0
  %6425 = vmatprep.subr.mxu0 0.0
  %6426 = vmatpush1.xpose.msra.mxu0 0.0
  %6427 = vmatprep.subr.mxu0 0.0
  %6428 = vmatpush1.xpose.msra.mxu0 0.0
  %6429 = vmatprep.subr.mxu0 0.0
  %6430 = vmatpush1.xpose.msra.mxu0 0.0
  %6431 = vmatprep.subr.mxu0 0.0
  %6432 = vmatpush1.xpose.msra.mxu0 0.0
  %6433 = vmatprep.subr.mxu0 0.0
  %6434 = vmatpush1.xpose.msra.mxu0 0.0
  %6435 = vmatprep.subr.mxu0 0.0
  %6436 = vmatpush1.xpose.msra.mxu0 0.0
  %6437 = vmatprep.subr.mxu0 0.0
  %6438 = vmatpush1.xpose.msra.mxu0 0.0
  %6439 = vmatprep.subr.mxu0 0.0
  %6440 = vmatpush1.xpose.msra.mxu0 0.0
  %6441 = vmatprep.subr.mxu0 0.0
  %6442 = vmatpush1.xpose.msra.mxu0 0.0
  %6443 = vmatprep.subr.mxu0 0.0
  %6444 = vmatpush1.xpose.msra.mxu0 0.0
  %6445 = vmatprep.subr.mxu0 0.0
  %6446 = vmatpush1.xpose.msra.mxu0 0.0
  %6447 = vmatprep.subr.mxu0 0.0
  %6448 = vmatpush1.xpose.msra.mxu0 0.0
  %6449 = vmatprep.mubr.f32.mxu0 0.0
  %6450 = vmatmul.mubr.f32.gmra.mrb[0].mxu0 %v6380
  %v6451 = vpop.f32.mrb[0].mxu0
  %v6452 = vadd.f32 %v2006, %v6451
  %v6453 = vpop.f32.mrb[0].mxu0
  %6454 = vdwg.mxu0
  %v6456 = vsel %vm2009, %v4755, 0
  %v6459 = vsel %vm2009, %v5339, 0
  %6461 = vmatprep.subr.mxu0 0.0
  %6462 = vmatpush1.xpose.msra.mxu0 %v6459
  %6463 = vmatprep.subr.mxu0 0.0
  %6464 = vmatpush1.xpose.msra.mxu0 0.0
  %6465 = vmatprep.subr.mxu0 0.0
  %6466 = vmatpush1.xpose.msra.mxu0 0.0
  %6467 = vmatprep.subr.mxu0 0.0
  %6468 = vmatpush1.xpose.msra.mxu0 0.0
  %6469 = vmatprep.subr.mxu0 0.0
  %6470 = vmatpush1.xpose.msra.mxu0 0.0
  %6471 = vmatprep.subr.mxu0 0.0
  %6472 = vmatpush1.xpose.msra.mxu0 0.0
  %6473 = vmatprep.subr.mxu0 0.0
  %6474 = vmatpush1.xpose.msra.mxu0 0.0
  %6475 = vmatprep.subr.mxu0 0.0
  %6476 = vmatpush1.xpose.msra.mxu0 0.0
  %6477 = vmatprep.subr.mxu0 0.0
  %6478 = vmatpush1.xpose.msra.mxu0 0.0
  %6479 = vmatprep.subr.mxu0 0.0
  %6480 = vmatpush1.xpose.msra.mxu0 0.0
  %6481 = vmatprep.subr.mxu0 0.0
  %6482 = vmatpush1.xpose.msra.mxu0 0.0
  %6483 = vmatprep.subr.mxu0 0.0
  %6484 = vmatpush1.xpose.msra.mxu0 0.0
  %6485 = vmatprep.subr.mxu0 0.0
  %6486 = vmatpush1.xpose.msra.mxu0 0.0
  %6487 = vmatprep.subr.mxu0 0.0
  %6488 = vmatpush1.xpose.msra.mxu0 0.0
  %6489 = vmatprep.subr.mxu0 0.0
  %6490 = vmatpush1.xpose.msra.mxu0 0.0
  %6491 = vmatprep.subr.mxu0 0.0
  %6492 = vmatpush1.xpose.msra.mxu0 0.0
  %6493 = vmatprep.subr.mxu0 0.0
  %6494 = vmatpush1.xpose.msra.mxu0 0.0
  %6495 = vmatprep.subr.mxu0 0.0
  %6496 = vmatpush1.xpose.msra.mxu0 0.0
  %6497 = vmatprep.subr.mxu0 0.0
  %6498 = vmatpush1.xpose.msra.mxu0 0.0
  %6499 = vmatprep.subr.mxu0 0.0
  %6500 = vmatpush1.xpose.msra.mxu0 0.0
  %6501 = vmatprep.subr.mxu0 0.0
  %6502 = vmatpush1.xpose.msra.mxu0 0.0
  %6503 = vmatprep.subr.mxu0 0.0
  %6504 = vmatpush1.xpose.msra.mxu0 0.0
  %6505 = vmatprep.subr.mxu0 0.0
  %6506 = vmatpush1.xpose.msra.mxu0 0.0
  %6507 = vmatprep.subr.mxu0 0.0
  %6508 = vmatpush1.xpose.msra.mxu0 0.0
  %6509 = vmatprep.subr.mxu0 0.0
  %6510 = vmatpush1.xpose.msra.mxu0 0.0
  %6511 = vmatprep.subr.mxu0 0.0
  %6512 = vmatpush1.xpose.msra.mxu0 0.0
  %6513 = vmatprep.subr.mxu0 0.0
  %6514 = vmatpush1.xpose.msra.mxu0 0.0
  %6515 = vmatprep.subr.mxu0 0.0
  %6516 = vmatpush1.xpose.msra.mxu0 0.0
  %6517 = vmatprep.subr.mxu0 0.0
  %6518 = vmatpush1.xpose.msra.mxu0 0.0
  %6519 = vmatprep.subr.mxu0 0.0
  %6520 = vmatpush1.xpose.msra.mxu0 0.0
  %6521 = vmatprep.subr.mxu0 0.0
  %6522 = vmatpush1.xpose.msra.mxu0 0.0
  %6523 = vmatprep.subr.mxu0 0.0
  %6524 = vmatpush1.xpose.msra.mxu0 0.0
  %6525 = vmatprep.mubr.f32.mxu0 0.0
  %6526 = vmatmul.mubr.f32.gmra.mrb[0].mxu0 %v6456
  %v6527 = vpop.f32.mrb[0].mxu0
  %v6528 = vadd.f32 %v2002, %v6527
  %v6529 = vpop.f32.mrb[0].mxu0
  %6530 = vdwg.mxu0
  %v6532 = vsel %vm2009, %v4828, 0
  %v6535 = vsel %vm2009, %v5412, 0
  %6537 = vmatprep.subr.mxu0 0.0
  %6538 = vmatpush1.xpose.msra.mxu0 %v6535
  %6539 = vmatprep.subr.mxu0 0.0
  %6540 = vmatpush1.xpose.msra.mxu0 0.0
  %6541 = vmatprep.subr.mxu0 0.0
  %6542 = vmatpush1.xpose.msra.mxu0 0.0
  %6543 = vmatprep.subr.mxu0 0.0
  %6544 = vmatpush1.xpose.msra.mxu0 0.0
  %6545 = vmatprep.subr.mxu0 0.0
  %6546 = vmatpush1.xpose.msra.mxu0 0.0
  %6547 = vmatprep.subr.mxu0 0.0
  %6548 = vmatpush1.xpose.msra.mxu0 0.0
  %6549 = vmatprep.subr.mxu0 0.0
  %6550 = vmatpush1.xpose.msra.mxu0 0.0
  %6551 = vmatprep.subr.mxu0 0.0
  %6552 = vmatpush1.xpose.msra.mxu0 0.0
  %6553 = vmatprep.subr.mxu0 0.0
  %6554 = vmatpush1.xpose.msra.mxu0 0.0
  %6555 = vmatprep.subr.mxu0 0.0
  %6556 = vmatpush1.xpose.msra.mxu0 0.0
  %6557 = vmatprep.subr.mxu0 0.0
  %6558 = vmatpush1.xpose.msra.mxu0 0.0
  %6559 = vmatprep.subr.mxu0 0.0
  %6560 = vmatpush1.xpose.msra.mxu0 0.0
  %6561 = vmatprep.subr.mxu0 0.0
  %6562 = vmatpush1.xpose.msra.mxu0 0.0
  %6563 = vmatprep.subr.mxu0 0.0
  %6564 = vmatpush1.xpose.msra.mxu0 0.0
  %6565 = vmatprep.subr.mxu0 0.0
  %6566 = vmatpush1.xpose.msra.mxu0 0.0
  %6567 = vmatprep.subr.mxu0 0.0
  %6568 = vmatpush1.xpose.msra.mxu0 0.0
  %6569 = vmatprep.subr.mxu0 0.0
  %6570 = vmatpush1.xpose.msra.mxu0 0.0
  %6571 = vmatprep.subr.mxu0 0.0
  %6572 = vmatpush1.xpose.msra.mxu0 0.0
  %6573 = vmatprep.subr.mxu0 0.0
  %6574 = vmatpush1.xpose.msra.mxu0 0.0
  %6575 = vmatprep.subr.mxu0 0.0
  %6576 = vmatpush1.xpose.msra.mxu0 0.0
  %6577 = vmatprep.subr.mxu0 0.0
  %6578 = vmatpush1.xpose.msra.mxu0 0.0
  %6579 = vmatprep.subr.mxu0 0.0
  %6580 = vmatpush1.xpose.msra.mxu0 0.0
  %6581 = vmatprep.subr.mxu0 0.0
  %6582 = vmatpush1.xpose.msra.mxu0 0.0
  %6583 = vmatprep.subr.mxu0 0.0
  %6584 = vmatpush1.xpose.msra.mxu0 0.0
  %6585 = vmatprep.subr.mxu0 0.0
  %6586 = vmatpush1.xpose.msra.mxu0 0.0
  %6587 = vmatprep.subr.mxu0 0.0
  %6588 = vmatpush1.xpose.msra.mxu0 0.0
  %6589 = vmatprep.subr.mxu0 0.0
  %6590 = vmatpush1.xpose.msra.mxu0 0.0
  %6591 = vmatprep.subr.mxu0 0.0
  %6592 = vmatpush1.xpose.msra.mxu0 0.0
  %6593 = vmatprep.subr.mxu0 0.0
  %6594 = vmatpush1.xpose.msra.mxu0 0.0
  %6595 = vmatprep.subr.mxu0 0.0
  %6596 = vmatpush1.xpose.msra.mxu0 0.0
  %6597 = vmatprep.subr.mxu0 0.0
  %6598 = vmatpush1.xpose.msra.mxu0 0.0
  %6599 = vmatprep.subr.mxu0 0.0
  %6600 = vmatpush1.xpose.msra.mxu0 0.0
  %6601 = vmatprep.mubr.f32.mxu0 0.0
  %6602 = vmatmul.mubr.f32.gmra.mrb[0].mxu0 %v6532
  %v6603 = vpop.f32.mrb[0].mxu0
  %v6604 = vadd.f32 %v2006, %v6603
  %v6605 = vpop.f32.mrb[0].mxu0
  %6606 = vdwg.mxu0
  %v6607 = vsel %vm2009, %v6072, -inf
  %6608 = vmax.xlane.f32.xlu0 %v6607
  %v6609 = vpop.xlane.xlu0 %6608
  %v6610 = vsel %vm2009, %v6148, -inf
  %6611 = vmax.xlane.f32.xlu0 %v6610
  %v6612 = vpop.xlane.xlu0 %6611
  %v6613 = vsel %vm2009, %v6224, -inf
  %6614 = vmax.xlane.f32.xlu0 %v6613
  %v6615 = vpop.xlane.xlu0 %6614
  %v6616 = vsel %vm2009, %v6300, -inf
  %6617 = vmax.xlane.f32.xlu0 %v6616
  %v6618 = vpop.xlane.xlu0 %6617
  %v6619 = vsel %vm2009, %v6376, -inf
  %6620 = vmax.xlane.f32.xlu0 %v6619
  %v6621 = vpop.xlane.xlu0 %6620
  %v6622 = vsel %vm2009, %v6452, -inf
  %6623 = vmax.xlane.f32.xlu0 %v6622
  %v6624 = vpop.xlane.xlu0 %6623
  %v6625 = vsel %vm2009, %v6528, -inf
  %6626 = vmax.xlane.f32.xlu0 %v6625
  %v6627 = vpop.xlane.xlu0 %6626
  %v6628 = vsel %vm2009, %v6604, -inf
  %6629 = vmax.xlane.f32.xlu0 %v6628
  %v6630 = vpop.xlane.xlu0 %6629
  %v6631 = vsub.f32 %v6072, %v6609
  %v6632 = vsub.f32 %v6148, %v6612
  %v6633 = vsub.f32 %v6224, %v6615
  %v6634 = vsub.f32 %v6300, %v6618
  %v6635 = vsub.f32 %v6376, %v6621
  %v6636 = vsub.f32 %v6452, %v6624
  %v6637 = vsub.f32 %v6528, %v6627
  %v6638 = vsub.f32 %v6604, %v6630
  %v6639 = vmul.f32 %v6631, 1.442695
  %v6640 = vpow.pop %v6639
  %v6641 = vmul.f32 %v6632, 1.442695
  %v6642 = vpow.pop %v6641
  %v6643 = vmul.f32 %v6633, 1.442695
  %v6644 = vpow.pop %v6643
  %v6645 = vmul.f32 %v6634, 1.442695
  %v6646 = vpow.pop %v6645
  %v6647 = vmul.f32 %v6635, 1.442695
  %v6648 = vpow.pop %v6647
  %v6649 = vmul.f32 %v6636, 1.442695
  %v6650 = vpow.pop %v6649
  %v6651 = vmul.f32 %v6637, 1.442695
  %v6652 = vpow.pop %v6651
  %v6653 = vmul.f32 %v6638, 1.442695
  %v6654 = vpow.pop %v6653
  %v6655 = vsel %vm2009, %v6640, 0.0
  %6656 = vadd.xlane.f32.xlu0 %v6655
  %v6657 = vpop.xlane.xlu0 %6656
  %v6658 = vsel %vm2009, %v6642, 0.0
  %6659 = vadd.xlane.f32.xlu0 %v6658
  %v6660 = vpop.xlane.xlu0 %6659
  %v6661 = vsel %vm2009, %v6644, 0.0
  %6662 = vadd.xlane.f32.xlu0 %v6661
  %v6663 = vpop.xlane.xlu0 %6662
  %v6664 = vsel %vm2009, %v6646, 0.0
  %6665 = vadd.xlane.f32.xlu0 %v6664
  %v6666 = vpop.xlane.xlu0 %6665
  %v6667 = vsel %vm2009, %v6648, 0.0
  %6668 = vadd.xlane.f32.xlu0 %v6667
  %v6669 = vpop.xlane.xlu0 %6668
  %v6670 = vsel %vm2009, %v6650, 0.0
  %6671 = vadd.xlane.f32.xlu0 %v6670
  %v6672 = vpop.xlane.xlu0 %6671
  %v6673 = vsel %vm2009, %v6652, 0.0
  %6674 = vadd.xlane.f32.xlu0 %v6673
  %v6675 = vpop.xlane.xlu0 %6674
  %v6676 = vsel %vm2009, %v6654, 0.0
  %6677 = vadd.xlane.f32.xlu0 %v6676
  %v6678 = vpop.xlane.xlu0 %6677
  %v6679 = vrcp.pop %v6657
  %v6680 = vrcp.pop %v6660
  %v6681 = vrcp.pop %v6663
  %v6682 = vrcp.pop %v6666
  %v6683 = vrcp.pop %v6669
  %v6684 = vrcp.pop %v6672
  %v6685 = vrcp.pop %v6675
  %v6686 = vrcp.pop %v6678
  %v6687 = vmul.f32 %v6640, %v6679
  %v6688 = vmul.f32 %v6642, %v6680
  %v6689 = vmul.f32 %v6644, %v6681
  %v6690 = vmul.f32 %v6646, %v6682
  %v6691 = vmul.f32 %v6648, %v6683
  %v6692 = vmul.f32 %v6650, %v6684
  %v6693 = vmul.f32 %v6652, %v6685
  %v6694 = vmul.f32 %v6654, %v6686
  %v6696 = vsel %vm2009, %v6687, 0
  %6698 = vmatprep.subr.mxu0 0.0
  %6699 = vmatpush1.msra.mxu0 %v5485
  %6700 = vmatprep.subr.mxu0 0.0
  %6701 = vmatpush1.msra.mxu0 0.0
  %6702 = vmatprep.subr.mxu0 0.0
  %6703 = vmatpush1.msra.mxu0 0.0
  %6704 = vmatprep.subr.mxu0 0.0
  %6705 = vmatpush1.msra.mxu0 0.0
  %6706 = vmatprep.subr.mxu0 0.0
  %6707 = vmatpush1.msra.mxu0 0.0
  %6708 = vmatprep.subr.mxu0 0.0
  %6709 = vmatpush1.msra.mxu0 0.0
  %6710 = vmatprep.subr.mxu0 0.0
  %6711 = vmatpush1.msra.mxu0 0.0
  %6712 = vmatprep.subr.mxu0 0.0
  %6713 = vmatpush1.msra.mxu0 0.0
  %6714 = vmatprep.subr.mxu0 0.0
  %6715 = vmatpush1.msra.mxu0 0.0
  %6716 = vmatprep.subr.mxu0 0.0
  %6717 = vmatpush1.msra.mxu0 0.0
  %6718 = vmatprep.subr.mxu0 0.0
  %6719 = vmatpush1.msra.mxu0 0.0
  %6720 = vmatprep.subr.mxu0 0.0
  %6721 = vmatpush1.msra.mxu0 0.0
  %6722 = vmatprep.subr.mxu0 0.0
  %6723 = vmatpush1.msra.mxu0 0.0
  %6724 = vmatprep.subr.mxu0 0.0
  %6725 = vmatpush1.msra.mxu0 0.0
  %6726 = vmatprep.subr.mxu0 0.0
  %6727 = vmatpush1.msra.mxu0 0.0
  %6728 = vmatprep.subr.mxu0 0.0
  %6729 = vmatpush1.msra.mxu0 0.0
  %6730 = vmatprep.subr.mxu0 0.0
  %6731 = vmatpush1.msra.mxu0 0.0
  %6732 = vmatprep.subr.mxu0 0.0
  %6733 = vmatpush1.msra.mxu0 0.0
  %6734 = vmatprep.subr.mxu0 0.0
  %6735 = vmatpush1.msra.mxu0 0.0
  %6736 = vmatprep.subr.mxu0 0.0
  %6737 = vmatpush1.msra.mxu0 0.0
  %6738 = vmatprep.subr.mxu0 0.0
  %6739 = vmatpush1.msra.mxu0 0.0
  %6740 = vmatprep.subr.mxu0 0.0
  %6741 = vmatpush1.msra.mxu0 0.0
  %6742 = vmatprep.subr.mxu0 0.0
  %6743 = vmatpush1.msra.mxu0 0.0
  %6744 = vmatprep.subr.mxu0 0.0
  %6745 = vmatpush1.msra.mxu0 0.0
  %6746 = vmatprep.subr.mxu0 0.0
  %6747 = vmatpush1.msra.mxu0 0.0
  %6748 = vmatprep.subr.mxu0 0.0
  %6749 = vmatpush1.msra.mxu0 0.0
  %6750 = vmatprep.subr.mxu0 0.0
  %6751 = vmatpush1.msra.mxu0 0.0
  %6752 = vmatprep.subr.mxu0 0.0
  %6753 = vmatpush1.msra.mxu0 0.0
  %6754 = vmatprep.subr.mxu0 0.0
  %6755 = vmatpush1.msra.mxu0 0.0
  %6756 = vmatprep.subr.mxu0 0.0
  %6757 = vmatpush1.msra.mxu0 0.0
  %6758 = vmatprep.subr.mxu0 0.0
  %6759 = vmatpush1.msra.mxu0 0.0
  %6760 = vmatprep.subr.mxu0 0.0
  %6761 = vmatpush1.msra.mxu0 0.0
  %6762 = vmatprep.mubr.f32.mxu0 0.0
  %6763 = vmatmul.mubr.f32.gmra.mrb[0].mxu0 %v6696
  %v6764 = vpop.f32.mrb[0].mxu0
  %v6765 = vadd.f32 0.0, %v6764
  %v6766 = vpop.f32.mrb[0].mxu0
  %6767 = vdwg.mxu0
  %v6769 = vsel %vm2009, %v6688, 0
  %6771 = vmatprep.subr.mxu0 0.0
  %6772 = vmatpush1.msra.mxu0 %v5558
  %6773 = vmatprep.subr.mxu0 0.0
  %6774 = vmatpush1.msra.mxu0 0.0
  %6775 = vmatprep.subr.mxu0 0.0
  %6776 = vmatpush1.msra.mxu0 0.0
  %6777 = vmatprep.subr.mxu0 0.0
  %6778 = vmatpush1.msra.mxu0 0.0
  %6779 = vmatprep.subr.mxu0 0.0
  %6780 = vmatpush1.msra.mxu0 0.0
  %6781 = vmatprep.subr.mxu0 0.0
  %6782 = vmatpush1.msra.mxu0 0.0
  %6783 = vmatprep.subr.mxu0 0.0
  %6784 = vmatpush1.msra.mxu0 0.0
  %6785 = vmatprep.subr.mxu0 0.0
  %6786 = vmatpush1.msra.mxu0 0.0
  %6787 = vmatprep.subr.mxu0 0.0
  %6788 = vmatpush1.msra.mxu0 0.0
  %6789 = vmatprep.subr.mxu0 0.0
  %6790 = vmatpush1.msra.mxu0 0.0
  %6791 = vmatprep.subr.mxu0 0.0
  %6792 = vmatpush1.msra.mxu0 0.0
  %6793 = vmatprep.subr.mxu0 0.0
  %6794 = vmatpush1.msra.mxu0 0.0
  %6795 = vmatprep.subr.mxu0 0.0
  %6796 = vmatpush1.msra.mxu0 0.0
  %6797 = vmatprep.subr.mxu0 0.0
  %6798 = vmatpush1.msra.mxu0 0.0
  %6799 = vmatprep.subr.mxu0 0.0
  %6800 = vmatpush1.msra.mxu0 0.0
  %6801 = vmatprep.subr.mxu0 0.0
  %6802 = vmatpush1.msra.mxu0 0.0
  %6803 = vmatprep.subr.mxu0 0.0
  %6804 = vmatpush1.msra.mxu0 0.0
  %6805 = vmatprep.subr.mxu0 0.0
  %6806 = vmatpush1.msra.mxu0 0.0
  %6807 = vmatprep.subr.mxu0 0.0
  %6808 = vmatpush1.msra.mxu0 0.0
  %6809 = vmatprep.subr.mxu0 0.0
  %6810 = vmatpush1.msra.mxu0 0.0
  %6811 = vmatprep.subr.mxu0 0.0
  %6812 = vmatpush1.msra.mxu0 0.0
  %6813 = vmatprep.subr.mxu0 0.0
  %6814 = vmatpush1.msra.mxu0 0.0
  %6815 = vmatprep.subr.mxu0 0.0
  %6816 = vmatpush1.msra.mxu0 0.0
  %6817 = vmatprep.subr.mxu0 0.0
  %6818 = vmatpush1.msra.mxu0 0.0
  %6819 = vmatprep.subr.mxu0 0.0
  %6820 = vmatpush1.msra.mxu0 0.0
  %6821 = vmatprep.subr.mxu0 0.0
  %6822 = vmatpush1.msra.mxu0 0.0
  %6823 = vmatprep.subr.mxu0 0.0
  %6824 = vmatpush1.msra.mxu0 0.0
  %6825 = vmatprep.subr.mxu0 0.0
  %6826 = vmatpush1.msra.mxu0 0.0
  %6827 = vmatprep.subr.mxu0 0.0
  %6828 = vmatpush1.msra.mxu0 0.0
  %6829 = vmatprep.subr.mxu0 0.0
  %6830 = vmatpush1.msra.mxu0 0.0
  %6831 = vmatprep.subr.mxu0 0.0
  %6832 = vmatpush1.msra.mxu0 0.0
  %6833 = vmatprep.subr.mxu0 0.0
  %6834 = vmatpush1.msra.mxu0 0.0
  %6835 = vmatprep.mubr.f32.mxu0 0.0
  %6836 = vmatmul.mubr.f32.gmra.mrb[0].mxu0 %v6769
  %v6837 = vpop.f32.mrb[0].mxu0
  %v6838 = vadd.f32 0.0, %v6837
  %v6839 = vpop.f32.mrb[0].mxu0
  %6840 = vdwg.mxu0
  %v6842 = vsel %vm2009, %v6689, 0
  %6844 = vmatprep.subr.mxu0 0.0
  %6845 = vmatpush1.msra.mxu0 %v5631
  %6846 = vmatprep.subr.mxu0 0.0
  %6847 = vmatpush1.msra.mxu0 0.0
  %6848 = vmatprep.subr.mxu0 0.0
  %6849 = vmatpush1.msra.mxu0 0.0
  %6850 = vmatprep.subr.mxu0 0.0
  %6851 = vmatpush1.msra.mxu0 0.0
  %6852 = vmatprep.subr.mxu0 0.0
  %6853 = vmatpush1.msra.mxu0 0.0
  %6854 = vmatprep.subr.mxu0 0.0
  %6855 = vmatpush1.msra.mxu0 0.0
  %6856 = vmatprep.subr.mxu0 0.0
  %6857 = vmatpush1.msra.mxu0 0.0
  %6858 = vmatprep.subr.mxu0 0.0
  %6859 = vmatpush1.msra.mxu0 0.0
  %6860 = vmatprep.subr.mxu0 0.0
  %6861 = vmatpush1.msra.mxu0 0.0
  %6862 = vmatprep.subr.mxu0 0.0
  %6863 = vmatpush1.msra.mxu0 0.0
  %6864 = vmatprep.subr.mxu0 0.0
  %6865 = vmatpush1.msra.mxu0 0.0
  %6866 = vmatprep.subr.mxu0 0.0
  %6867 = vmatpush1.msra.mxu0 0.0
  %6868 = vmatprep.subr.mxu0 0.0
  %6869 = vmatpush1.msra.mxu0 0.0
  %6870 = vmatprep.subr.mxu0 0.0
  %6871 = vmatpush1.msra.mxu0 0.0
  %6872 = vmatprep.subr.mxu0 0.0
  %6873 = vmatpush1.msra.mxu0 0.0
  %6874 = vmatprep.subr.mxu0 0.0
  %6875 = vmatpush1.msra.mxu0 0.0
  %6876 = vmatprep.subr.mxu0 0.0
  %6877 = vmatpush1.msra.mxu0 0.0
  %6878 = vmatprep.subr.mxu0 0.0
  %6879 = vmatpush1.msra.mxu0 0.0
  %6880 = vmatprep.subr.mxu0 0.0
  %6881 = vmatpush1.msra.mxu0 0.0
  %6882 = vmatprep.subr.mxu0 0.0
  %6883 = vmatpush1.msra.mxu0 0.0
  %6884 = vmatprep.subr.mxu0 0.0
  %6885 = vmatpush1.msra.mxu0 0.0
  %6886 = vmatprep.subr.mxu0 0.0
  %6887 = vmatpush1.msra.mxu0 0.0
  %6888 = vmatprep.subr.mxu0 0.0
  %6889 = vmatpush1.msra.mxu0 0.0
  %6890 = vmatprep.subr.mxu0 0.0
  %6891 = vmatpush1.msra.mxu0 0.0
  %6892 = vmatprep.subr.mxu0 0.0
  %6893 = vmatpush1.msra.mxu0 0.0
  %6894 = vmatprep.subr.mxu0 0.0
  %6895 = vmatpush1.msra.mxu0 0.0
  %6896 = vmatprep.subr.mxu0 0.0
  %6897 = vmatpush1.msra.mxu0 0.0
  %6898 = vmatprep.subr.mxu0 0.0
  %6899 = vmatpush1.msra.mxu0 0.0
  %6900 = vmatprep.subr.mxu0 0.0
  %6901 = vmatpush1.msra.mxu0 0.0
  %6902 = vmatprep.subr.mxu0 0.0
  %6903 = vmatpush1.msra.mxu0 0.0
  %6904 = vmatprep.subr.mxu0 0.0
  %6905 = vmatpush1.msra.mxu0 0.0
  %6906 = vmatprep.subr.mxu0 0.0
  %6907 = vmatpush1.msra.mxu0 0.0
  %6908 = vmatprep.mubr.f32.mxu0 0.0
  %6909 = vmatmul.mubr.f32.gmra.mrb[0].mxu0 %v6842
  %v6910 = vpop.f32.mrb[0].mxu0
  %v6911 = vadd.f32 0.0, %v6910
  %v6912 = vpop.f32.mrb[0].mxu0
  %6913 = vdwg.mxu0
  %v6915 = vsel %vm2009, %v6690, 0
  %6917 = vmatprep.subr.mxu0 0.0
  %6918 = vmatpush1.msra.mxu0 %v5704
  %6919 = vmatprep.subr.mxu0 0.0
  %6920 = vmatpush1.msra.mxu0 0.0
  %6921 = vmatprep.subr.mxu0 0.0
  %6922 = vmatpush1.msra.mxu0 0.0
  %6923 = vmatprep.subr.mxu0 0.0
  %6924 = vmatpush1.msra.mxu0 0.0
  %6925 = vmatprep.subr.mxu0 0.0
  %6926 = vmatpush1.msra.mxu0 0.0
  %6927 = vmatprep.subr.mxu0 0.0
  %6928 = vmatpush1.msra.mxu0 0.0
  %6929 = vmatprep.subr.mxu0 0.0
  %6930 = vmatpush1.msra.mxu0 0.0
  %6931 = vmatprep.subr.mxu0 0.0
  %6932 = vmatpush1.msra.mxu0 0.0
  %6933 = vmatprep.subr.mxu0 0.0
  %6934 = vmatpush1.msra.mxu0 0.0
  %6935 = vmatprep.subr.mxu0 0.0
  %6936 = vmatpush1.msra.mxu0 0.0
  %6937 = vmatprep.subr.mxu0 0.0
  %6938 = vmatpush1.msra.mxu0 0.0
  %6939 = vmatprep.subr.mxu0 0.0
  %6940 = vmatpush1.msra.mxu0 0.0
  %6941 = vmatprep.subr.mxu0 0.0
  %6942 = vmatpush1.msra.mxu0 0.0
  %6943 = vmatprep.subr.mxu0 0.0
  %6944 = vmatpush1.msra.mxu0 0.0
  %6945 = vmatprep.subr.mxu0 0.0
  %6946 = vmatpush1.msra.mxu0 0.0
  %6947 = vmatprep.subr.mxu0 0.0
  %6948 = vmatpush1.msra.mxu0 0.0
  %6949 = vmatprep.subr.mxu0 0.0
  %6950 = vmatpush1.msra.mxu0 0.0
  %6951 = vmatprep.subr.mxu0 0.0
  %6952 = vmatpush1.msra.mxu0 0.0
  %6953 = vmatprep.subr.mxu0 0.0
  %6954 = vmatpush1.msra.mxu0 0.0
  %6955 = vmatprep.subr.mxu0 0.0
  %6956 = vmatpush1.msra.mxu0 0.0
  %6957 = vmatprep.subr.mxu0 0.0
  %6958 = vmatpush1.msra.mxu0 0.0
  %6959 = vmatprep.subr.mxu0 0.0
  %6960 = vmatpush1.msra.mxu0 0.0
  %6961 = vmatprep.subr.mxu0 0.0
  %6962 = vmatpush1.msra.mxu0 0.0
  %6963 = vmatprep.subr.mxu0 0.0
  %6964 = vmatpush1.msra.mxu0 0.0
  %6965 = vmatprep.subr.mxu0 0.0
  %6966 = vmatpush1.msra.mxu0 0.0
  %6967 = vmatprep.subr.mxu0 0.0
  %6968 = vmatpush1.msra.mxu0 0.0
  %6969 = vmatprep.subr.mxu0 0.0
  %6970 = vmatpush1.msra.mxu0 0.0
  %6971 = vmatprep.subr.mxu0 0.0
  %6972 = vmatpush1.msra.mxu0 0.0
  %6973 = vmatprep.subr.mxu0 0.0
  %6974 = vmatpush1.msra.mxu0 0.0
  %6975 = vmatprep.subr.mxu0 0.0
  %6976 = vmatpush1.msra.mxu0 0.0
  %6977 = vmatprep.subr.mxu0 0.0
  %6978 = vmatpush1.msra.mxu0 0.0
  %6979 = vmatprep.subr.mxu0 0.0
  %6980 = vmatpush1.msra.mxu0 0.0
  %6981 = vmatprep.mubr.f32.mxu0 0.0
  %6982 = vmatmul.mubr.f32.gmra.mrb[0].mxu0 %v6915
  %v6983 = vpop.f32.mrb[0].mxu0
  %v6984 = vadd.f32 0.0, %v6983
  %v6985 = vpop.f32.mrb[0].mxu0
  %6986 = vdwg.mxu0
  %v6988 = vsel %vm2009, %v6691, 0
  %6990 = vmatprep.subr.mxu0 0.0
  %6991 = vmatpush1.msra.mxu0 %v5777
  %6992 = vmatprep.subr.mxu0 0.0
  %6993 = vmatpush1.msra.mxu0 0.0
  %6994 = vmatprep.subr.mxu0 0.0
  %6995 = vmatpush1.msra.mxu0 0.0
  %6996 = vmatprep.subr.mxu0 0.0
  %6997 = vmatpush1.msra.mxu0 0.0
  %6998 = vmatprep.subr.mxu0 0.0
  %6999 = vmatpush1.msra.mxu0 0.0
  %7000 = vmatprep.subr.mxu0 0.0
  %7001 = vmatpush1.msra.mxu0 0.0
  %7002 = vmatprep.subr.mxu0 0.0
  %7003 = vmatpush1.msra.mxu0 0.0
  %7004 = vmatprep.subr.mxu0 0.0
  %7005 = vmatpush1.msra.mxu0 0.0
  %7006 = vmatprep.subr.mxu0 0.0
  %7007 = vmatpush1.msra.mxu0 0.0
  %7008 = vmatprep.subr.mxu0 0.0
  %7009 = vmatpush1.msra.mxu0 0.0
  %7010 = vmatprep.subr.mxu0 0.0
  %7011 = vmatpush1.msra.mxu0 0.0
  %7012 = vmatprep.subr.mxu0 0.0
  %7013 = vmatpush1.msra.mxu0 0.0
  %7014 = vmatprep.subr.mxu0 0.0
  %7015 = vmatpush1.msra.mxu0 0.0
  %7016 = vmatprep.subr.mxu0 0.0
  %7017 = vmatpush1.msra.mxu0 0.0
  %7018 = vmatprep.subr.mxu0 0.0
  %7019 = vmatpush1.msra.mxu0 0.0
  %7020 = vmatprep.subr.mxu0 0.0
  %7021 = vmatpush1.msra.mxu0 0.0
  %7022 = vmatprep.subr.mxu0 0.0
  %7023 = vmatpush1.msra.mxu0 0.0
  %7024 = vmatprep.subr.mxu0 0.0
  %7025 = vmatpush1.msra.mxu0 0.0
  %7026 = vmatprep.subr.mxu0 0.0
  %7027 = vmatpush1.msra.mxu0 0.0
  %7028 = vmatprep.subr.mxu0 0.0
  %7029 = vmatpush1.msra.mxu0 0.0
  %7030 = vmatprep.subr.mxu0 0.0
  %7031 = vmatpush1.msra.mxu0 0.0
  %7032 = vmatprep.subr.mxu0 0.0
  %7033 = vmatpush1.msra.mxu0 0.0
  %7034 = vmatprep.subr.mxu0 0.0
  %7035 = vmatpush1.msra.mxu0 0.0
  %7036 = vmatprep.subr.mxu0 0.0
  %7037 = vmatpush1.msra.mxu0 0.0
  %7038 = vmatprep.subr.mxu0 0.0
  %7039 = vmatpush1.msra.mxu0 0.0
  %7040 = vmatprep.subr.mxu0 0.0
  %7041 = vmatpush1.msra.mxu0 0.0
  %7042 = vmatprep.subr.mxu0 0.0
  %7043 = vmatpush1.msra.mxu0 0.0
  %7044 = vmatprep.subr.mxu0 0.0
  %7045 = vmatpush1.msra.mxu0 0.0
  %7046 = vmatprep.subr.mxu0 0.0
  %7047 = vmatpush1.msra.mxu0 0.0
  %7048 = vmatprep.subr.mxu0 0.0
  %7049 = vmatpush1.msra.mxu0 0.0
  %7050 = vmatprep.subr.mxu0 0.0
  %7051 = vmatpush1.msra.mxu0 0.0
  %7052 = vmatprep.subr.mxu0 0.0
  %7053 = vmatpush1.msra.mxu0 0.0
  %7054 = vmatprep.mubr.f32.mxu0 0.0
  %7055 = vmatmul.mubr.f32.gmra.mrb[0].mxu0 %v6988
  %v7056 = vpop.f32.mrb[0].mxu0
  %v7057 = vadd.f32 0.0, %v7056
  %v7058 = vpop.f32.mrb[0].mxu0
  %7059 = vdwg.mxu0
  %v7061 = vsel %vm2009, %v6692, 0
  %7063 = vmatprep.subr.mxu0 0.0
  %7064 = vmatpush1.msra.mxu0 %v5850
  %7065 = vmatprep.subr.mxu0 0.0
  %7066 = vmatpush1.msra.mxu0 0.0
  %7067 = vmatprep.subr.mxu0 0.0
  %7068 = vmatpush1.msra.mxu0 0.0
  %7069 = vmatprep.subr.mxu0 0.0
  %7070 = vmatpush1.msra.mxu0 0.0
  %7071 = vmatprep.subr.mxu0 0.0
  %7072 = vmatpush1.msra.mxu0 0.0
  %7073 = vmatprep.subr.mxu0 0.0
  %7074 = vmatpush1.msra.mxu0 0.0
  %7075 = vmatprep.subr.mxu0 0.0
  %7076 = vmatpush1.msra.mxu0 0.0
  %7077 = vmatprep.subr.mxu0 0.0
  %7078 = vmatpush1.msra.mxu0 0.0
  %7079 = vmatprep.subr.mxu0 0.0
  %7080 = vmatpush1.msra.mxu0 0.0
  %7081 = vmatprep.subr.mxu0 0.0
  %7082 = vmatpush1.msra.mxu0 0.0
  %7083 = vmatprep.subr.mxu0 0.0
  %7084 = vmatpush1.msra.mxu0 0.0
  %7085 = vmatprep.subr.mxu0 0.0
  %7086 = vmatpush1.msra.mxu0 0.0
  %7087 = vmatprep.subr.mxu0 0.0
  %7088 = vmatpush1.msra.mxu0 0.0
  %7089 = vmatprep.subr.mxu0 0.0
  %7090 = vmatpush1.msra.mxu0 0.0
  %7091 = vmatprep.subr.mxu0 0.0
  %7092 = vmatpush1.msra.mxu0 0.0
  %7093 = vmatprep.subr.mxu0 0.0
  %7094 = vmatpush1.msra.mxu0 0.0
  %7095 = vmatprep.subr.mxu0 0.0
  %7096 = vmatpush1.msra.mxu0 0.0
  %7097 = vmatprep.subr.mxu0 0.0
  %7098 = vmatpush1.msra.mxu0 0.0
  %7099 = vmatprep.subr.mxu0 0.0
  %7100 = vmatpush1.msra.mxu0 0.0
  %7101 = vmatprep.subr.mxu0 0.0
  %7102 = vmatpush1.msra.mxu0 0.0
  %7103 = vmatprep.subr.mxu0 0.0
  %7104 = vmatpush1.msra.mxu0 0.0
  %7105 = vmatprep.subr.mxu0 0.0
  %7106 = vmatpush1.msra.mxu0 0.0
  %7107 = vmatprep.subr.mxu0 0.0
  %7108 = vmatpush1.msra.mxu0 0.0
  %7109 = vmatprep.subr.mxu0 0.0
  %7110 = vmatpush1.msra.mxu0 0.0
  %7111 = vmatprep.subr.mxu0 0.0
  %7112 = vmatpush1.msra.mxu0 0.0
  %7113 = vmatprep.subr.mxu0 0.0
  %7114 = vmatpush1.msra.mxu0 0.0
  %7115 = vmatprep.subr.mxu0 0.0
  %7116 = vmatpush1.msra.mxu0 0.0
  %7117 = vmatprep.subr.mxu0 0.0
  %7118 = vmatpush1.msra.mxu0 0.0
  %7119 = vmatprep.subr.mxu0 0.0
  %7120 = vmatpush1.msra.mxu0 0.0
  %7121 = vmatprep.subr.mxu0 0.0
  %7122 = vmatpush1.msra.mxu0 0.0
  %7123 = vmatprep.subr.mxu0 0.0
  %7124 = vmatpush1.msra.mxu0 0.0
  %7125 = vmatprep.subr.mxu0 0.0
  %7126 = vmatpush1.msra.mxu0 0.0
  %7127 = vmatprep.mubr.f32.mxu0 0.0
  %7128 = vmatmul.mubr.f32.gmra.mrb[0].mxu0 %v7061
  %v7129 = vpop.f32.mrb[0].mxu0
  %v7130 = vadd.f32 0.0, %v7129
  %v7131 = vpop.f32.mrb[0].mxu0
  %7132 = vdwg.mxu0
  %v7134 = vsel %vm2009, %v6693, 0
  %7136 = vmatprep.subr.mxu0 0.0
  %7137 = vmatpush1.msra.mxu0 %v5923
  %7138 = vmatprep.subr.mxu0 0.0
  %7139 = vmatpush1.msra.mxu0 0.0
  %7140 = vmatprep.subr.mxu0 0.0
  %7141 = vmatpush1.msra.mxu0 0.0
  %7142 = vmatprep.subr.mxu0 0.0
  %7143 = vmatpush1.msra.mxu0 0.0
  %7144 = vmatprep.subr.mxu0 0.0
  %7145 = vmatpush1.msra.mxu0 0.0
  %7146 = vmatprep.subr.mxu0 0.0
  %7147 = vmatpush1.msra.mxu0 0.0
  %7148 = vmatprep.subr.mxu0 0.0
  %7149 = vmatpush1.msra.mxu0 0.0
  %7150 = vmatprep.subr.mxu0 0.0
  %7151 = vmatpush1.msra.mxu0 0.0
  %7152 = vmatprep.subr.mxu0 0.0
  %7153 = vmatpush1.msra.mxu0 0.0
  %7154 = vmatprep.subr.mxu0 0.0
  %7155 = vmatpush1.msra.mxu0 0.0
  %7156 = vmatprep.subr.mxu0 0.0
  %7157 = vmatpush1.msra.mxu0 0.0
  %7158 = vmatprep.subr.mxu0 0.0
  %7159 = vmatpush1.msra.mxu0 0.0
  %7160 = vmatprep.subr.mxu0 0.0
  %7161 = vmatpush1.msra.mxu0 0.0
  %7162 = vmatprep.subr.mxu0 0.0
  %7163 = vmatpush1.msra.mxu0 0.0
  %7164 = vmatprep.subr.mxu0 0.0
  %7165 = vmatpush1.msra.mxu0 0.0
  %7166 = vmatprep.subr.mxu0 0.0
  %7167 = vmatpush1.msra.mxu0 0.0
  %7168 = vmatprep.subr.mxu0 0.0
  %7169 = vmatpush1.msra.mxu0 0.0
  %7170 = vmatprep.subr.mxu0 0.0
  %7171 = vmatpush1.msra.mxu0 0.0
  %7172 = vmatprep.subr.mxu0 0.0
  %7173 = vmatpush1.msra.mxu0 0.0
  %7174 = vmatprep.subr.mxu0 0.0
  %7175 = vmatpush1.msra.mxu0 0.0
  %7176 = vmatprep.subr.mxu0 0.0
  %7177 = vmatpush1.msra.mxu0 0.0
  %7178 = vmatprep.subr.mxu0 0.0
  %7179 = vmatpush1.msra.mxu0 0.0
  %7180 = vmatprep.subr.mxu0 0.0
  %7181 = vmatpush1.msra.mxu0 0.0
  %7182 = vmatprep.subr.mxu0 0.0
  %7183 = vmatpush1.msra.mxu0 0.0
  %7184 = vmatprep.subr.mxu0 0.0
  %7185 = vmatpush1.msra.mxu0 0.0
  %7186 = vmatprep.subr.mxu0 0.0
  %7187 = vmatpush1.msra.mxu0 0.0
  %7188 = vmatprep.subr.mxu0 0.0
  %7189 = vmatpush1.msra.mxu0 0.0
  %7190 = vmatprep.subr.mxu0 0.0
  %7191 = vmatpush1.msra.mxu0 0.0
  %7192 = vmatprep.subr.mxu0 0.0
  %7193 = vmatpush1.msra.mxu0 0.0
  %7194 = vmatprep.subr.mxu0 0.0
  %7195 = vmatpush1.msra.mxu0 0.0
  %7196 = vmatprep.subr.mxu0 0.0
  %7197 = vmatpush1.msra.mxu0 0.0
  %7198 = vmatprep.subr.mxu0 0.0
  %7199 = vmatpush1.msra.mxu0 0.0
  %7200 = vmatprep.mubr.f32.mxu0 0.0
  %7201 = vmatmul.mubr.f32.gmra.mrb[0].mxu0 %v7134
  %v7202 = vpop.f32.mrb[0].mxu0
  %v7203 = vadd.f32 0.0, %v7202
  %v7204 = vpop.f32.mrb[0].mxu0
  %7205 = vdwg.mxu0
  %v7207 = vsel %vm2009, %v6694, 0
  %7209 = vmatprep.subr.mxu0 0.0
  %7210 = vmatpush1.msra.mxu0 %v5996
  %7211 = vmatprep.subr.mxu0 0.0
  %7212 = vmatpush1.msra.mxu0 0.0
  %7213 = vmatprep.subr.mxu0 0.0
  %7214 = vmatpush1.msra.mxu0 0.0
  %7215 = vmatprep.subr.mxu0 0.0
  %7216 = vmatpush1.msra.mxu0 0.0
  %7217 = vmatprep.subr.mxu0 0.0
  %7218 = vmatpush1.msra.mxu0 0.0
  %7219 = vmatprep.subr.mxu0 0.0
  %7220 = vmatpush1.msra.mxu0 0.0
  %7221 = vmatprep.subr.mxu0 0.0
  %7222 = vmatpush1.msra.mxu0 0.0
  %7223 = vmatprep.subr.mxu0 0.0
  %7224 = vmatpush1.msra.mxu0 0.0
  %7225 = vmatprep.subr.mxu0 0.0
  %7226 = vmatpush1.msra.mxu0 0.0
  %7227 = vmatprep.subr.mxu0 0.0
  %7228 = vmatpush1.msra.mxu0 0.0
  %7229 = vmatprep.subr.mxu0 0.0
  %7230 = vmatpush1.msra.mxu0 0.0
  %7231 = vmatprep.subr.mxu0 0.0
  %7232 = vmatpush1.msra.mxu0 0.0
  %7233 = vmatprep.subr.mxu0 0.0
  %7234 = vmatpush1.msra.mxu0 0.0
  %7235 = vmatprep.subr.mxu0 0.0
  %7236 = vmatpush1.msra.mxu0 0.0
  %7237 = vmatprep.subr.mxu0 0.0
  %7238 = vmatpush1.msra.mxu0 0.0
  %7239 = vmatprep.subr.mxu0 0.0
  %7240 = vmatpush1.msra.mxu0 0.0
  %7241 = vmatprep.subr.mxu0 0.0
  %7242 = vmatpush1.msra.mxu0 0.0
  %7243 = vmatprep.subr.mxu0 0.0
  %7244 = vmatpush1.msra.mxu0 0.0
  %7245 = vmatprep.subr.mxu0 0.0
  %7246 = vmatpush1.msra.mxu0 0.0
  %7247 = vmatprep.subr.mxu0 0.0
  %7248 = vmatpush1.msra.mxu0 0.0
  %7249 = vmatprep.subr.mxu0 0.0
  %7250 = vmatpush1.msra.mxu0 0.0
  %7251 = vmatprep.subr.mxu0 0.0
  %7252 = vmatpush1.msra.mxu0 0.0
  %7253 = vmatprep.subr.mxu0 0.0
  %7254 = vmatpush1.msra.mxu0 0.0
  %7255 = vmatprep.subr.mxu0 0.0
  %7256 = vmatpush1.msra.mxu0 0.0
  %7257 = vmatprep.subr.mxu0 0.0
  %7258 = vmatpush1.msra.mxu0 0.0
  %7259 = vmatprep.subr.mxu0 0.0
  %7260 = vmatpush1.msra.mxu0 0.0
  %7261 = vmatprep.subr.mxu0 0.0
  %7262 = vmatpush1.msra.mxu0 0.0
  %7263 = vmatprep.subr.mxu0 0.0
  %7264 = vmatpush1.msra.mxu0 0.0
  %7265 = vmatprep.subr.mxu0 0.0
  %7266 = vmatpush1.msra.mxu0 0.0
  %7267 = vmatprep.subr.mxu0 0.0
  %7268 = vmatpush1.msra.mxu0 0.0
  %7269 = vmatprep.subr.mxu0 0.0
  %7270 = vmatpush1.msra.mxu0 0.0
  %7271 = vmatprep.subr.mxu0 0.0
  %7272 = vmatpush1.msra.mxu0 0.0
  %7273 = vmatprep.mubr.f32.mxu0 0.0
  %7274 = vmatmul.mubr.f32.gmra.mrb[0].mxu0 %v7207
  %v7275 = vpop.f32.mrb[0].mxu0
  %v7276 = vadd.f32 0.0, %v7275
  %v7277 = vpop.f32.mrb[0].mxu0
  %7278 = vdwg.mxu0
  %v7280 = vsel %vm2009, %v6765, 0
  %7282 = vmatprep.subr.mxu0 0.0
  %7283 = vmatpush1.msra.mxu0 %v4208
  %7284 = vmatprep.subr.mxu0 0.0
  %7285 = vmatpush1.msra.mxu0 0.0
  %7286 = vmatprep.subr.mxu0 0.0
  %7287 = vmatpush1.msra.mxu0 0.0
  %7288 = vmatprep.subr.mxu0 0.0
  %7289 = vmatpush1.msra.mxu0 0.0
  %7290 = vmatprep.subr.mxu0 0.0
  %7291 = vmatpush1.msra.mxu0 0.0
  %7292 = vmatprep.subr.mxu0 0.0
  %7293 = vmatpush1.msra.mxu0 0.0
  %7294 = vmatprep.subr.mxu0 0.0
  %7295 = vmatpush1.msra.mxu0 0.0
  %7296 = vmatprep.subr.mxu0 0.0
  %7297 = vmatpush1.msra.mxu0 0.0
  %7298 = vmatprep.subr.mxu0 0.0
  %7299 = vmatpush1.msra.mxu0 0.0
  %7300 = vmatprep.subr.mxu0 0.0
  %7301 = vmatpush1.msra.mxu0 0.0
  %7302 = vmatprep.subr.mxu0 0.0
  %7303 = vmatpush1.msra.mxu0 0.0
  %7304 = vmatprep.subr.mxu0 0.0
  %7305 = vmatpush1.msra.mxu0 0.0
  %7306 = vmatprep.subr.mxu0 0.0
  %7307 = vmatpush1.msra.mxu0 0.0
  %7308 = vmatprep.subr.mxu0 0.0
  %7309 = vmatpush1.msra.mxu0 0.0
  %7310 = vmatprep.subr.mxu0 0.0
  %7311 = vmatpush1.msra.mxu0 0.0
  %7312 = vmatprep.subr.mxu0 0.0
  %7313 = vmatpush1.msra.mxu0 0.0
  %7314 = vmatprep.subr.mxu0 0.0
  %7315 = vmatpush1.msra.mxu0 0.0
  %7316 = vmatprep.subr.mxu0 0.0
  %7317 = vmatpush1.msra.mxu0 0.0
  %7318 = vmatprep.subr.mxu0 0.0
  %7319 = vmatpush1.msra.mxu0 0.0
  %7320 = vmatprep.subr.mxu0 0.0
  %7321 = vmatpush1.msra.mxu0 0.0
  %7322 = vmatprep.subr.mxu0 0.0
  %7323 = vmatpush1.msra.mxu0 0.0
  %7324 = vmatprep.subr.mxu0 0.0
  %7325 = vmatpush1.msra.mxu0 0.0
  %7326 = vmatprep.subr.mxu0 0.0
  %7327 = vmatpush1.msra.mxu0 0.0
  %7328 = vmatprep.subr.mxu0 0.0
  %7329 = vmatpush1.msra.mxu0 0.0
  %7330 = vmatprep.subr.mxu0 0.0
  %7331 = vmatpush1.msra.mxu0 0.0
  %7332 = vmatprep.subr.mxu0 0.0
  %7333 = vmatpush1.msra.mxu0 0.0
  %7334 = vmatprep.subr.mxu0 0.0
  %7335 = vmatpush1.msra.mxu0 0.0
  %7336 = vmatprep.subr.mxu0 0.0
  %7337 = vmatpush1.msra.mxu0 0.0
  %7338 = vmatprep.subr.mxu0 0.0
  %7339 = vmatpush1.msra.mxu0 0.0
  %7340 = vmatprep.subr.mxu0 0.0
  %7341 = vmatpush1.msra.mxu0 0.0
  %7342 = vmatprep.subr.mxu0 0.0
  %7343 = vmatpush1.msra.mxu0 0.0
  %7344 = vmatprep.subr.mxu0 0.0
  %7345 = vmatpush1.msra.mxu0 0.0
  %7346 = vmatprep.mubr.f32.mxu0 0.0
  %7347 = vmatmul.mubr.f32.gmra.mrb[0].mxu0 %v7280
  %v7348 = vpop.f32.mrb[0].mxu0
  %v7349 = vadd.f32 0.0, %v7348
  %v7350 = vpop.f32.mrb[0].mxu0
  %7351 = vdwg.mxu0
  %v7353 = vsel %vm2009, %v6838, 0
  %7355 = vmatprep.subr.mxu0 0.0
  %7356 = vmatpush1.msra.mxu0 %v4209
  %7357 = vmatprep.subr.mxu0 0.0
  %7358 = vmatpush1.msra.mxu0 0.0
  %7359 = vmatprep.subr.mxu0 0.0
  %7360 = vmatpush1.msra.mxu0 0.0
  %7361 = vmatprep.subr.mxu0 0.0
  %7362 = vmatpush1.msra.mxu0 0.0
  %7363 = vmatprep.subr.mxu0 0.0
  %7364 = vmatpush1.msra.mxu0 0.0
  %7365 = vmatprep.subr.mxu0 0.0
  %7366 = vmatpush1.msra.mxu0 0.0
  %7367 = vmatprep.subr.mxu0 0.0
  %7368 = vmatpush1.msra.mxu0 0.0
  %7369 = vmatprep.subr.mxu0 0.0
  %7370 = vmatpush1.msra.mxu0 0.0
  %7371 = vmatprep.subr.mxu0 0.0
  %7372 = vmatpush1.msra.mxu0 0.0
  %7373 = vmatprep.subr.mxu0 0.0
  %7374 = vmatpush1.msra.mxu0 0.0
  %7375 = vmatprep.subr.mxu0 0.0
  %7376 = vmatpush1.msra.mxu0 0.0
  %7377 = vmatprep.subr.mxu0 0.0
  %7378 = vmatpush1.msra.mxu0 0.0
  %7379 = vmatprep.subr.mxu0 0.0
  %7380 = vmatpush1.msra.mxu0 0.0
  %7381 = vmatprep.subr.mxu0 0.0
  %7382 = vmatpush1.msra.mxu0 0.0
  %7383 = vmatprep.subr.mxu0 0.0
  %7384 = vmatpush1.msra.mxu0 0.0
  %7385 = vmatprep.subr.mxu0 0.0
  %7386 = vmatpush1.msra.mxu0 0.0
  %7387 = vmatprep.subr.mxu0 0.0
  %7388 = vmatpush1.msra.mxu0 0.0
  %7389 = vmatprep.subr.mxu0 0.0
  %7390 = vmatpush1.msra.mxu0 0.0
  %7391 = vmatprep.subr.mxu0 0.0
  %7392 = vmatpush1.msra.mxu0 0.0
  %7393 = vmatprep.subr.mxu0 0.0
  %7394 = vmatpush1.msra.mxu0 0.0
  %7395 = vmatprep.subr.mxu0 0.0
  %7396 = vmatpush1.msra.mxu0 0.0
  %7397 = vmatprep.subr.mxu0 0.0
  %7398 = vmatpush1.msra.mxu0 0.0
  %7399 = vmatprep.subr.mxu0 0.0
  %7400 = vmatpush1.msra.mxu0 0.0
  %7401 = vmatprep.subr.mxu0 0.0
  %7402 = vmatpush1.msra.mxu0 0.0
  %7403 = vmatprep.subr.mxu0 0.0
  %7404 = vmatpush1.msra.mxu0 0.0
  %7405 = vmatprep.subr.mxu0 0.0
  %7406 = vmatpush1.msra.mxu0 0.0
  %7407 = vmatprep.subr.mxu0 0.0
  %7408 = vmatpush1.msra.mxu0 0.0
  %7409 = vmatprep.subr.mxu0 0.0
  %7410 = vmatpush1.msra.mxu0 0.0
  %7411 = vmatprep.subr.mxu0 0.0
  %7412 = vmatpush1.msra.mxu0 0.0
  %7413 = vmatprep.subr.mxu0 0.0
  %7414 = vmatpush1.msra.mxu0 0.0
  %7415 = vmatprep.subr.mxu0 0.0
  %7416 = vmatpush1.msra.mxu0 0.0
  %7417 = vmatprep.subr.mxu0 0.0
  %7418 = vmatpush1.msra.mxu0 0.0
  %7419 = vmatprep.mubr.f32.mxu0 0.0
  %7420 = vmatmul.mubr.f32.gmra.mrb[0].mxu0 %v7353
  %v7421 = vpop.f32.mrb[0].mxu0
  %v7422 = vadd.f32 0.0, %v7421
  %v7423 = vpop.f32.mrb[0].mxu0
  %7424 = vdwg.mxu0
  %v7426 = vsel %vm2009, %v6911, 0
  %7428 = vmatprep.subr.mxu0 0.0
  %7429 = vmatpush1.msra.mxu0 %v4210
  %7430 = vmatprep.subr.mxu0 0.0
  %7431 = vmatpush1.msra.mxu0 0.0
  %7432 = vmatprep.subr.mxu0 0.0
  %7433 = vmatpush1.msra.mxu0 0.0
  %7434 = vmatprep.subr.mxu0 0.0
  %7435 = vmatpush1.msra.mxu0 0.0
  %7436 = vmatprep.subr.mxu0 0.0
  %7437 = vmatpush1.msra.mxu0 0.0
  %7438 = vmatprep.subr.mxu0 0.0
  %7439 = vmatpush1.msra.mxu0 0.0
  %7440 = vmatprep.subr.mxu0 0.0
  %7441 = vmatpush1.msra.mxu0 0.0
  %7442 = vmatprep.subr.mxu0 0.0
  %7443 = vmatpush1.msra.mxu0 0.0
  %7444 = vmatprep.subr.mxu0 0.0
  %7445 = vmatpush1.msra.mxu0 0.0
  %7446 = vmatprep.subr.mxu0 0.0
  %7447 = vmatpush1.msra.mxu0 0.0
  %7448 = vmatprep.subr.mxu0 0.0
  %7449 = vmatpush1.msra.mxu0 0.0
  %7450 = vmatprep.subr.mxu0 0.0
  %7451 = vmatpush1.msra.mxu0 0.0
  %7452 = vmatprep.subr.mxu0 0.0
  %7453 = vmatpush1.msra.mxu0 0.0
  %7454 = vmatprep.subr.mxu0 0.0
  %7455 = vmatpush1.msra.mxu0 0.0
  %7456 = vmatprep.subr.mxu0 0.0
  %7457 = vmatpush1.msra.mxu0 0.0
  %7458 = vmatprep.subr.mxu0 0.0
  %7459 = vmatpush1.msra.mxu0 0.0
  %7460 = vmatprep.subr.mxu0 0.0
  %7461 = vmatpush1.msra.mxu0 0.0
  %7462 = vmatprep.subr.mxu0 0.0
  %7463 = vmatpush1.msra.mxu0 0.0
  %7464 = vmatprep.subr.mxu0 0.0
  %7465 = vmatpush1.msra.mxu0 0.0
  %7466 = vmatprep.subr.mxu0 0.0
  %7467 = vmatpush1.msra.mxu0 0.0
  %7468 = vmatprep.subr.mxu0 0.0
  %7469 = vmatpush1.msra.mxu0 0.0
  %7470 = vmatprep.subr.mxu0 0.0
  %7471 = vmatpush1.msra.mxu0 0.0
  %7472 = vmatprep.subr.mxu0 0.0
  %7473 = vmatpush1.msra.mxu0 0.0
  %7474 = vmatprep.subr.mxu0 0.0
  %7475 = vmatpush1.msra.mxu0 0.0
  %7476 = vmatprep.subr.mxu0 0.0
  %7477 = vmatpush1.msra.mxu0 0.0
  %7478 = vmatprep.subr.mxu0 0.0
  %7479 = vmatpush1.msra.mxu0 0.0
  %7480 = vmatprep.subr.mxu0 0.0
  %7481 = vmatpush1.msra.mxu0 0.0
  %7482 = vmatprep.subr.mxu0 0.0
  %7483 = vmatpush1.msra.mxu0 0.0
  %7484 = vmatprep.subr.mxu0 0.0
  %7485 = vmatpush1.msra.mxu0 0.0
  %7486 = vmatprep.subr.mxu0 0.0
  %7487 = vmatpush1.msra.mxu0 0.0
  %7488 = vmatprep.subr.mxu0 0.0
  %7489 = vmatpush1.msra.mxu0 0.0
  %7490 = vmatprep.subr.mxu0 0.0
  %7491 = vmatpush1.msra.mxu0 0.0
  %7492 = vmatprep.mubr.f32.mxu0 0.0
  %7493 = vmatmul.mubr.f32.gmra.mrb[0].mxu0 %v7426
  %v7494 = vpop.f32.mrb[0].mxu0
  %v7495 = vadd.f32 0.0, %v7494
  %v7496 = vpop.f32.mrb[0].mxu0
  %7497 = vdwg.mxu0
  %v7499 = vsel %vm2009, %v6984, 0
  %7501 = vmatprep.subr.mxu0 0.0
  %7502 = vmatpush1.msra.mxu0 %v4211
  %7503 = vmatprep.subr.mxu0 0.0
  %7504 = vmatpush1.msra.mxu0 0.0
  %7505 = vmatprep.subr.mxu0 0.0
  %7506 = vmatpush1.msra.mxu0 0.0
  %7507 = vmatprep.subr.mxu0 0.0
  %7508 = vmatpush1.msra.mxu0 0.0
  %7509 = vmatprep.subr.mxu0 0.0
  %7510 = vmatpush1.msra.mxu0 0.0
  %7511 = vmatprep.subr.mxu0 0.0
  %7512 = vmatpush1.msra.mxu0 0.0
  %7513 = vmatprep.subr.mxu0 0.0
  %7514 = vmatpush1.msra.mxu0 0.0
  %7515 = vmatprep.subr.mxu0 0.0
  %7516 = vmatpush1.msra.mxu0 0.0
  %7517 = vmatprep.subr.mxu0 0.0
  %7518 = vmatpush1.msra.mxu0 0.0
  %7519 = vmatprep.subr.mxu0 0.0
  %7520 = vmatpush1.msra.mxu0 0.0
  %7521 = vmatprep.subr.mxu0 0.0
  %7522 = vmatpush1.msra.mxu0 0.0
  %7523 = vmatprep.subr.mxu0 0.0
  %7524 = vmatpush1.msra.mxu0 0.0
  %7525 = vmatprep.subr.mxu0 0.0
  %7526 = vmatpush1.msra.mxu0 0.0
  %7527 = vmatprep.subr.mxu0 0.0
  %7528 = vmatpush1.msra.mxu0 0.0
  %7529 = vmatprep.subr.mxu0 0.0
  %7530 = vmatpush1.msra.mxu0 0.0
  %7531 = vmatprep.subr.mxu0 0.0
  %7532 = vmatpush1.msra.mxu0 0.0
  %7533 = vmatprep.subr.mxu0 0.0
  %7534 = vmatpush1.msra.mxu0 0.0
  %7535 = vmatprep.subr.mxu0 0.0
  %7536 = vmatpush1.msra.mxu0 0.0
  %7537 = vmatprep.subr.mxu0 0.0
  %7538 = vmatpush1.msra.mxu0 0.0
  %7539 = vmatprep.subr.mxu0 0.0
  %7540 = vmatpush1.msra.mxu0 0.0
  %7541 = vmatprep.subr.mxu0 0.0
  %7542 = vmatpush1.msra.mxu0 0.0
  %7543 = vmatprep.subr.mxu0 0.0
  %7544 = vmatpush1.msra.mxu0 0.0
  %7545 = vmatprep.subr.mxu0 0.0
  %7546 = vmatpush1.msra.mxu0 0.0
  %7547 = vmatprep.subr.mxu0 0.0
  %7548 = vmatpush1.msra.mxu0 0.0
  %7549 = vmatprep.subr.mxu0 0.0
  %7550 = vmatpush1.msra.mxu0 0.0
  %7551 = vmatprep.subr.mxu0 0.0
  %7552 = vmatpush1.msra.mxu0 0.0
  %7553 = vmatprep.subr.mxu0 0.0
  %7554 = vmatpush1.msra.mxu0 0.0
  %7555 = vmatprep.subr.mxu0 0.0
  %7556 = vmatpush1.msra.mxu0 0.0
  %7557 = vmatprep.subr.mxu0 0.0
  %7558 = vmatpush1.msra.mxu0 0.0
  %7559 = vmatprep.subr.mxu0 0.0
  %7560 = vmatpush1.msra.mxu0 0.0
  %7561 = vmatprep.subr.mxu0 0.0
  %7562 = vmatpush1.msra.mxu0 0.0
  %7563 = vmatprep.subr.mxu0 0.0
  %7564 = vmatpush1.msra.mxu0 0.0
  %7565 = vmatprep.mubr.f32.mxu0 0.0
  %7566 = vmatmul.mubr.f32.gmra.mrb[0].mxu0 %v7499
  %v7567 = vpop.f32.mrb[0].mxu0
  %v7568 = vadd.f32 0.0, %v7567
  %v7569 = vpop.f32.mrb[0].mxu0
  %7570 = vdwg.mxu0
  %v7572 = vsel %vm2009, %v7057, 0
  %7574 = vmatprep.subr.mxu0 0.0
  %7575 = vmatpush1.msra.mxu0 %v4212
  %7576 = vmatprep.subr.mxu0 0.0
  %7577 = vmatpush1.msra.mxu0 0.0
  %7578 = vmatprep.subr.mxu0 0.0
  %7579 = vmatpush1.msra.mxu0 0.0
  %7580 = vmatprep.subr.mxu0 0.0
  %7581 = vmatpush1.msra.mxu0 0.0
  %7582 = vmatprep.subr.mxu0 0.0
  %7583 = vmatpush1.msra.mxu0 0.0
  %7584 = vmatprep.subr.mxu0 0.0
  %7585 = vmatpush1.msra.mxu0 0.0
  %7586 = vmatprep.subr.mxu0 0.0
  %7587 = vmatpush1.msra.mxu0 0.0
  %7588 = vmatprep.subr.mxu0 0.0
  %7589 = vmatpush1.msra.mxu0 0.0
  %7590 = vmatprep.subr.mxu0 0.0
  %7591 = vmatpush1.msra.mxu0 0.0
  %7592 = vmatprep.subr.mxu0 0.0
  %7593 = vmatpush1.msra.mxu0 0.0
  %7594 = vmatprep.subr.mxu0 0.0
  %7595 = vmatpush1.msra.mxu0 0.0
  %7596 = vmatprep.subr.mxu0 0.0
  %7597 = vmatpush1.msra.mxu0 0.0
  %7598 = vmatprep.subr.mxu0 0.0
  %7599 = vmatpush1.msra.mxu0 0.0
  %7600 = vmatprep.subr.mxu0 0.0
  %7601 = vmatpush1.msra.mxu0 0.0
  %7602 = vmatprep.subr.mxu0 0.0
  %7603 = vmatpush1.msra.mxu0 0.0
  %7604 = vmatprep.subr.mxu0 0.0
  %7605 = vmatpush1.msra.mxu0 0.0
  %7606 = vmatprep.subr.mxu0 0.0
  %7607 = vmatpush1.msra.mxu0 0.0
  %7608 = vmatprep.subr.mxu0 0.0
  %7609 = vmatpush1.msra.mxu0 0.0
  %7610 = vmatprep.subr.mxu0 0.0
  %7611 = vmatpush1.msra.mxu0 0.0
  %7612 = vmatprep.subr.mxu0 0.0
  %7613 = vmatpush1.msra.mxu0 0.0
  %7614 = vmatprep.subr.mxu0 0.0
  %7615 = vmatpush1.msra.mxu0 0.0
  %7616 = vmatprep.subr.mxu0 0.0
  %7617 = vmatpush1.msra.mxu0 0.0
  %7618 = vmatprep.subr.mxu0 0.0
  %7619 = vmatpush1.msra.mxu0 0.0
  %7620 = vmatprep.subr.mxu0 0.0
  %7621 = vmatpush1.msra.mxu0 0.0
  %7622 = vmatprep.subr.mxu0 0.0
  %7623 = vmatpush1.msra.mxu0 0.0
  %7624 = vmatprep.subr.mxu0 0.0
  %7625 = vmatpush1.msra.mxu0 0.0
  %7626 = vmatprep.subr.mxu0 0.0
  %7627 = vmatpush1.msra.mxu0 0.0
  %7628 = vmatprep.subr.mxu0 0.0
  %7629 = vmatpush1.msra.mxu0 0.0
  %7630 = vmatprep.subr.mxu0 0.0
  %7631 = vmatpush1.msra.mxu0 0.0
  %7632 = vmatprep.subr.mxu0 0.0
  %7633 = vmatpush1.msra.mxu0 0.0
  %7634 = vmatprep.subr.mxu0 0.0
  %7635 = vmatpush1.msra.mxu0 0.0
  %7636 = vmatprep.subr.mxu0 0.0
  %7637 = vmatpush1.msra.mxu0 0.0
  %7638 = vmatprep.mubr.f32.mxu0 0.0
  %7639 = vmatmul.mubr.f32.gmra.mrb[0].mxu0 %v7572
  %v7640 = vpop.f32.mrb[0].mxu0
  %v7641 = vadd.f32 0.0, %v7640
  %v7642 = vpop.f32.mrb[0].mxu0
  %7643 = vdwg.mxu0
  %v7645 = vsel %vm2009, %v7130, 0
  %7647 = vmatprep.subr.mxu0 0.0
  %7648 = vmatpush1.msra.mxu0 %v4213
  %7649 = vmatprep.subr.mxu0 0.0
  %7650 = vmatpush1.msra.mxu0 0.0
  %7651 = vmatprep.subr.mxu0 0.0
  %7652 = vmatpush1.msra.mxu0 0.0
  %7653 = vmatprep.subr.mxu0 0.0
  %7654 = vmatpush1.msra.mxu0 0.0
  %7655 = vmatprep.subr.mxu0 0.0
  %7656 = vmatpush1.msra.mxu0 0.0
  %7657 = vmatprep.subr.mxu0 0.0
  %7658 = vmatpush1.msra.mxu0 0.0
  %7659 = vmatprep.subr.mxu0 0.0
  %7660 = vmatpush1.msra.mxu0 0.0
  %7661 = vmatprep.subr.mxu0 0.0
  %7662 = vmatpush1.msra.mxu0 0.0
  %7663 = vmatprep.subr.mxu0 0.0
  %7664 = vmatpush1.msra.mxu0 0.0
  %7665 = vmatprep.subr.mxu0 0.0
  %7666 = vmatpush1.msra.mxu0 0.0
  %7667 = vmatprep.subr.mxu0 0.0
  %7668 = vmatpush1.msra.mxu0 0.0
  %7669 = vmatprep.subr.mxu0 0.0
  %7670 = vmatpush1.msra.mxu0 0.0
  %7671 = vmatprep.subr.mxu0 0.0
  %7672 = vmatpush1.msra.mxu0 0.0
  %7673 = vmatprep.subr.mxu0 0.0
  %7674 = vmatpush1.msra.mxu0 0.0
  %7675 = vmatprep.subr.mxu0 0.0
  %7676 = vmatpush1.msra.mxu0 0.0
  %7677 = vmatprep.subr.mxu0 0.0
  %7678 = vmatpush1.msra.mxu0 0.0
  %7679 = vmatprep.subr.mxu0 0.0
  %7680 = vmatpush1.msra.mxu0 0.0
  %7681 = vmatprep.subr.mxu0 0.0
  %7682 = vmatpush1.msra.mxu0 0.0
  %7683 = vmatprep.subr.mxu0 0.0
  %7684 = vmatpush1.msra.mxu0 0.0
  %7685 = vmatprep.subr.mxu0 0.0
  %7686 = vmatpush1.msra.mxu0 0.0
  %7687 = vmatprep.subr.mxu0 0.0
  %7688 = vmatpush1.msra.mxu0 0.0
  %7689 = vmatprep.subr.mxu0 0.0
  %7690 = vmatpush1.msra.mxu0 0.0
  %7691 = vmatprep.subr.mxu0 0.0
  %7692 = vmatpush1.msra.mxu0 0.0
  %7693 = vmatprep.subr.mxu0 0.0
  %7694 = vmatpush1.msra.mxu0 0.0
  %7695 = vmatprep.subr.mxu0 0.0
  %7696 = vmatpush1.msra.mxu0 0.0
  %7697 = vmatprep.subr.mxu0 0.0
  %7698 = vmatpush1.msra.mxu0 0.0
  %7699 = vmatprep.subr.mxu0 0.0
  %7700 = vmatpush1.msra.mxu0 0.0
  %7701 = vmatprep.subr.mxu0 0.0
  %7702 = vmatpush1.msra.mxu0 0.0
  %7703 = vmatprep.subr.mxu0 0.0
  %7704 = vmatpush1.msra.mxu0 0.0
  %7705 = vmatprep.subr.mxu0 0.0
  %7706 = vmatpush1.msra.mxu0 0.0
  %7707 = vmatprep.subr.mxu0 0.0
  %7708 = vmatpush1.msra.mxu0 0.0
  %7709 = vmatprep.subr.mxu0 0.0
  %7710 = vmatpush1.msra.mxu0 0.0
  %7711 = vmatprep.mubr.f32.mxu0 0.0
  %7712 = vmatmul.mubr.f32.gmra.mrb[0].mxu0 %v7645
  %v7713 = vpop.f32.mrb[0].mxu0
  %v7714 = vadd.f32 0.0, %v7713
  %v7715 = vpop.f32.mrb[0].mxu0
  %7716 = vdwg.mxu0
  %v7718 = vsel %vm2009, %v7203, 0
  %7720 = vmatprep.subr.mxu0 0.0
  %7721 = vmatpush1.msra.mxu0 %v4214
  %7722 = vmatprep.subr.mxu0 0.0
  %7723 = vmatpush1.msra.mxu0 0.0
  %7724 = vmatprep.subr.mxu0 0.0
  %7725 = vmatpush1.msra.mxu0 0.0
  %7726 = vmatprep.subr.mxu0 0.0
  %7727 = vmatpush1.msra.mxu0 0.0
  %7728 = vmatprep.subr.mxu0 0.0
  %7729 = vmatpush1.msra.mxu0 0.0
  %7730 = vmatprep.subr.mxu0 0.0
  %7731 = vmatpush1.msra.mxu0 0.0
  %7732 = vmatprep.subr.mxu0 0.0
  %7733 = vmatpush1.msra.mxu0 0.0
  %7734 = vmatprep.subr.mxu0 0.0
  %7735 = vmatpush1.msra.mxu0 0.0
  %7736 = vmatprep.subr.mxu0 0.0
  %7737 = vmatpush1.msra.mxu0 0.0
  %7738 = vmatprep.subr.mxu0 0.0
  %7739 = vmatpush1.msra.mxu0 0.0
  %7740 = vmatprep.subr.mxu0 0.0
  %7741 = vmatpush1.msra.mxu0 0.0
  %7742 = vmatprep.subr.mxu0 0.0
  %7743 = vmatpush1.msra.mxu0 0.0
  %7744 = vmatprep.subr.mxu0 0.0
  %7745 = vmatpush1.msra.mxu0 0.0
  %7746 = vmatprep.subr.mxu0 0.0
  %7747 = vmatpush1.msra.mxu0 0.0
  %7748 = vmatprep.subr.mxu0 0.0
  %7749 = vmatpush1.msra.mxu0 0.0
  %7750 = vmatprep.subr.mxu0 0.0
  %7751 = vmatpush1.msra.mxu0 0.0
  %7752 = vmatprep.subr.mxu0 0.0
  %7753 = vmatpush1.msra.mxu0 0.0
  %7754 = vmatprep.subr.mxu0 0.0
  %7755 = vmatpush1.msra.mxu0 0.0
  %7756 = vmatprep.subr.mxu0 0.0
  %7757 = vmatpush1.msra.mxu0 0.0
  %7758 = vmatprep.subr.mxu0 0.0
  %7759 = vmatpush1.msra.mxu0 0.0
  %7760 = vmatprep.subr.mxu0 0.0
  %7761 = vmatpush1.msra.mxu0 0.0
  %7762 = vmatprep.subr.mxu0 0.0
  %7763 = vmatpush1.msra.mxu0 0.0
  %7764 = vmatprep.subr.mxu0 0.0
  %7765 = vmatpush1.msra.mxu0 0.0
  %7766 = vmatprep.subr.mxu0 0.0
  %7767 = vmatpush1.msra.mxu0 0.0
  %7768 = vmatprep.subr.mxu0 0.0
  %7769 = vmatpush1.msra.mxu0 0.0
  %7770 = vmatprep.subr.mxu0 0.0
  %7771 = vmatpush1.msra.mxu0 0.0
  %7772 = vmatprep.subr.mxu0 0.0
  %7773 = vmatpush1.msra.mxu0 0.0
  %7774 = vmatprep.subr.mxu0 0.0
  %7775 = vmatpush1.msra.mxu0 0.0
  %7776 = vmatprep.subr.mxu0 0.0
  %7777 = vmatpush1.msra.mxu0 0.0
  %7778 = vmatprep.subr.mxu0 0.0
  %7779 = vmatpush1.msra.mxu0 0.0
  %7780 = vmatprep.subr.mxu0 0.0
  %7781 = vmatpush1.msra.mxu0 0.0
  %7782 = vmatprep.subr.mxu0 0.0
  %7783 = vmatpush1.msra.mxu0 0.0
  %7784 = vmatprep.mubr.f32.mxu0 0.0
  %7785 = vmatmul.mubr.f32.gmra.mrb[0].mxu0 %v7718
  %v7786 = vpop.f32.mrb[0].mxu0
  %v7787 = vadd.f32 0.0, %v7786
  %v7788 = vpop.f32.mrb[0].mxu0
  %7789 = vdwg.mxu0
  %v7791 = vsel %vm2009, %v7276, 0
  %7793 = vmatprep.subr.mxu0 0.0
  %7794 = vmatpush1.msra.mxu0 %v4215
  %7795 = vmatprep.subr.mxu0 0.0
  %7796 = vmatpush1.msra.mxu0 0.0
  %7797 = vmatprep.subr.mxu0 0.0
  %7798 = vmatpush1.msra.mxu0 0.0
  %7799 = vmatprep.subr.mxu0 0.0
  %7800 = vmatpush1.msra.mxu0 0.0
  %7801 = vmatprep.subr.mxu0 0.0
  %7802 = vmatpush1.msra.mxu0 0.0
  %7803 = vmatprep.subr.mxu0 0.0
  %7804 = vmatpush1.msra.mxu0 0.0
  %7805 = vmatprep.subr.mxu0 0.0
  %7806 = vmatpush1.msra.mxu0 0.0
  %7807 = vmatprep.subr.mxu0 0.0
  %7808 = vmatpush1.msra.mxu0 0.0
  %7809 = vmatprep.subr.mxu0 0.0
  %7810 = vmatpush1.msra.mxu0 0.0
  %7811 = vmatprep.subr.mxu0 0.0
  %7812 = vmatpush1.msra.mxu0 0.0
  %7813 = vmatprep.subr.mxu0 0.0
  %7814 = vmatpush1.msra.mxu0 0.0
  %7815 = vmatprep.subr.mxu0 0.0
  %7816 = vmatpush1.msra.mxu0 0.0
  %7817 = vmatprep.subr.mxu0 0.0
  %7818 = vmatpush1.msra.mxu0 0.0
  %7819 = vmatprep.subr.mxu0 0.0
  %7820 = vmatpush1.msra.mxu0 0.0
  %7821 = vmatprep.subr.mxu0 0.0
  %7822 = vmatpush1.msra.mxu0 0.0
  %7823 = vmatprep.subr.mxu0 0.0
  %7824 = vmatpush1.msra.mxu0 0.0
  %7825 = vmatprep.subr.mxu0 0.0
  %7826 = vmatpush1.msra.mxu0 0.0
  %7827 = vmatprep.subr.mxu0 0.0
  %7828 = vmatpush1.msra.mxu0 0.0
  %7829 = vmatprep.subr.mxu0 0.0
  %7830 = vmatpush1.msra.mxu0 0.0
  %7831 = vmatprep.subr.mxu0 0.0
  %7832 = vmatpush1.msra.mxu0 0.0
  %7833 = vmatprep.subr.mxu0 0.0
  %7834 = vmatpush1.msra.mxu0 0.0
  %7835 = vmatprep.subr.mxu0 0.0
  %7836 = vmatpush1.msra.mxu0 0.0
  %7837 = vmatprep.subr.mxu0 0.0
  %7838 = vmatpush1.msra.mxu0 0.0
  %7839 = vmatprep.subr.mxu0 0.0
  %7840 = vmatpush1.msra.mxu0 0.0
  %7841 = vmatprep.subr.mxu0 0.0
  %7842 = vmatpush1.msra.mxu0 0.0
  %7843 = vmatprep.subr.mxu0 0.0
  %7844 = vmatpush1.msra.mxu0 0.0
  %7845 = vmatprep.subr.mxu0 0.0
  %7846 = vmatpush1.msra.mxu0 0.0
  %7847 = vmatprep.subr.mxu0 0.0
  %7848 = vmatpush1.msra.mxu0 0.0
  %7849 = vmatprep.subr.mxu0 0.0
  %7850 = vmatpush1.msra.mxu0 0.0
  %7851 = vmatprep.subr.mxu0 0.0
  %7852 = vmatpush1.msra.mxu0 0.0
  %7853 = vmatprep.subr.mxu0 0.0
  %7854 = vmatpush1.msra.mxu0 0.0
  %7855 = vmatprep.subr.mxu0 0.0
  %7856 = vmatpush1.msra.mxu0 0.0
  %7857 = vmatprep.mubr.f32.mxu0 0.0
  %7858 = vmatmul.mubr.f32.gmra.mrb[0].mxu0 %v7791
  %v7859 = vpop.f32.mrb[0].mxu0
  %v7860 = vadd.f32 0.0, %v7859
  %v7861 = vpop.f32.mrb[0].mxu0
  %7862 = vdwg.mxu0
  %v7863 = vadd.f32 %v7349, %v7495
  %v7864 = vadd.f32 %v7422, %v7568
  %v7865 = vadd.f32 %v7863, %v7641
  %v7866 = vadd.f32 %v7864, %v7714
  %v7867 = vadd.f32 %v7865, %v7787
  %v7868 = vadd.f32 %v7866, %v7860
  %v7869 = vld [vmem:[%s5 + $0x7b] sm:$0x1]
  %v7870 = vlaneseq
  %v7871 = vshrl.u32 %v7870, 7
  %v7872 = vsub.s32 0, %v7871
  %v7873 = vrot.slane %v7869, %v7872
  %v7874 = vadd.f32 %v7867, %v7873
  %v7875 = vadd.f32 %v7868, %v7873
  %v7876 = vadd.f32 %v4180, %v7874
  %v7877 = vadd.f32 %v4181, %v7875
  %v7878 = vld [vmem:[%s5 + $0x7c] sm:$0x1]
  %v7879 = vld [vmem:[%s5 + $0x7d] sm:$0x1]
  %v7880 = vsel %vm134, %v7876, 0.0
  %7881 = vadd.xlane.f32.xlu0 %v7880
  %v7882 = vpop.xlane.xlu0 %7881
  %v7883 = vsel %vm134, %v7877, 0.0
  %7884 = vadd.xlane.f32.xlu0 %v7883
  %v7885 = vpop.xlane.xlu0 %7884
  %v7886 = vmul.f32 %v7882, %v141
  %v7887 = vmul.f32 %v7885, %v141
  %v7888 = vsub.f32 %v7876, %v7886
  %v7889 = vsub.f32 %v7877, %v7887
  %v7890 = vmul.f32 %v7888, %v7888
  %v7891 = vmul.f32 %v7889, %v7889
  %v7892 = vsel %vm134, %v7890, 0.0
  %7893 = vadd.xlane.f32.xlu0 %v7892
  %v7894 = vpop.xlane.xlu0 %7893
  %v7895 = vsel %vm134, %v7891, 0.0
  %7896 = vadd.xlane.f32.xlu0 %v7895
  %v7897 = vpop.xlane.xlu0 %7896
  %v7898 = vmul.f32 %v7894, %v141
  %v7899 = vmul.f32 %v7897, %v141
  %v7900 = vadd.f32 %v7898, 1e-12
  %v7901 = vadd.f32 %v7899, 1e-12
  %v7902 = vrsqrt.pop %v7900
  %v7903 = vrsqrt.pop %v7901
  %v7904 = vmul.f32 %v7888, %v7902
  %v7905 = vmul.f32 %v7889, %v7903
  %v7906 = vlaneseq
  %v7907 = vshrl.u32 %v7906, 7
  %v7908 = vsub.s32 0, %v7907
  %v7909 = vrot.slane %v7878, %v7908
  %v7910 = vmul.f32 %v7904, %v7909
  %v7911 = vmul.f32 %v7905, %v7909
  %v7912 = vlaneseq
  %v7913 = vshrl.u32 %v7912, 7
  %v7914 = vsub.s32 0, %v7913
  %v7915 = vrot.slane %v7879, %v7914
  %v7916 = vadd.f32 %v7910, %v7915
  %v7917 = vadd.f32 %v7911, %v7915
  %s7918 = scalar_lea.vmem %s4, 72
  %v7919 = vld [vmem:[%s7918] sm:$0xff]
  %v7920 = vld [vmem:[%s7918 + $0x8] sm:$0xff]
  %v7921 = vld [vmem:[%s7918 + $0x10] sm:$0xff]
  %v7922 = vld [vmem:[%s7918 + $0x18] sm:$0xff]
  %v7923 = vld [vmem:[%s7918 + $0x20] sm:$0xff]
  %v7924 = vld [vmem:[%s7918 + $0x28] sm:$0xff]
  %v7925 = vld [vmem:[%s7918 + $0x30] sm:$0xff]
  %v7926 = vld [vmem:[%s7918 + $0x38] sm:$0xff]
  %v7927 = vld [vmem:[%s7918 + $0x40] sm:$0x1]
  %v7928 = vlaneseq
  %v7929 = vshrl.u32 %v7928, 7
  %v7930 = vsub.s32 0, %v7929
  %v7931 = vrot.slane %v7927, %v7930
  %v7933 = vsel %vm134, %v7916, 0
  %v7936 = vsel %vm134, %v7917, 0
  %7938 = vmatprep.subr.mxu0 0.0
  %7939 = vmatpush1.msra.mxu0 %v7919
  %7940 = vmatprep.subr.mxu0 0.0
  %7941 = vmatpush1.msra.mxu0 %v7920
  %7942 = vmatprep.subr.mxu0 0.0
  %7943 = vmatpush1.msra.mxu0 %v7921
  %7944 = vmatprep.subr.mxu0 0.0
  %7945 = vmatpush1.msra.mxu0 %v7922
  %7946 = vmatprep.subr.mxu0 0.0
  %7947 = vmatpush1.msra.mxu0 0.0
  %7948 = vmatprep.subr.mxu0 0.0
  %7949 = vmatpush1.msra.mxu0 0.0
  %7950 = vmatprep.subr.mxu0 0.0
  %7951 = vmatpush1.msra.mxu0 0.0
  %7952 = vmatprep.subr.mxu0 0.0
  %7953 = vmatpush1.msra.mxu0 0.0
  %7954 = vmatprep.subr.mxu0 0.0
  %7955 = vmatpush1.msra.mxu0 0.0
  %7956 = vmatprep.subr.mxu0 0.0
  %7957 = vmatpush1.msra.mxu0 0.0
  %7958 = vmatprep.subr.mxu0 0.0
  %7959 = vmatpush1.msra.mxu0 0.0
  %7960 = vmatprep.subr.mxu0 0.0
  %7961 = vmatpush1.msra.mxu0 0.0
  %7962 = vmatprep.subr.mxu0 0.0
  %7963 = vmatpush1.msra.mxu0 0.0
  %7964 = vmatprep.subr.mxu0 0.0
  %7965 = vmatpush1.msra.mxu0 0.0
  %7966 = vmatprep.subr.mxu0 0.0
  %7967 = vmatpush1.msra.mxu0 0.0
  %7968 = vmatprep.subr.mxu0 0.0
  %7969 = vmatpush1.msra.mxu0 0.0
  %7970 = vmatprep.subr.mxu0 0.0
  %7971 = vmatpush1.msra.mxu0 0.0
  %7972 = vmatprep.subr.mxu0 0.0
  %7973 = vmatpush1.msra.mxu0 0.0
  %7974 = vmatprep.subr.mxu0 0.0
  %7975 = vmatpush1.msra.mxu0 0.0
  %7976 = vmatprep.subr.mxu0 0.0
  %7977 = vmatpush1.msra.mxu0 0.0
  %7978 = vmatprep.subr.mxu0 0.0
  %7979 = vmatpush1.msra.mxu0 0.0
  %7980 = vmatprep.subr.mxu0 0.0
  %7981 = vmatpush1.msra.mxu0 0.0
  %7982 = vmatprep.subr.mxu0 0.0
  %7983 = vmatpush1.msra.mxu0 0.0
  %7984 = vmatprep.subr.mxu0 0.0
  %7985 = vmatpush1.msra.mxu0 0.0
  %7986 = vmatprep.subr.mxu0 0.0
  %7987 = vmatpush1.msra.mxu0 0.0
  %7988 = vmatprep.subr.mxu0 0.0
  %7989 = vmatpush1.msra.mxu0 0.0
  %7990 = vmatprep.subr.mxu0 0.0
  %7991 = vmatpush1.msra.mxu0 0.0
  %7992 = vmatprep.subr.mxu0 0.0
  %7993 = vmatpush1.msra.mxu0 0.0
  %7994 = vmatprep.subr.mxu0 0.0
  %7995 = vmatpush1.msra.mxu0 0.0
  %7996 = vmatprep.subr.mxu0 0.0
  %7997 = vmatpush1.msra.mxu0 0.0
  %7998 = vmatprep.subr.mxu0 0.0
  %7999 = vmatpush1.msra.mxu0 0.0
  %8000 = vmatprep.subr.mxu0 0.0
  %8001 = vmatpush1.msra.mxu0 0.0
  %8002 = vmatprep.mubr.f32.mxu0 0.0
  %8003 = vmatmul.mubr.f32.gmra.mrb[0].mxu0 %v7933
  %v8004 = vpop.f32.mrb[0].mxu0
  %v8005 = vadd.f32 %v7931, %v8004
  %v8006 = vpop.f32.mrb[0].mxu0
  %8007 = vmatprep.mubr.f32.mxu0 0.0
  %8008 = vmatmul.mubr.f32.gmra.mrb[0].mxu0 %v7936
  %v8009 = vpop.f32.mrb[0].mxu0
  %v8010 = vadd.f32 %v7931, %v8009
  %v8011 = vpop.f32.mrb[0].mxu0
  %8012 = vdwg.mxu0
  %v8013 = vmul.f32 %v8005, 0.5
  %v8014 = vmul.f32 %v8010, 0.5
  %v8015 = vmul.f32 %v8005, 0.044715
  %v8016 = vmul.f32 %v8010, 0.044715
  %v8017 = vmul.f32 %v8015, %v8005
  %v8018 = vmul.f32 %v8016, %v8010
  %v8019 = vmul.f32 %v8017, %v8005
  %v8020 = vmul.f32 %v8018, %v8010
  %v8021 = vadd.f32 %v8005, %v8019
  %v8022 = vadd.f32 %v8010, %v8020
  %v8023 = vmul.f32 %v8021, 0.7978846
  %v8024 = vmul.f32 %v8022, 0.7978846
  %v8025 = vtanh.pop %v8023
  %v8026 = vtanh.pop %v8024
  %v8027 = vadd.f32 %v8025, 1.0
  %v8028 = vadd.f32 %v8026, 1.0
  %v8029 = vmul.f32 %v8013, %v8027
  %v8030 = vmul.f32 %v8014, %v8028
  %v8031 = vld [vmem:[%s5 + $0x7e] sm:$0x1]
  %v8032 = vlaneseq
  %v8033 = vshrl.u32 %v8032, 7
  %v8034 = vsub.s32 0, %v8033
  %v8035 = vrot.slane %v8031, %v8034
  %v8037 = vsel %vm4046, %v8029, 0
  %v8040 = vsel %vm4046, %v8030, 0
  %v8043 = vsel %vm4046, %v7923, 0
  %v8046 = vsel %vm4046, %v7924, 0
  %v8049 = vsel %vm4046, %v7925, 0
  %v8052 = vsel %vm4046, %v7926, 0
  %8054 = vmatprep.subr.mxu0 0.0
  %8055 = vmatpush1.xpose.msra.mxu0 %v8043
  %8056 = vmatprep.subr.mxu0 0.0
  %8057 = vmatpush1.xpose.msra.mxu0 %v8046
  %8058 = vmatprep.subr.mxu0 0.0
  %8059 = vmatpush1.xpose.msra.mxu0 %v8049
  %8060 = vmatprep.subr.mxu0 0.0
  %8061 = vmatpush1.xpose.msra.mxu0 %v8052
  %8062 = vmatprep.subr.mxu0 0.0
  %8063 = vmatpush1.xpose.msra.mxu0 0.0
  %8064 = vmatprep.subr.mxu0 0.0
  %8065 = vmatpush1.xpose.msra.mxu0 0.0
  %8066 = vmatprep.subr.mxu0 0.0
  %8067 = vmatpush1.xpose.msra.mxu0 0.0
  %8068 = vmatprep.subr.mxu0 0.0
  %8069 = vmatpush1.xpose.msra.mxu0 0.0
  %8070 = vmatprep.subr.mxu0 0.0
  %8071 = vmatpush1.xpose.msra.mxu0 0.0
  %8072 = vmatprep.subr.mxu0 0.0
  %8073 = vmatpush1.xpose.msra.mxu0 0.0
  %8074 = vmatprep.subr.mxu0 0.0
  %8075 = vmatpush1.xpose.msra.mxu0 0.0
  %8076 = vmatprep.subr.mxu0 0.0
  %8077 = vmatpush1.xpose.msra.mxu0 0.0
  %8078 = vmatprep.subr.mxu0 0.0
  %8079 = vmatpush1.xpose.msra.mxu0 0.0
  %8080 = vmatprep.subr.mxu0 0.0
  %8081 = vmatpush1.xpose.msra.mxu0 0.0
  %8082 = vmatprep.subr.mxu0 0.0
  %8083 = vmatpush1.xpose.msra.mxu0 0.0
  %8084 = vmatprep.subr.mxu0 0.0
  %8085 = vmatpush1.xpose.msra.mxu0 0.0
  %8086 = vmatprep.subr.mxu0 0.0
  %8087 = vmatpush1.xpose.msra.mxu0 0.0
  %8088 = vmatprep.subr.mxu0 0.0
  %8089 = vmatpush1.xpose.msra.mxu0 0.0
  %8090 = vmatprep.subr.mxu0 0.0
  %8091 = vmatpush1.xpose.msra.mxu0 0.0
  %8092 = vmatprep.subr.mxu0 0.0
  %8093 = vmatpush1.xpose.msra.mxu0 0.0
  %8094 = vmatprep.subr.mxu0 0.0
  %8095 = vmatpush1.xpose.msra.mxu0 0.0
  %8096 = vmatprep.subr.mxu0 0.0
  %8097 = vmatpush1.xpose.msra.mxu0 0.0
  %8098 = vmatprep.subr.mxu0 0.0
  %8099 = vmatpush1.xpose.msra.mxu0 0.0
  %8100 = vmatprep.subr.mxu0 0.0
  %8101 = vmatpush1.xpose.msra.mxu0 0.0
  %8102 = vmatprep.subr.mxu0 0.0
  %8103 = vmatpush1.xpose.msra.mxu0 0.0
  %8104 = vmatprep.subr.mxu0 0.0
  %8105 = vmatpush1.xpose.msra.mxu0 0.0
  %8106 = vmatprep.subr.mxu0 0.0
  %8107 = vmatpush1.xpose.msra.mxu0 0.0
  %8108 = vmatprep.subr.mxu0 0.0
  %8109 = vmatpush1.xpose.msra.mxu0 0.0
  %8110 = vmatprep.subr.mxu0 0.0
  %8111 = vmatpush1.xpose.msra.mxu0 0.0
  %8112 = vmatprep.subr.mxu0 0.0
  %8113 = vmatpush1.xpose.msra.mxu0 0.0
  %8114 = vmatprep.subr.mxu0 0.0
  %8115 = vmatpush1.xpose.msra.mxu0 0.0
  %8116 = vmatprep.subr.mxu0 0.0
  %8117 = vmatpush1.xpose.msra.mxu0 0.0
  %8118 = vmatprep.mubr.f32.mxu0 0.0
  %8119 = vmatmul.mubr.f32.gmra.mrb[0].mxu0 %v8037
  %v8120 = vpop.f32.mrb[0].mxu0
  %v8121 = vadd.f32 %v8035, %v8120
  %v8122 = vpop.f32.mrb[0].mxu0
  %8123 = vmatprep.mubr.f32.mxu0 0.0
  %8124 = vmatmul.mubr.f32.gmra.mrb[0].mxu0 %v8040
  %v8125 = vpop.f32.mrb[0].mxu0
  %v8126 = vadd.f32 %v8035, %v8125
  %v8127 = vpop.f32.mrb[0].mxu0
  %8128 = vdwg.mxu0
  %v8129 = vadd.f32 %v7916, %v8121
  %v8130 = vadd.f32 %v7917, %v8126
  %v8131 = vld [vmem:[%s5 + $0x7f] sm:$0x1]
  %v8132 = vld [vmem:[%s5 + $0x80] sm:$0x1]
  %v8133 = vsel %vm134, %v8129, 0.0
  %8134 = vadd.xlane.f32.xlu0 %v8133
  %v8135 = vpop.xlane.xlu0 %8134
  %v8136 = vsel %vm134, %v8130, 0.0
  %8137 = vadd.xlane.f32.xlu0 %v8136
  %v8138 = vpop.xlane.xlu0 %8137
  %v8139 = vmul.f32 %v8135, %v141
  %v8140 = vmul.f32 %v8138, %v141
  %v8141 = vsub.f32 %v8129, %v8139
  %v8142 = vsub.f32 %v8130, %v8140
  %v8143 = vmul.f32 %v8141, %v8141
  %v8144 = vmul.f32 %v8142, %v8142
  %v8145 = vsel %vm134, %v8143, 0.0
  %8146 = vadd.xlane.f32.xlu0 %v8145
  %v8147 = vpop.xlane.xlu0 %8146
  %v8148 = vsel %vm134, %v8144, 0.0
  %8149 = vadd.xlane.f32.xlu0 %v8148
  %v8150 = vpop.xlane.xlu0 %8149
  %v8151 = vmul.f32 %v8147, %v141
  %v8152 = vmul.f32 %v8150, %v141
  %v8153 = vadd.f32 %v8151, 1e-12
  %v8154 = vadd.f32 %v8152, 1e-12
  %v8155 = vrsqrt.pop %v8153
  %v8156 = vrsqrt.pop %v8154
  %v8157 = vmul.f32 %v8141, %v8155
  %v8158 = vmul.f32 %v8142, %v8156
  %v8159 = vlaneseq
  %v8160 = vshrl.u32 %v8159, 7
  %v8161 = vsub.s32 0, %v8160
  %v8162 = vrot.slane %v8131, %v8161
  %v8163 = vmul.f32 %v8157, %v8162
  %v8164 = vmul.f32 %v8158, %v8162
  %v8165 = vlaneseq
  %v8166 = vshrl.u32 %v8165, 7
  %v8167 = vsub.s32 0, %v8166
  %v8168 = vrot.slane %v8132, %v8167
  %v8169 = vadd.f32 %v8163, %v8168
  %v8170 = vadd.f32 %v8164, %v8168
  %v8171 = vld [vmem:[%s5 + $0x48] sm:$0xff]
  %v8172 = vld [vmem:[%s5 + $0x50] sm:$0xff]
  %v8173 = vld [vmem:[%s5 + $0x58] sm:$0xff]
  %v8174 = vld [vmem:[%s5 + $0x60] sm:$0xff]
  %v8175 = vld [vmem:[%s5 + $0x73] sm:$0x1]
  %v8176 = vlaneseq
  %v8177 = vshrl.u32 %v8176, 7
  %v8178 = vsub.s32 0, %v8177
  %v8179 = vrot.slane %v8175, %v8178
  %v8182 = vrot.slane %v8170, 7
  %vm8183 = vcmask 1041409
  %v8184 = vsel %vm8183, %v8182, %v8169
  %v8185 = vsel %vm134, %v8184, 0
  %8187 = vmatprep.subr.mxu0 0.0
  %8188 = vmatpush1.msra.mxu0 %v8171
  %8189 = vmatprep.subr.mxu0 0.0
  %8190 = vmatpush1.msra.mxu0 %v8172
  %8191 = vmatprep.subr.mxu0 0.0
  %8192 = vmatpush1.msra.mxu0 %v8173
  %8193 = vmatprep.subr.mxu0 0.0
  %8194 = vmatpush1.msra.mxu0 %v8174
  %8195 = vmatprep.subr.mxu0 0.0
  %8196 = vmatpush1.msra.mxu0 0.0
  %8197 = vmatprep.subr.mxu0 0.0
  %8198 = vmatpush1.msra.mxu0 0.0
  %8199 = vmatprep.subr.mxu0 0.0
  %8200 = vmatpush1.msra.mxu0 0.0
  %8201 = vmatprep.subr.mxu0 0.0
  %8202 = vmatpush1.msra.mxu0 0.0
  %8203 = vmatprep.subr.mxu0 0.0
  %8204 = vmatpush1.msra.mxu0 0.0
  %8205 = vmatprep.subr.mxu0 0.0
  %8206 = vmatpush1.msra.mxu0 0.0
  %8207 = vmatprep.subr.mxu0 0.0
  %8208 = vmatpush1.msra.mxu0 0.0
  %8209 = vmatprep.subr.mxu0 0.0
  %8210 = vmatpush1.msra.mxu0 0.0
  %8211 = vmatprep.subr.mxu0 0.0
  %8212 = vmatpush1.msra.mxu0 0.0
  %8213 = vmatprep.subr.mxu0 0.0
  %8214 = vmatpush1.msra.mxu0 0.0
  %8215 = vmatprep.subr.mxu0 0.0
  %8216 = vmatpush1.msra.mxu0 0.0
  %8217 = vmatprep.subr.mxu0 0.0
  %8218 = vmatpush1.msra.mxu0 0.0
  %8219 = vmatprep.subr.mxu0 0.0
  %8220 = vmatpush1.msra.mxu0 0.0
  %8221 = vmatprep.subr.mxu0 0.0
  %8222 = vmatpush1.msra.mxu0 0.0
  %8223 = vmatprep.subr.mxu0 0.0
  %8224 = vmatpush1.msra.mxu0 0.0
  %8225 = vmatprep.subr.mxu0 0.0
  %8226 = vmatpush1.msra.mxu0 0.0
  %8227 = vmatprep.subr.mxu0 0.0
  %8228 = vmatpush1.msra.mxu0 0.0
  %8229 = vmatprep.subr.mxu0 0.0
  %8230 = vmatpush1.msra.mxu0 0.0
  %8231 = vmatprep.subr.mxu0 0.0
  %8232 = vmatpush1.msra.mxu0 0.0
  %8233 = vmatprep.subr.mxu0 0.0
  %8234 = vmatpush1.msra.mxu0 0.0
  %8235 = vmatprep.subr.mxu0 0.0
  %8236 = vmatpush1.msra.mxu0 0.0
  %8237 = vmatprep.subr.mxu0 0.0
  %8238 = vmatpush1.msra.mxu0 0.0
  %8239 = vmatprep.subr.mxu0 0.0
  %8240 = vmatpush1.msra.mxu0 0.0
  %8241 = vmatprep.subr.mxu0 0.0
  %8242 = vmatpush1.msra.mxu0 0.0
  %8243 = vmatprep.subr.mxu0 0.0
  %8244 = vmatpush1.msra.mxu0 0.0
  %8245 = vmatprep.subr.mxu0 0.0
  %8246 = vmatpush1.msra.mxu0 0.0
  %8247 = vmatprep.subr.mxu0 0.0
  %8248 = vmatpush1.msra.mxu0 0.0
  %8249 = vmatprep.subr.mxu0 0.0
  %8250 = vmatpush1.msra.mxu0 0.0
  %8251 = vmatprep.mubr.f32.mxu0 0.0
  %8252 = vmatmul.mubr.f32.gmra.mrb[0].mxu0 %v8185
  %v8253 = vpop.f32.mrb[0].mxu0
  %v8254 = vadd.f32 %v8179, %v8253
  %v8255 = vpop.f32.mrb[0].mxu0
  %8256 = vdwg.mxu0
  %v8257 = vtanh.pop %v8254
  %v8258 = vld [vmem:[%s5 + $0x68] sm:$0xff]
  %v8259 = vld [vmem:[%s5 + $0x70] sm:$0x1]
  %v8260 = vld [vmem:[%s5 + $0x74] sm:$0x1]
  %v8261 = vlaneseq
  %v8262 = vshrl.u32 %v8261, 7
  %v8263 = vsub.s32 0, %v8262
  %v8264 = vrot.slane %v8260, %v8263
  %v8266 = vsel %vm134, %v8257, 0
  %v8269 = vsel %vm134, %v8258, 0
  %v8272 = vsel %vm134, %v8259, 0
  %8274 = vmatprep.subr.mxu0 0.0
  %8275 = vmatpush1.xpose.msra.mxu0 %v8269
  %8276 = vmatprep.subr.mxu0 0.0
  %8277 = vmatpush1.xpose.msra.mxu0 %v8272
  %8278 = vmatprep.subr.mxu0 0.0
  %8279 = vmatpush1.xpose.msra.mxu0 0.0
  %8280 = vmatprep.subr.mxu0 0.0
  %8281 = vmatpush1.xpose.msra.mxu0 0.0
  %8282 = vmatprep.subr.mxu0 0.0
  %8283 = vmatpush1.xpose.msra.mxu0 0.0
  %8284 = vmatprep.subr.mxu0 0.0
  %8285 = vmatpush1.xpose.msra.mxu0 0.0
  %8286 = vmatprep.subr.mxu0 0.0
  %8287 = vmatpush1.xpose.msra.mxu0 0.0
  %8288 = vmatprep.subr.mxu0 0.0
  %8289 = vmatpush1.xpose.msra.mxu0 0.0
  %8290 = vmatprep.subr.mxu0 0.0
  %8291 = vmatpush1.xpose.msra.mxu0 0.0
  %8292 = vmatprep.subr.mxu0 0.0
  %8293 = vmatpush1.xpose.msra.mxu0 0.0
  %8294 = vmatprep.subr.mxu0 0.0
  %8295 = vmatpush1.xpose.msra.mxu0 0.0
  %8296 = vmatprep.subr.mxu0 0.0
  %8297 = vmatpush1.xpose.msra.mxu0 0.0
  %8298 = vmatprep.subr.mxu0 0.0
  %8299 = vmatpush1.xpose.msra.mxu0 0.0
  %8300 = vmatprep.subr.mxu0 0.0
  %8301 = vmatpush1.xpose.msra.mxu0 0.0
  %8302 = vmatprep.subr.mxu0 0.0
  %8303 = vmatpush1.xpose.msra.mxu0 0.0
  %8304 = vmatprep.subr.mxu0 0.0
  %8305 = vmatpush1.xpose.msra.mxu0 0.0
  %8306 = vmatprep.subr.mxu0 0.0
  %8307 = vmatpush1.xpose.msra.mxu0 0.0
  %8308 = vmatprep.subr.mxu0 0.0
  %8309 = vmatpush1.xpose.msra.mxu0 0.0
  %8310 = vmatprep.subr.mxu0 0.0
  %8311 = vmatpush1.xpose.msra.mxu0 0.0
  %8312 = vmatprep.subr.mxu0 0.0
  %8313 = vmatpush1.xpose.msra.mxu0 0.0
  %8314 = vmatprep.subr.mxu0 0.0
  %8315 = vmatpush1.xpose.msra.mxu0 0.0
  %8316 = vmatprep.subr.mxu0 0.0
  %8317 = vmatpush1.xpose.msra.mxu0 0.0
  %8318 = vmatprep.subr.mxu0 0.0
  %8319 = vmatpush1.xpose.msra.mxu0 0.0
  %8320 = vmatprep.subr.mxu0 0.0
  %8321 = vmatpush1.xpose.msra.mxu0 0.0
  %8322 = vmatprep.subr.mxu0 0.0
  %8323 = vmatpush1.xpose.msra.mxu0 0.0
  %8324 = vmatprep.subr.mxu0 0.0
  %8325 = vmatpush1.xpose.msra.mxu0 0.0
  %8326 = vmatprep.subr.mxu0 0.0
  %8327 = vmatpush1.xpose.msra.mxu0 0.0
  %8328 = vmatprep.subr.mxu0 0.0
  %8329 = vmatpush1.xpose.msra.mxu0 0.0
  %8330 = vmatprep.subr.mxu0 0.0
  %8331 = vmatpush1.xpose.msra.mxu0 0.0
  %8332 = vmatprep.subr.mxu0 0.0
  %8333 = vmatpush1.xpose.msra.mxu0 0.0
  %8334 = vmatprep.subr.mxu0 0.0
  %8335 = vmatpush1.xpose.msra.mxu0 0.0
  %8336 = vmatprep.subr.mxu0 0.0
  %8337 = vmatpush1.xpose.msra.mxu0 0.0
  %8338 = vmatprep.mubr.f32.mxu0 0.0
  %8339 = vmatmul.mubr.f32.gmra.mrb[0].mxu0 %v8266
  %v8340 = vpop.f32.mrb[0].mxu0
  %v8341 = vadd.f32 %v8264, %v8340
  %v8342 = vpop.f32.mrb[0].mxu0
  %8343 = vdwg.mxu0
  %vm8344 = vcmask 254976
  %8345 = vst.msk [vmem:[%s6] sm:$0x3] %vm8344, %v8257
  %8347 = vrot.lane.b32.xlu0 %v8341, 32
  %v8348 = vpop.permute.xlu0 %8347
  %vm8350 = vcmask 328960
  %8351 = vst.msk [vmem:[%s6] sm:$0x3] %vm8350, %v8348
  // Predicated region
  $region26: #{mrl_transformer_forward.1} parent=0 // pred_check
    _
  $region27: #{mrl_transformer_forward.1} parent=0 // pred_check_branch
    %8353 = sbr.rel (0) target = $region29
  $region28: #{mrl_transformer_forward.1} parent=0 // pred_region
    _
  $region29: #{mrl_transformer_forward.1} parent=0 // pred_fallthru
    _
  // Predicated region
  $region30: #{mrl_transformer_forward.1} parent=0 // pred_check
    _
  $region31: #{mrl_transformer_forward.1} parent=0 // pred_check_branch
    %8355 = sbr.rel (0) target = $region33
  $region32: #{mrl_transformer_forward.1} parent=0 // pred_region
    _
  $region33: #{mrl_transformer_forward.1} parent=0 // pred_fallthru
    _

</llo_original>
